<compile_context>
chip_gen: v7x
topology: tpu7x:2x2x1
jax: 0.10.0
libtpu: 0.0.40
codegen_flags: <defaults>
</compile_context>

<pallas_src>
import functools

import jax
import jax.numpy as jnp
from jax.experimental import pallas as pl
from jax.experimental.pallas import tpu as pltpu


def _round_up(x: int, m: int) -> int:
    return (x + m - 1) // m * m


@functools.lru_cache(maxsize=None)
def _hw_config():
    """(tm_max, vmem_limit_bytes) chosen per TPU generation.

    v5e: 4x128x128 MXU -> tm=256 buys nothing over 128; keep 128.
    v7x: 2 TensorCores/chip and 64 MiB VMEM/TC -> smaller tm (more grid steps
         for megacore sharding) and a smaller scoped-VMEM reservation.
    v6e (and unknown): tm=256, 32 MiB.
    """
    tm, vmem = 256, 32 * 1024 * 1024
    try:
        kind = jax.devices()[0].device_kind.lower()
    except Exception:
        return tm, vmem
    if "v5" in kind:
        tm, vmem = 128, 32 * 1024 * 1024
    elif "v7" in kind:
        tm, vmem = 128, 24 * 1024 * 1024
    return tm, vmem


# ----------------------------------------------------------------------------
# Fused matmul + bias (+ReLU) kernel: bf16 operands, f32 accumulation
# ----------------------------------------------------------------------------
def _matmul_bias_kernel(x_ref, w_ref, b_ref, o_ref, *, apply_relu: bool):
    acc = jnp.dot(x_ref[...], w_ref[...], preferred_element_type=jnp.float32)
    acc = acc + b_ref[...]                        # (1, N) f32 broadcast over M
    if apply_relu:
        acc = jnp.maximum(acc, 0.0)
    o_ref[...] = acc.astype(o_ref.dtype)


def matmul_bias_act(x, w, b, *, apply_relu: bool, out_dtype=jnp.bfloat16):
    """x: (M, K), w: (K, N) bf16, b: (N,) f32 -> (M, N) out_dtype."""
    M, K = x.shape
    Kw, N = w.shape
    assert K == Kw, (K, Kw)
    tm_max, vmem_limit = _hw_config()

    tm = min(tm_max, _round_up(M, 16))            # bf16 sublane packing
    Mp = _round_up(M, tm)
    if Mp != M:
        x = jnp.pad(x, ((0, Mp - M), (0, 0)))
    x = x.astype(jnp.bfloat16)
    w = w.astype(jnp.bfloat16)
    b2 = b.reshape(1, N).astype(jnp.float32)

    out = pl.pallas_call(
        functools.partial(_matmul_bias_kernel, apply_relu=apply_relu),
        out_shape=jax.ShapeDtypeStruct((Mp, N), out_dtype),
        grid=(Mp // tm,),
        in_specs=[
            pl.BlockSpec((tm, K), lambda i: (i, 0)),
            pl.BlockSpec((K, N), lambda i: (0, 0)),   # resident weight block
            pl.BlockSpec((1, N), lambda i: (0, 0)),
        ],
        out_specs=pl.BlockSpec((tm, N), lambda i: (i, 0)),
        compiler_params=pltpu.CompilerParams(
            dimension_semantics=("parallel",),
            vmem_limit_bytes=vmem_limit),
        cost_estimate=pl.CostEstimate(
            flops=2 * Mp * K * N,
            transcendentals=0,
            bytes_accessed=2 * Mp * K + 2 * K * N + 4 * N
                           + Mp * N * jnp.dtype(out_dtype).itemsize),
    )(x, w, b2)
    return out if Mp == M else out[:M]


# ----------------------------------------------------------------------------
# Fused classifier kernel: fc1 -> ReLU -> fc2 -> ReLU -> fc3 in one pallas_call
# ----------------------------------------------------------------------------
def _classifier_kernel(x_ref, w1_ref, b1_ref, w2_ref, b2_ref, w3_ref, b3_ref,
                       o_ref):
    h = jnp.dot(x_ref[...], w1_ref[...], preferred_element_type=jnp.float32)
    h = jnp.maximum(h + b1_ref[...], 0.0).astype(jnp.bfloat16)
    h = jnp.dot(h, w2_ref[...], preferred_element_type=jnp.float32)
    h = jnp.maximum(h + b2_ref[...], 0.0).astype(jnp.bfloat16)
    h = jnp.dot(h, w3_ref[...], preferred_element_type=jnp.float32)
    o_ref[...] = (h + b3_ref[...]).astype(o_ref.dtype)


def classifier(x, w1, b1, w2, b2, w3, b3, num_classes: int):
    """x: (B, 4096) in HWC-flatten order.  Weights already (K, N) bf16, padded."""
    M, K1 = x.shape
    N1, N2, N3 = w1.shape[1], w2.shape[1], w3.shape[1]
    tm_max, vmem_limit = _hw_config()

    tm = min(tm_max, _round_up(M, 16))
    Mp = _round_up(M, tm)
    if Mp != M:
        x = jnp.pad(x, ((0, Mp - M), (0, 0)))
    x = x.astype(jnp.bfloat16)
    b1r = b1.reshape(1, N1).astype(jnp.float32)
    b2r = b2.reshape(1, N2).astype(jnp.float32)
    b3r = b3.reshape(1, N3).astype(jnp.float32)

    flops = 2 * Mp * (K1 * N1 + N1 * N2 + N2 * N3)
    bytes_acc = (2 * (Mp * K1 + K1 * N1 + N1 * N2 + N2 * N3)
                 + 4 * (N1 + N2 + N3) + 4 * Mp * N3)

    out = pl.pallas_call(
        _classifier_kernel,
        out_shape=jax.ShapeDtypeStruct((Mp, N3), jnp.float32),
        grid=(Mp // tm,),
        in_specs=[
            pl.BlockSpec((tm, K1), lambda i: (i, 0)),
            pl.BlockSpec((K1, N1), lambda i: (0, 0)),
            pl.BlockSpec((1, N1), lambda i: (0, 0)),
            pl.BlockSpec((N1, N2), lambda i: (0, 0)),
            pl.BlockSpec((1, N2), lambda i: (0, 0)),
            pl.BlockSpec((N2, N3), lambda i: (0, 0)),
            pl.BlockSpec((1, N3), lambda i: (0, 0)),
        ],
        out_specs=pl.BlockSpec((tm, N3), lambda i: (i, 0)),
        compiler_params=pltpu.CompilerParams(
            dimension_semantics=("parallel",),
            vmem_limit_bytes=vmem_limit),
        cost_estimate=pl.CostEstimate(flops=flops, transcendentals=0,
                                      bytes_accessed=bytes_acc),
    )(x, w1, b1r, w2, b2r, w3, b3r)
    return out[:M, :num_classes]


# ----------------------------------------------------------------------------
# MaxPool2d(kernel=3, stride=1, padding=1): separable max, in-kernel -inf pad
# ----------------------------------------------------------------------------
def _maxpool3x3_kernel(x_ref, o_ref, pad_ref):
    H, W = o_ref.shape[1], o_ref.shape[2]
    # Build the -inf border inside VMEM; the unpadded tile is all that crosses
    # HBM (cuts pool HBM traffic ~2x vs wrapper-side jnp.pad).
    pad_ref[...] = jnp.full(pad_ref.shape, -jnp.inf, dtype=pad_ref.dtype)
    pad_ref[:, 1:H + 1, 1:W + 1, :] = x_ref[...]
    xp = pad_ref[...]                              # (bb, H+2, W+2, C)
    # separable: 3 maxima along H, then 3 along W (6 ops instead of 9)
    mh = jnp.maximum(jnp.maximum(xp[:, 0:H, :, :], xp[:, 1:H + 1, :, :]),
                     xp[:, 2:H + 2, :, :])
    out = jnp.maximum(jnp.maximum(mh[:, :, 0:W, :], mh[:, :, 1:W + 1, :]),
                      mh[:, :, 2:W + 2, :])
    o_ref[...] = out.astype(o_ref.dtype)


def maxpool3x3_s1_p1(x, bb_max: int = 32):
    """x: NHWC (C lane-dense: 128 or 256) -> same H, W."""
    B, H, W, C = x.shape
    _, vmem_limit = _hw_config()
    bb = max(1, min(bb_max, B))
    Bp = _round_up(B, bb)                          # padded remainder, not bb=1
    if Bp != B:
        x = jnp.pad(x, ((0, Bp - B), (0, 0), (0, 0), (0, 0)))
    numel = Bp * H * W * C

    out = pl.pallas_call(
        _maxpool3x3_kernel,
        out_shape=jax.ShapeDtypeStruct((Bp, H, W, C), x.dtype),
        grid=(Bp // bb,),
        in_specs=[pl.BlockSpec((bb, H, W, C), lambda i: (i, 0, 0, 0))],
        out_specs=pl.BlockSpec((bb, H, W, C), lambda i: (i, 0, 0, 0)),
        scratch_shapes=[pltpu.VMEM((bb, H + 2, W + 2, C), x.dtype)],
        compiler_params=pltpu.CompilerParams(
            dimension_semantics=("parallel",),
            vmem_limit_bytes=vmem_limit),
        cost_estimate=pl.CostEstimate(
            flops=6 * numel, transcendentals=0,
            bytes_accessed=2 * numel * x.dtype.itemsize),
    )(x)
    return out if Bp == B else out[:B]


# ----------------------------------------------------------------------------
# Conv2d = im2col (thin bf16 XLA glue, ~2.8x replication) + fused matmul
# ----------------------------------------------------------------------------
def conv2d(x, wmat, b, *, kh: int, kw: int, stride: int, pad: int,
           apply_relu: bool):
    """x: NHWC bf16; wmat: (Kp, Cout) bf16 (pre-transposed/padded); b: (Cout,) f32."""
    B, H, W, Cin = x.shape
    Kp, Cout = wmat.shape
    K = kh * kw * Cin
    Hout = (H + 2 * pad - kh) // stride + 1
    Wout = (W + 2 * pad - kw) // stride + 1

    xp = jnp.pad(x, ((0, 0), (pad, pad), (pad, pad), (0, 0)))   # bf16 pad
    cols = []
    for i in range(kh):
        for j in range(kw):
            cols.append(xp[:, i:i + stride * (Hout - 1) + 1:stride,
                           j:j + stride * (Wout - 1) + 1:stride, :])
    patches = jnp.concatenate(cols, axis=-1)                    # (B,Ho,Wo,K) bf16
    if Kp > K:                                                  # lane-align K
        patches = jnp.pad(patches, ((0, 0), (0, 0), (0, 0), (0, Kp - K)))
    patches = patches.reshape(B * Hout * Wout, Kp)

    out = matmul_bias_act(patches, wmat, b, apply_relu=apply_relu)
    return out.reshape(B, Hout, Wout, Cout)


# ----------------------------------------------------------------------------
# Parameters: PyTorch layouts -> kernel-ready (pre-transposed/padded/bf16)
# ----------------------------------------------------------------------------
def init_params(key, num_classes: int = 10):
    ks = jax.random.split(key, 10)

    def dense_init(k, shape, fan_in):
        return jax.random.normal(k, shape, jnp.float32) * (1.0 / jnp.sqrt(fan_in))

    return {
        # features (PyTorch conv layout: (Cout, Cin, KH, KW))
        "conv1_w": dense_init(ks[0], (96, 3, 5, 5), 3 * 5 * 5),
        "conv1_b": dense_init(ks[1], (96,), 3 * 5 * 5),
        "conv2_w": dense_init(ks[2], (256, 96, 5, 5), 96 * 5 * 5),
        "conv2_b": dense_init(ks[3], (256,), 96 * 5 * 5),
        # classifier (PyTorch nn.Linear layout: (out_features, in_features))
        "fc1_w": dense_init(ks[4], (384, 256 * 4 * 4), 256 * 4 * 4),
        "fc1_b": dense_init(ks[5], (384,), 256 * 4 * 4),
        "fc2_w": dense_init(ks[6], (192, 384), 384),
        "fc2_b": dense_init(ks[7], (192,), 384),
        "fc3_w": dense_init(ks[8], (num_classes, 192), 192),
        "fc3_b": dense_init(ks[9], (num_classes,), 192),
    }


def prepare_params(params, num_classes: int = 10):
    """One-time weight prep: transpose to (K, N), pad to lane-dense, cast bf16.

    fc1's K (input-feature) axis is additionally permuted from PyTorch's CHW
    flatten order to HWC order so the NHWC pool2 output can be fed with a
    plain reshape (no runtime transpose).  All padding is with zeros, so the
    padded lanes/rows contribute exactly 0 downstream -> identical semantics
    after the final [:, :num_classes] slice (modulo bf16 operand rounding).
    """
    def conv_wmat(w, cin_pad=None, cout_pad=None, k_pad=None):
        cout, cin, kh, kw = w.shape
        wm = jnp.transpose(w, (2, 3, 1, 0))            # (kh, kw, cin, cout)
        cin_t = cin_pad if (cin_pad and cin_pad > cin) else cin
        cout_t = cout_pad if (cout_pad and cout_pad > cout) else cout
        wm = jnp.pad(wm, ((0, 0), (0, 0), (0, cin_t - cin), (0, cout_t - cout)))
        wm = wm.reshape(kh * kw * cin_t, cout_t)
        if k_pad and k_pad > wm.shape[0]:
            wm = jnp.pad(wm, ((0, k_pad - wm.shape[0]), (0, 0)))
        return wm.astype(jnp.bfloat16)

    def pad_vec(v, n):
        return jnp.pad(v, (0, n - v.shape[0])) if n > v.shape[0] else v

    nc_pad = _round_up(num_classes, 128)               # fc3 N: 10 -> 128
    fc2_out_pad = _round_up(192, 128)                  # fc2 N: 192 -> 256
    fc3_in_pad = fc2_out_pad                           # fc3 K matches fc2 N

    # fc1: permute K axis CHW (PyTorch flatten) -> HWC (NHWC reshape), then (K, N)
    fc1 = params["fc1_w"].reshape(384, 256, 4, 4)      # (N, C, H, W)
    fc1 = jnp.transpose(fc1, (0, 2, 3, 1)).reshape(384, 256 * 4 * 4)
    fc1 = jnp.transpose(fc1).astype(jnp.bfloat16)      # (4096, 384), K in HWC order

    fc2 = jnp.transpose(params["fc2_w"])                            # (384, 192)
    fc2 = jnp.pad(fc2, ((0, 0), (0, fc2_out_pad - fc2.shape[1]))).astype(jnp.bfloat16)
    fc3 = jnp.transpose(params["fc3_w"])                            # (192, nc)
    fc3 = jnp.pad(fc3, ((0, fc3_in_pad - fc3.shape[0]),
                        (0, nc_pad - fc3.shape[1]))).astype(jnp.bfloat16)

    return {
        # conv1: K 75->128, Cout 96->128 (lane-dense feature maps downstream)
        "conv1_wmat": conv_wmat(params["conv1_w"], cout_pad=128, k_pad=128),
        "conv1_b": pad_vec(params["conv1_b"], 128).astype(jnp.float32),
        # conv2: Cin 96->128 (matches padded conv1 output), K = 25*128 = 3200
        "conv2_wmat": conv_wmat(params["conv2_w"], cin_pad=128),
        "conv2_b": params["conv2_b"].astype(jnp.float32),
        "fc1_w": fc1, "fc1_b": params["fc1_b"].astype(jnp.float32),
        "fc2_w": fc2, "fc2_b": pad_vec(params["fc2_b"], fc2_out_pad).astype(jnp.float32),
        "fc3_w": fc3, "fc3_b": pad_vec(params["fc3_b"], nc_pad).astype(jnp.float32),
    }


# ----------------------------------------------------------------------------
# Forward
# ----------------------------------------------------------------------------
def mini_alexnet_forward(prepped, x_nchw, num_classes: int = 10):
    """x_nchw: (B, 3, 32, 32) float32 -> logits (B, num_classes) float32."""
    # NCHW -> NHWC and single bf16 cast up front: all im2col / pad glue moves bf16.
    x = jnp.transpose(x_nchw, (0, 2, 3, 1)).astype(jnp.bfloat16)

    # features
    x = conv2d(x, prepped["conv1_wmat"], prepped["conv1_b"],
               kh=5, kw=5, stride=3, pad=2, apply_relu=True)    # (B, 11, 11, 128)
    x = maxpool3x3_s1_p1(x)                                     # (B, 11, 11, 128)
    x = conv2d(x, prepped["conv2_wmat"], prepped["conv2_b"],
               kh=5, kw=5, stride=3, pad=2, apply_relu=True)    # (B, 4, 4, 256)
    x = maxpool3x3_s1_p1(x)                                     # (B, 4, 4, 256)

    # HWC flatten (free reshape); fc1_w's K axis was permuted to match torch's
    # CHW flatten, so this equals torch.flatten(x_nchw_features, 1) @ fc1.T.
    B = x.shape[0]
    x = x.reshape(B, -1)                                        # (B, 4096)

    # fused classifier (single pallas_call)
    return classifier(x, prepped["fc1_w"], prepped["fc1_b"],
                      prepped["fc2_w"], prepped["fc2_b"],
                      prepped["fc3_w"], prepped["fc3_b"], num_classes)


if __name__ == "__main__":
    key = jax.random.PRNGKey(0)
    k_params, k_x = jax.random.split(key)

    params = init_params(k_params, num_classes=10)
    prepped = prepare_params(params, num_classes=10)

    # The classifier requires 256*4*4 flattened features -> input must be 3x32x32.
    x = jax.random.normal(k_x, (2, 3, 32, 32), jnp.float32)

    fwd = jax.jit(functools.partial(mini_alexnet_forward, num_classes=10))
    logits = fwd(prepped, x)
    jax.block_until_ready(logits)

    assert logits.shape == (2, 10), logits.shape
    assert logits.dtype == jnp.float32
    assert bool(jnp.all(jnp.isfinite(logits)))
    print("KERNEL_OK")
</pallas_src>

<mosaic_0001>
module attributes {stable_mosaic.version = 11 : i64} {
  func.func @_matmul_bias_kernel(%arg0: i32, %arg1: memref<256x128xbf16, #tpu.memory_space<vmem>>, %arg2: memref<128x128xbf16, #tpu.memory_space<vmem>>, %arg3: memref<1x128xf32, #tpu.memory_space<vmem>>, %arg4: memref<256x128xbf16, #tpu.memory_space<vmem>>) attributes {dimension_semantics = [#tpu.dimension_semantics<parallel>], iteration_bounds = array<i64: 1>, scalar_prefetch = 0 : i64, scratch_operands = 0 : i64, tpu.core_type = #tpu.core_type<tc>, window_params = [{transform_indices = @transform_0, window_bounds = array<i64: 256, 128>}, {pipeline_mode = #tpu.pipeline_mode<synchronous>, transform_indices = @transform_1, window_bounds = array<i64: 128, 128>}, {pipeline_mode = #tpu.pipeline_mode<synchronous>, transform_indices = @transform_2, window_bounds = array<i64: 1, 128>}, {transform_indices = @transform_3, window_bounds = array<i64: 256, 128>}]} {
    %c0 = arith.constant 0 : index
    %c0_0 = arith.constant 0 : index
    %0 = vector.load %arg1[%c0, %c0_0] : memref<256x128xbf16, #tpu.memory_space<vmem>>, vector<256x128xbf16>
    %c0_1 = arith.constant 0 : index
    %c0_2 = arith.constant 0 : index
    %1 = vector.load %arg2[%c0_1, %c0_2] : memref<128x128xbf16, #tpu.memory_space<vmem>>, vector<128x128xbf16>
    %cst = arith.constant dense<0.000000e+00> : vector<256x128xf32>
    %2 = tpu.matmul %0, %1, %cst {dimension_numbers = #tpu.dot_dimension_numbers<[1], [0], [0], [1], [0, 0, 1, 1], [], []>} : vector<256x128xbf16>, vector<128x128xbf16>, vector<256x128xf32> -> vector<256x128xf32>
    %c0_3 = arith.constant 0 : index
    %c0_4 = arith.constant 0 : index
    %3 = vector.load %arg3[%c0_3, %c0_4] : memref<1x128xf32, #tpu.memory_space<vmem>>, vector<1x128xf32>
    %4 = vector.broadcast %3 : vector<1x128xf32> to vector<256x128xf32>
    %5 = arith.addf %2, %4 : vector<256x128xf32>
    %cst_5 = arith.constant 0.000000e+00 : f32
    %6 = vector.broadcast %cst_5 : f32 to vector<256x128xf32>
    %7 = arith.maximumf %5, %6 : vector<256x128xf32>
    %8 = arith.truncf %7 : vector<256x128xf32> to vector<256x128xbf16>
    %c0_6 = arith.constant 0 : index
    %c0_7 = arith.constant 0 : index
    %9 = vector.load %arg4[%c0_6, %c0_7] : memref<256x128xbf16, #tpu.memory_space<vmem>>, vector<256x128xbf16>
    tpu.vector_store %arg4[%c0_6, %c0_7], %8 {strides = array<i32>} : memref<256x128xbf16, #tpu.memory_space<vmem>>, vector<256x128xbf16>,
    return
  }
  func.func @transform_0(%arg0: i32) -> (i32, i32) {
    %c0_i32 = arith.constant 0 : i32
    %c0_i32_0 = arith.constant 0 : i32
    return %arg0, %c0_i32 : i32, i32
  }
  func.func @transform_1(%arg0: i32) -> (i32, i32) {
    %c0_i32 = arith.constant 0 : i32
    %c0_i32_0 = arith.constant 0 : i32
    %c0_i32_1 = arith.constant 0 : i32
    return %c0_i32, %c0_i32_0 : i32, i32
  }
  func.func @transform_2(%arg0: i32) -> (i32, i32) {
    %c0_i32 = arith.constant 0 : i32
    %c0_i32_0 = arith.constant 0 : i32
    %c0_i32_1 = arith.constant 0 : i32
    return %c0_i32, %c0_i32_0 : i32, i32
  }
  func.func @transform_3(%arg0: i32) -> (i32, i32) {
    %c0_i32 = arith.constant 0 : i32
    %c0_i32_0 = arith.constant 0 : i32
    return %arg0, %c0_i32 : i32, i32
  }
}

module attributes {stable_mosaic.version = 11 : i64} {
  func.func @_maxpool3x3_kernel(%arg0: i32, %arg1: memref<2x11x11x128xbf16, #tpu.memory_space<vmem>>, %arg2: memref<2x11x11x128xbf16, #tpu.memory_space<vmem>>, %arg3: memref<2x13x13x128xbf16, #tpu.memory_space<vmem>>) attributes {dimension_semantics = [#tpu.dimension_semantics<parallel>], iteration_bounds = array<i64: 1>, scalar_prefetch = 0 : i64, scratch_operands = 1 : i64, tpu.core_type = #tpu.core_type<tc>, window_params = [{transform_indices = @transform_0, window_bounds = array<i64: 2, 11, 11, 128>}, {transform_indices = @transform_1, window_bounds = array<i64: 2, 11, 11, 128>}]} {
    %cst = arith.constant 0xFF80 : bf16
    %0 = vector.broadcast %cst : bf16 to vector<2x13x13x128xbf16>
    %c0 = arith.constant 0 : index
    %c0_0 = arith.constant 0 : index
    %c0_1 = arith.constant 0 : index
    %c0_2 = arith.constant 0 : index
    %1 = vector.load %arg3[%c0, %c0_0, %c0_1, %c0_2] : memref<2x13x13x128xbf16, #tpu.memory_space<vmem>>, vector<2x13x13x128xbf16>
    tpu.vector_store %arg3[%c0, %c0_0, %c0_1, %c0_2], %0 {strides = array<i32>} : memref<2x13x13x128xbf16, #tpu.memory_space<vmem>>, vector<2x13x13x128xbf16>,
    %c0_3 = arith.constant 0 : index
    %c0_4 = arith.constant 0 : index
    %c0_5 = arith.constant 0 : index
    %c0_6 = arith.constant 0 : index
    %2 = vector.load %arg1[%c0_3, %c0_4, %c0_5, %c0_6] : memref<2x11x11x128xbf16, #tpu.memory_space<vmem>>, vector<2x11x11x128xbf16>
    %c0_7 = arith.constant 0 : index
    %c1 = arith.constant 1 : index
    %c1_8 = arith.constant 1 : index
    %c0_9 = arith.constant 0 : index
    %3 = vector.load %arg3[%c0_7, %c1, %c1_8, %c0_9] : memref<2x13x13x128xbf16, #tpu.memory_space<vmem>>, vector<2x11x11x128xbf16>
    tpu.vector_store %arg3[%c0_7, %c1, %c1_8, %c0_9], %2 {strides = array<i32>} : memref<2x13x13x128xbf16, #tpu.memory_space<vmem>>, vector<2x11x11x128xbf16>,
    %c0_10 = arith.constant 0 : index
    %c0_11 = arith.constant 0 : index
    %c0_12 = arith.constant 0 : index
    %c0_13 = arith.constant 0 : index
    %4 = vector.load %arg3[%c0_10, %c0_11, %c0_12, %c0_13] : memref<2x13x13x128xbf16, #tpu.memory_space<vmem>>, vector<2x13x13x128xbf16>
    %5 = vector.extract_strided_slice %4 {offsets = [0, 0, 0, 0], sizes = [2, 11, 13, 128], strides = [1, 1, 1, 1]} : vector<2x13x13x128xbf16> to vector<2x11x13x128xbf16>
    %6 = vector.extract_strided_slice %4 {offsets = [0, 1, 0, 0], sizes = [2, 11, 13, 128], strides = [1, 1, 1, 1]} : vector<2x13x13x128xbf16> to vector<2x11x13x128xbf16>
    %7 = arith.maximumf %5, %6 : vector<2x11x13x128xbf16>
    %8 = vector.extract_strided_slice %4 {offsets = [0, 2, 0, 0], sizes = [2, 11, 13, 128], strides = [1, 1, 1, 1]} : vector<2x13x13x128xbf16> to vector<2x11x13x128xbf16>
    %9 = arith.maximumf %7, %8 : vector<2x11x13x128xbf16>
    %10 = vector.extract_strided_slice %9 {offsets = [0, 0, 0, 0], sizes = [2, 11, 11, 128], strides = [1, 1, 1, 1]} : vector<2x11x13x128xbf16> to vector<2x11x11x128xbf16>
    %11 = vector.extract_strided_slice %9 {offsets = [0, 0, 1, 0], sizes = [2, 11, 11, 128], strides = [1, 1, 1, 1]} : vector<2x11x13x128xbf16> to vector<2x11x11x128xbf16>
    %12 = arith.maximumf %10, %11 : vector<2x11x11x128xbf16>
    %13 = vector.extract_strided_slice %9 {offsets = [0, 0, 2, 0], sizes = [2, 11, 11, 128], strides = [1, 1, 1, 1]} : vector<2x11x13x128xbf16> to vector<2x11x11x128xbf16>
    %14 = arith.maximumf %12, %13 : vector<2x11x11x128xbf16>
    %c0_14 = arith.constant 0 : index
    %c0_15 = arith.constant 0 : index
    %c0_16 = arith.constant 0 : index
    %c0_17 = arith.constant 0 : index
    %15 = vector.load %arg2[%c0_14, %c0_15, %c0_16, %c0_17] : memref<2x11x11x128xbf16, #tpu.memory_space<vmem>>, vector<2x11x11x128xbf16>
    tpu.vector_store %arg2[%c0_14, %c0_15, %c0_16, %c0_17], %14 {strides = array<i32>} : memref<2x11x11x128xbf16, #tpu.memory_space<vmem>>, vector<2x11x11x128xbf16>,
    return
  }
  func.func @transform_0(%arg0: i32) -> (i32, i32, i32, i32) {
    %c0_i32 = arith.constant 0 : i32
    %c0_i32_0 = arith.constant 0 : i32
    %c0_i32_1 = arith.constant 0 : i32
    %c0_i32_2 = arith.constant 0 : i32
    return %arg0, %c0_i32, %c0_i32_0, %c0_i32_1 : i32, i32, i32, i32
  }
  func.func @transform_1(%arg0: i32) -> (i32, i32, i32, i32) {
    %c0_i32 = arith.constant 0 : i32
    %c0_i32_0 = arith.constant 0 : i32
    %c0_i32_1 = arith.constant 0 : i32
    %c0_i32_2 = arith.constant 0 : i32
    return %arg0, %c0_i32, %c0_i32_0, %c0_i32_1 : i32, i32, i32, i32
  }
}

module attributes {stable_mosaic.version = 11 : i64} {
  func.func @_matmul_bias_kernel(%arg0: i32, %arg1: memref<32x3200xbf16, #tpu.memory_space<vmem>>, %arg2: memref<3200x256xbf16, #tpu.memory_space<vmem>>, %arg3: memref<1x256xf32, #tpu.memory_space<vmem>>, %arg4: memref<32x256xbf16, #tpu.memory_space<vmem>>) attributes {dimension_semantics = [#tpu.dimension_semantics<parallel>], iteration_bounds = array<i64: 1>, scalar_prefetch = 0 : i64, scratch_operands = 0 : i64, tpu.core_type = #tpu.core_type<tc>, window_params = [{transform_indices = @transform_0, window_bounds = array<i64: 32, 3200>}, {pipeline_mode = #tpu.pipeline_mode<synchronous>, transform_indices = @transform_1, window_bounds = array<i64: 3200, 256>}, {pipeline_mode = #tpu.pipeline_mode<synchronous>, transform_indices = @transform_2, window_bounds = array<i64: 1, 256>}, {transform_indices = @transform_3, window_bounds = array<i64: 32, 256>}]} {
    %c0 = arith.constant 0 : index
    %c0_0 = arith.constant 0 : index
    %0 = vector.load %arg1[%c0, %c0_0] : memref<32x3200xbf16, #tpu.memory_space<vmem>>, vector<32x3200xbf16>
    %c0_1 = arith.constant 0 : index
    %c0_2 = arith.constant 0 : index
    %1 = vector.load %arg2[%c0_1, %c0_2] : memref<3200x256xbf16, #tpu.memory_space<vmem>>, vector<3200x256xbf16>
    %cst = arith.constant dense<0.000000e+00> : vector<32x256xf32>
    %2 = tpu.matmul %0, %1, %cst {dimension_numbers = #tpu.dot_dimension_numbers<[1], [0], [0], [1], [0, 0, 1, 1], [], []>} : vector<32x3200xbf16>, vector<3200x256xbf16>, vector<32x256xf32> -> vector<32x256xf32>
    %c0_3 = arith.constant 0 : index
    %c0_4 = arith.constant 0 : index
    %3 = vector.load %arg3[%c0_3, %c0_4] : memref<1x256xf32, #tpu.memory_space<vmem>>, vector<1x256xf32>
    %4 = vector.broadcast %3 : vector<1x256xf32> to vector<32x256xf32>
    %5 = arith.addf %2, %4 : vector<32x256xf32>
    %cst_5 = arith.constant 0.000000e+00 : f32
    %6 = vector.broadcast %cst_5 : f32 to vector<32x256xf32>
    %7 = arith.maximumf %5, %6 : vector<32x256xf32>
    %8 = arith.truncf %7 : vector<32x256xf32> to vector<32x256xbf16>
    %c0_6 = arith.constant 0 : index
    %c0_7 = arith.constant 0 : index
    %9 = vector.load %arg4[%c0_6, %c0_7] : memref<32x256xbf16, #tpu.memory_space<vmem>>, vector<32x256xbf16>
    tpu.vector_store %arg4[%c0_6, %c0_7], %8 {strides = array<i32>} : memref<32x256xbf16, #tpu.memory_space<vmem>>, vector<32x256xbf16>,
    return
  }
  func.func @transform_0(%arg0: i32) -> (i32, i32) {
    %c0_i32 = arith.constant 0 : i32
    %c0_i32_0 = arith.constant 0 : i32
    return %arg0, %c0_i32 : i32, i32
  }
  func.func @transform_1(%arg0: i32) -> (i32, i32) {
    %c0_i32 = arith.constant 0 : i32
    %c0_i32_0 = arith.constant 0 : i32
    %c0_i32_1 = arith.constant 0 : i32
    return %c0_i32, %c0_i32_0 : i32, i32
  }
  func.func @transform_2(%arg0: i32) -> (i32, i32) {
    %c0_i32 = arith.constant 0 : i32
    %c0_i32_0 = arith.constant 0 : i32
    %c0_i32_1 = arith.constant 0 : i32
    return %c0_i32, %c0_i32_0 : i32, i32
  }
  func.func @transform_3(%arg0: i32) -> (i32, i32) {
    %c0_i32 = arith.constant 0 : i32
    %c0_i32_0 = arith.constant 0 : i32
    return %arg0, %c0_i32 : i32, i32
  }
}

module attributes {stable_mosaic.version = 11 : i64} {
  func.func @_maxpool3x3_kernel(%arg0: i32, %arg1: memref<2x4x4x256xbf16, #tpu.memory_space<vmem>>, %arg2: memref<2x4x4x256xbf16, #tpu.memory_space<vmem>>, %arg3: memref<2x6x6x256xbf16, #tpu.memory_space<vmem>>) attributes {dimension_semantics = [#tpu.dimension_semantics<parallel>], iteration_bounds = array<i64: 1>, scalar_prefetch = 0 : i64, scratch_operands = 1 : i64, tpu.core_type = #tpu.core_type<tc>, window_params = [{transform_indices = @transform_0, window_bounds = array<i64: 2, 4, 4, 256>}, {transform_indices = @transform_1, window_bounds = array<i64: 2, 4, 4, 256>}]} {
    %cst = arith.constant 0xFF80 : bf16
    %0 = vector.broadcast %cst : bf16 to vector<2x6x6x256xbf16>
    %c0 = arith.constant 0 : index
    %c0_0 = arith.constant 0 : index
    %c0_1 = arith.constant 0 : index
    %c0_2 = arith.constant 0 : index
    %1 = vector.load %arg3[%c0, %c0_0, %c0_1, %c0_2] : memref<2x6x6x256xbf16, #tpu.memory_space<vmem>>, vector<2x6x6x256xbf16>
    tpu.vector_store %arg3[%c0, %c0_0, %c0_1, %c0_2], %0 {strides = array<i32>} : memref<2x6x6x256xbf16, #tpu.memory_space<vmem>>, vector<2x6x6x256xbf16>,
    %c0_3 = arith.constant 0 : index
    %c0_4 = arith.constant 0 : index
    %c0_5 = arith.constant 0 : index
    %c0_6 = arith.constant 0 : index
    %2 = vector.load %arg1[%c0_3, %c0_4, %c0_5, %c0_6] : memref<2x4x4x256xbf16, #tpu.memory_space<vmem>>, vector<2x4x4x256xbf16>
    %c0_7 = arith.constant 0 : index
    %c1 = arith.constant 1 : index
    %c1_8 = arith.constant 1 : index
    %c0_9 = arith.constant 0 : index
    %3 = vector.load %arg3[%c0_7, %c1, %c1_8, %c0_9] : memref<2x6x6x256xbf16, #tpu.memory_space<vmem>>, vector<2x4x4x256xbf16>
    tpu.vector_store %arg3[%c0_7, %c1, %c1_8, %c0_9], %2 {strides = array<i32>} : memref<2x6x6x256xbf16, #tpu.memory_space<vmem>>, vector<2x4x4x256xbf16>,
    %c0_10 = arith.constant 0 : index
    %c0_11 = arith.constant 0 : index
    %c0_12 = arith.constant 0 : index
    %c0_13 = arith.constant 0 : index
    %4 = vector.load %arg3[%c0_10, %c0_11, %c0_12, %c0_13] : memref<2x6x6x256xbf16, #tpu.memory_space<vmem>>, vector<2x6x6x256xbf16>
    %5 = vector.extract_strided_slice %4 {offsets = [0, 0, 0, 0], sizes = [2, 4, 6, 256], strides = [1, 1, 1, 1]} : vector<2x6x6x256xbf16> to vector<2x4x6x256xbf16>
    %6 = vector.extract_strided_slice %4 {offsets = [0, 1, 0, 0], sizes = [2, 4, 6, 256], strides = [1, 1, 1, 1]} : vector<2x6x6x256xbf16> to vector<2x4x6x256xbf16>
    %7 = arith.maximumf %5, %6 : vector<2x4x6x256xbf16>
    %8 = vector.extract_strided_slice %4 {offsets = [0, 2, 0, 0], sizes = [2, 4, 6, 256], strides = [1, 1, 1, 1]} : vector<2x6x6x256xbf16> to vector<2x4x6x256xbf16>
    %9 = arith.maximumf %7, %8 : vector<2x4x6x256xbf16>
    %10 = vector.extract_strided_slice %9 {offsets = [0, 0, 0, 0], sizes = [2, 4, 4, 256], strides = [1, 1, 1, 1]} : vector<2x4x6x256xbf16> to vector<2x4x4x256xbf16>
    %11 = vector.extract_strided_slice %9 {offsets = [0, 0, 1, 0], sizes = [2, 4, 4, 256], strides = [1, 1, 1, 1]} : vector<2x4x6x256xbf16> to vector<2x4x4x256xbf16>
    %12 = arith.maximumf %10, %11 : vector<2x4x4x256xbf16>
    %13 = vector.extract_strided_slice %9 {offsets = [0, 0, 2, 0], sizes = [2, 4, 4, 256], strides = [1, 1, 1, 1]} : vector<2x4x6x256xbf16> to vector<2x4x4x256xbf16>
    %14 = arith.maximumf %12, %13 : vector<2x4x4x256xbf16>
    %c0_14 = arith.constant 0 : index
    %c0_15 = arith.constant 0 : index
    %c0_16 = arith.constant 0 : index
    %c0_17 = arith.constant 0 : index
    %15 = vector.load %arg2[%c0_14, %c0_15, %c0_16, %c0_17] : memref<2x4x4x256xbf16, #tpu.memory_space<vmem>>, vector<2x4x4x256xbf16>
    tpu.vector_store %arg2[%c0_14, %c0_15, %c0_16, %c0_17], %14 {strides = array<i32>} : memref<2x4x4x256xbf16, #tpu.memory_space<vmem>>, vector<2x4x4x256xbf16>,
    return
  }
  func.func @transform_0(%arg0: i32) -> (i32, i32, i32, i32) {
    %c0_i32 = arith.constant 0 : i32
    %c0_i32_0 = arith.constant 0 : i32
    %c0_i32_1 = arith.constant 0 : i32
    %c0_i32_2 = arith.constant 0 : i32
    return %arg0, %c0_i32, %c0_i32_0, %c0_i32_1 : i32, i32, i32, i32
  }
  func.func @transform_1(%arg0: i32) -> (i32, i32, i32, i32) {
    %c0_i32 = arith.constant 0 : i32
    %c0_i32_0 = arith.constant 0 : i32
    %c0_i32_1 = arith.constant 0 : i32
    %c0_i32_2 = arith.constant 0 : i32
    return %arg0, %c0_i32, %c0_i32_0, %c0_i32_1 : i32, i32, i32, i32
  }
}

module attributes {stable_mosaic.version = 11 : i64} {
  func.func @_classifier_kernel(%arg0: i32, %arg1: memref<16x4096xbf16, #tpu.memory_space<vmem>>, %arg2: memref<4096x384xbf16, #tpu.memory_space<vmem>>, %arg3: memref<1x384xf32, #tpu.memory_space<vmem>>, %arg4: memref<384x256xbf16, #tpu.memory_space<vmem>>, %arg5: memref<1x256xf32, #tpu.memory_space<vmem>>, %arg6: memref<256x128xbf16, #tpu.memory_space<vmem>>, %arg7: memref<1x128xf32, #tpu.memory_space<vmem>>, %arg8: memref<16x128xf32, #tpu.memory_space<vmem>>) attributes {dimension_semantics = [#tpu.dimension_semantics<parallel>], iteration_bounds = array<i64: 1>, scalar_prefetch = 0 : i64, scratch_operands = 0 : i64, tpu.core_type = #tpu.core_type<tc>, window_params = [{transform_indices = @transform_0, window_bounds = array<i64: 16, 4096>}, {pipeline_mode = #tpu.pipeline_mode<synchronous>, transform_indices = @transform_1, window_bounds = array<i64: 4096, 384>}, {pipeline_mode = #tpu.pipeline_mode<synchronous>, transform_indices = @transform_2, window_bounds = array<i64: 1, 384>}, {pipeline_mode = #tpu.pipeline_mode<synchronous>, transform_indices = @transform_3, window_bounds = array<i64: 384, 256>}, {pipeline_mode = #tpu.pipeline_mode<synchronous>, transform_indices = @transform_4, window_bounds = array<i64: 1, 256>}, {pipeline_mode = #tpu.pipeline_mode<synchronous>, transform_indices = @transform_5, window_bounds = array<i64: 256, 128>}, {pipeline_mode = #tpu.pipeline_mode<synchronous>, transform_indices = @transform_6, window_bounds = array<i64: 1, 128>}, {transform_indices = @transform_7, window_bounds = array<i64: 16, 128>}]} {
    %c0 = arith.constant 0 : index
    %c0_0 = arith.constant 0 : index
    %0 = vector.load %arg1[%c0, %c0_0] : memref<16x4096xbf16, #tpu.memory_space<vmem>>, vector<16x4096xbf16>
    %c0_1 = arith.constant 0 : index
    %c0_2 = arith.constant 0 : index
    %1 = vector.load %arg2[%c0_1, %c0_2] : memref<4096x384xbf16, #tpu.memory_space<vmem>>, vector<4096x384xbf16>
    %cst = arith.constant dense<0.000000e+00> : vector<16x384xf32>
    %2 = tpu.matmul %0, %1, %cst {dimension_numbers = #tpu.dot_dimension_numbers<[1], [0], [0], [1], [0, 0, 1, 1], [], []>} : vector<16x4096xbf16>, vector<4096x384xbf16>, vector<16x384xf32> -> vector<16x384xf32>
    %c0_3 = arith.constant 0 : index
    %c0_4 = arith.constant 0 : index
    %3 = vector.load %arg3[%c0_3, %c0_4] : memref<1x384xf32, #tpu.memory_space<vmem>>, vector<1x384xf32>
    %4 = vector.broadcast %3 : vector<1x384xf32> to vector<16x384xf32>
    %5 = arith.addf %2, %4 : vector<16x384xf32>
    %cst_5 = arith.constant 0.000000e+00 : f32
    %6 = vector.broadcast %cst_5 : f32 to vector<16x384xf32>
    %7 = arith.maximumf %5, %6 : vector<16x384xf32>
    %8 = arith.truncf %7 : vector<16x384xf32> to vector<16x384xbf16>
    %c0_6 = arith.constant 0 : index
    %c0_7 = arith.constant 0 : index
    %9 = vector.load %arg4[%c0_6, %c0_7] : memref<384x256xbf16, #tpu.memory_space<vmem>>, vector<384x256xbf16>
    %cst_8 = arith.constant dense<0.000000e+00> : vector<16x256xf32>
    %10 = tpu.matmul %8, %9, %cst_8 {dimension_numbers = #tpu.dot_dimension_numbers<[1], [0], [0], [1], [0, 0, 1, 1], [], []>} : vector<16x384xbf16>, vector<384x256xbf16>, vector<16x256xf32> -> vector<16x256xf32>
    %c0_9 = arith.constant 0 : index
    %c0_10 = arith.constant 0 : index
    %11 = vector.load %arg5[%c0_9, %c0_10] : memref<1x256xf32, #tpu.memory_space<vmem>>, vector<1x256xf32>
    %12 = vector.broadcast %11 : vector<1x256xf32> to vector<16x256xf32>
    %13 = arith.addf %10, %12 : vector<16x256xf32>
    %cst_11 = arith.constant 0.000000e+00 : f32
    %14 = vector.broadcast %cst_11 : f32 to vector<16x256xf32>
    %15 = arith.maximumf %13, %14 : vector<16x256xf32>
    %16 = arith.truncf %15 : vector<16x256xf32> to vector<16x256xbf16>
    %c0_12 = arith.constant 0 : index
    %c0_13 = arith.constant 0 : index
    %17 = vector.load %arg6[%c0_12, %c0_13] : memref<256x128xbf16, #tpu.memory_space<vmem>>, vector<256x128xbf16>
    %cst_14 = arith.constant dense<0.000000e+00> : vector<16x128xf32>
    %18 = tpu.matmul %16, %17, %cst_14 {dimension_numbers = #tpu.dot_dimension_numbers<[1], [0], [0], [1], [0, 0, 1, 1], [], []>} : vector<16x256xbf16>, vector<256x128xbf16>, vector<16x128xf32> -> vector<16x128xf32>
    %c0_15 = arith.constant 0 : index
    %c0_16 = arith.constant 0 : index
    %19 = vector.load %arg7[%c0_15, %c0_16] : memref<1x128xf32, #tpu.memory_space<vmem>>, vector<1x128xf32>
    %20 = vector.broadcast %19 : vector<1x128xf32> to vector<16x128xf32>
    %21 = arith.addf %18, %20 : vector<16x128xf32>
    %c0_17 = arith.constant 0 : index
    %c0_18 = arith.constant 0 : index
    %22 = vector.load %arg8[%c0_17, %c0_18] : memref<16x128xf32, #tpu.memory_space<vmem>>, vector<16x128xf32>
    tpu.vector_store %arg8[%c0_17, %c0_18], %21 {strides = array<i32>} : memref<16x128xf32, #tpu.memory_space<vmem>>, vector<16x128xf32>,
    return
  }
  func.func @transform_0(%arg0: i32) -> (i32, i32) {
    %c0_i32 = arith.constant 0 : i32
    %c0_i32_0 = arith.constant 0 : i32
    return %arg0, %c0_i32 : i32, i32
  }
  func.func @transform_1(%arg0: i32) -> (i32, i32) {
    %c0_i32 = arith.constant 0 : i32
    %c0_i32_0 = arith.constant 0 : i32
    %c0_i32_1 = arith.constant 0 : i32
    return %c0_i32, %c0_i32_0 : i32, i32
  }
  func.func @transform_2(%arg0: i32) -> (i32, i32) {
    %c0_i32 = arith.constant 0 : i32
    %c0_i32_0 = arith.constant 0 : i32
    %c0_i32_1 = arith.constant 0 : i32
    return %c0_i32, %c0_i32_0 : i32, i32
  }
  func.func @transform_3(%arg0: i32) -> (i32, i32) {
    %c0_i32 = arith.constant 0 : i32
    %c0_i32_0 = arith.constant 0 : i32
    %c0_i32_1 = arith.constant 0 : i32
    return %c0_i32, %c0_i32_0 : i32, i32
  }
  func.func @transform_4(%arg0: i32) -> (i32, i32) {
    %c0_i32 = arith.constant 0 : i32
    %c0_i32_0 = arith.constant 0 : i32
    %c0_i32_1 = arith.constant 0 : i32
    return %c0_i32, %c0_i32_0 : i32, i32
  }
  func.func @transform_5(%arg0: i32) -> (i32, i32) {
    %c0_i32 = arith.constant 0 : i32
    %c0_i32_0 = arith.constant 0 : i32
    %c0_i32_1 = arith.constant 0 : i32
    return %c0_i32, %c0_i32_0 : i32, i32
  }
  func.func @transform_6(%arg0: i32) -> (i32, i32) {
    %c0_i32 = arith.constant 0 : i32
    %c0_i32_0 = arith.constant 0 : i32
    %c0_i32_1 = arith.constant 0 : i32
    return %c0_i32, %c0_i32_0 : i32, i32
  }
  func.func @transform_7(%arg0: i32) -> (i32, i32) {
    %c0_i32 = arith.constant 0 : i32
    %c0_i32_0 = arith.constant 0 : i32
    return %arg0, %c0_i32 : i32, i32
  }
}

</mosaic_0001>

<llo_original>
// kernel: mini_alexnet_forward.5
$region0: #{mini_alexnet_forward.5}
  #allocation0 [shape = 'u32[]', space=smem, size = 0x4, offset = 0x4, fixed_abs, tag = 'smem constant byte address 0x4 - core index']
  #allocation1 [shape = 'u32[144,128]{1,0:T(1,128)}', space=vmem, size = 0x12000, scoped, tag = 'internal scratch']
  %s0 = inlined_call_operand.vmem [shape: bf16[256,128], index: 0, kind: input, shape index: {}]
  %s1 = inlined_call_operand.vmem [shape: bf16[128,128], index: 1, kind: input, shape index: {}]
  %s2 = inlined_call_operand.vmem [shape: f32[1,128], index: 2, kind: input, shape index: {}]
  %s3 = inlined_call_operand.vmem [shape: bf16[256,128], index: 3, kind: output, shape index: {}]
  %s4 = sld [smem:[#allocation0]]
  $region22: #{mini_alexnet_forward.5} parent=0
    _
  %s6 = ssub.s32 1, %s4
  %s7 = scalar_select 0, %s6, %s4
  // Predicated region
  $region2: #{mini_alexnet_forward.5} parent=0 // pred_check
    _
  $region3: #{mini_alexnet_forward.5} parent=0 // pred_check_branch
    %9 = sbr.rel (0) target = $region5
  $region4: #{mini_alexnet_forward.5} parent=0 // pred_region
    _
  $region5: #{mini_alexnet_forward.5} parent=0 // pred_fallthru
    _
  // Predicated region
  $region6: #{mini_alexnet_forward.5} parent=0 // pred_check
    _
  $region7: #{mini_alexnet_forward.5} parent=0 // pred_check_branch
    %11 = sbr.rel (0) target = $region9
  $region8: #{mini_alexnet_forward.5} parent=0 // pred_region
    _
  $region9: #{mini_alexnet_forward.5} parent=0 // pred_fallthru
    _
  // Predicated region
  $region10: #{mini_alexnet_forward.5} parent=0 // pred_check
    _
  $region11: #{mini_alexnet_forward.5} parent=0 // pred_check_branch
    %13 = sbr.rel (0) target = $region13
  $region12: #{mini_alexnet_forward.5} parent=0 // pred_region
    _
  $region13: #{mini_alexnet_forward.5} parent=0 // pred_fallthru
    _
  %v15 = vld [vmem:[%s0] sm:$0xf]
  %v16 = vld [vmem:[%s0 + $0x4] sm:$0xf]
  %v17 = vld [vmem:[%s0 + $0x8] sm:$0xf]
  %v18 = vld [vmem:[%s0 + $0xc] sm:$0xf]
  %v19 = vld [vmem:[%s0 + $0x10] sm:$0xf]
  %v20 = vld [vmem:[%s0 + $0x14] sm:$0xf]
  %v21 = vld [vmem:[%s0 + $0x18] sm:$0xf]
  %v22 = vld [vmem:[%s0 + $0x1c] sm:$0xf]
  %v23 = vld [vmem:[%s0 + $0x20] sm:$0xf]
  %v24 = vld [vmem:[%s0 + $0x24] sm:$0xf]
  %v25 = vld [vmem:[%s0 + $0x28] sm:$0xf]
  %v26 = vld [vmem:[%s0 + $0x2c] sm:$0xf]
  %v27 = vld [vmem:[%s0 + $0x30] sm:$0xf]
  %v28 = vld [vmem:[%s0 + $0x34] sm:$0xf]
  %v29 = vld [vmem:[%s0 + $0x38] sm:$0xf]
  %v30 = vld [vmem:[%s0 + $0x3c] sm:$0xf]
  %v31 = vld [vmem:[%s0 + $0x40] sm:$0xf]
  %v32 = vld [vmem:[%s0 + $0x44] sm:$0xf]
  %v33 = vld [vmem:[%s0 + $0x48] sm:$0xf]
  %v34 = vld [vmem:[%s0 + $0x4c] sm:$0xf]
  %v35 = vld [vmem:[%s0 + $0x50] sm:$0xf]
  %v36 = vld [vmem:[%s0 + $0x54] sm:$0xf]
  %v37 = vld [vmem:[%s0 + $0x58] sm:$0xf]
  %v38 = vld [vmem:[%s0 + $0x5c] sm:$0xf]
  %v39 = vld [vmem:[%s0 + $0x60] sm:$0xf]
  %v40 = vld [vmem:[%s0 + $0x64] sm:$0xf]
  %v41 = vld [vmem:[%s0 + $0x68] sm:$0xf]
  %v42 = vld [vmem:[%s0 + $0x6c] sm:$0xf]
  %v43 = vld [vmem:[%s0 + $0x70] sm:$0xf]
  %v44 = vld [vmem:[%s0 + $0x74] sm:$0xf]
  %v45 = vld [vmem:[%s0 + $0x78] sm:$0xf]
  %v46 = vld [vmem:[%s0 + $0x7c] sm:$0xf]
  %v47 = vld [vmem:[%s1] sm:$0xf]
  %v48 = vld [vmem:[%s1 + $0x4] sm:$0xf]
  %v49 = vld [vmem:[%s1 + $0x8] sm:$0xf]
  %v50 = vld [vmem:[%s1 + $0xc] sm:$0xf]
  %v51 = vld [vmem:[%s1 + $0x10] sm:$0xf]
  %v52 = vld [vmem:[%s1 + $0x14] sm:$0xf]
  %v53 = vld [vmem:[%s1 + $0x18] sm:$0xf]
  %v54 = vld [vmem:[%s1 + $0x1c] sm:$0xf]
  %v55 = vld [vmem:[%s1 + $0x20] sm:$0xf]
  %v56 = vld [vmem:[%s1 + $0x24] sm:$0xf]
  %v57 = vld [vmem:[%s1 + $0x28] sm:$0xf]
  %v58 = vld [vmem:[%s1 + $0x2c] sm:$0xf]
  %v59 = vld [vmem:[%s1 + $0x30] sm:$0xf]
  %v60 = vld [vmem:[%s1 + $0x34] sm:$0xf]
  %v61 = vld [vmem:[%s1 + $0x38] sm:$0xf]
  %v62 = vld [vmem:[%s1 + $0x3c] sm:$0xf]
  %v63 = vld [vmem:[%s2] sm:$0x1]
  %v65 = vlaneseq
  %v66 = vshrl.u32 %v65, 7
  %v67 = vsub.s32 0, %v66
  %v68 = vrot.slane %v63, %v67
  %v102 = vunpack.c.l.b16 %v15
  %v103 = vunpack.c.l.b16 %v16
  %v104 = vunpack.c.l.b16 %v17
  %v105 = vunpack.c.l.b16 %v18
  %v106 = vunpack.c.l.b16 %v19
  %v107 = vunpack.c.l.b16 %v20
  %v108 = vunpack.c.l.b16 %v21
  %v109 = vunpack.c.l.b16 %v22
  %v110 = vunpack.c.l.b16 %v23
  %v111 = vunpack.c.l.b16 %v24
  %v112 = vunpack.c.l.b16 %v25
  %v113 = vunpack.c.l.b16 %v26
  %v114 = vunpack.c.l.b16 %v27
  %v115 = vunpack.c.l.b16 %v28
  %v116 = vunpack.c.l.b16 %v29
  %v117 = vunpack.c.l.b16 %v30
  %v118 = vunpack.c.l.b16 %v31
  %v119 = vunpack.c.l.b16 %v32
  %v120 = vunpack.c.l.b16 %v33
  %v121 = vunpack.c.l.b16 %v34
  %v122 = vunpack.c.l.b16 %v35
  %v123 = vunpack.c.l.b16 %v36
  %v124 = vunpack.c.l.b16 %v37
  %v125 = vunpack.c.l.b16 %v38
  %v126 = vunpack.c.l.b16 %v39
  %v127 = vunpack.c.l.b16 %v40
  %v128 = vunpack.c.l.b16 %v41
  %v129 = vunpack.c.l.b16 %v42
  %v130 = vunpack.c.l.b16 %v43
  %v131 = vunpack.c.l.b16 %v44
  %v132 = vunpack.c.l.b16 %v45
  %v133 = vunpack.c.l.b16 %v46
  %v134 = vpack.c.b16 %v103, %v102
  %v135 = vpack.c.b16 %v105, %v104
  %v136 = vpack.c.b16 %v107, %v106
  %v137 = vpack.c.b16 %v109, %v108
  %v138 = vpack.c.b16 %v111, %v110
  %v139 = vpack.c.b16 %v113, %v112
  %v140 = vpack.c.b16 %v115, %v114
  %v141 = vpack.c.b16 %v117, %v116
  %v142 = vpack.c.b16 %v119, %v118
  %v143 = vpack.c.b16 %v121, %v120
  %v144 = vpack.c.b16 %v123, %v122
  %v145 = vpack.c.b16 %v125, %v124
  %v146 = vpack.c.b16 %v127, %v126
  %v147 = vpack.c.b16 %v129, %v128
  %v148 = vpack.c.b16 %v131, %v130
  %v149 = vpack.c.b16 %v133, %v132
  %v182 = vunpack.c.l.b16 %v47
  %v183 = vunpack.c.l.b16 %v48
  %v184 = vunpack.c.l.b16 %v49
  %v185 = vunpack.c.l.b16 %v50
  %v186 = vunpack.c.l.b16 %v51
  %v187 = vunpack.c.l.b16 %v52
  %v188 = vunpack.c.l.b16 %v53
  %v189 = vunpack.c.l.b16 %v54
  %v190 = vunpack.c.l.b16 %v55
  %v191 = vunpack.c.l.b16 %v56
  %v192 = vunpack.c.l.b16 %v57
  %v193 = vunpack.c.l.b16 %v58
  %v194 = vunpack.c.l.b16 %v59
  %v195 = vunpack.c.l.b16 %v60
  %v196 = vunpack.c.l.b16 %v61
  %v197 = vunpack.c.l.b16 %v62
  %v198 = vpack.c.b16 %v183, %v182
  %v199 = vpack.c.b16 %v185, %v184
  %v200 = vpack.c.b16 %v187, %v186
  %v201 = vpack.c.b16 %v189, %v188
  %v202 = vpack.c.b16 %v191, %v190
  %v203 = vpack.c.b16 %v193, %v192
  %v204 = vpack.c.b16 %v195, %v194
  %v205 = vpack.c.b16 %v197, %v196
  %214 = vmatprep.subr.bf16.mxu0 0
  %215 = vmatpush1.bf16.msra.mxu0 %v198
  %216 = vmatprep.subr.bf16.mxu0 0
  %217 = vmatpush1.bf16.msra.mxu0 %v199
  %218 = vmatprep.subr.bf16.mxu0 0
  %219 = vmatpush1.bf16.msra.mxu0 %v200
  %220 = vmatprep.subr.bf16.mxu0 0
  %221 = vmatpush1.bf16.msra.mxu0 %v201
  %222 = vmatprep.subr.bf16.mxu0 0
  %223 = vmatpush1.bf16.msra.mxu0 %v202
  %224 = vmatprep.subr.bf16.mxu0 0
  %225 = vmatpush1.bf16.msra.mxu0 %v203
  %226 = vmatprep.subr.bf16.mxu0 0
  %227 = vmatpush1.bf16.msra.mxu0 %v204
  %228 = vmatprep.subr.bf16.mxu0 0
  %229 = vmatpush1.bf16.msra.mxu0 %v205
  %230 = vmatprep.subr.bf16.mxu0 0
  %231 = vmatpush1.bf16.msra.mxu0 0
  %232 = vmatprep.subr.bf16.mxu0 0
  %233 = vmatpush1.bf16.msra.mxu0 0
  %234 = vmatprep.subr.bf16.mxu0 0
  %235 = vmatpush1.bf16.msra.mxu0 0
  %236 = vmatprep.subr.bf16.mxu0 0
  %237 = vmatpush1.bf16.msra.mxu0 0
  %238 = vmatprep.subr.bf16.mxu0 0
  %239 = vmatpush1.bf16.msra.mxu0 0
  %240 = vmatprep.subr.bf16.mxu0 0
  %241 = vmatpush1.bf16.msra.mxu0 0
  %242 = vmatprep.subr.bf16.mxu0 0
  %243 = vmatpush1.bf16.msra.mxu0 0
  %244 = vmatprep.subr.bf16.mxu0 0
  %245 = vmatpush1.bf16.msra.mxu0 0
  %246 = vmatprep.mubr.bf16.mxu0 0
  %247 = vmatmul.mubr.bf16.gmra.mrb[0].mxu0 %v134
  %v248 = vpop.f32.mrb[0].mxu0
  %v249 = vadd.f32 %v68, %v248
  %v250 = vpop.f32.mrb[0].mxu0
  %v251 = vpop.f32.mrb[0].mxu0
  %v252 = vadd.f32 %v68, %v251
  %v253 = vpop.f32.mrb[0].mxu0
  %254 = vmatprep.mubr.bf16.mxu0 0
  %255 = vmatmul.mubr.bf16.gmra.mrb[0].mxu0 %v135
  %v256 = vpop.f32.mrb[0].mxu0
  %v257 = vadd.f32 %v68, %v256
  %v258 = vpop.f32.mrb[0].mxu0
  %v259 = vpop.f32.mrb[0].mxu0
  %v260 = vadd.f32 %v68, %v259
  %v261 = vpop.f32.mrb[0].mxu0
  %262 = vmatprep.mubr.bf16.mxu0 0
  %263 = vmatmul.mubr.bf16.gmra.mrb[0].mxu0 %v136
  %v264 = vpop.f32.mrb[0].mxu0
  %v265 = vadd.f32 %v68, %v264
  %v266 = vpop.f32.mrb[0].mxu0
  %v267 = vpop.f32.mrb[0].mxu0
  %v268 = vadd.f32 %v68, %v267
  %v269 = vpop.f32.mrb[0].mxu0
  %270 = vmatprep.mubr.bf16.mxu0 0
  %271 = vmatmul.mubr.bf16.gmra.mrb[0].mxu0 %v137
  %v272 = vpop.f32.mrb[0].mxu0
  %v273 = vadd.f32 %v68, %v272
  %v274 = vpop.f32.mrb[0].mxu0
  %v275 = vpop.f32.mrb[0].mxu0
  %v276 = vadd.f32 %v68, %v275
  %v277 = vpop.f32.mrb[0].mxu0
  %278 = vmatprep.mubr.bf16.mxu0 0
  %279 = vmatmul.mubr.bf16.gmra.mrb[0].mxu0 %v138
  %v280 = vpop.f32.mrb[0].mxu0
  %v281 = vadd.f32 %v68, %v280
  %v282 = vpop.f32.mrb[0].mxu0
  %v283 = vpop.f32.mrb[0].mxu0
  %v284 = vadd.f32 %v68, %v283
  %v285 = vpop.f32.mrb[0].mxu0
  %286 = vmatprep.mubr.bf16.mxu0 0
  %287 = vmatmul.mubr.bf16.gmra.mrb[0].mxu0 %v139
  %v288 = vpop.f32.mrb[0].mxu0
  %v289 = vadd.f32 %v68, %v288
  %v290 = vpop.f32.mrb[0].mxu0
  %v291 = vpop.f32.mrb[0].mxu0
  %v292 = vadd.f32 %v68, %v291
  %v293 = vpop.f32.mrb[0].mxu0
  %294 = vmatprep.mubr.bf16.mxu0 0
  %295 = vmatmul.mubr.bf16.gmra.mrb[0].mxu0 %v140
  %v296 = vpop.f32.mrb[0].mxu0
  %v297 = vadd.f32 %v68, %v296
  %v298 = vpop.f32.mrb[0].mxu0
  %v299 = vpop.f32.mrb[0].mxu0
  %v300 = vadd.f32 %v68, %v299
  %v301 = vpop.f32.mrb[0].mxu0
  %302 = vmatprep.mubr.bf16.mxu0 0
  %303 = vmatmul.mubr.bf16.gmra.mrb[0].mxu0 %v141
  %v304 = vpop.f32.mrb[0].mxu0
  %v305 = vadd.f32 %v68, %v304
  %v306 = vpop.f32.mrb[0].mxu0
  %v307 = vpop.f32.mrb[0].mxu0
  %v308 = vadd.f32 %v68, %v307
  %v309 = vpop.f32.mrb[0].mxu0
  %310 = vmatprep.mubr.bf16.mxu0 0
  %311 = vmatmul.mubr.bf16.gmra.mrb[0].mxu0 %v142
  %v312 = vpop.f32.mrb[0].mxu0
  %v313 = vadd.f32 %v68, %v312
  %v314 = vpop.f32.mrb[0].mxu0
  %v315 = vpop.f32.mrb[0].mxu0
  %v316 = vadd.f32 %v68, %v315
  %v317 = vpop.f32.mrb[0].mxu0
  %318 = vmatprep.mubr.bf16.mxu0 0
  %319 = vmatmul.mubr.bf16.gmra.mrb[0].mxu0 %v143
  %v320 = vpop.f32.mrb[0].mxu0
  %v321 = vadd.f32 %v68, %v320
  %v322 = vpop.f32.mrb[0].mxu0
  %v323 = vpop.f32.mrb[0].mxu0
  %v324 = vadd.f32 %v68, %v323
  %v325 = vpop.f32.mrb[0].mxu0
  %326 = vmatprep.mubr.bf16.mxu0 0
  %327 = vmatmul.mubr.bf16.gmra.mrb[0].mxu0 %v144
  %v328 = vpop.f32.mrb[0].mxu0
  %v329 = vadd.f32 %v68, %v328
  %v330 = vpop.f32.mrb[0].mxu0
  %v331 = vpop.f32.mrb[0].mxu0
  %v332 = vadd.f32 %v68, %v331
  %v333 = vpop.f32.mrb[0].mxu0
  %334 = vmatprep.mubr.bf16.mxu0 0
  %335 = vmatmul.mubr.bf16.gmra.mrb[0].mxu0 %v145
  %v336 = vpop.f32.mrb[0].mxu0
  %v337 = vadd.f32 %v68, %v336
  %v338 = vpop.f32.mrb[0].mxu0
  %v339 = vpop.f32.mrb[0].mxu0
  %v340 = vadd.f32 %v68, %v339
  %v341 = vpop.f32.mrb[0].mxu0
  %342 = vmatprep.mubr.bf16.mxu0 0
  %343 = vmatmul.mubr.bf16.gmra.mrb[0].mxu0 %v146
  %v344 = vpop.f32.mrb[0].mxu0
  %v345 = vadd.f32 %v68, %v344
  %v346 = vpop.f32.mrb[0].mxu0
  %v347 = vpop.f32.mrb[0].mxu0
  %v348 = vadd.f32 %v68, %v347
  %v349 = vpop.f32.mrb[0].mxu0
  %350 = vmatprep.mubr.bf16.mxu0 0
  %351 = vmatmul.mubr.bf16.gmra.mrb[0].mxu0 %v147
  %v352 = vpop.f32.mrb[0].mxu0
  %v353 = vadd.f32 %v68, %v352
  %v354 = vpop.f32.mrb[0].mxu0
  %v355 = vpop.f32.mrb[0].mxu0
  %v356 = vadd.f32 %v68, %v355
  %v357 = vpop.f32.mrb[0].mxu0
  %358 = vmatprep.mubr.bf16.mxu0 0
  %359 = vmatmul.mubr.bf16.gmra.mrb[0].mxu0 %v148
  %v360 = vpop.f32.mrb[0].mxu0
  %v361 = vadd.f32 %v68, %v360
  %v362 = vpop.f32.mrb[0].mxu0
  %v363 = vpop.f32.mrb[0].mxu0
  %v364 = vadd.f32 %v68, %v363
  %v365 = vpop.f32.mrb[0].mxu0
  %366 = vmatprep.mubr.bf16.mxu0 0
  %367 = vmatmul.mubr.bf16.gmra.mrb[0].mxu0 %v149
  %v368 = vpop.f32.mrb[0].mxu0
  %v369 = vadd.f32 %v68, %v368
  %v370 = vpop.f32.mrb[0].mxu0
  %v371 = vpop.f32.mrb[0].mxu0
  %v372 = vadd.f32 %v68, %v371
  %v373 = vpop.f32.mrb[0].mxu0
  %374 = vdwg.mxu0
  %v375 = vmax.f32 %v249, 0.0
  %v376 = vmax.f32 %v252, 0.0
  %v377 = vmax.f32 %v257, 0.0
  %v378 = vmax.f32 %v260, 0.0
  %v379 = vmax.f32 %v265, 0.0
  %v380 = vmax.f32 %v268, 0.0
  %v381 = vmax.f32 %v273, 0.0
  %v382 = vmax.f32 %v276, 0.0
  %v383 = vmax.f32 %v281, 0.0
  %v384 = vmax.f32 %v284, 0.0
  %v385 = vmax.f32 %v289, 0.0
  %v386 = vmax.f32 %v292, 0.0
  %v387 = vmax.f32 %v297, 0.0
  %v388 = vmax.f32 %v300, 0.0
  %v389 = vmax.f32 %v305, 0.0
  %v390 = vmax.f32 %v308, 0.0
  %v391 = vmax.f32 %v313, 0.0
  %v392 = vmax.f32 %v316, 0.0
  %v393 = vmax.f32 %v321, 0.0
  %v394 = vmax.f32 %v324, 0.0
  %v395 = vmax.f32 %v329, 0.0
  %v396 = vmax.f32 %v332, 0.0
  %v397 = vmax.f32 %v337, 0.0
  %v398 = vmax.f32 %v340, 0.0
  %v399 = vmax.f32 %v345, 0.0
  %v400 = vmax.f32 %v348, 0.0
  %v401 = vmax.f32 %v353, 0.0
  %v402 = vmax.f32 %v356, 0.0
  %v403 = vmax.f32 %v361, 0.0
  %v404 = vmax.f32 %v364, 0.0
  %v405 = vmax.f32 %v369, 0.0
  %v406 = vmax.f32 %v372, 0.0
  %v407 = vpack.c.bf16 %v376, %v375
  %v408 = vpack.c.bf16 %v378, %v377
  %v409 = vpack.c.bf16 %v380, %v379
  %v410 = vpack.c.bf16 %v382, %v381
  %v411 = vpack.c.bf16 %v384, %v383
  %v412 = vpack.c.bf16 %v386, %v385
  %v413 = vpack.c.bf16 %v388, %v387
  %v414 = vpack.c.bf16 %v390, %v389
  %v415 = vpack.c.bf16 %v392, %v391
  %v416 = vpack.c.bf16 %v394, %v393
  %v417 = vpack.c.bf16 %v396, %v395
  %v418 = vpack.c.bf16 %v398, %v397
  %v419 = vpack.c.bf16 %v400, %v399
  %v420 = vpack.c.bf16 %v402, %v401
  %v421 = vpack.c.bf16 %v404, %v403
  %v422 = vpack.c.bf16 %v406, %v405
  %v439 = vunpack.c.l.b16 %v407
  %v440 = vunpack.c.h.b16 %v407
  %v441 = vunpack.c.l.b16 %v408
  %v442 = vunpack.c.h.b16 %v408
  %v443 = vunpack.c.l.b16 %v409
  %v444 = vunpack.c.h.b16 %v409
  %v445 = vunpack.c.l.b16 %v410
  %v446 = vunpack.c.h.b16 %v410
  %v447 = vunpack.c.l.b16 %v411
  %v448 = vunpack.c.h.b16 %v411
  %v449 = vunpack.c.l.b16 %v412
  %v450 = vunpack.c.h.b16 %v412
  %v451 = vunpack.c.l.b16 %v413
  %v452 = vunpack.c.h.b16 %v413
  %v453 = vunpack.c.l.b16 %v414
  %v454 = vunpack.c.h.b16 %v414
  %v455 = vunpack.c.l.b16 %v415
  %v456 = vunpack.c.h.b16 %v415
  %v457 = vunpack.c.l.b16 %v416
  %v458 = vunpack.c.h.b16 %v416
  %v459 = vunpack.c.l.b16 %v417
  %v460 = vunpack.c.h.b16 %v417
  %v461 = vunpack.c.l.b16 %v418
  %v462 = vunpack.c.h.b16 %v418
  %v463 = vunpack.c.l.b16 %v419
  %v464 = vunpack.c.h.b16 %v419
  %v465 = vunpack.c.l.b16 %v420
  %v466 = vunpack.c.h.b16 %v420
  %v467 = vunpack.c.l.b16 %v421
  %v468 = vunpack.c.h.b16 %v421
  %v469 = vunpack.c.l.b16 %v422
  %v470 = vunpack.c.h.b16 %v422
  %v471 = vpack.c.b16 %v439, %v439
  %v472 = vpack.c.b16 %v440, %v440
  %v473 = vpack.c.b16 %v441, %v441
  %v474 = vpack.c.b16 %v442, %v442
  %v475 = vpack.c.b16 %v443, %v443
  %v476 = vpack.c.b16 %v444, %v444
  %v477 = vpack.c.b16 %v445, %v445
  %v478 = vpack.c.b16 %v446, %v446
  %v479 = vpack.c.b16 %v447, %v447
  %v480 = vpack.c.b16 %v448, %v448
  %v481 = vpack.c.b16 %v449, %v449
  %v482 = vpack.c.b16 %v450, %v450
  %v483 = vpack.c.b16 %v451, %v451
  %v484 = vpack.c.b16 %v452, %v452
  %v485 = vpack.c.b16 %v453, %v453
  %v486 = vpack.c.b16 %v454, %v454
  %v487 = vpack.c.b16 %v455, %v455
  %v488 = vpack.c.b16 %v456, %v456
  %v489 = vpack.c.b16 %v457, %v457
  %v490 = vpack.c.b16 %v458, %v458
  %v491 = vpack.c.b16 %v459, %v459
  %v492 = vpack.c.b16 %v460, %v460
  %v493 = vpack.c.b16 %v461, %v461
  %v494 = vpack.c.b16 %v462, %v462
  %v495 = vpack.c.b16 %v463, %v463
  %v496 = vpack.c.b16 %v464, %v464
  %v497 = vpack.c.b16 %v465, %v465
  %v498 = vpack.c.b16 %v466, %v466
  %v499 = vpack.c.b16 %v467, %v467
  %v500 = vpack.c.b16 %v468, %v468
  %v501 = vpack.c.b16 %v469, %v469
  %v502 = vpack.c.b16 %v470, %v470
  %535 = vst [vmem:[%s3] sm:$0xf] %v471
  %536 = vst [vmem:[%s3 + $0x4] sm:$0xf] %v472
  %537 = vst [vmem:[%s3 + $0x8] sm:$0xf] %v473
  %538 = vst [vmem:[%s3 + $0xc] sm:$0xf] %v474
  %539 = vst [vmem:[%s3 + $0x10] sm:$0xf] %v475
  %540 = vst [vmem:[%s3 + $0x14] sm:$0xf] %v476
  %541 = vst [vmem:[%s3 + $0x18] sm:$0xf] %v477
  %542 = vst [vmem:[%s3 + $0x1c] sm:$0xf] %v478
  %543 = vst [vmem:[%s3 + $0x20] sm:$0xf] %v479
  %544 = vst [vmem:[%s3 + $0x24] sm:$0xf] %v480
  %545 = vst [vmem:[%s3 + $0x28] sm:$0xf] %v481
  %546 = vst [vmem:[%s3 + $0x2c] sm:$0xf] %v482
  %547 = vst [vmem:[%s3 + $0x30] sm:$0xf] %v483
  %548 = vst [vmem:[%s3 + $0x34] sm:$0xf] %v484
  %549 = vst [vmem:[%s3 + $0x38] sm:$0xf] %v485
  %550 = vst [vmem:[%s3 + $0x3c] sm:$0xf] %v486
  %551 = vst [vmem:[%s3 + $0x40] sm:$0xf] %v487
  %552 = vst [vmem:[%s3 + $0x44] sm:$0xf] %v488
  %553 = vst [vmem:[%s3 + $0x48] sm:$0xf] %v489
  %554 = vst [vmem:[%s3 + $0x4c] sm:$0xf] %v490
  %555 = vst [vmem:[%s3 + $0x50] sm:$0xf] %v491
  %556 = vst [vmem:[%s3 + $0x54] sm:$0xf] %v492
  %557 = vst [vmem:[%s3 + $0x58] sm:$0xf] %v493
  %558 = vst [vmem:[%s3 + $0x5c] sm:$0xf] %v494
  %559 = vst [vmem:[%s3 + $0x60] sm:$0xf] %v495
  %560 = vst [vmem:[%s3 + $0x64] sm:$0xf] %v496
  %561 = vst [vmem:[%s3 + $0x68] sm:$0xf] %v497
  %562 = vst [vmem:[%s3 + $0x6c] sm:$0xf] %v498
  %563 = vst [vmem:[%s3 + $0x70] sm:$0xf] %v499
  %564 = vst [vmem:[%s3 + $0x74] sm:$0xf] %v500
  %565 = vst [vmem:[%s3 + $0x78] sm:$0xf] %v501
  %566 = vst [vmem:[%s3 + $0x7c] sm:$0xf] %v502
  // Predicated region
  $region14: #{mini_alexnet_forward.5} parent=0 // pred_check
    _
  $region15: #{mini_alexnet_forward.5} parent=0 // pred_check_branch
    %568 = sbr.rel (0) target = $region17
  $region16: #{mini_alexnet_forward.5} parent=0 // pred_region
    _
  $region17: #{mini_alexnet_forward.5} parent=0 // pred_fallthru
    _
  // Predicated region
  $region18: #{mini_alexnet_forward.5} parent=0 // pred_check
    _
  $region19: #{mini_alexnet_forward.5} parent=0 // pred_check_branch
    %570 = sbr.rel (0) target = $region21
  $region20: #{mini_alexnet_forward.5} parent=0 // pred_region
    _
  $region21: #{mini_alexnet_forward.5} parent=0 // pred_fallthru
    _

// kernel: mini_alexnet_forward.6
$region0: #{mini_alexnet_forward.6}
  #allocation0 [shape = 'u32[]', space=smem, size = 0x4, offset = 0x4, fixed_abs, tag = 'smem constant byte address 0x4 - core index']
  #allocation1 [shape = 'u32[144,128]{1,0:T(1,128)}', space=vmem, size = 0x12000, scoped, tag = 'internal scratch']
  #allocation2 [shape = 'bf16[2,13,13,128]{3,2,1,0:T(8,128)(2,1)}', space=vmem, size = 0x1a000, scoped, tag = 'scratch operand']
  %s0 = inlined_call_operand.vmem [shape: bf16[2,11,11,128], index: 0, kind: input, shape index: {}]
  %s1 = inlined_call_operand.vmem [shape: bf16[2,11,11,128], index: 1, kind: output, shape index: {}]
  %s2 = sld [smem:[#allocation0]]
  $region14: #{mini_alexnet_forward.6} parent=0
    _
  %s4 = ssub.s32 1, %s2
  %s5 = scalar_select 0, %s4, %s2
  // Predicated region
  $region2: #{mini_alexnet_forward.6} parent=0 // pred_check
    _
  $region3: #{mini_alexnet_forward.6} parent=0 // pred_check_branch
    %7 = sbr.rel (0) target = $region5
  $region4: #{mini_alexnet_forward.6} parent=0 // pred_region
    _
  $region5: #{mini_alexnet_forward.6} parent=0 // pred_fallthru
    _
  %9 = vst [vmem:[#allocation2] sm:$0xf] 4286644096
  %vm10 = vcmask 1042432
  %vm11 = vsmask.f32 2304
  %vm12 = vmand %vm10, %vm11
  %v13 = vld [vmem:[#allocation2 + $0x4] sm:$0x7]
  %v14 = vsel %vm12, 4286644096, %v13
  %15 = vst [vmem:[#allocation2 + $0x4] sm:$0x7] %v14
  %16 = vst [vmem:[#allocation2 + $0x8] sm:$0xf] 4286644096
  %v17 = vld [vmem:[#allocation2 + $0xc] sm:$0x7]
  %v18 = vsel %vm12, 4286644096, %v17
  %19 = vst [vmem:[#allocation2 + $0xc] sm:$0x7] %v18
  %20 = vst [vmem:[#allocation2 + $0x10] sm:$0xf] 4286644096
  %v21 = vld [vmem:[#allocation2 + $0x14] sm:$0x7]
  %v22 = vsel %vm12, 4286644096, %v21
  %23 = vst [vmem:[#allocation2 + $0x14] sm:$0x7] %v22
  %24 = vst [vmem:[#allocation2 + $0x18] sm:$0xf] 4286644096
  %v25 = vld [vmem:[#allocation2 + $0x1c] sm:$0x7]
  %v26 = vsel %vm12, 4286644096, %v25
  %27 = vst [vmem:[#allocation2 + $0x1c] sm:$0x7] %v26
  %28 = vst [vmem:[#allocation2 + $0x20] sm:$0xf] 4286644096
  %v29 = vld [vmem:[#allocation2 + $0x24] sm:$0x7]
  %v30 = vsel %vm12, 4286644096, %v29
  %31 = vst [vmem:[#allocation2 + $0x24] sm:$0x7] %v30
  %32 = vst [vmem:[#allocation2 + $0x28] sm:$0xf] 4286644096
  %v33 = vld [vmem:[#allocation2 + $0x2c] sm:$0x7]
  %v34 = vsel %vm12, 4286644096, %v33
  %35 = vst [vmem:[#allocation2 + $0x2c] sm:$0x7] %v34
  %36 = vst [vmem:[#allocation2 + $0x30] sm:$0xf] 4286644096
  %v37 = vld [vmem:[#allocation2 + $0x34] sm:$0x7]
  %v38 = vsel %vm12, 4286644096, %v37
  %39 = vst [vmem:[#allocation2 + $0x34] sm:$0x7] %v38
  %40 = vst [vmem:[#allocation2 + $0x38] sm:$0xf] 4286644096
  %v41 = vld [vmem:[#allocation2 + $0x3c] sm:$0x7]
  %v42 = vsel %vm12, 4286644096, %v41
  %43 = vst [vmem:[#allocation2 + $0x3c] sm:$0x7] %v42
  %44 = vst [vmem:[#allocation2 + $0x40] sm:$0xf] 4286644096
  %v45 = vld [vmem:[#allocation2 + $0x44] sm:$0x7]
  %v46 = vsel %vm12, 4286644096, %v45
  %47 = vst [vmem:[#allocation2 + $0x44] sm:$0x7] %v46
  %48 = vst [vmem:[#allocation2 + $0x48] sm:$0xf] 4286644096
  %v49 = vld [vmem:[#allocation2 + $0x4c] sm:$0x7]
  %v50 = vsel %vm12, 4286644096, %v49
  %51 = vst [vmem:[#allocation2 + $0x4c] sm:$0x7] %v50
  %52 = vst [vmem:[#allocation2 + $0x50] sm:$0xf] 4286644096
  %v53 = vld [vmem:[#allocation2 + $0x54] sm:$0x7]
  %v54 = vsel %vm12, 4286644096, %v53
  %55 = vst [vmem:[#allocation2 + $0x54] sm:$0x7] %v54
  %56 = vst [vmem:[#allocation2 + $0x58] sm:$0xf] 4286644096
  %v57 = vld [vmem:[#allocation2 + $0x5c] sm:$0x7]
  %v58 = vsel %vm12, 4286644096, %v57
  %59 = vst [vmem:[#allocation2 + $0x5c] sm:$0x7] %v58
  %60 = vst [vmem:[#allocation2 + $0x60] sm:$0xf] 4286644096
  %v61 = vld [vmem:[#allocation2 + $0x64] sm:$0x7]
  %v62 = vsel %vm12, 4286644096, %v61
  %63 = vst [vmem:[#allocation2 + $0x64] sm:$0x7] %v62
  %64 = vst [vmem:[#allocation2 + $0x68] sm:$0xf] 4286644096
  %v65 = vld [vmem:[#allocation2 + $0x6c] sm:$0x7]
  %v66 = vsel %vm12, 4286644096, %v65
  %67 = vst [vmem:[#allocation2 + $0x6c] sm:$0x7] %v66
  %68 = vst [vmem:[#allocation2 + $0x70] sm:$0xf] 4286644096
  %v69 = vld [vmem:[#allocation2 + $0x74] sm:$0x7]
  %v70 = vsel %vm12, 4286644096, %v69
  %71 = vst [vmem:[#allocation2 + $0x74] sm:$0x7] %v70
  %72 = vst [vmem:[#allocation2 + $0x78] sm:$0xf] 4286644096
  %v73 = vld [vmem:[#allocation2 + $0x7c] sm:$0x7]
  %v74 = vsel %vm12, 4286644096, %v73
  %75 = vst [vmem:[#allocation2 + $0x7c] sm:$0x7] %v74
  %76 = vst [vmem:[#allocation2 + $0x80] sm:$0xf] 4286644096
  %v77 = vld [vmem:[#allocation2 + $0x84] sm:$0x7]
  %v78 = vsel %vm12, 4286644096, %v77
  %79 = vst [vmem:[#allocation2 + $0x84] sm:$0x7] %v78
  %80 = vst [vmem:[#allocation2 + $0x88] sm:$0xf] 4286644096
  %v81 = vld [vmem:[#allocation2 + $0x8c] sm:$0x7]
  %v82 = vsel %vm12, 4286644096, %v81
  %83 = vst [vmem:[#allocation2 + $0x8c] sm:$0x7] %v82
  %84 = vst [vmem:[#allocation2 + $0x90] sm:$0xf] 4286644096
  %v85 = vld [vmem:[#allocation2 + $0x94] sm:$0x7]
  %v86 = vsel %vm12, 4286644096, %v85
  %87 = vst [vmem:[#allocation2 + $0x94] sm:$0x7] %v86
  %88 = vst [vmem:[#allocation2 + $0x98] sm:$0xf] 4286644096
  %v89 = vld [vmem:[#allocation2 + $0x9c] sm:$0x7]
  %v90 = vsel %vm12, 4286644096, %v89
  %91 = vst [vmem:[#allocation2 + $0x9c] sm:$0x7] %v90
  %92 = vst [vmem:[#allocation2 + $0xa0] sm:$0xf] 4286644096
  %v93 = vld [vmem:[#allocation2 + $0xa4] sm:$0x7]
  %v94 = vsel %vm12, 4286644096, %v93
  %95 = vst [vmem:[#allocation2 + $0xa4] sm:$0x7] %v94
  %96 = vst [vmem:[#allocation2 + $0xa8] sm:$0xf] 4286644096
  %v97 = vld [vmem:[#allocation2 + $0xac] sm:$0x7]
  %v98 = vsel %vm12, 4286644096, %v97
  %99 = vst [vmem:[#allocation2 + $0xac] sm:$0x7] %v98
  %100 = vst [vmem:[#allocation2 + $0xb0] sm:$0xf] 4286644096
  %v101 = vld [vmem:[#allocation2 + $0xb4] sm:$0x7]
  %v102 = vsel %vm12, 4286644096, %v101
  %103 = vst [vmem:[#allocation2 + $0xb4] sm:$0x7] %v102
  %104 = vst [vmem:[#allocation2 + $0xb8] sm:$0xf] 4286644096
  %v105 = vld [vmem:[#allocation2 + $0xbc] sm:$0x7]
  %v106 = vsel %vm12, 4286644096, %v105
  %107 = vst [vmem:[#allocation2 + $0xbc] sm:$0x7] %v106
  %108 = vst [vmem:[#allocation2 + $0xc0] sm:$0xf] 4286644096
  %v109 = vld [vmem:[#allocation2 + $0xc4] sm:$0x7]
  %v110 = vsel %vm12, 4286644096, %v109
  %111 = vst [vmem:[#allocation2 + $0xc4] sm:$0x7] %v110
  %112 = vst [vmem:[#allocation2 + $0xc8] sm:$0xf] 4286644096
  %v113 = vld [vmem:[#allocation2 + $0xcc] sm:$0x7]
  %v114 = vsel %vm12, 4286644096, %v113
  %115 = vst [vmem:[#allocation2 + $0xcc] sm:$0x7] %v114
  %v116 = vld [vmem:[%s0] sm:$0xf]
  %v117 = vld [vmem:[%s0 + $0x4] sm:$0x3]
  %v118 = vld [vmem:[%s0 + $0x8] sm:$0xf]
  %v119 = vld [vmem:[%s0 + $0xc] sm:$0x3]
  %v120 = vld [vmem:[%s0 + $0x10] sm:$0xf]
  %v121 = vld [vmem:[%s0 + $0x14] sm:$0x3]
  %v122 = vld [vmem:[%s0 + $0x18] sm:$0xf]
  %v123 = vld [vmem:[%s0 + $0x1c] sm:$0x3]
  %v124 = vld [vmem:[%s0 + $0x20] sm:$0xf]
  %v125 = vld [vmem:[%s0 + $0x24] sm:$0x3]
  %v126 = vld [vmem:[%s0 + $0x28] sm:$0xf]
  %v127 = vld [vmem:[%s0 + $0x2c] sm:$0x3]
  %v128 = vld [vmem:[%s0 + $0x30] sm:$0xf]
  %v129 = vld [vmem:[%s0 + $0x34] sm:$0x3]
  %v130 = vld [vmem:[%s0 + $0x38] sm:$0xf]
  %v131 = vld [vmem:[%s0 + $0x3c] sm:$0x3]
  %v132 = vld [vmem:[%s0 + $0x40] sm:$0xf]
  %v133 = vld [vmem:[%s0 + $0x44] sm:$0x3]
  %v134 = vld [vmem:[%s0 + $0x48] sm:$0xf]
  %v135 = vld [vmem:[%s0 + $0x4c] sm:$0x3]
  %v136 = vld [vmem:[%s0 + $0x50] sm:$0xf]
  %v137 = vld [vmem:[%s0 + $0x54] sm:$0x3]
  %v138 = vld [vmem:[%s0 + $0x58] sm:$0xf]
  %v139 = vld [vmem:[%s0 + $0x5c] sm:$0x3]
  %v140 = vld [vmem:[%s0 + $0x60] sm:$0xf]
  %v141 = vld [vmem:[%s0 + $0x64] sm:$0x3]
  %v142 = vld [vmem:[%s0 + $0x68] sm:$0xf]
  %v143 = vld [vmem:[%s0 + $0x6c] sm:$0x3]
  %v144 = vld [vmem:[%s0 + $0x70] sm:$0xf]
  %v145 = vld [vmem:[%s0 + $0x74] sm:$0x3]
  %v146 = vld [vmem:[%s0 + $0x78] sm:$0xf]
  %v147 = vld [vmem:[%s0 + $0x7c] sm:$0x3]
  %v148 = vld [vmem:[%s0 + $0x80] sm:$0xf]
  %v149 = vld [vmem:[%s0 + $0x84] sm:$0x3]
  %v150 = vld [vmem:[%s0 + $0x88] sm:$0xf]
  %v151 = vld [vmem:[%s0 + $0x8c] sm:$0x3]
  %v152 = vld [vmem:[%s0 + $0x90] sm:$0xf]
  %v153 = vld [vmem:[%s0 + $0x94] sm:$0x3]
  %v154 = vld [vmem:[%s0 + $0x98] sm:$0xf]
  %v155 = vld [vmem:[%s0 + $0x9c] sm:$0x3]
  %v156 = vld [vmem:[%s0 + $0xa0] sm:$0xf]
  %v157 = vld [vmem:[%s0 + $0xa4] sm:$0x3]
  %v158 = vld [vmem:[%s0 + $0xa8] sm:$0xf]
  %v159 = vld [vmem:[%s0 + $0xac] sm:$0x3]
  %vm160 = vsmask.f32 256
  %vm161 = vsmask.f32 4368
  %vm162 = vmor %vm160, %vm161
  %v164 = vshrl.u32 %v116, 16
  %v166 = vrot.slane %v164, 7
  %v167 = vshll.u32 %v116, 16
  %v169 = vor.u32 %v166, %v167
  %v170 = vrot.slane %v166, 4
  %v172 = vshrl.u32 %v117, 16
  %v174 = vrot.slane %v172, 7
  %v175 = vshll.u32 %v117, 16
  %v177 = vor.u32 %v174, %v175
  %v178 = vsel %vm162, %v170, %v177
  %v180 = vshrl.u32 %v118, 16
  %v182 = vrot.slane %v180, 7
  %v183 = vshll.u32 %v118, 16
  %v185 = vor.u32 %v182, %v183
  %v186 = vrot.slane %v182, 4
  %v188 = vshrl.u32 %v119, 16
  %v190 = vrot.slane %v188, 7
  %v191 = vshll.u32 %v119, 16
  %v193 = vor.u32 %v190, %v191
  %v194 = vsel %vm162, %v186, %v193
  %v196 = vshrl.u32 %v120, 16
  %v198 = vrot.slane %v196, 7
  %v199 = vshll.u32 %v120, 16
  %v201 = vor.u32 %v198, %v199
  %v202 = vrot.slane %v198, 4
  %v204 = vshrl.u32 %v121, 16
  %v206 = vrot.slane %v204, 7
  %v207 = vshll.u32 %v121, 16
  %v209 = vor.u32 %v206, %v207
  %v210 = vsel %vm162, %v202, %v209
  %v212 = vshrl.u32 %v122, 16
  %v214 = vrot.slane %v212, 7
  %v215 = vshll.u32 %v122, 16
  %v217 = vor.u32 %v214, %v215
  %v218 = vrot.slane %v214, 4
  %v220 = vshrl.u32 %v123, 16
  %v222 = vrot.slane %v220, 7
  %v223 = vshll.u32 %v123, 16
  %v225 = vor.u32 %v222, %v223
  %v226 = vsel %vm162, %v218, %v225
  %v228 = vshrl.u32 %v124, 16
  %v230 = vrot.slane %v228, 7
  %v231 = vshll.u32 %v124, 16
  %v233 = vor.u32 %v230, %v231
  %v234 = vrot.slane %v230, 4
  %v236 = vshrl.u32 %v125, 16
  %v238 = vrot.slane %v236, 7
  %v239 = vshll.u32 %v125, 16
  %v241 = vor.u32 %v238, %v239
  %v242 = vsel %vm162, %v234, %v241
  %v244 = vshrl.u32 %v126, 16
  %v246 = vrot.slane %v244, 7
  %v247 = vshll.u32 %v126, 16
  %v249 = vor.u32 %v246, %v247
  %v250 = vrot.slane %v246, 4
  %v252 = vshrl.u32 %v127, 16
  %v254 = vrot.slane %v252, 7
  %v255 = vshll.u32 %v127, 16
  %v257 = vor.u32 %v254, %v255
  %v258 = vsel %vm162, %v250, %v257
  %v260 = vshrl.u32 %v128, 16
  %v262 = vrot.slane %v260, 7
  %v263 = vshll.u32 %v128, 16
  %v265 = vor.u32 %v262, %v263
  %v266 = vrot.slane %v262, 4
  %v268 = vshrl.u32 %v129, 16
  %v270 = vrot.slane %v268, 7
  %v271 = vshll.u32 %v129, 16
  %v273 = vor.u32 %v270, %v271
  %v274 = vsel %vm162, %v266, %v273
  %v276 = vshrl.u32 %v130, 16
  %v278 = vrot.slane %v276, 7
  %v279 = vshll.u32 %v130, 16
  %v281 = vor.u32 %v278, %v279
  %v282 = vrot.slane %v278, 4
  %v284 = vshrl.u32 %v131, 16
  %v286 = vrot.slane %v284, 7
  %v287 = vshll.u32 %v131, 16
  %v289 = vor.u32 %v286, %v287
  %v290 = vsel %vm162, %v282, %v289
  %v292 = vshrl.u32 %v132, 16
  %v294 = vrot.slane %v292, 7
  %v295 = vshll.u32 %v132, 16
  %v297 = vor.u32 %v294, %v295
  %v298 = vrot.slane %v294, 4
  %v300 = vshrl.u32 %v133, 16
  %v302 = vrot.slane %v300, 7
  %v303 = vshll.u32 %v133, 16
  %v305 = vor.u32 %v302, %v303
  %v306 = vsel %vm162, %v298, %v305
  %v308 = vshrl.u32 %v134, 16
  %v310 = vrot.slane %v308, 7
  %v311 = vshll.u32 %v134, 16
  %v313 = vor.u32 %v310, %v311
  %v314 = vrot.slane %v310, 4
  %v316 = vshrl.u32 %v135, 16
  %v318 = vrot.slane %v316, 7
  %v319 = vshll.u32 %v135, 16
  %v321 = vor.u32 %v318, %v319
  %v322 = vsel %vm162, %v314, %v321
  %v324 = vshrl.u32 %v136, 16
  %v326 = vrot.slane %v324, 7
  %v327 = vshll.u32 %v136, 16
  %v329 = vor.u32 %v326, %v327
  %v330 = vrot.slane %v326, 4
  %v332 = vshrl.u32 %v137, 16
  %v334 = vrot.slane %v332, 7
  %v335 = vshll.u32 %v137, 16
  %v337 = vor.u32 %v334, %v335
  %v338 = vsel %vm162, %v330, %v337
  %v340 = vshrl.u32 %v138, 16
  %v342 = vrot.slane %v340, 7
  %v343 = vshll.u32 %v138, 16
  %v345 = vor.u32 %v342, %v343
  %v346 = vrot.slane %v342, 4
  %v348 = vshrl.u32 %v139, 16
  %v350 = vrot.slane %v348, 7
  %v351 = vshll.u32 %v139, 16
  %v353 = vor.u32 %v350, %v351
  %v354 = vsel %vm162, %v346, %v353
  %v356 = vshrl.u32 %v140, 16
  %v358 = vrot.slane %v356, 7
  %v359 = vshll.u32 %v140, 16
  %v361 = vor.u32 %v358, %v359
  %v362 = vrot.slane %v358, 4
  %v364 = vshrl.u32 %v141, 16
  %v366 = vrot.slane %v364, 7
  %v367 = vshll.u32 %v141, 16
  %v369 = vor.u32 %v366, %v367
  %v370 = vsel %vm162, %v362, %v369
  %v372 = vshrl.u32 %v142, 16
  %v374 = vrot.slane %v372, 7
  %v375 = vshll.u32 %v142, 16
  %v377 = vor.u32 %v374, %v375
  %v378 = vrot.slane %v374, 4
  %v380 = vshrl.u32 %v143, 16
  %v382 = vrot.slane %v380, 7
  %v383 = vshll.u32 %v143, 16
  %v385 = vor.u32 %v382, %v383
  %v386 = vsel %vm162, %v378, %v385
  %v388 = vshrl.u32 %v144, 16
  %v390 = vrot.slane %v388, 7
  %v391 = vshll.u32 %v144, 16
  %v393 = vor.u32 %v390, %v391
  %v394 = vrot.slane %v390, 4
  %v396 = vshrl.u32 %v145, 16
  %v398 = vrot.slane %v396, 7
  %v399 = vshll.u32 %v145, 16
  %v401 = vor.u32 %v398, %v399
  %v402 = vsel %vm162, %v394, %v401
  %v404 = vshrl.u32 %v146, 16
  %v406 = vrot.slane %v404, 7
  %v407 = vshll.u32 %v146, 16
  %v409 = vor.u32 %v406, %v407
  %v410 = vrot.slane %v406, 4
  %v412 = vshrl.u32 %v147, 16
  %v414 = vrot.slane %v412, 7
  %v415 = vshll.u32 %v147, 16
  %v417 = vor.u32 %v414, %v415
  %v418 = vsel %vm162, %v410, %v417
  %v420 = vshrl.u32 %v148, 16
  %v422 = vrot.slane %v420, 7
  %v423 = vshll.u32 %v148, 16
  %v425 = vor.u32 %v422, %v423
  %v426 = vrot.slane %v422, 4
  %v428 = vshrl.u32 %v149, 16
  %v430 = vrot.slane %v428, 7
  %v431 = vshll.u32 %v149, 16
  %v433 = vor.u32 %v430, %v431
  %v434 = vsel %vm162, %v426, %v433
  %v436 = vshrl.u32 %v150, 16
  %v438 = vrot.slane %v436, 7
  %v439 = vshll.u32 %v150, 16
  %v441 = vor.u32 %v438, %v439
  %v442 = vrot.slane %v438, 4
  %v444 = vshrl.u32 %v151, 16
  %v446 = vrot.slane %v444, 7
  %v447 = vshll.u32 %v151, 16
  %v449 = vor.u32 %v446, %v447
  %v450 = vsel %vm162, %v442, %v449
  %v452 = vshrl.u32 %v152, 16
  %v454 = vrot.slane %v452, 7
  %v455 = vshll.u32 %v152, 16
  %v457 = vor.u32 %v454, %v455
  %v458 = vrot.slane %v454, 4
  %v460 = vshrl.u32 %v153, 16
  %v462 = vrot.slane %v460, 7
  %v463 = vshll.u32 %v153, 16
  %v465 = vor.u32 %v462, %v463
  %v466 = vsel %vm162, %v458, %v465
  %v468 = vshrl.u32 %v154, 16
  %v470 = vrot.slane %v468, 7
  %v471 = vshll.u32 %v154, 16
  %v473 = vor.u32 %v470, %v471
  %v474 = vrot.slane %v470, 4
  %v476 = vshrl.u32 %v155, 16
  %v478 = vrot.slane %v476, 7
  %v479 = vshll.u32 %v155, 16
  %v481 = vor.u32 %v478, %v479
  %v482 = vsel %vm162, %v474, %v481
  %v484 = vshrl.u32 %v156, 16
  %v486 = vrot.slane %v484, 7
  %v487 = vshll.u32 %v156, 16
  %v489 = vor.u32 %v486, %v487
  %v490 = vrot.slane %v486, 4
  %v492 = vshrl.u32 %v157, 16
  %v494 = vrot.slane %v492, 7
  %v495 = vshll.u32 %v157, 16
  %v497 = vor.u32 %v494, %v495
  %v498 = vsel %vm162, %v490, %v497
  %v500 = vshrl.u32 %v158, 16
  %v502 = vrot.slane %v500, 7
  %v503 = vshll.u32 %v158, 16
  %v505 = vor.u32 %v502, %v503
  %v506 = vrot.slane %v502, 4
  %v508 = vshrl.u32 %v159, 16
  %v510 = vrot.slane %v508, 7
  %v511 = vshll.u32 %v159, 16
  %v513 = vor.u32 %v510, %v511
  %v514 = vsel %vm162, %v506, %v513
  %s559 = scalar_lea.vmem [#allocation2], 8
  %vm560 = vcmask 1043456
  %vm561 = vsmask.f32 7938
  %vm562 = vmand %vm560, %vm561
  %v563 = vld [vmem:[%s559] sm:$0xf]
  %v564 = vsel %vm562, %v169, %v563
  %565 = vst [vmem:[%s559] sm:$0xf] %v564
  %566 = vst [vmem:[%s559 + $0x4] sm:$0x3] %v178
  %v567 = vld [vmem:[%s559 + $0x8] sm:$0xf]
  %v568 = vsel %vm562, %v185, %v567
  %569 = vst [vmem:[%s559 + $0x8] sm:$0xf] %v568
  %570 = vst [vmem:[%s559 + $0xc] sm:$0x3] %v194
  %v571 = vld [vmem:[%s559 + $0x10] sm:$0xf]
  %v572 = vsel %vm562, %v201, %v571
  %573 = vst [vmem:[%s559 + $0x10] sm:$0xf] %v572
  %574 = vst [vmem:[%s559 + $0x14] sm:$0x3] %v210
  %v575 = vld [vmem:[%s559 + $0x18] sm:$0xf]
  %v576 = vsel %vm562, %v217, %v575
  %577 = vst [vmem:[%s559 + $0x18] sm:$0xf] %v576
  %578 = vst [vmem:[%s559 + $0x1c] sm:$0x3] %v226
  %v579 = vld [vmem:[%s559 + $0x20] sm:$0xf]
  %v580 = vsel %vm562, %v233, %v579
  %581 = vst [vmem:[%s559 + $0x20] sm:$0xf] %v580
  %582 = vst [vmem:[%s559 + $0x24] sm:$0x3] %v242
  %v583 = vld [vmem:[%s559 + $0x28] sm:$0xf]
  %v584 = vsel %vm562, %v249, %v583
  %585 = vst [vmem:[%s559 + $0x28] sm:$0xf] %v584
  %586 = vst [vmem:[%s559 + $0x2c] sm:$0x3] %v258
  %v587 = vld [vmem:[%s559 + $0x30] sm:$0xf]
  %v588 = vsel %vm562, %v265, %v587
  %589 = vst [vmem:[%s559 + $0x30] sm:$0xf] %v588
  %590 = vst [vmem:[%s559 + $0x34] sm:$0x3] %v274
  %v591 = vld [vmem:[%s559 + $0x38] sm:$0xf]
  %v592 = vsel %vm562, %v281, %v591
  %593 = vst [vmem:[%s559 + $0x38] sm:$0xf] %v592
  %594 = vst [vmem:[%s559 + $0x3c] sm:$0x3] %v290
  %v595 = vld [vmem:[%s559 + $0x40] sm:$0xf]
  %v596 = vsel %vm562, %v297, %v595
  %597 = vst [vmem:[%s559 + $0x40] sm:$0xf] %v596
  %598 = vst [vmem:[%s559 + $0x44] sm:$0x3] %v306
  %v599 = vld [vmem:[%s559 + $0x48] sm:$0xf]
  %v600 = vsel %vm562, %v313, %v599
  %601 = vst [vmem:[%s559 + $0x48] sm:$0xf] %v600
  %602 = vst [vmem:[%s559 + $0x4c] sm:$0x3] %v322
  %v603 = vld [vmem:[%s559 + $0x50] sm:$0xf]
  %v604 = vsel %vm562, %v329, %v603
  %605 = vst [vmem:[%s559 + $0x50] sm:$0xf] %v604
  %606 = vst [vmem:[%s559 + $0x54] sm:$0x3] %v338
  %v607 = vld [vmem:[%s559 + $0x68] sm:$0xf]
  %v608 = vsel %vm562, %v345, %v607
  %609 = vst [vmem:[%s559 + $0x68] sm:$0xf] %v608
  %610 = vst [vmem:[%s559 + $0x6c] sm:$0x3] %v354
  %v611 = vld [vmem:[%s559 + $0x70] sm:$0xf]
  %v612 = vsel %vm562, %v361, %v611
  %613 = vst [vmem:[%s559 + $0x70] sm:$0xf] %v612
  %614 = vst [vmem:[%s559 + $0x74] sm:$0x3] %v370
  %v615 = vld [vmem:[%s559 + $0x78] sm:$0xf]
  %v616 = vsel %vm562, %v377, %v615
  %617 = vst [vmem:[%s559 + $0x78] sm:$0xf] %v616
  %618 = vst [vmem:[%s559 + $0x7c] sm:$0x3] %v386
  %v619 = vld [vmem:[%s559 + $0x80] sm:$0xf]
  %v620 = vsel %vm562, %v393, %v619
  %621 = vst [vmem:[%s559 + $0x80] sm:$0xf] %v620
  %622 = vst [vmem:[%s559 + $0x84] sm:$0x3] %v402
  %v623 = vld [vmem:[%s559 + $0x88] sm:$0xf]
  %v624 = vsel %vm562, %v409, %v623
  %625 = vst [vmem:[%s559 + $0x88] sm:$0xf] %v624
  %626 = vst [vmem:[%s559 + $0x8c] sm:$0x3] %v418
  %v627 = vld [vmem:[%s559 + $0x90] sm:$0xf]
  %v628 = vsel %vm562, %v425, %v627
  %629 = vst [vmem:[%s559 + $0x90] sm:$0xf] %v628
  %630 = vst [vmem:[%s559 + $0x94] sm:$0x3] %v434
  %v631 = vld [vmem:[%s559 + $0x98] sm:$0xf]
  %v632 = vsel %vm562, %v441, %v631
  %633 = vst [vmem:[%s559 + $0x98] sm:$0xf] %v632
  %634 = vst [vmem:[%s559 + $0x9c] sm:$0x3] %v450
  %v635 = vld [vmem:[%s559 + $0xa0] sm:$0xf]
  %v636 = vsel %vm562, %v457, %v635
  %637 = vst [vmem:[%s559 + $0xa0] sm:$0xf] %v636
  %638 = vst [vmem:[%s559 + $0xa4] sm:$0x3] %v466
  %v639 = vld [vmem:[%s559 + $0xa8] sm:$0xf]
  %v640 = vsel %vm562, %v473, %v639
  %641 = vst [vmem:[%s559 + $0xa8] sm:$0xf] %v640
  %642 = vst [vmem:[%s559 + $0xac] sm:$0x3] %v482
  %v643 = vld [vmem:[%s559 + $0xb0] sm:$0xf]
  %v644 = vsel %vm562, %v489, %v643
  %645 = vst [vmem:[%s559 + $0xb0] sm:$0xf] %v644
  %646 = vst [vmem:[%s559 + $0xb4] sm:$0x3] %v498
  %v647 = vld [vmem:[%s559 + $0xb8] sm:$0xf]
  %v648 = vsel %vm562, %v505, %v647
  %649 = vst [vmem:[%s559 + $0xb8] sm:$0xf] %v648
  %650 = vst [vmem:[%s559 + $0xbc] sm:$0x3] %v514
  %v651 = vld [vmem:[#allocation2] sm:$0xf]
  %v652 = vld [vmem:[#allocation2 + $0x4] sm:$0x7]
  %v653 = vld [vmem:[#allocation2 + $0x8] sm:$0xf]
  %v654 = vld [vmem:[#allocation2 + $0xc] sm:$0x7]
  %v655 = vld [vmem:[#allocation2 + $0x10] sm:$0xf]
  %v656 = vld [vmem:[#allocation2 + $0x14] sm:$0x7]
  %v657 = vld [vmem:[#allocation2 + $0x18] sm:$0xf]
  %v658 = vld [vmem:[#allocation2 + $0x1c] sm:$0x7]
  %v659 = vld [vmem:[#allocation2 + $0x20] sm:$0xf]
  %v660 = vld [vmem:[#allocation2 + $0x24] sm:$0x7]
  %v661 = vld [vmem:[#allocation2 + $0x28] sm:$0xf]
  %v662 = vld [vmem:[#allocation2 + $0x2c] sm:$0x7]
  %v663 = vld [vmem:[#allocation2 + $0x30] sm:$0xf]
  %v664 = vld [vmem:[#allocation2 + $0x34] sm:$0x7]
  %v665 = vld [vmem:[#allocation2 + $0x38] sm:$0xf]
  %v666 = vld [vmem:[#allocation2 + $0x3c] sm:$0x7]
  %v667 = vld [vmem:[#allocation2 + $0x40] sm:$0xf]
  %v668 = vld [vmem:[#allocation2 + $0x44] sm:$0x7]
  %v669 = vld [vmem:[#allocation2 + $0x48] sm:$0xf]
  %v670 = vld [vmem:[#allocation2 + $0x4c] sm:$0x7]
  %v671 = vld [vmem:[#allocation2 + $0x50] sm:$0xf]
  %v672 = vld [vmem:[#allocation2 + $0x54] sm:$0x7]
  %v673 = vld [vmem:[#allocation2 + $0x58] sm:$0xf]
  %v674 = vld [vmem:[#allocation2 + $0x5c] sm:$0x7]
  %v675 = vld [vmem:[#allocation2 + $0x60] sm:$0xf]
  %v676 = vld [vmem:[#allocation2 + $0x64] sm:$0x7]
  %v677 = vld [vmem:[#allocation2 + $0x68] sm:$0xf]
  %v678 = vld [vmem:[#allocation2 + $0x6c] sm:$0x7]
  %v679 = vld [vmem:[#allocation2 + $0x70] sm:$0xf]
  %v680 = vld [vmem:[#allocation2 + $0x74] sm:$0x7]
  %v681 = vld [vmem:[#allocation2 + $0x78] sm:$0xf]
  %v682 = vld [vmem:[#allocation2 + $0x7c] sm:$0x7]
  %v683 = vld [vmem:[#allocation2 + $0x80] sm:$0xf]
  %v684 = vld [vmem:[#allocation2 + $0x84] sm:$0x7]
  %v685 = vld [vmem:[#allocation2 + $0x88] sm:$0xf]
  %v686 = vld [vmem:[#allocation2 + $0x8c] sm:$0x7]
  %v687 = vld [vmem:[#allocation2 + $0x90] sm:$0xf]
  %v688 = vld [vmem:[#allocation2 + $0x94] sm:$0x7]
  %v689 = vld [vmem:[#allocation2 + $0x98] sm:$0xf]
  %v690 = vld [vmem:[#allocation2 + $0x9c] sm:$0x7]
  %v691 = vld [vmem:[#allocation2 + $0xa0] sm:$0xf]
  %v692 = vld [vmem:[#allocation2 + $0xa4] sm:$0x7]
  %v693 = vld [vmem:[#allocation2 + $0xa8] sm:$0xf]
  %v694 = vld [vmem:[#allocation2 + $0xac] sm:$0x7]
  %v695 = vld [vmem:[#allocation2 + $0xb0] sm:$0xf]
  %v696 = vld [vmem:[#allocation2 + $0xb4] sm:$0x7]
  %v697 = vld [vmem:[#allocation2 + $0xb8] sm:$0xf]
  %v698 = vld [vmem:[#allocation2 + $0xbc] sm:$0x7]
  %v699 = vld [vmem:[#allocation2 + $0xc0] sm:$0xf]
  %v700 = vld [vmem:[#allocation2 + $0xc4] sm:$0x7]
  %v701 = vld [vmem:[#allocation2 + $0xc8] sm:$0xf]
  %v702 = vld [vmem:[#allocation2 + $0xcc] sm:$0x7]
  %v703 = vmax.bf16 %v651, %v653
  %v704 = vmax.bf16 %v652, %v654
  %v705 = vmax.bf16 %v653, %v655
  %v706 = vmax.bf16 %v654, %v656
  %v707 = vmax.bf16 %v655, %v657
  %v708 = vmax.bf16 %v656, %v658
  %v709 = vmax.bf16 %v657, %v659
  %v710 = vmax.bf16 %v658, %v660
  %v711 = vmax.bf16 %v659, %v661
  %v712 = vmax.bf16 %v660, %v662
  %v713 = vmax.bf16 %v661, %v663
  %v714 = vmax.bf16 %v662, %v664
  %v715 = vmax.bf16 %v663, %v665
  %v716 = vmax.bf16 %v664, %v666
  %v717 = vmax.bf16 %v665, %v667
  %v718 = vmax.bf16 %v666, %v668
  %v719 = vmax.bf16 %v667, %v669
  %v720 = vmax.bf16 %v668, %v670
  %v721 = vmax.bf16 %v669, %v671
  %v722 = vmax.bf16 %v670, %v672
  %v723 = vmax.bf16 %v671, %v673
  %v724 = vmax.bf16 %v672, %v674
  %v725 = vmax.bf16 %v677, %v679
  %v726 = vmax.bf16 %v678, %v680
  %v727 = vmax.bf16 %v679, %v681
  %v728 = vmax.bf16 %v680, %v682
  %v729 = vmax.bf16 %v681, %v683
  %v730 = vmax.bf16 %v682, %v684
  %v731 = vmax.bf16 %v683, %v685
  %v732 = vmax.bf16 %v684, %v686
  %v733 = vmax.bf16 %v685, %v687
  %v734 = vmax.bf16 %v686, %v688
  %v735 = vmax.bf16 %v687, %v689
  %v736 = vmax.bf16 %v688, %v690
  %v737 = vmax.bf16 %v689, %v691
  %v738 = vmax.bf16 %v690, %v692
  %v739 = vmax.bf16 %v691, %v693
  %v740 = vmax.bf16 %v692, %v694
  %v741 = vmax.bf16 %v693, %v695
  %v742 = vmax.bf16 %v694, %v696
  %v743 = vmax.bf16 %v695, %v697
  %v744 = vmax.bf16 %v696, %v698
  %v745 = vmax.bf16 %v697, %v699
  %v746 = vmax.bf16 %v698, %v700
  %v747 = vmax.bf16 %v703, %v655
  %v748 = vmax.bf16 %v704, %v656
  %v749 = vmax.bf16 %v705, %v657
  %v750 = vmax.bf16 %v706, %v658
  %v751 = vmax.bf16 %v707, %v659
  %v752 = vmax.bf16 %v708, %v660
  %v753 = vmax.bf16 %v709, %v661
  %v754 = vmax.bf16 %v710, %v662
  %v755 = vmax.bf16 %v711, %v663
  %v756 = vmax.bf16 %v712, %v664
  %v757 = vmax.bf16 %v713, %v665
  %v758 = vmax.bf16 %v714, %v666
  %v759 = vmax.bf16 %v715, %v667
  %v760 = vmax.bf16 %v716, %v668
  %v761 = vmax.bf16 %v717, %v669
  %v762 = vmax.bf16 %v718, %v670
  %v763 = vmax.bf16 %v719, %v671
  %v764 = vmax.bf16 %v720, %v672
  %v765 = vmax.bf16 %v721, %v673
  %v766 = vmax.bf16 %v722, %v674
  %v767 = vmax.bf16 %v723, %v675
  %v768 = vmax.bf16 %v724, %v676
  %v769 = vmax.bf16 %v725, %v681
  %v770 = vmax.bf16 %v726, %v682
  %v771 = vmax.bf16 %v727, %v683
  %v772 = vmax.bf16 %v728, %v684
  %v773 = vmax.bf16 %v729, %v685
  %v774 = vmax.bf16 %v730, %v686
  %v775 = vmax.bf16 %v731, %v687
  %v776 = vmax.bf16 %v732, %v688
  %v777 = vmax.bf16 %v733, %v689
  %v778 = vmax.bf16 %v734, %v690
  %v779 = vmax.bf16 %v735, %v691
  %v780 = vmax.bf16 %v736, %v692
  %v781 = vmax.bf16 %v737, %v693
  %v782 = vmax.bf16 %v738, %v694
  %v783 = vmax.bf16 %v739, %v695
  %v784 = vmax.bf16 %v740, %v696
  %v785 = vmax.bf16 %v741, %v697
  %v786 = vmax.bf16 %v742, %v698
  %v787 = vmax.bf16 %v743, %v699
  %v788 = vmax.bf16 %v744, %v700
  %v789 = vmax.bf16 %v745, %v701
  %v790 = vmax.bf16 %v746, %v702
  %vm791 = vsmask.f32 3328
  %vm792 = vsmask.f32 7440
  %vm793 = vmor %vm791, %vm792
  %v795 = vshrl.u32 %v747, 16
  %v797 = vrot.slane %v795, 4
  %v798 = vshll.u32 %v747, 16
  %v800 = vrot.slane %v798, 5
  %v801 = vor.u32 %v797, %v800
  %v802 = vrot.slane %v801, 4
  %v804 = vshll.u32 %v748, 16
  %v806 = vrot.slane %v804, 5
  %v807 = vsel %vm793, %v802, %v806
  %v808 = vshrl.u32 %v748, 16
  %v810 = vrot.slane %v808, 4
  %v811 = vor.u32 %v810, %v806
  %v812 = vrot.slane %v811, 4
  %v814 = vshrl.u32 %v749, 16
  %v816 = vrot.slane %v814, 4
  %v817 = vshll.u32 %v749, 16
  %v819 = vrot.slane %v817, 5
  %v820 = vor.u32 %v816, %v819
  %v821 = vrot.slane %v820, 4
  %v823 = vshll.u32 %v750, 16
  %v825 = vrot.slane %v823, 5
  %v826 = vsel %vm793, %v821, %v825
  %v827 = vshrl.u32 %v750, 16
  %v829 = vrot.slane %v827, 4
  %v830 = vor.u32 %v829, %v825
  %v831 = vrot.slane %v830, 4
  %v833 = vshrl.u32 %v751, 16
  %v835 = vrot.slane %v833, 4
  %v836 = vshll.u32 %v751, 16
  %v838 = vrot.slane %v836, 5
  %v839 = vor.u32 %v835, %v838
  %v840 = vrot.slane %v839, 4
  %v842 = vshll.u32 %v752, 16
  %v844 = vrot.slane %v842, 5
  %v845 = vsel %vm793, %v840, %v844
  %v846 = vshrl.u32 %v752, 16
  %v848 = vrot.slane %v846, 4
  %v849 = vor.u32 %v848, %v844
  %v850 = vrot.slane %v849, 4
  %v852 = vshrl.u32 %v753, 16
  %v854 = vrot.slane %v852, 4
  %v855 = vshll.u32 %v753, 16
  %v857 = vrot.slane %v855, 5
  %v858 = vor.u32 %v854, %v857
  %v859 = vrot.slane %v858, 4
  %v861 = vshll.u32 %v754, 16
  %v863 = vrot.slane %v861, 5
  %v864 = vsel %vm793, %v859, %v863
  %v865 = vshrl.u32 %v754, 16
  %v867 = vrot.slane %v865, 4
  %v868 = vor.u32 %v867, %v863
  %v869 = vrot.slane %v868, 4
  %v871 = vshrl.u32 %v755, 16
  %v873 = vrot.slane %v871, 4
  %v874 = vshll.u32 %v755, 16
  %v876 = vrot.slane %v874, 5
  %v877 = vor.u32 %v873, %v876
  %v878 = vrot.slane %v877, 4
  %v880 = vshll.u32 %v756, 16
  %v882 = vrot.slane %v880, 5
  %v883 = vsel %vm793, %v878, %v882
  %v884 = vshrl.u32 %v756, 16
  %v886 = vrot.slane %v884, 4
  %v887 = vor.u32 %v886, %v882
  %v888 = vrot.slane %v887, 4
  %v890 = vshrl.u32 %v757, 16
  %v892 = vrot.slane %v890, 4
  %v893 = vshll.u32 %v757, 16
  %v895 = vrot.slane %v893, 5
  %v896 = vor.u32 %v892, %v895
  %v897 = vrot.slane %v896, 4
  %v899 = vshll.u32 %v758, 16
  %v901 = vrot.slane %v899, 5
  %v902 = vsel %vm793, %v897, %v901
  %v903 = vshrl.u32 %v758, 16
  %v905 = vrot.slane %v903, 4
  %v906 = vor.u32 %v905, %v901
  %v907 = vrot.slane %v906, 4
  %v909 = vshrl.u32 %v759, 16
  %v911 = vrot.slane %v909, 4
  %v912 = vshll.u32 %v759, 16
  %v914 = vrot.slane %v912, 5
  %v915 = vor.u32 %v911, %v914
  %v916 = vrot.slane %v915, 4
  %v918 = vshll.u32 %v760, 16
  %v920 = vrot.slane %v918, 5
  %v921 = vsel %vm793, %v916, %v920
  %v922 = vshrl.u32 %v760, 16
  %v924 = vrot.slane %v922, 4
  %v925 = vor.u32 %v924, %v920
  %v926 = vrot.slane %v925, 4
  %v928 = vshrl.u32 %v761, 16
  %v930 = vrot.slane %v928, 4
  %v931 = vshll.u32 %v761, 16
  %v933 = vrot.slane %v931, 5
  %v934 = vor.u32 %v930, %v933
  %v935 = vrot.slane %v934, 4
  %v937 = vshll.u32 %v762, 16
  %v939 = vrot.slane %v937, 5
  %v940 = vsel %vm793, %v935, %v939
  %v941 = vshrl.u32 %v762, 16
  %v943 = vrot.slane %v941, 4
  %v944 = vor.u32 %v943, %v939
  %v945 = vrot.slane %v944, 4
  %v947 = vshrl.u32 %v763, 16
  %v949 = vrot.slane %v947, 4
  %v950 = vshll.u32 %v763, 16
  %v952 = vrot.slane %v950, 5
  %v953 = vor.u32 %v949, %v952
  %v954 = vrot.slane %v953, 4
  %v956 = vshll.u32 %v764, 16
  %v958 = vrot.slane %v956, 5
  %v959 = vsel %vm793, %v954, %v958
  %v960 = vshrl.u32 %v764, 16
  %v962 = vrot.slane %v960, 4
  %v963 = vor.u32 %v962, %v958
  %v964 = vrot.slane %v963, 4
  %v966 = vshrl.u32 %v765, 16
  %v968 = vrot.slane %v966, 4
  %v969 = vshll.u32 %v765, 16
  %v971 = vrot.slane %v969, 5
  %v972 = vor.u32 %v968, %v971
  %v973 = vrot.slane %v972, 4
  %v975 = vshll.u32 %v766, 16
  %v977 = vrot.slane %v975, 5
  %v978 = vsel %vm793, %v973, %v977
  %v979 = vshrl.u32 %v766, 16
  %v981 = vrot.slane %v979, 4
  %v982 = vor.u32 %v981, %v977
  %v983 = vrot.slane %v982, 4
  %v985 = vshrl.u32 %v767, 16
  %v987 = vrot.slane %v985, 4
  %v988 = vshll.u32 %v767, 16
  %v990 = vrot.slane %v988, 5
  %v991 = vor.u32 %v987, %v990
  %v992 = vrot.slane %v991, 4
  %v994 = vshll.u32 %v768, 16
  %v996 = vrot.slane %v994, 5
  %v997 = vsel %vm793, %v992, %v996
  %v998 = vshrl.u32 %v768, 16
  %v1000 = vrot.slane %v998, 4
  %v1001 = vor.u32 %v1000, %v996
  %v1002 = vrot.slane %v1001, 4
  %v1004 = vshrl.u32 %v769, 16
  %v1006 = vrot.slane %v1004, 4
  %v1007 = vshll.u32 %v769, 16
  %v1009 = vrot.slane %v1007, 5
  %v1010 = vor.u32 %v1006, %v1009
  %v1011 = vrot.slane %v1010, 4
  %v1013 = vshll.u32 %v770, 16
  %v1015 = vrot.slane %v1013, 5
  %v1016 = vsel %vm793, %v1011, %v1015
  %v1017 = vshrl.u32 %v770, 16
  %v1019 = vrot.slane %v1017, 4
  %v1020 = vor.u32 %v1019, %v1015
  %v1021 = vrot.slane %v1020, 4
  %v1023 = vshrl.u32 %v771, 16
  %v1025 = vrot.slane %v1023, 4
  %v1026 = vshll.u32 %v771, 16
  %v1028 = vrot.slane %v1026, 5
  %v1029 = vor.u32 %v1025, %v1028
  %v1030 = vrot.slane %v1029, 4
  %v1032 = vshll.u32 %v772, 16
  %v1034 = vrot.slane %v1032, 5
  %v1035 = vsel %vm793, %v1030, %v1034
  %v1036 = vshrl.u32 %v772, 16
  %v1038 = vrot.slane %v1036, 4
  %v1039 = vor.u32 %v1038, %v1034
  %v1040 = vrot.slane %v1039, 4
  %v1042 = vshrl.u32 %v773, 16
  %v1044 = vrot.slane %v1042, 4
  %v1045 = vshll.u32 %v773, 16
  %v1047 = vrot.slane %v1045, 5
  %v1048 = vor.u32 %v1044, %v1047
  %v1049 = vrot.slane %v1048, 4
  %v1051 = vshll.u32 %v774, 16
  %v1053 = vrot.slane %v1051, 5
  %v1054 = vsel %vm793, %v1049, %v1053
  %v1055 = vshrl.u32 %v774, 16
  %v1057 = vrot.slane %v1055, 4
  %v1058 = vor.u32 %v1057, %v1053
  %v1059 = vrot.slane %v1058, 4
  %v1061 = vshrl.u32 %v775, 16
  %v1063 = vrot.slane %v1061, 4
  %v1064 = vshll.u32 %v775, 16
  %v1066 = vrot.slane %v1064, 5
  %v1067 = vor.u32 %v1063, %v1066
  %v1068 = vrot.slane %v1067, 4
  %v1070 = vshll.u32 %v776, 16
  %v1072 = vrot.slane %v1070, 5
  %v1073 = vsel %vm793, %v1068, %v1072
  %v1074 = vshrl.u32 %v776, 16
  %v1076 = vrot.slane %v1074, 4
  %v1077 = vor.u32 %v1076, %v1072
  %v1078 = vrot.slane %v1077, 4
  %v1080 = vshrl.u32 %v777, 16
  %v1082 = vrot.slane %v1080, 4
  %v1083 = vshll.u32 %v777, 16
  %v1085 = vrot.slane %v1083, 5
  %v1086 = vor.u32 %v1082, %v1085
  %v1087 = vrot.slane %v1086, 4
  %v1089 = vshll.u32 %v778, 16
  %v1091 = vrot.slane %v1089, 5
  %v1092 = vsel %vm793, %v1087, %v1091
  %v1093 = vshrl.u32 %v778, 16
  %v1095 = vrot.slane %v1093, 4
  %v1096 = vor.u32 %v1095, %v1091
  %v1097 = vrot.slane %v1096, 4
  %v1099 = vshrl.u32 %v779, 16
  %v1101 = vrot.slane %v1099, 4
  %v1102 = vshll.u32 %v779, 16
  %v1104 = vrot.slane %v1102, 5
  %v1105 = vor.u32 %v1101, %v1104
  %v1106 = vrot.slane %v1105, 4
  %v1108 = vshll.u32 %v780, 16
  %v1110 = vrot.slane %v1108, 5
  %v1111 = vsel %vm793, %v1106, %v1110
  %v1112 = vshrl.u32 %v780, 16
  %v1114 = vrot.slane %v1112, 4
  %v1115 = vor.u32 %v1114, %v1110
  %v1116 = vrot.slane %v1115, 4
  %v1118 = vshrl.u32 %v781, 16
  %v1120 = vrot.slane %v1118, 4
  %v1121 = vshll.u32 %v781, 16
  %v1123 = vrot.slane %v1121, 5
  %v1124 = vor.u32 %v1120, %v1123
  %v1125 = vrot.slane %v1124, 4
  %v1127 = vshll.u32 %v782, 16
  %v1129 = vrot.slane %v1127, 5
  %v1130 = vsel %vm793, %v1125, %v1129
  %v1131 = vshrl.u32 %v782, 16
  %v1133 = vrot.slane %v1131, 4
  %v1134 = vor.u32 %v1133, %v1129
  %v1135 = vrot.slane %v1134, 4
  %v1137 = vshrl.u32 %v783, 16
  %v1139 = vrot.slane %v1137, 4
  %v1140 = vshll.u32 %v783, 16
  %v1142 = vrot.slane %v1140, 5
  %v1143 = vor.u32 %v1139, %v1142
  %v1144 = vrot.slane %v1143, 4
  %v1146 = vshll.u32 %v784, 16
  %v1148 = vrot.slane %v1146, 5
  %v1149 = vsel %vm793, %v1144, %v1148
  %v1150 = vshrl.u32 %v784, 16
  %v1152 = vrot.slane %v1150, 4
  %v1153 = vor.u32 %v1152, %v1148
  %v1154 = vrot.slane %v1153, 4
  %v1156 = vshrl.u32 %v785, 16
  %v1158 = vrot.slane %v1156, 4
  %v1159 = vshll.u32 %v785, 16
  %v1161 = vrot.slane %v1159, 5
  %v1162 = vor.u32 %v1158, %v1161
  %v1163 = vrot.slane %v1162, 4
  %v1165 = vshll.u32 %v786, 16
  %v1167 = vrot.slane %v1165, 5
  %v1168 = vsel %vm793, %v1163, %v1167
  %v1169 = vshrl.u32 %v786, 16
  %v1171 = vrot.slane %v1169, 4
  %v1172 = vor.u32 %v1171, %v1167
  %v1173 = vrot.slane %v1172, 4
  %v1175 = vshrl.u32 %v787, 16
  %v1177 = vrot.slane %v1175, 4
  %v1178 = vshll.u32 %v787, 16
  %v1180 = vrot.slane %v1178, 5
  %v1181 = vor.u32 %v1177, %v1180
  %v1182 = vrot.slane %v1181, 4
  %v1184 = vshll.u32 %v788, 16
  %v1186 = vrot.slane %v1184, 5
  %v1187 = vsel %vm793, %v1182, %v1186
  %v1188 = vshrl.u32 %v788, 16
  %v1190 = vrot.slane %v1188, 4
  %v1191 = vor.u32 %v1190, %v1186
  %v1192 = vrot.slane %v1191, 4
  %v1194 = vshrl.u32 %v789, 16
  %v1196 = vrot.slane %v1194, 4
  %v1197 = vshll.u32 %v789, 16
  %v1199 = vrot.slane %v1197, 5
  %v1200 = vor.u32 %v1196, %v1199
  %v1201 = vrot.slane %v1200, 4
  %v1203 = vshll.u32 %v790, 16
  %v1205 = vrot.slane %v1203, 5
  %v1206 = vsel %vm793, %v1201, %v1205
  %v1207 = vshrl.u32 %v790, 16
  %v1209 = vrot.slane %v1207, 4
  %v1210 = vor.u32 %v1209, %v1205
  %v1211 = vrot.slane %v1210, 4
  %v1256 = vmax.bf16 %v747, %v807
  %v1257 = vmax.bf16 %v748, %v812
  %v1258 = vmax.bf16 %v749, %v826
  %v1259 = vmax.bf16 %v750, %v831
  %v1260 = vmax.bf16 %v751, %v845
  %v1261 = vmax.bf16 %v752, %v850
  %v1262 = vmax.bf16 %v753, %v864
  %v1263 = vmax.bf16 %v754, %v869
  %v1264 = vmax.bf16 %v755, %v883
  %v1265 = vmax.bf16 %v756, %v888
  %v1266 = vmax.bf16 %v757, %v902
  %v1267 = vmax.bf16 %v758, %v907
  %v1268 = vmax.bf16 %v759, %v921
  %v1269 = vmax.bf16 %v760, %v926
  %v1270 = vmax.bf16 %v761, %v940
  %v1271 = vmax.bf16 %v762, %v945
  %v1272 = vmax.bf16 %v763, %v959
  %v1273 = vmax.bf16 %v764, %v964
  %v1274 = vmax.bf16 %v765, %v978
  %v1275 = vmax.bf16 %v766, %v983
  %v1276 = vmax.bf16 %v767, %v997
  %v1277 = vmax.bf16 %v768, %v1002
  %v1278 = vmax.bf16 %v769, %v1016
  %v1279 = vmax.bf16 %v770, %v1021
  %v1280 = vmax.bf16 %v771, %v1035
  %v1281 = vmax.bf16 %v772, %v1040
  %v1282 = vmax.bf16 %v773, %v1054
  %v1283 = vmax.bf16 %v774, %v1059
  %v1284 = vmax.bf16 %v775, %v1073
  %v1285 = vmax.bf16 %v776, %v1078
  %v1286 = vmax.bf16 %v777, %v1092
  %v1287 = vmax.bf16 %v778, %v1097
  %v1288 = vmax.bf16 %v779, %v1111
  %v1289 = vmax.bf16 %v780, %v1116
  %v1290 = vmax.bf16 %v781, %v1130
  %v1291 = vmax.bf16 %v782, %v1135
  %v1292 = vmax.bf16 %v783, %v1149
  %v1293 = vmax.bf16 %v784, %v1154
  %v1294 = vmax.bf16 %v785, %v1168
  %v1295 = vmax.bf16 %v786, %v1173
  %v1296 = vmax.bf16 %v787, %v1187
  %v1297 = vmax.bf16 %v788, %v1192
  %v1298 = vmax.bf16 %v789, %v1206
  %v1299 = vmax.bf16 %v790, %v1211
  %vm1344 = vcmask 1046532
  %vm1345 = vmor %vm10, %vm1344
  %v1346 = vrot.slane %v747, 5
  %v1347 = vrot.slane %v1346, 4
  %v1348 = vrot.slane %v748, 5
  %v1349 = vsel %vm1345, %v1347, %v1348
  %v1350 = vrot.slane %v1348, 4
  %v1351 = vrot.slane %v749, 5
  %v1352 = vrot.slane %v1351, 4
  %v1353 = vrot.slane %v750, 5
  %v1354 = vsel %vm1345, %v1352, %v1353
  %v1355 = vrot.slane %v1353, 4
  %v1356 = vrot.slane %v751, 5
  %v1357 = vrot.slane %v1356, 4
  %v1358 = vrot.slane %v752, 5
  %v1359 = vsel %vm1345, %v1357, %v1358
  %v1360 = vrot.slane %v1358, 4
  %v1361 = vrot.slane %v753, 5
  %v1362 = vrot.slane %v1361, 4
  %v1363 = vrot.slane %v754, 5
  %v1364 = vsel %vm1345, %v1362, %v1363
  %v1365 = vrot.slane %v1363, 4
  %v1366 = vrot.slane %v755, 5
  %v1367 = vrot.slane %v1366, 4
  %v1368 = vrot.slane %v756, 5
  %v1369 = vsel %vm1345, %v1367, %v1368
  %v1370 = vrot.slane %v1368, 4
  %v1371 = vrot.slane %v757, 5
  %v1372 = vrot.slane %v1371, 4
  %v1373 = vrot.slane %v758, 5
  %v1374 = vsel %vm1345, %v1372, %v1373
  %v1375 = vrot.slane %v1373, 4
  %v1376 = vrot.slane %v759, 5
  %v1377 = vrot.slane %v1376, 4
  %v1378 = vrot.slane %v760, 5
  %v1379 = vsel %vm1345, %v1377, %v1378
  %v1380 = vrot.slane %v1378, 4
  %v1381 = vrot.slane %v761, 5
  %v1382 = vrot.slane %v1381, 4
  %v1383 = vrot.slane %v762, 5
  %v1384 = vsel %vm1345, %v1382, %v1383
  %v1385 = vrot.slane %v1383, 4
  %v1386 = vrot.slane %v763, 5
  %v1387 = vrot.slane %v1386, 4
  %v1388 = vrot.slane %v764, 5
  %v1389 = vsel %vm1345, %v1387, %v1388
  %v1390 = vrot.slane %v1388, 4
  %v1391 = vrot.slane %v765, 5
  %v1392 = vrot.slane %v1391, 4
  %v1393 = vrot.slane %v766, 5
  %v1394 = vsel %vm1345, %v1392, %v1393
  %v1395 = vrot.slane %v1393, 4
  %v1396 = vrot.slane %v767, 5
  %v1397 = vrot.slane %v1396, 4
  %v1398 = vrot.slane %v768, 5
  %v1399 = vsel %vm1345, %v1397, %v1398
  %v1400 = vrot.slane %v1398, 4
  %v1401 = vrot.slane %v769, 5
  %v1402 = vrot.slane %v1401, 4
  %v1403 = vrot.slane %v770, 5
  %v1404 = vsel %vm1345, %v1402, %v1403
  %v1405 = vrot.slane %v1403, 4
  %v1406 = vrot.slane %v771, 5
  %v1407 = vrot.slane %v1406, 4
  %v1408 = vrot.slane %v772, 5
  %v1409 = vsel %vm1345, %v1407, %v1408
  %v1410 = vrot.slane %v1408, 4
  %v1411 = vrot.slane %v773, 5
  %v1412 = vrot.slane %v1411, 4
  %v1413 = vrot.slane %v774, 5
  %v1414 = vsel %vm1345, %v1412, %v1413
  %v1415 = vrot.slane %v1413, 4
  %v1416 = vrot.slane %v775, 5
  %v1417 = vrot.slane %v1416, 4
  %v1418 = vrot.slane %v776, 5
  %v1419 = vsel %vm1345, %v1417, %v1418
  %v1420 = vrot.slane %v1418, 4
  %v1421 = vrot.slane %v777, 5
  %v1422 = vrot.slane %v1421, 4
  %v1423 = vrot.slane %v778, 5
  %v1424 = vsel %vm1345, %v1422, %v1423
  %v1425 = vrot.slane %v1423, 4
  %v1426 = vrot.slane %v779, 5
  %v1427 = vrot.slane %v1426, 4
  %v1428 = vrot.slane %v780, 5
  %v1429 = vsel %vm1345, %v1427, %v1428
  %v1430 = vrot.slane %v1428, 4
  %v1431 = vrot.slane %v781, 5
  %v1432 = vrot.slane %v1431, 4
  %v1433 = vrot.slane %v782, 5
  %v1434 = vsel %vm1345, %v1432, %v1433
  %v1435 = vrot.slane %v1433, 4
  %v1436 = vrot.slane %v783, 5
  %v1437 = vrot.slane %v1436, 4
  %v1438 = vrot.slane %v784, 5
  %v1439 = vsel %vm1345, %v1437, %v1438
  %v1440 = vrot.slane %v1438, 4
  %v1441 = vrot.slane %v785, 5
  %v1442 = vrot.slane %v1441, 4
  %v1443 = vrot.slane %v786, 5
  %v1444 = vsel %vm1345, %v1442, %v1443
  %v1445 = vrot.slane %v1443, 4
  %v1446 = vrot.slane %v787, 5
  %v1447 = vrot.slane %v1446, 4
  %v1448 = vrot.slane %v788, 5
  %v1449 = vsel %vm1345, %v1447, %v1448
  %v1450 = vrot.slane %v1448, 4
  %v1451 = vrot.slane %v789, 5
  %v1452 = vrot.slane %v1451, 4
  %v1453 = vrot.slane %v790, 5
  %v1454 = vsel %vm1345, %v1452, %v1453
  %v1455 = vrot.slane %v1453, 4
  %v1500 = vmax.bf16 %v1256, %v1349
  %v1501 = vmax.bf16 %v1257, %v1350
  %v1502 = vmax.bf16 %v1258, %v1354
  %v1503 = vmax.bf16 %v1259, %v1355
  %v1504 = vmax.bf16 %v1260, %v1359
  %v1505 = vmax.bf16 %v1261, %v1360
  %v1506 = vmax.bf16 %v1262, %v1364
  %v1507 = vmax.bf16 %v1263, %v1365
  %v1508 = vmax.bf16 %v1264, %v1369
  %v1509 = vmax.bf16 %v1265, %v1370
  %v1510 = vmax.bf16 %v1266, %v1374
  %v1511 = vmax.bf16 %v1267, %v1375
  %v1512 = vmax.bf16 %v1268, %v1379
  %v1513 = vmax.bf16 %v1269, %v1380
  %v1514 = vmax.bf16 %v1270, %v1384
  %v1515 = vmax.bf16 %v1271, %v1385
  %v1516 = vmax.bf16 %v1272, %v1389
  %v1517 = vmax.bf16 %v1273, %v1390
  %v1518 = vmax.bf16 %v1274, %v1394
  %v1519 = vmax.bf16 %v1275, %v1395
  %v1520 = vmax.bf16 %v1276, %v1399
  %v1521 = vmax.bf16 %v1277, %v1400
  %v1522 = vmax.bf16 %v1278, %v1404
  %v1523 = vmax.bf16 %v1279, %v1405
  %v1524 = vmax.bf16 %v1280, %v1409
  %v1525 = vmax.bf16 %v1281, %v1410
  %v1526 = vmax.bf16 %v1282, %v1414
  %v1527 = vmax.bf16 %v1283, %v1415
  %v1528 = vmax.bf16 %v1284, %v1419
  %v1529 = vmax.bf16 %v1285, %v1420
  %v1530 = vmax.bf16 %v1286, %v1424
  %v1531 = vmax.bf16 %v1287, %v1425
  %v1532 = vmax.bf16 %v1288, %v1429
  %v1533 = vmax.bf16 %v1289, %v1430
  %v1534 = vmax.bf16 %v1290, %v1434
  %v1535 = vmax.bf16 %v1291, %v1435
  %v1536 = vmax.bf16 %v1292, %v1439
  %v1537 = vmax.bf16 %v1293, %v1440
  %v1538 = vmax.bf16 %v1294, %v1444
  %v1539 = vmax.bf16 %v1295, %v1445
  %v1540 = vmax.bf16 %v1296, %v1449
  %v1541 = vmax.bf16 %v1297, %v1450
  %v1542 = vmax.bf16 %v1298, %v1454
  %v1543 = vmax.bf16 %v1299, %v1455
  %1544 = vst [vmem:[%s1] sm:$0xf] %v1500
  %vm1545 = vcmask 1041408
  %vm1546 = vsmask.f32 1280
  %vm1547 = vmand %vm1545, %vm1546
  %v1548 = vld [vmem:[%s1 + $0x4] sm:$0x3]
  %v1549 = vsel %vm1547, %v1501, %v1548
  %1550 = vst [vmem:[%s1 + $0x4] sm:$0x3] %v1549
  %1551 = vst [vmem:[%s1 + $0x8] sm:$0xf] %v1502
  %v1552 = vld [vmem:[%s1 + $0xc] sm:$0x3]
  %v1553 = vsel %vm1547, %v1503, %v1552
  %1554 = vst [vmem:[%s1 + $0xc] sm:$0x3] %v1553
  %1555 = vst [vmem:[%s1 + $0x10] sm:$0xf] %v1504
  %v1556 = vld [vmem:[%s1 + $0x14] sm:$0x3]
  %v1557 = vsel %vm1547, %v1505, %v1556
  %1558 = vst [vmem:[%s1 + $0x14] sm:$0x3] %v1557
  %1559 = vst [vmem:[%s1 + $0x18] sm:$0xf] %v1506
  %v1560 = vld [vmem:[%s1 + $0x1c] sm:$0x3]
  %v1561 = vsel %vm1547, %v1507, %v1560
  %1562 = vst [vmem:[%s1 + $0x1c] sm:$0x3] %v1561
  %1563 = vst [vmem:[%s1 + $0x20] sm:$0xf] %v1508
  %v1564 = vld [vmem:[%s1 + $0x24] sm:$0x3]
  %v1565 = vsel %vm1547, %v1509, %v1564
  %1566 = vst [vmem:[%s1 + $0x24] sm:$0x3] %v1565
  %1567 = vst [vmem:[%s1 + $0x28] sm:$0xf] %v1510
  %v1568 = vld [vmem:[%s1 + $0x2c] sm:$0x3]
  %v1569 = vsel %vm1547, %v1511, %v1568
  %1570 = vst [vmem:[%s1 + $0x2c] sm:$0x3] %v1569
  %1571 = vst [vmem:[%s1 + $0x30] sm:$0xf] %v1512
  %v1572 = vld [vmem:[%s1 + $0x34] sm:$0x3]
  %v1573 = vsel %vm1547, %v1513, %v1572
  %1574 = vst [vmem:[%s1 + $0x34] sm:$0x3] %v1573
  %1575 = vst [vmem:[%s1 + $0x38] sm:$0xf] %v1514
  %v1576 = vld [vmem:[%s1 + $0x3c] sm:$0x3]
  %v1577 = vsel %vm1547, %v1515, %v1576
  %1578 = vst [vmem:[%s1 + $0x3c] sm:$0x3] %v1577
  %1579 = vst [vmem:[%s1 + $0x40] sm:$0xf] %v1516
  %v1580 = vld [vmem:[%s1 + $0x44] sm:$0x3]
  %v1581 = vsel %vm1547, %v1517, %v1580
  %1582 = vst [vmem:[%s1 + $0x44] sm:$0x3] %v1581
  %1583 = vst [vmem:[%s1 + $0x48] sm:$0xf] %v1518
  %v1584 = vld [vmem:[%s1 + $0x4c] sm:$0x3]
  %v1585 = vsel %vm1547, %v1519, %v1584
  %1586 = vst [vmem:[%s1 + $0x4c] sm:$0x3] %v1585
  %1587 = vst [vmem:[%s1 + $0x50] sm:$0xf] %v1520
  %v1588 = vld [vmem:[%s1 + $0x54] sm:$0x3]
  %v1589 = vsel %vm1547, %v1521, %v1588
  %1590 = vst [vmem:[%s1 + $0x54] sm:$0x3] %v1589
  %1591 = vst [vmem:[%s1 + $0x58] sm:$0xf] %v1522
  %v1592 = vld [vmem:[%s1 + $0x5c] sm:$0x3]
  %v1593 = vsel %vm1547, %v1523, %v1592
  %1594 = vst [vmem:[%s1 + $0x5c] sm:$0x3] %v1593
  %1595 = vst [vmem:[%s1 + $0x60] sm:$0xf] %v1524
  %v1596 = vld [vmem:[%s1 + $0x64] sm:$0x3]
  %v1597 = vsel %vm1547, %v1525, %v1596
  %1598 = vst [vmem:[%s1 + $0x64] sm:$0x3] %v1597
  %1599 = vst [vmem:[%s1 + $0x68] sm:$0xf] %v1526
  %v1600 = vld [vmem:[%s1 + $0x6c] sm:$0x3]
  %v1601 = vsel %vm1547, %v1527, %v1600
  %1602 = vst [vmem:[%s1 + $0x6c] sm:$0x3] %v1601
  %1603 = vst [vmem:[%s1 + $0x70] sm:$0xf] %v1528
  %v1604 = vld [vmem:[%s1 + $0x74] sm:$0x3]
  %v1605 = vsel %vm1547, %v1529, %v1604
  %1606 = vst [vmem:[%s1 + $0x74] sm:$0x3] %v1605
  %1607 = vst [vmem:[%s1 + $0x78] sm:$0xf] %v1530
  %v1608 = vld [vmem:[%s1 + $0x7c] sm:$0x3]
  %v1609 = vsel %vm1547, %v1531, %v1608
  %1610 = vst [vmem:[%s1 + $0x7c] sm:$0x3] %v1609
  %1611 = vst [vmem:[%s1 + $0x80] sm:$0xf] %v1532
  %v1612 = vld [vmem:[%s1 + $0x84] sm:$0x3]
  %v1613 = vsel %vm1547, %v1533, %v1612
  %1614 = vst [vmem:[%s1 + $0x84] sm:$0x3] %v1613
  %1615 = vst [vmem:[%s1 + $0x88] sm:$0xf] %v1534
  %v1616 = vld [vmem:[%s1 + $0x8c] sm:$0x3]
  %v1617 = vsel %vm1547, %v1535, %v1616
  %1618 = vst [vmem:[%s1 + $0x8c] sm:$0x3] %v1617
  %1619 = vst [vmem:[%s1 + $0x90] sm:$0xf] %v1536
  %v1620 = vld [vmem:[%s1 + $0x94] sm:$0x3]
  %v1621 = vsel %vm1547, %v1537, %v1620
  %1622 = vst [vmem:[%s1 + $0x94] sm:$0x3] %v1621
  %1623 = vst [vmem:[%s1 + $0x98] sm:$0xf] %v1538
  %v1624 = vld [vmem:[%s1 + $0x9c] sm:$0x3]
  %v1625 = vsel %vm1547, %v1539, %v1624
  %1626 = vst [vmem:[%s1 + $0x9c] sm:$0x3] %v1625
  %1627 = vst [vmem:[%s1 + $0xa0] sm:$0xf] %v1540
  %v1628 = vld [vmem:[%s1 + $0xa4] sm:$0x3]
  %v1629 = vsel %vm1547, %v1541, %v1628
  %1630 = vst [vmem:[%s1 + $0xa4] sm:$0x3] %v1629
  %1631 = vst [vmem:[%s1 + $0xa8] sm:$0xf] %v1542
  %v1632 = vld [vmem:[%s1 + $0xac] sm:$0x3]
  %v1633 = vsel %vm1547, %v1543, %v1632
  %1634 = vst [vmem:[%s1 + $0xac] sm:$0x3] %v1633
  // Predicated region
  $region6: #{mini_alexnet_forward.6} parent=0 // pred_check
    _
  $region7: #{mini_alexnet_forward.6} parent=0 // pred_check_branch
    %1636 = sbr.rel (0) target = $region9
  $region8: #{mini_alexnet_forward.6} parent=0 // pred_region
    _
  $region9: #{mini_alexnet_forward.6} parent=0 // pred_fallthru
    _
  // Predicated region
  $region10: #{mini_alexnet_forward.6} parent=0 // pred_check
    _
  $region11: #{mini_alexnet_forward.6} parent=0 // pred_check_branch
    %1638 = sbr.rel (0) target = $region13
  $region12: #{mini_alexnet_forward.6} parent=0 // pred_region
    _
  $region13: #{mini_alexnet_forward.6} parent=0 // pred_fallthru
    _

// kernel: mini_alexnet_forward.8
$region0: #{mini_alexnet_forward.8}
  #allocation0 [shape = 'u32[]', space=smem, size = 0x4, offset = 0x4, fixed_abs, tag = 'smem constant byte address 0x4 - core index']
  #allocation1 [shape = 'u32[144,128]{1,0:T(1,128)}', space=vmem, size = 0x12000, scoped, tag = 'internal scratch']
  #allocation2 [shape = 'bf16[2,6,6,256]{3,2,1,0:T(8,128)(2,1)}', space=vmem, size = 0xc000, scoped, tag = 'scratch operand']
  %s0 = inlined_call_operand.vmem [shape: bf16[2,4,4,256], index: 0, kind: input, shape index: {}]
  %s1 = inlined_call_operand.vmem [shape: bf16[2,4,4,256], index: 1, kind: output, shape index: {}]
  %s2 = sld [smem:[#allocation0]]
  $region14: #{mini_alexnet_forward.8} parent=0
    _
  %s4 = ssub.s32 1, %s2
  %s5 = scalar_select 0, %s4, %s2
  // Predicated region
  $region2: #{mini_alexnet_forward.8} parent=0 // pred_check
    _
  $region3: #{mini_alexnet_forward.8} parent=0 // pred_check_branch
    %7 = sbr.rel (0) target = $region5
  $region4: #{mini_alexnet_forward.8} parent=0 // pred_region
    _
  $region5: #{mini_alexnet_forward.8} parent=0 // pred_fallthru
    _
  %9 = vst [vmem:[#allocation2] sm:$0x77] 4286644096
  %10 = vst [vmem:[#allocation2 + $0x8] sm:$0x77] 4286644096
  %11 = vst [vmem:[#allocation2 + $0x10] sm:$0x77] 4286644096
  %12 = vst [vmem:[#allocation2 + $0x18] sm:$0x77] 4286644096
  %13 = vst [vmem:[#allocation2 + $0x20] sm:$0x77] 4286644096
  %14 = vst [vmem:[#allocation2 + $0x28] sm:$0x77] 4286644096
  %15 = vst [vmem:[#allocation2 + $0x30] sm:$0x77] 4286644096
  %16 = vst [vmem:[#allocation2 + $0x38] sm:$0x77] 4286644096
  %17 = vst [vmem:[#allocation2 + $0x40] sm:$0x77] 4286644096
  %18 = vst [vmem:[#allocation2 + $0x48] sm:$0x77] 4286644096
  %19 = vst [vmem:[#allocation2 + $0x50] sm:$0x77] 4286644096
  %20 = vst [vmem:[#allocation2 + $0x58] sm:$0x77] 4286644096
  %v21 = vld [vmem:[%s0] sm:$0xf]
  %v22 = vld [vmem:[%s0 + $0x4] sm:$0xf]
  %v23 = vld [vmem:[%s0 + $0x8] sm:$0xf]
  %v24 = vld [vmem:[%s0 + $0xc] sm:$0xf]
  %v25 = vld [vmem:[%s0 + $0x10] sm:$0xf]
  %v26 = vld [vmem:[%s0 + $0x14] sm:$0xf]
  %v27 = vld [vmem:[%s0 + $0x18] sm:$0xf]
  %v28 = vld [vmem:[%s0 + $0x1c] sm:$0xf]
  %v38 = vunpack.c.l.s4 1983009808
  %v39 = vunpack.c.0.s8 %v38
  %v40 = vlaneseq
  %v41 = vshrl.u32 %v40, 7
  %v42 = vsub.s32 %v39, %v41
  %v43 = vrot.slane %v21, %v42
  %v45 = vunpack.c.l.s4 1983009808
  %v46 = vunpack.c.0.s8 %v45
  %v47 = vlaneseq
  %v48 = vshrl.u32 %v47, 7
  %v49 = vsub.s32 %v46, %v48
  %v50 = vrot.slane %v22, %v49
  %v52 = vunpack.c.l.s4 1983009808
  %v53 = vunpack.c.0.s8 %v52
  %v54 = vlaneseq
  %v55 = vshrl.u32 %v54, 7
  %v56 = vsub.s32 %v53, %v55
  %v57 = vrot.slane %v23, %v56
  %v59 = vunpack.c.l.s4 1983009808
  %v60 = vunpack.c.0.s8 %v59
  %v61 = vlaneseq
  %v62 = vshrl.u32 %v61, 7
  %v63 = vsub.s32 %v60, %v62
  %v64 = vrot.slane %v24, %v63
  %v66 = vunpack.c.l.s4 1983009808
  %v67 = vunpack.c.0.s8 %v66
  %v68 = vlaneseq
  %v69 = vshrl.u32 %v68, 7
  %v70 = vsub.s32 %v67, %v69
  %v71 = vrot.slane %v25, %v70
  %v73 = vunpack.c.l.s4 1983009808
  %v74 = vunpack.c.0.s8 %v73
  %v75 = vlaneseq
  %v76 = vshrl.u32 %v75, 7
  %v77 = vsub.s32 %v74, %v76
  %v78 = vrot.slane %v26, %v77
  %v80 = vunpack.c.l.s4 1983009808
  %v81 = vunpack.c.0.s8 %v80
  %v82 = vlaneseq
  %v83 = vshrl.u32 %v82, 7
  %v84 = vsub.s32 %v81, %v83
  %v85 = vrot.slane %v27, %v84
  %v87 = vunpack.c.l.s4 1983009808
  %v88 = vunpack.c.0.s8 %v87
  %v89 = vlaneseq
  %v90 = vshrl.u32 %v89, 7
  %v91 = vsub.s32 %v88, %v90
  %v92 = vrot.slane %v28, %v91
  %v94 = vshrl.u32 %v43, 16
  %v96 = vrot.slane %v94, 7
  %v97 = vshll.u32 %v43, 16
  %v99 = vor.u32 %v96, %v97
  %v101 = vshrl.u32 %v50, 16
  %v103 = vrot.slane %v101, 7
  %v104 = vshll.u32 %v50, 16
  %v106 = vor.u32 %v103, %v104
  %v108 = vshrl.u32 %v57, 16
  %v110 = vrot.slane %v108, 7
  %v111 = vshll.u32 %v57, 16
  %v113 = vor.u32 %v110, %v111
  %v115 = vshrl.u32 %v64, 16
  %v117 = vrot.slane %v115, 7
  %v118 = vshll.u32 %v64, 16
  %v120 = vor.u32 %v117, %v118
  %v122 = vshrl.u32 %v71, 16
  %v124 = vrot.slane %v122, 7
  %v125 = vshll.u32 %v71, 16
  %v127 = vor.u32 %v124, %v125
  %v129 = vshrl.u32 %v78, 16
  %v131 = vrot.slane %v129, 7
  %v132 = vshll.u32 %v78, 16
  %v134 = vor.u32 %v131, %v132
  %v136 = vshrl.u32 %v85, 16
  %v138 = vrot.slane %v136, 7
  %v139 = vshll.u32 %v85, 16
  %v141 = vor.u32 %v138, %v139
  %v143 = vshrl.u32 %v92, 16
  %v145 = vrot.slane %v143, 7
  %v146 = vshll.u32 %v92, 16
  %v148 = vor.u32 %v145, %v146
  %s157 = scalar_lea.vmem [#allocation2], 8
  %vm158 = vcmask 1042432
  %vm159 = vsmask.f32 2306
  %vm160 = vmand %vm158, %vm159
  %vm161 = vcmask 1046532
  %vm162 = vsmask.f32 6418
  %vm163 = vmand %vm161, %vm162
  %vm164 = vmor %vm163, %vm160
  %v165 = vld [vmem:[%s157] sm:$0x77]
  %v166 = vsel %vm164, %v99, %v165
  %167 = vst [vmem:[%s157] sm:$0x77] %v166
  %v168 = vld [vmem:[%s157 + $0x8] sm:$0x77]
  %v169 = vsel %vm164, %v106, %v168
  %170 = vst [vmem:[%s157 + $0x8] sm:$0x77] %v169
  %v171 = vld [vmem:[%s157 + $0x10] sm:$0x77]
  %v172 = vsel %vm164, %v113, %v171
  %173 = vst [vmem:[%s157 + $0x10] sm:$0x77] %v172
  %v174 = vld [vmem:[%s157 + $0x18] sm:$0x77]
  %v175 = vsel %vm164, %v120, %v174
  %176 = vst [vmem:[%s157 + $0x18] sm:$0x77] %v175
  %v177 = vld [vmem:[%s157 + $0x30] sm:$0x77]
  %v178 = vsel %vm164, %v127, %v177
  %179 = vst [vmem:[%s157 + $0x30] sm:$0x77] %v178
  %v180 = vld [vmem:[%s157 + $0x38] sm:$0x77]
  %v181 = vsel %vm164, %v134, %v180
  %182 = vst [vmem:[%s157 + $0x38] sm:$0x77] %v181
  %v183 = vld [vmem:[%s157 + $0x40] sm:$0x77]
  %v184 = vsel %vm164, %v141, %v183
  %185 = vst [vmem:[%s157 + $0x40] sm:$0x77] %v184
  %v186 = vld [vmem:[%s157 + $0x48] sm:$0x77]
  %v187 = vsel %vm164, %v148, %v186
  %188 = vst [vmem:[%s157 + $0x48] sm:$0x77] %v187
  %v189 = vld [vmem:[#allocation2] sm:$0x77]
  %v190 = vld [vmem:[#allocation2 + $0x8] sm:$0x77]
  %v191 = vld [vmem:[#allocation2 + $0x10] sm:$0x77]
  %v192 = vld [vmem:[#allocation2 + $0x18] sm:$0x77]
  %v193 = vld [vmem:[#allocation2 + $0x20] sm:$0x77]
  %v194 = vld [vmem:[#allocation2 + $0x28] sm:$0x77]
  %v195 = vld [vmem:[#allocation2 + $0x30] sm:$0x77]
  %v196 = vld [vmem:[#allocation2 + $0x38] sm:$0x77]
  %v197 = vld [vmem:[#allocation2 + $0x40] sm:$0x77]
  %v198 = vld [vmem:[#allocation2 + $0x48] sm:$0x77]
  %v199 = vld [vmem:[#allocation2 + $0x50] sm:$0x77]
  %v200 = vld [vmem:[#allocation2 + $0x58] sm:$0x77]
  %v201 = vmax.bf16 %v189, %v190
  %v202 = vmax.bf16 %v190, %v191
  %v203 = vmax.bf16 %v191, %v192
  %v204 = vmax.bf16 %v192, %v193
  %v205 = vmax.bf16 %v195, %v196
  %v206 = vmax.bf16 %v196, %v197
  %v207 = vmax.bf16 %v197, %v198
  %v208 = vmax.bf16 %v198, %v199
  %v209 = vmax.bf16 %v201, %v191
  %v210 = vmax.bf16 %v202, %v192
  %v211 = vmax.bf16 %v203, %v193
  %v212 = vmax.bf16 %v204, %v194
  %v213 = vmax.bf16 %v205, %v197
  %v214 = vmax.bf16 %v206, %v198
  %v215 = vmax.bf16 %v207, %v199
  %v216 = vmax.bf16 %v208, %v200
  %v218 = vshrl.u32 %v209, 16
  %v220 = vrot.slane %v218, 4
  %v221 = vshll.u32 %v209, 16
  %v223 = vrot.slane %v221, 5
  %v224 = vor.u32 %v220, %v223
  %v225 = vrot.slane %v224, 4
  %v227 = vshrl.u32 %v210, 16
  %v229 = vrot.slane %v227, 4
  %v230 = vshll.u32 %v210, 16
  %v232 = vrot.slane %v230, 5
  %v233 = vor.u32 %v229, %v232
  %v234 = vrot.slane %v233, 4
  %v236 = vshrl.u32 %v211, 16
  %v238 = vrot.slane %v236, 4
  %v239 = vshll.u32 %v211, 16
  %v241 = vrot.slane %v239, 5
  %v242 = vor.u32 %v238, %v241
  %v243 = vrot.slane %v242, 4
  %v245 = vshrl.u32 %v212, 16
  %v247 = vrot.slane %v245, 4
  %v248 = vshll.u32 %v212, 16
  %v250 = vrot.slane %v248, 5
  %v251 = vor.u32 %v247, %v250
  %v252 = vrot.slane %v251, 4
  %v254 = vshrl.u32 %v213, 16
  %v256 = vrot.slane %v254, 4
  %v257 = vshll.u32 %v213, 16
  %v259 = vrot.slane %v257, 5
  %v260 = vor.u32 %v256, %v259
  %v261 = vrot.slane %v260, 4
  %v263 = vshrl.u32 %v214, 16
  %v265 = vrot.slane %v263, 4
  %v266 = vshll.u32 %v214, 16
  %v268 = vrot.slane %v266, 5
  %v269 = vor.u32 %v265, %v268
  %v270 = vrot.slane %v269, 4
  %v272 = vshrl.u32 %v215, 16
  %v274 = vrot.slane %v272, 4
  %v275 = vshll.u32 %v215, 16
  %v277 = vrot.slane %v275, 5
  %v278 = vor.u32 %v274, %v277
  %v279 = vrot.slane %v278, 4
  %v281 = vshrl.u32 %v216, 16
  %v283 = vrot.slane %v281, 4
  %v284 = vshll.u32 %v216, 16
  %v286 = vrot.slane %v284, 5
  %v287 = vor.u32 %v283, %v286
  %v288 = vrot.slane %v287, 4
  %v297 = vmax.bf16 %v209, %v225
  %v298 = vmax.bf16 %v210, %v234
  %v299 = vmax.bf16 %v211, %v243
  %v300 = vmax.bf16 %v212, %v252
  %v301 = vmax.bf16 %v213, %v261
  %v302 = vmax.bf16 %v214, %v270
  %v303 = vmax.bf16 %v215, %v279
  %v304 = vmax.bf16 %v216, %v288
  %v313 = vrot.slane %v209, 5
  %v314 = vrot.slane %v313, 4
  %v315 = vrot.slane %v210, 5
  %v316 = vrot.slane %v315, 4
  %v317 = vrot.slane %v211, 5
  %v318 = vrot.slane %v317, 4
  %v319 = vrot.slane %v212, 5
  %v320 = vrot.slane %v319, 4
  %v321 = vrot.slane %v213, 5
  %v322 = vrot.slane %v321, 4
  %v323 = vrot.slane %v214, 5
  %v324 = vrot.slane %v323, 4
  %v325 = vrot.slane %v215, 5
  %v326 = vrot.slane %v325, 4
  %v327 = vrot.slane %v216, 5
  %v328 = vrot.slane %v327, 4
  %v337 = vmax.bf16 %v297, %v314
  %v338 = vmax.bf16 %v298, %v316
  %v339 = vmax.bf16 %v299, %v318
  %v340 = vmax.bf16 %v300, %v320
  %v341 = vmax.bf16 %v301, %v322
  %v342 = vmax.bf16 %v302, %v324
  %v343 = vmax.bf16 %v303, %v326
  %v344 = vmax.bf16 %v304, %v328
  %v354 = vunpack.c.l.s4 1983009808
  %v355 = vunpack.c.0.s8 %v354
  %v356 = vlaneseq
  %v357 = vshrl.u32 %v356, 7
  %v358 = vsub.s32 %v355, %v357
  %v359 = vrot.slane %v337, %v358
  %v361 = vunpack.c.l.s4 1983009808
  %v362 = vunpack.c.0.s8 %v361
  %v363 = vlaneseq
  %v364 = vshrl.u32 %v363, 7
  %v365 = vsub.s32 %v362, %v364
  %v366 = vrot.slane %v338, %v365
  %v368 = vunpack.c.l.s4 1983009808
  %v369 = vunpack.c.0.s8 %v368
  %v370 = vlaneseq
  %v371 = vshrl.u32 %v370, 7
  %v372 = vsub.s32 %v369, %v371
  %v373 = vrot.slane %v339, %v372
  %v375 = vunpack.c.l.s4 1983009808
  %v376 = vunpack.c.0.s8 %v375
  %v377 = vlaneseq
  %v378 = vshrl.u32 %v377, 7
  %v379 = vsub.s32 %v376, %v378
  %v380 = vrot.slane %v340, %v379
  %v382 = vunpack.c.l.s4 1983009808
  %v383 = vunpack.c.0.s8 %v382
  %v384 = vlaneseq
  %v385 = vshrl.u32 %v384, 7
  %v386 = vsub.s32 %v383, %v385
  %v387 = vrot.slane %v341, %v386
  %v389 = vunpack.c.l.s4 1983009808
  %v390 = vunpack.c.0.s8 %v389
  %v391 = vlaneseq
  %v392 = vshrl.u32 %v391, 7
  %v393 = vsub.s32 %v390, %v392
  %v394 = vrot.slane %v342, %v393
  %v396 = vunpack.c.l.s4 1983009808
  %v397 = vunpack.c.0.s8 %v396
  %v398 = vlaneseq
  %v399 = vshrl.u32 %v398, 7
  %v400 = vsub.s32 %v397, %v399
  %v401 = vrot.slane %v343, %v400
  %v403 = vunpack.c.l.s4 1983009808
  %v404 = vunpack.c.0.s8 %v403
  %v405 = vlaneseq
  %v406 = vshrl.u32 %v405, 7
  %v407 = vsub.s32 %v404, %v406
  %v408 = vrot.slane %v344, %v407
  %417 = vst [vmem:[%s1] sm:$0xf] %v359
  %418 = vst [vmem:[%s1 + $0x4] sm:$0xf] %v366
  %419 = vst [vmem:[%s1 + $0x8] sm:$0xf] %v373
  %420 = vst [vmem:[%s1 + $0xc] sm:$0xf] %v380
  %421 = vst [vmem:[%s1 + $0x10] sm:$0xf] %v387
  %422 = vst [vmem:[%s1 + $0x14] sm:$0xf] %v394
  %423 = vst [vmem:[%s1 + $0x18] sm:$0xf] %v401
  %424 = vst [vmem:[%s1 + $0x1c] sm:$0xf] %v408
  // Predicated region
  $region6: #{mini_alexnet_forward.8} parent=0 // pred_check
    _
  $region7: #{mini_alexnet_forward.8} parent=0 // pred_check_branch
    %426 = sbr.rel (0) target = $region9
  $region8: #{mini_alexnet_forward.8} parent=0 // pred_region
    _
  $region9: #{mini_alexnet_forward.8} parent=0 // pred_fallthru
    _
  // Predicated region
  $region10: #{mini_alexnet_forward.8} parent=0 // pred_check
    _
  $region11: #{mini_alexnet_forward.8} parent=0 // pred_check_branch
    %428 = sbr.rel (0) target = $region13
  $region12: #{mini_alexnet_forward.8} parent=0 // pred_region
    _
  $region13: #{mini_alexnet_forward.8} parent=0 // pred_fallthru
    _

// kernel: mini_alexnet_forward.7
$region0: #{mini_alexnet_forward.7}
  #allocation0 [shape = 'u32[]', space=smem, size = 0x4, offset = 0x4, fixed_abs, tag = 'smem constant byte address 0x4 - core index']
  #allocation1 [shape = 'u32[144,128]{1,0:T(1,128)}', space=vmem, size = 0x12000, scoped, tag = 'internal scratch']
  %s0 = inlined_call_operand.vmem [shape: bf16[32,3200], index: 0, kind: input, shape index: {}]
  %s1 = inlined_call_operand.vmem [shape: bf16[3200,256], index: 1, kind: input, shape index: {}]
  %s2 = inlined_call_operand.vmem [shape: f32[1,256], index: 2, kind: input, shape index: {}]
  %s3 = inlined_call_operand.vmem [shape: bf16[32,256], index: 3, kind: output, shape index: {}]
  %s4 = sld [smem:[#allocation0]]
  $region22: #{mini_alexnet_forward.7} parent=0
    _
  %s6 = ssub.s32 1, %s4
  %s7 = scalar_select 0, %s6, %s4
  // Predicated region
  $region2: #{mini_alexnet_forward.7} parent=0 // pred_check
    _
  $region3: #{mini_alexnet_forward.7} parent=0 // pred_check_branch
    %9 = sbr.rel (0) target = $region5
  $region4: #{mini_alexnet_forward.7} parent=0 // pred_region
    _
  $region5: #{mini_alexnet_forward.7} parent=0 // pred_fallthru
    _
  // Predicated region
  $region6: #{mini_alexnet_forward.7} parent=0 // pred_check
    _
  $region7: #{mini_alexnet_forward.7} parent=0 // pred_check_branch
    %11 = sbr.rel (0) target = $region9
  $region8: #{mini_alexnet_forward.7} parent=0 // pred_region
    _
  $region9: #{mini_alexnet_forward.7} parent=0 // pred_fallthru
    _
  // Predicated region
  $region10: #{mini_alexnet_forward.7} parent=0 // pred_check
    _
  $region11: #{mini_alexnet_forward.7} parent=0 // pred_check_branch
    %13 = sbr.rel (0) target = $region13
  $region12: #{mini_alexnet_forward.7} parent=0 // pred_region
    _
  $region13: #{mini_alexnet_forward.7} parent=0 // pred_fallthru
    _
  %v15 = vld [vmem:[%s0] sm:$0xff]
  %v16 = vld [vmem:[%s0 + $0x8] sm:$0xff]
  %v17 = vld [vmem:[%s0 + $0x10] sm:$0xff]
  %v18 = vld [vmem:[%s0 + $0x18] sm:$0xff]
  %v19 = vld [vmem:[%s0 + $0x20] sm:$0xff]
  %v20 = vld [vmem:[%s0 + $0x28] sm:$0xff]
  %v21 = vld [vmem:[%s0 + $0x30] sm:$0xff]
  %v22 = vld [vmem:[%s0 + $0x38] sm:$0xff]
  %v23 = vld [vmem:[%s0 + $0x40] sm:$0xff]
  %v24 = vld [vmem:[%s0 + $0x48] sm:$0xff]
  %v25 = vld [vmem:[%s0 + $0x50] sm:$0xff]
  %v26 = vld [vmem:[%s0 + $0x58] sm:$0xff]
  %v27 = vld [vmem:[%s0 + $0x60] sm:$0xf]
  %v28 = vld [vmem:[%s0 + $0x64] sm:$0xff]
  %v29 = vld [vmem:[%s0 + $0x6c] sm:$0xff]
  %v30 = vld [vmem:[%s0 + $0x74] sm:$0xff]
  %v31 = vld [vmem:[%s0 + $0x7c] sm:$0xff]
  %v32 = vld [vmem:[%s0 + $0x84] sm:$0xff]
  %v33 = vld [vmem:[%s0 + $0x8c] sm:$0xff]
  %v34 = vld [vmem:[%s0 + $0x94] sm:$0xff]
  %v35 = vld [vmem:[%s0 + $0x9c] sm:$0xff]
  %v36 = vld [vmem:[%s0 + $0xa4] sm:$0xff]
  %v37 = vld [vmem:[%s0 + $0xac] sm:$0xff]
  %v38 = vld [vmem:[%s0 + $0xb4] sm:$0xff]
  %v39 = vld [vmem:[%s0 + $0xbc] sm:$0xff]
  %v40 = vld [vmem:[%s0 + $0xc4] sm:$0xf]
  %v41 = vld [vmem:[%s0 + $0xc8] sm:$0xff]
  %v42 = vld [vmem:[%s0 + $0xd0] sm:$0xff]
  %v43 = vld [vmem:[%s0 + $0xd8] sm:$0xff]
  %v44 = vld [vmem:[%s0 + $0xe0] sm:$0xff]
  %v45 = vld [vmem:[%s0 + $0xe8] sm:$0xff]
  %v46 = vld [vmem:[%s0 + $0xf0] sm:$0xff]
  %v47 = vld [vmem:[%s0 + $0xf8] sm:$0xff]
  %v48 = vld [vmem:[%s0 + $0x100] sm:$0xff]
  %v49 = vld [vmem:[%s0 + $0x108] sm:$0xff]
  %v50 = vld [vmem:[%s0 + $0x110] sm:$0xff]
  %v51 = vld [vmem:[%s0 + $0x118] sm:$0xff]
  %v52 = vld [vmem:[%s0 + $0x120] sm:$0xff]
  %v53 = vld [vmem:[%s0 + $0x128] sm:$0xf]
  %v54 = vld [vmem:[%s0 + $0x12c] sm:$0xff]
  %v55 = vld [vmem:[%s0 + $0x134] sm:$0xff]
  %v56 = vld [vmem:[%s0 + $0x13c] sm:$0xff]
  %v57 = vld [vmem:[%s0 + $0x144] sm:$0xff]
  %v58 = vld [vmem:[%s0 + $0x14c] sm:$0xff]
  %v59 = vld [vmem:[%s0 + $0x154] sm:$0xff]
  %v60 = vld [vmem:[%s0 + $0x15c] sm:$0xff]
  %v61 = vld [vmem:[%s0 + $0x164] sm:$0xff]
  %v62 = vld [vmem:[%s0 + $0x16c] sm:$0xff]
  %v63 = vld [vmem:[%s0 + $0x174] sm:$0xff]
  %v64 = vld [vmem:[%s0 + $0x17c] sm:$0xff]
  %v65 = vld [vmem:[%s0 + $0x184] sm:$0xff]
  %v66 = vld [vmem:[%s0 + $0x18c] sm:$0xf]
  %v67 = vld [vmem:[%s1] sm:$0xff]
  %v68 = vld [vmem:[%s1 + $0x8] sm:$0xff]
  %v69 = vld [vmem:[%s1 + $0x10] sm:$0xff]
  %v70 = vld [vmem:[%s1 + $0x18] sm:$0xff]
  %v71 = vld [vmem:[%s1 + $0x20] sm:$0xff]
  %v72 = vld [vmem:[%s1 + $0x28] sm:$0xff]
  %v73 = vld [vmem:[%s1 + $0x30] sm:$0xff]
  %v74 = vld [vmem:[%s1 + $0x38] sm:$0xff]
  %v75 = vld [vmem:[%s1 + $0x40] sm:$0xff]
  %v76 = vld [vmem:[%s1 + $0x48] sm:$0xff]
  %v77 = vld [vmem:[%s1 + $0x50] sm:$0xff]
  %v78 = vld [vmem:[%s1 + $0x58] sm:$0xff]
  %v79 = vld [vmem:[%s1 + $0x60] sm:$0xff]
  %v80 = vld [vmem:[%s1 + $0x68] sm:$0xff]
  %v81 = vld [vmem:[%s1 + $0x70] sm:$0xff]
  %v82 = vld [vmem:[%s1 + $0x78] sm:$0xff]
  %v83 = vld [vmem:[%s1 + $0x80] sm:$0xff]
  %v84 = vld [vmem:[%s1 + $0x88] sm:$0xff]
  %v85 = vld [vmem:[%s1 + $0x90] sm:$0xff]
  %v86 = vld [vmem:[%s1 + $0x98] sm:$0xff]
  %v87 = vld [vmem:[%s1 + $0xa0] sm:$0xff]
  %v88 = vld [vmem:[%s1 + $0xa8] sm:$0xff]
  %v89 = vld [vmem:[%s1 + $0xb0] sm:$0xff]
  %v90 = vld [vmem:[%s1 + $0xb8] sm:$0xff]
  %v91 = vld [vmem:[%s1 + $0xc0] sm:$0xff]
  %v92 = vld [vmem:[%s1 + $0xc8] sm:$0xff]
  %v93 = vld [vmem:[%s1 + $0xd0] sm:$0xff]
  %v94 = vld [vmem:[%s1 + $0xd8] sm:$0xff]
  %v95 = vld [vmem:[%s1 + $0xe0] sm:$0xff]
  %v96 = vld [vmem:[%s1 + $0xe8] sm:$0xff]
  %v97 = vld [vmem:[%s1 + $0xf0] sm:$0xff]
  %v98 = vld [vmem:[%s1 + $0xf8] sm:$0xff]
  %v99 = vld [vmem:[%s1 + $0x100] sm:$0xff]
  %v100 = vld [vmem:[%s1 + $0x108] sm:$0xff]
  %v101 = vld [vmem:[%s1 + $0x110] sm:$0xff]
  %v102 = vld [vmem:[%s1 + $0x118] sm:$0xff]
  %v103 = vld [vmem:[%s1 + $0x120] sm:$0xff]
  %v104 = vld [vmem:[%s1 + $0x128] sm:$0xff]
  %v105 = vld [vmem:[%s1 + $0x130] sm:$0xff]
  %v106 = vld [vmem:[%s1 + $0x138] sm:$0xff]
  %v107 = vld [vmem:[%s1 + $0x140] sm:$0xff]
  %v108 = vld [vmem:[%s1 + $0x148] sm:$0xff]
  %v109 = vld [vmem:[%s1 + $0x150] sm:$0xff]
  %v110 = vld [vmem:[%s1 + $0x158] sm:$0xff]
  %v111 = vld [vmem:[%s1 + $0x160] sm:$0xff]
  %v112 = vld [vmem:[%s1 + $0x168] sm:$0xff]
  %v113 = vld [vmem:[%s1 + $0x170] sm:$0xff]
  %v114 = vld [vmem:[%s1 + $0x178] sm:$0xff]
  %v115 = vld [vmem:[%s1 + $0x180] sm:$0xff]
  %v116 = vld [vmem:[%s1 + $0x188] sm:$0xff]
  %v117 = vld [vmem:[%s1 + $0x190] sm:$0xff]
  %v118 = vld [vmem:[%s1 + $0x198] sm:$0xff]
  %v119 = vld [vmem:[%s1 + $0x1a0] sm:$0xff]
  %v120 = vld [vmem:[%s1 + $0x1a8] sm:$0xff]
  %v121 = vld [vmem:[%s1 + $0x1b0] sm:$0xff]
  %v122 = vld [vmem:[%s1 + $0x1b8] sm:$0xff]
  %v123 = vld [vmem:[%s1 + $0x1c0] sm:$0xff]
  %v124 = vld [vmem:[%s1 + $0x1c8] sm:$0xff]
  %v125 = vld [vmem:[%s1 + $0x1d0] sm:$0xff]
  %v126 = vld [vmem:[%s1 + $0x1d8] sm:$0xff]
  %v127 = vld [vmem:[%s1 + $0x1e0] sm:$0xff]
  %v128 = vld [vmem:[%s1 + $0x1e8] sm:$0xff]
  %v129 = vld [vmem:[%s1 + $0x1f0] sm:$0xff]
  %v130 = vld [vmem:[%s1 + $0x1f8] sm:$0xff]
  %v131 = vld [vmem:[%s1 + $0x200] sm:$0xff]
  %v132 = vld [vmem:[%s1 + $0x208] sm:$0xff]
  %v133 = vld [vmem:[%s1 + $0x210] sm:$0xff]
  %v134 = vld [vmem:[%s1 + $0x218] sm:$0xff]
  %v135 = vld [vmem:[%s1 + $0x220] sm:$0xff]
  %v136 = vld [vmem:[%s1 + $0x228] sm:$0xff]
  %v137 = vld [vmem:[%s1 + $0x230] sm:$0xff]
  %v138 = vld [vmem:[%s1 + $0x238] sm:$0xff]
  %v139 = vld [vmem:[%s1 + $0x240] sm:$0xff]
  %v140 = vld [vmem:[%s1 + $0x248] sm:$0xff]
  %v141 = vld [vmem:[%s1 + $0x250] sm:$0xff]
  %v142 = vld [vmem:[%s1 + $0x258] sm:$0xff]
  %v143 = vld [vmem:[%s1 + $0x260] sm:$0xff]
  %v144 = vld [vmem:[%s1 + $0x268] sm:$0xff]
  %v145 = vld [vmem:[%s1 + $0x270] sm:$0xff]
  %v146 = vld [vmem:[%s1 + $0x278] sm:$0xff]
  %v147 = vld [vmem:[%s1 + $0x280] sm:$0xff]
  %v148 = vld [vmem:[%s1 + $0x288] sm:$0xff]
  %v149 = vld [vmem:[%s1 + $0x290] sm:$0xff]
  %v150 = vld [vmem:[%s1 + $0x298] sm:$0xff]
  %v151 = vld [vmem:[%s1 + $0x2a0] sm:$0xff]
  %v152 = vld [vmem:[%s1 + $0x2a8] sm:$0xff]
  %v153 = vld [vmem:[%s1 + $0x2b0] sm:$0xff]
  %v154 = vld [vmem:[%s1 + $0x2b8] sm:$0xff]
  %v155 = vld [vmem:[%s1 + $0x2c0] sm:$0xff]
  %v156 = vld [vmem:[%s1 + $0x2c8] sm:$0xff]
  %v157 = vld [vmem:[%s1 + $0x2d0] sm:$0xff]
  %v158 = vld [vmem:[%s1 + $0x2d8] sm:$0xff]
  %v159 = vld [vmem:[%s1 + $0x2e0] sm:$0xff]
  %v160 = vld [vmem:[%s1 + $0x2e8] sm:$0xff]
  %v161 = vld [vmem:[%s1 + $0x2f0] sm:$0xff]
  %v162 = vld [vmem:[%s1 + $0x2f8] sm:$0xff]
  %v163 = vld [vmem:[%s1 + $0x300] sm:$0xff]
  %v164 = vld [vmem:[%s1 + $0x308] sm:$0xff]
  %v165 = vld [vmem:[%s1 + $0x310] sm:$0xff]
  %v166 = vld [vmem:[%s1 + $0x318] sm:$0xff]
  %v167 = vld [vmem:[%s1 + $0x320] sm:$0xff]
  %v168 = vld [vmem:[%s1 + $0x328] sm:$0xff]
  %v169 = vld [vmem:[%s1 + $0x330] sm:$0xff]
  %v170 = vld [vmem:[%s1 + $0x338] sm:$0xff]
  %v171 = vld [vmem:[%s1 + $0x340] sm:$0xff]
  %v172 = vld [vmem:[%s1 + $0x348] sm:$0xff]
  %v173 = vld [vmem:[%s1 + $0x350] sm:$0xff]
  %v174 = vld [vmem:[%s1 + $0x358] sm:$0xff]
  %v175 = vld [vmem:[%s1 + $0x360] sm:$0xff]
  %v176 = vld [vmem:[%s1 + $0x368] sm:$0xff]
  %v177 = vld [vmem:[%s1 + $0x370] sm:$0xff]
  %v178 = vld [vmem:[%s1 + $0x378] sm:$0xff]
  %v179 = vld [vmem:[%s1 + $0x380] sm:$0xff]
  %v180 = vld [vmem:[%s1 + $0x388] sm:$0xff]
  %v181 = vld [vmem:[%s1 + $0x390] sm:$0xff]
  %v182 = vld [vmem:[%s1 + $0x398] sm:$0xff]
  %v183 = vld [vmem:[%s1 + $0x3a0] sm:$0xff]
  %v184 = vld [vmem:[%s1 + $0x3a8] sm:$0xff]
  %v185 = vld [vmem:[%s1 + $0x3b0] sm:$0xff]
  %v186 = vld [vmem:[%s1 + $0x3b8] sm:$0xff]
  %v187 = vld [vmem:[%s1 + $0x3c0] sm:$0xff]
  %v188 = vld [vmem:[%s1 + $0x3c8] sm:$0xff]
  %v189 = vld [vmem:[%s1 + $0x3d0] sm:$0xff]
  %v190 = vld [vmem:[%s1 + $0x3d8] sm:$0xff]
  %v191 = vld [vmem:[%s1 + $0x3e0] sm:$0xff]
  %v192 = vld [vmem:[%s1 + $0x3e8] sm:$0xff]
  %v193 = vld [vmem:[%s1 + $0x3f0] sm:$0xff]
  %v194 = vld [vmem:[%s1 + $0x3f8] sm:$0xff]
  %v195 = vld [vmem:[%s1 + $0x400] sm:$0xff]
  %v196 = vld [vmem:[%s1 + $0x408] sm:$0xff]
  %v197 = vld [vmem:[%s1 + $0x410] sm:$0xff]
  %v198 = vld [vmem:[%s1 + $0x418] sm:$0xff]
  %v199 = vld [vmem:[%s1 + $0x420] sm:$0xff]
  %v200 = vld [vmem:[%s1 + $0x428] sm:$0xff]
  %v201 = vld [vmem:[%s1 + $0x430] sm:$0xff]
  %v202 = vld [vmem:[%s1 + $0x438] sm:$0xff]
  %v203 = vld [vmem:[%s1 + $0x440] sm:$0xff]
  %v204 = vld [vmem:[%s1 + $0x448] sm:$0xff]
  %v205 = vld [vmem:[%s1 + $0x450] sm:$0xff]
  %v206 = vld [vmem:[%s1 + $0x458] sm:$0xff]
  %v207 = vld [vmem:[%s1 + $0x460] sm:$0xff]
  %v208 = vld [vmem:[%s1 + $0x468] sm:$0xff]
  %v209 = vld [vmem:[%s1 + $0x470] sm:$0xff]
  %v210 = vld [vmem:[%s1 + $0x478] sm:$0xff]
  %v211 = vld [vmem:[%s1 + $0x480] sm:$0xff]
  %v212 = vld [vmem:[%s1 + $0x488] sm:$0xff]
  %v213 = vld [vmem:[%s1 + $0x490] sm:$0xff]
  %v214 = vld [vmem:[%s1 + $0x498] sm:$0xff]
  %v215 = vld [vmem:[%s1 + $0x4a0] sm:$0xff]
  %v216 = vld [vmem:[%s1 + $0x4a8] sm:$0xff]
  %v217 = vld [vmem:[%s1 + $0x4b0] sm:$0xff]
  %v218 = vld [vmem:[%s1 + $0x4b8] sm:$0xff]
  %v219 = vld [vmem:[%s1 + $0x4c0] sm:$0xff]
  %v220 = vld [vmem:[%s1 + $0x4c8] sm:$0xff]
  %v221 = vld [vmem:[%s1 + $0x4d0] sm:$0xff]
  %v222 = vld [vmem:[%s1 + $0x4d8] sm:$0xff]
  %v223 = vld [vmem:[%s1 + $0x4e0] sm:$0xff]
  %v224 = vld [vmem:[%s1 + $0x4e8] sm:$0xff]
  %v225 = vld [vmem:[%s1 + $0x4f0] sm:$0xff]
  %v226 = vld [vmem:[%s1 + $0x4f8] sm:$0xff]
  %v227 = vld [vmem:[%s1 + $0x500] sm:$0xff]
  %v228 = vld [vmem:[%s1 + $0x508] sm:$0xff]
  %v229 = vld [vmem:[%s1 + $0x510] sm:$0xff]
  %v230 = vld [vmem:[%s1 + $0x518] sm:$0xff]
  %v231 = vld [vmem:[%s1 + $0x520] sm:$0xff]
  %v232 = vld [vmem:[%s1 + $0x528] sm:$0xff]
  %v233 = vld [vmem:[%s1 + $0x530] sm:$0xff]
  %v234 = vld [vmem:[%s1 + $0x538] sm:$0xff]
  %v235 = vld [vmem:[%s1 + $0x540] sm:$0xff]
  %v236 = vld [vmem:[%s1 + $0x548] sm:$0xff]
  %v237 = vld [vmem:[%s1 + $0x550] sm:$0xff]
  %v238 = vld [vmem:[%s1 + $0x558] sm:$0xff]
  %v239 = vld [vmem:[%s1 + $0x560] sm:$0xff]
  %v240 = vld [vmem:[%s1 + $0x568] sm:$0xff]
  %v241 = vld [vmem:[%s1 + $0x570] sm:$0xff]
  %v242 = vld [vmem:[%s1 + $0x578] sm:$0xff]
  %v243 = vld [vmem:[%s1 + $0x580] sm:$0xff]
  %v244 = vld [vmem:[%s1 + $0x588] sm:$0xff]
  %v245 = vld [vmem:[%s1 + $0x590] sm:$0xff]
  %v246 = vld [vmem:[%s1 + $0x598] sm:$0xff]
  %v247 = vld [vmem:[%s1 + $0x5a0] sm:$0xff]
  %v248 = vld [vmem:[%s1 + $0x5a8] sm:$0xff]
  %v249 = vld [vmem:[%s1 + $0x5b0] sm:$0xff]
  %v250 = vld [vmem:[%s1 + $0x5b8] sm:$0xff]
  %v251 = vld [vmem:[%s1 + $0x5c0] sm:$0xff]
  %v252 = vld [vmem:[%s1 + $0x5c8] sm:$0xff]
  %v253 = vld [vmem:[%s1 + $0x5d0] sm:$0xff]
  %v254 = vld [vmem:[%s1 + $0x5d8] sm:$0xff]
  %v255 = vld [vmem:[%s1 + $0x5e0] sm:$0xff]
  %v256 = vld [vmem:[%s1 + $0x5e8] sm:$0xff]
  %v257 = vld [vmem:[%s1 + $0x5f0] sm:$0xff]
  %v258 = vld [vmem:[%s1 + $0x5f8] sm:$0xff]
  %v259 = vld [vmem:[%s1 + $0x600] sm:$0xff]
  %v260 = vld [vmem:[%s1 + $0x608] sm:$0xff]
  %v261 = vld [vmem:[%s1 + $0x610] sm:$0xff]
  %v262 = vld [vmem:[%s1 + $0x618] sm:$0xff]
  %v263 = vld [vmem:[%s1 + $0x620] sm:$0xff]
  %v264 = vld [vmem:[%s1 + $0x628] sm:$0xff]
  %v265 = vld [vmem:[%s1 + $0x630] sm:$0xff]
  %v266 = vld [vmem:[%s1 + $0x638] sm:$0xff]
  %v267 = vld [vmem:[%s1 + $0x640] sm:$0xff]
  %v268 = vld [vmem:[%s1 + $0x648] sm:$0xff]
  %v269 = vld [vmem:[%s1 + $0x650] sm:$0xff]
  %v270 = vld [vmem:[%s1 + $0x658] sm:$0xff]
  %v271 = vld [vmem:[%s1 + $0x660] sm:$0xff]
  %v272 = vld [vmem:[%s1 + $0x668] sm:$0xff]
  %v273 = vld [vmem:[%s1 + $0x670] sm:$0xff]
  %v274 = vld [vmem:[%s1 + $0x678] sm:$0xff]
  %v275 = vld [vmem:[%s1 + $0x680] sm:$0xff]
  %v276 = vld [vmem:[%s1 + $0x688] sm:$0xff]
  %v277 = vld [vmem:[%s1 + $0x690] sm:$0xff]
  %v278 = vld [vmem:[%s1 + $0x698] sm:$0xff]
  %v279 = vld [vmem:[%s1 + $0x6a0] sm:$0xff]
  %v280 = vld [vmem:[%s1 + $0x6a8] sm:$0xff]
  %v281 = vld [vmem:[%s1 + $0x6b0] sm:$0xff]
  %v282 = vld [vmem:[%s1 + $0x6b8] sm:$0xff]
  %v283 = vld [vmem:[%s1 + $0x6c0] sm:$0xff]
  %v284 = vld [vmem:[%s1 + $0x6c8] sm:$0xff]
  %v285 = vld [vmem:[%s1 + $0x6d0] sm:$0xff]
  %v286 = vld [vmem:[%s1 + $0x6d8] sm:$0xff]
  %v287 = vld [vmem:[%s1 + $0x6e0] sm:$0xff]
  %v288 = vld [vmem:[%s1 + $0x6e8] sm:$0xff]
  %v289 = vld [vmem:[%s1 + $0x6f0] sm:$0xff]
  %v290 = vld [vmem:[%s1 + $0x6f8] sm:$0xff]
  %v291 = vld [vmem:[%s1 + $0x700] sm:$0xff]
  %v292 = vld [vmem:[%s1 + $0x708] sm:$0xff]
  %v293 = vld [vmem:[%s1 + $0x710] sm:$0xff]
  %v294 = vld [vmem:[%s1 + $0x718] sm:$0xff]
  %v295 = vld [vmem:[%s1 + $0x720] sm:$0xff]
  %v296 = vld [vmem:[%s1 + $0x728] sm:$0xff]
  %v297 = vld [vmem:[%s1 + $0x730] sm:$0xff]
  %v298 = vld [vmem:[%s1 + $0x738] sm:$0xff]
  %v299 = vld [vmem:[%s1 + $0x740] sm:$0xff]
  %v300 = vld [vmem:[%s1 + $0x748] sm:$0xff]
  %v301 = vld [vmem:[%s1 + $0x750] sm:$0xff]
  %v302 = vld [vmem:[%s1 + $0x758] sm:$0xff]
  %v303 = vld [vmem:[%s1 + $0x760] sm:$0xff]
  %v304 = vld [vmem:[%s1 + $0x768] sm:$0xff]
  %v305 = vld [vmem:[%s1 + $0x770] sm:$0xff]
  %v306 = vld [vmem:[%s1 + $0x778] sm:$0xff]
  %v307 = vld [vmem:[%s1 + $0x780] sm:$0xff]
  %v308 = vld [vmem:[%s1 + $0x788] sm:$0xff]
  %v309 = vld [vmem:[%s1 + $0x790] sm:$0xff]
  %v310 = vld [vmem:[%s1 + $0x798] sm:$0xff]
  %v311 = vld [vmem:[%s1 + $0x7a0] sm:$0xff]
  %v312 = vld [vmem:[%s1 + $0x7a8] sm:$0xff]
  %v313 = vld [vmem:[%s1 + $0x7b0] sm:$0xff]
  %v314 = vld [vmem:[%s1 + $0x7b8] sm:$0xff]
  %v315 = vld [vmem:[%s1 + $0x7c0] sm:$0xff]
  %v316 = vld [vmem:[%s1 + $0x7c8] sm:$0xff]
  %v317 = vld [vmem:[%s1 + $0x7d0] sm:$0xff]
  %v318 = vld [vmem:[%s1 + $0x7d8] sm:$0xff]
  %v319 = vld [vmem:[%s1 + $0x7e0] sm:$0xff]
  %v320 = vld [vmem:[%s1 + $0x7e8] sm:$0xff]
  %v321 = vld [vmem:[%s1 + $0x7f0] sm:$0xff]
  %v322 = vld [vmem:[%s1 + $0x7f8] sm:$0xff]
  %v323 = vld [vmem:[%s1 + $0x800] sm:$0xff]
  %v324 = vld [vmem:[%s1 + $0x808] sm:$0xff]
  %v325 = vld [vmem:[%s1 + $0x810] sm:$0xff]
  %v326 = vld [vmem:[%s1 + $0x818] sm:$0xff]
  %v327 = vld [vmem:[%s1 + $0x820] sm:$0xff]
  %v328 = vld [vmem:[%s1 + $0x828] sm:$0xff]
  %v329 = vld [vmem:[%s1 + $0x830] sm:$0xff]
  %v330 = vld [vmem:[%s1 + $0x838] sm:$0xff]
  %v331 = vld [vmem:[%s1 + $0x840] sm:$0xff]
  %v332 = vld [vmem:[%s1 + $0x848] sm:$0xff]
  %v333 = vld [vmem:[%s1 + $0x850] sm:$0xff]
  %v334 = vld [vmem:[%s1 + $0x858] sm:$0xff]
  %v335 = vld [vmem:[%s1 + $0x860] sm:$0xff]
  %v336 = vld [vmem:[%s1 + $0x868] sm:$0xff]
  %v337 = vld [vmem:[%s1 + $0x870] sm:$0xff]
  %v338 = vld [vmem:[%s1 + $0x878] sm:$0xff]
  %v339 = vld [vmem:[%s1 + $0x880] sm:$0xff]
  %v340 = vld [vmem:[%s1 + $0x888] sm:$0xff]
  %v341 = vld [vmem:[%s1 + $0x890] sm:$0xff]
  %v342 = vld [vmem:[%s1 + $0x898] sm:$0xff]
  %v343 = vld [vmem:[%s1 + $0x8a0] sm:$0xff]
  %v344 = vld [vmem:[%s1 + $0x8a8] sm:$0xff]
  %v345 = vld [vmem:[%s1 + $0x8b0] sm:$0xff]
  %v346 = vld [vmem:[%s1 + $0x8b8] sm:$0xff]
  %v347 = vld [vmem:[%s1 + $0x8c0] sm:$0xff]
  %v348 = vld [vmem:[%s1 + $0x8c8] sm:$0xff]
  %v349 = vld [vmem:[%s1 + $0x8d0] sm:$0xff]
  %v350 = vld [vmem:[%s1 + $0x8d8] sm:$0xff]
  %v351 = vld [vmem:[%s1 + $0x8e0] sm:$0xff]
  %v352 = vld [vmem:[%s1 + $0x8e8] sm:$0xff]
  %v353 = vld [vmem:[%s1 + $0x8f0] sm:$0xff]
  %v354 = vld [vmem:[%s1 + $0x8f8] sm:$0xff]
  %v355 = vld [vmem:[%s1 + $0x900] sm:$0xff]
  %v356 = vld [vmem:[%s1 + $0x908] sm:$0xff]
  %v357 = vld [vmem:[%s1 + $0x910] sm:$0xff]
  %v358 = vld [vmem:[%s1 + $0x918] sm:$0xff]
  %v359 = vld [vmem:[%s1 + $0x920] sm:$0xff]
  %v360 = vld [vmem:[%s1 + $0x928] sm:$0xff]
  %v361 = vld [vmem:[%s1 + $0x930] sm:$0xff]
  %v362 = vld [vmem:[%s1 + $0x938] sm:$0xff]
  %v363 = vld [vmem:[%s1 + $0x940] sm:$0xff]
  %v364 = vld [vmem:[%s1 + $0x948] sm:$0xff]
  %v365 = vld [vmem:[%s1 + $0x950] sm:$0xff]
  %v366 = vld [vmem:[%s1 + $0x958] sm:$0xff]
  %v367 = vld [vmem:[%s1 + $0x960] sm:$0xff]
  %v368 = vld [vmem:[%s1 + $0x968] sm:$0xff]
  %v369 = vld [vmem:[%s1 + $0x970] sm:$0xff]
  %v370 = vld [vmem:[%s1 + $0x978] sm:$0xff]
  %v371 = vld [vmem:[%s1 + $0x980] sm:$0xff]
  %v372 = vld [vmem:[%s1 + $0x988] sm:$0xff]
  %v373 = vld [vmem:[%s1 + $0x990] sm:$0xff]
  %v374 = vld [vmem:[%s1 + $0x998] sm:$0xff]
  %v375 = vld [vmem:[%s1 + $0x9a0] sm:$0xff]
  %v376 = vld [vmem:[%s1 + $0x9a8] sm:$0xff]
  %v377 = vld [vmem:[%s1 + $0x9b0] sm:$0xff]
  %v378 = vld [vmem:[%s1 + $0x9b8] sm:$0xff]
  %v379 = vld [vmem:[%s1 + $0x9c0] sm:$0xff]
  %v380 = vld [vmem:[%s1 + $0x9c8] sm:$0xff]
  %v381 = vld [vmem:[%s1 + $0x9d0] sm:$0xff]
  %v382 = vld [vmem:[%s1 + $0x9d8] sm:$0xff]
  %v383 = vld [vmem:[%s1 + $0x9e0] sm:$0xff]
  %v384 = vld [vmem:[%s1 + $0x9e8] sm:$0xff]
  %v385 = vld [vmem:[%s1 + $0x9f0] sm:$0xff]
  %v386 = vld [vmem:[%s1 + $0x9f8] sm:$0xff]
  %v387 = vld [vmem:[%s1 + $0xa00] sm:$0xff]
  %v388 = vld [vmem:[%s1 + $0xa08] sm:$0xff]
  %v389 = vld [vmem:[%s1 + $0xa10] sm:$0xff]
  %v390 = vld [vmem:[%s1 + $0xa18] sm:$0xff]
  %v391 = vld [vmem:[%s1 + $0xa20] sm:$0xff]
  %v392 = vld [vmem:[%s1 + $0xa28] sm:$0xff]
  %v393 = vld [vmem:[%s1 + $0xa30] sm:$0xff]
  %v394 = vld [vmem:[%s1 + $0xa38] sm:$0xff]
  %v395 = vld [vmem:[%s1 + $0xa40] sm:$0xff]
  %v396 = vld [vmem:[%s1 + $0xa48] sm:$0xff]
  %v397 = vld [vmem:[%s1 + $0xa50] sm:$0xff]
  %v398 = vld [vmem:[%s1 + $0xa58] sm:$0xff]
  %v399 = vld [vmem:[%s1 + $0xa60] sm:$0xff]
  %v400 = vld [vmem:[%s1 + $0xa68] sm:$0xff]
  %v401 = vld [vmem:[%s1 + $0xa70] sm:$0xff]
  %v402 = vld [vmem:[%s1 + $0xa78] sm:$0xff]
  %v403 = vld [vmem:[%s1 + $0xa80] sm:$0xff]
  %v404 = vld [vmem:[%s1 + $0xa88] sm:$0xff]
  %v405 = vld [vmem:[%s1 + $0xa90] sm:$0xff]
  %v406 = vld [vmem:[%s1 + $0xa98] sm:$0xff]
  %v407 = vld [vmem:[%s1 + $0xaa0] sm:$0xff]
  %v408 = vld [vmem:[%s1 + $0xaa8] sm:$0xff]
  %v409 = vld [vmem:[%s1 + $0xab0] sm:$0xff]
  %v410 = vld [vmem:[%s1 + $0xab8] sm:$0xff]
  %v411 = vld [vmem:[%s1 + $0xac0] sm:$0xff]
  %v412 = vld [vmem:[%s1 + $0xac8] sm:$0xff]
  %v413 = vld [vmem:[%s1 + $0xad0] sm:$0xff]
  %v414 = vld [vmem:[%s1 + $0xad8] sm:$0xff]
  %v415 = vld [vmem:[%s1 + $0xae0] sm:$0xff]
  %v416 = vld [vmem:[%s1 + $0xae8] sm:$0xff]
  %v417 = vld [vmem:[%s1 + $0xaf0] sm:$0xff]
  %v418 = vld [vmem:[%s1 + $0xaf8] sm:$0xff]
  %v419 = vld [vmem:[%s1 + $0xb00] sm:$0xff]
  %v420 = vld [vmem:[%s1 + $0xb08] sm:$0xff]
  %v421 = vld [vmem:[%s1 + $0xb10] sm:$0xff]
  %v422 = vld [vmem:[%s1 + $0xb18] sm:$0xff]
  %v423 = vld [vmem:[%s1 + $0xb20] sm:$0xff]
  %v424 = vld [vmem:[%s1 + $0xb28] sm:$0xff]
  %v425 = vld [vmem:[%s1 + $0xb30] sm:$0xff]
  %v426 = vld [vmem:[%s1 + $0xb38] sm:$0xff]
  %v427 = vld [vmem:[%s1 + $0xb40] sm:$0xff]
  %v428 = vld [vmem:[%s1 + $0xb48] sm:$0xff]
  %v429 = vld [vmem:[%s1 + $0xb50] sm:$0xff]
  %v430 = vld [vmem:[%s1 + $0xb58] sm:$0xff]
  %v431 = vld [vmem:[%s1 + $0xb60] sm:$0xff]
  %v432 = vld [vmem:[%s1 + $0xb68] sm:$0xff]
  %v433 = vld [vmem:[%s1 + $0xb70] sm:$0xff]
  %v434 = vld [vmem:[%s1 + $0xb78] sm:$0xff]
  %v435 = vld [vmem:[%s1 + $0xb80] sm:$0xff]
  %v436 = vld [vmem:[%s1 + $0xb88] sm:$0xff]
  %v437 = vld [vmem:[%s1 + $0xb90] sm:$0xff]
  %v438 = vld [vmem:[%s1 + $0xb98] sm:$0xff]
  %v439 = vld [vmem:[%s1 + $0xba0] sm:$0xff]
  %v440 = vld [vmem:[%s1 + $0xba8] sm:$0xff]
  %v441 = vld [vmem:[%s1 + $0xbb0] sm:$0xff]
  %v442 = vld [vmem:[%s1 + $0xbb8] sm:$0xff]
  %v443 = vld [vmem:[%s1 + $0xbc0] sm:$0xff]
  %v444 = vld [vmem:[%s1 + $0xbc8] sm:$0xff]
  %v445 = vld [vmem:[%s1 + $0xbd0] sm:$0xff]
  %v446 = vld [vmem:[%s1 + $0xbd8] sm:$0xff]
  %v447 = vld [vmem:[%s1 + $0xbe0] sm:$0xff]
  %v448 = vld [vmem:[%s1 + $0xbe8] sm:$0xff]
  %v449 = vld [vmem:[%s1 + $0xbf0] sm:$0xff]
  %v450 = vld [vmem:[%s1 + $0xbf8] sm:$0xff]
  %v451 = vld [vmem:[%s1 + $0xc00] sm:$0xff]
  %v452 = vld [vmem:[%s1 + $0xc08] sm:$0xff]
  %v453 = vld [vmem:[%s1 + $0xc10] sm:$0xff]
  %v454 = vld [vmem:[%s1 + $0xc18] sm:$0xff]
  %v455 = vld [vmem:[%s1 + $0xc20] sm:$0xff]
  %v456 = vld [vmem:[%s1 + $0xc28] sm:$0xff]
  %v457 = vld [vmem:[%s1 + $0xc30] sm:$0xff]
  %v458 = vld [vmem:[%s1 + $0xc38] sm:$0xff]
  %v459 = vld [vmem:[%s1 + $0xc40] sm:$0xff]
  %v460 = vld [vmem:[%s1 + $0xc48] sm:$0xff]
  %v461 = vld [vmem:[%s1 + $0xc50] sm:$0xff]
  %v462 = vld [vmem:[%s1 + $0xc58] sm:$0xff]
  %v463 = vld [vmem:[%s1 + $0xc60] sm:$0xff]
  %v464 = vld [vmem:[%s1 + $0xc68] sm:$0xff]
  %v465 = vld [vmem:[%s1 + $0xc70] sm:$0xff]
  %v466 = vld [vmem:[%s1 + $0xc78] sm:$0xff]
  %v467 = vld [vmem:[%s2] sm:$0x3]
  %v469 = vlaneseq
  %v470 = vshrl.u32 %v469, 7
  %v471 = vsub.s32 0, %v470
  %v472 = vrot.slane %v467, %v471
  %v473 = vlaneseq
  %v474 = vshrl.u32 %v473, 7
  %v475 = vsub.s32 1, %v474
  %v476 = vrot.slane %v467, %v475
  %v531 = vunpack.c.l.b16 %v15
  %v532 = vunpack.c.h.b16 %v15
  %v533 = vunpack.c.l.b16 %v16
  %v534 = vunpack.c.h.b16 %v16
  %v535 = vunpack.c.l.b16 %v17
  %v536 = vunpack.c.h.b16 %v17
  %v537 = vunpack.c.l.b16 %v18
  %v538 = vunpack.c.h.b16 %v18
  %v539 = vunpack.c.l.b16 %v19
  %v540 = vunpack.c.h.b16 %v19
  %v541 = vunpack.c.l.b16 %v20
  %v542 = vunpack.c.h.b16 %v20
  %v543 = vunpack.c.l.b16 %v21
  %v544 = vunpack.c.h.b16 %v21
  %v545 = vunpack.c.l.b16 %v22
  %v546 = vunpack.c.h.b16 %v22
  %v547 = vunpack.c.l.b16 %v23
  %v548 = vunpack.c.h.b16 %v23
  %v549 = vunpack.c.l.b16 %v24
  %v550 = vunpack.c.h.b16 %v24
  %v551 = vunpack.c.l.b16 %v25
  %v552 = vunpack.c.h.b16 %v25
  %v553 = vunpack.c.l.b16 %v26
  %v554 = vunpack.c.h.b16 %v26
  %v555 = vunpack.c.l.b16 %v27
  %v556 = vunpack.c.l.b16 %v28
  %v557 = vunpack.c.h.b16 %v28
  %v558 = vunpack.c.l.b16 %v29
  %v559 = vunpack.c.h.b16 %v29
  %v560 = vunpack.c.l.b16 %v30
  %v561 = vunpack.c.h.b16 %v30
  %v562 = vunpack.c.l.b16 %v31
  %v563 = vunpack.c.h.b16 %v31
  %v564 = vunpack.c.l.b16 %v32
  %v565 = vunpack.c.h.b16 %v32
  %v566 = vunpack.c.l.b16 %v33
  %v567 = vunpack.c.h.b16 %v33
  %v568 = vunpack.c.l.b16 %v34
  %v569 = vunpack.c.h.b16 %v34
  %v570 = vunpack.c.l.b16 %v35
  %v571 = vunpack.c.h.b16 %v35
  %v572 = vunpack.c.l.b16 %v36
  %v573 = vunpack.c.h.b16 %v36
  %v574 = vunpack.c.l.b16 %v37
  %v575 = vunpack.c.h.b16 %v37
  %v576 = vunpack.c.l.b16 %v38
  %v577 = vunpack.c.h.b16 %v38
  %v578 = vunpack.c.l.b16 %v39
  %v579 = vunpack.c.h.b16 %v39
  %v580 = vunpack.c.l.b16 %v40
  %v581 = vunpack.c.l.b16 %v41
  %v582 = vunpack.c.h.b16 %v41
  %v583 = vunpack.c.l.b16 %v42
  %v584 = vunpack.c.h.b16 %v42
  %v585 = vunpack.c.l.b16 %v43
  %v586 = vunpack.c.h.b16 %v43
  %v587 = vunpack.c.l.b16 %v44
  %v588 = vunpack.c.h.b16 %v44
  %v589 = vunpack.c.l.b16 %v45
  %v590 = vunpack.c.h.b16 %v45
  %v591 = vunpack.c.l.b16 %v46
  %v592 = vunpack.c.h.b16 %v46
  %v593 = vunpack.c.l.b16 %v47
  %v594 = vunpack.c.h.b16 %v47
  %v595 = vunpack.c.l.b16 %v48
  %v596 = vunpack.c.h.b16 %v48
  %v597 = vunpack.c.l.b16 %v49
  %v598 = vunpack.c.h.b16 %v49
  %v599 = vunpack.c.l.b16 %v50
  %v600 = vunpack.c.h.b16 %v50
  %v601 = vunpack.c.l.b16 %v51
  %v602 = vunpack.c.h.b16 %v51
  %v603 = vunpack.c.l.b16 %v52
  %v604 = vunpack.c.h.b16 %v52
  %v605 = vunpack.c.l.b16 %v53
  %v606 = vunpack.c.l.b16 %v54
  %v607 = vunpack.c.h.b16 %v54
  %v608 = vunpack.c.l.b16 %v55
  %v609 = vunpack.c.h.b16 %v55
  %v610 = vunpack.c.l.b16 %v56
  %v611 = vunpack.c.h.b16 %v56
  %v612 = vunpack.c.l.b16 %v57
  %v613 = vunpack.c.h.b16 %v57
  %v614 = vunpack.c.l.b16 %v58
  %v615 = vunpack.c.h.b16 %v58
  %v616 = vunpack.c.l.b16 %v59
  %v617 = vunpack.c.h.b16 %v59
  %v618 = vunpack.c.l.b16 %v60
  %v619 = vunpack.c.h.b16 %v60
  %v620 = vunpack.c.l.b16 %v61
  %v621 = vunpack.c.h.b16 %v61
  %v622 = vunpack.c.l.b16 %v62
  %v623 = vunpack.c.h.b16 %v62
  %v624 = vunpack.c.l.b16 %v63
  %v625 = vunpack.c.h.b16 %v63
  %v626 = vunpack.c.l.b16 %v64
  %v627 = vunpack.c.h.b16 %v64
  %v628 = vunpack.c.l.b16 %v65
  %v629 = vunpack.c.h.b16 %v65
  %v630 = vunpack.c.l.b16 %v66
  %v631 = vpack.c.b16 %v556, %v531
  %v632 = vpack.c.b16 %v557, %v532
  %v633 = vpack.c.b16 %v558, %v533
  %v634 = vpack.c.b16 %v559, %v534
  %v635 = vpack.c.b16 %v560, %v535
  %v636 = vpack.c.b16 %v561, %v536
  %v637 = vpack.c.b16 %v562, %v537
  %v638 = vpack.c.b16 %v563, %v538
  %v639 = vpack.c.b16 %v564, %v539
  %v640 = vpack.c.b16 %v565, %v540
  %v641 = vpack.c.b16 %v566, %v541
  %v642 = vpack.c.b16 %v567, %v542
  %v643 = vpack.c.b16 %v568, %v543
  %v644 = vpack.c.b16 %v569, %v544
  %v645 = vpack.c.b16 %v570, %v545
  %v646 = vpack.c.b16 %v571, %v546
  %v647 = vpack.c.b16 %v572, %v547
  %v648 = vpack.c.b16 %v573, %v548
  %v649 = vpack.c.b16 %v574, %v549
  %v650 = vpack.c.b16 %v575, %v550
  %v651 = vpack.c.b16 %v576, %v551
  %v652 = vpack.c.b16 %v577, %v552
  %v653 = vpack.c.b16 %v578, %v553
  %v654 = vpack.c.b16 %v579, %v554
  %v655 = vpack.c.b16 %v580, %v555
  %v656 = vpack.c.b16 %v606, %v581
  %v657 = vpack.c.b16 %v607, %v582
  %v658 = vpack.c.b16 %v608, %v583
  %v659 = vpack.c.b16 %v609, %v584
  %v660 = vpack.c.b16 %v610, %v585
  %v661 = vpack.c.b16 %v611, %v586
  %v662 = vpack.c.b16 %v612, %v587
  %v663 = vpack.c.b16 %v613, %v588
  %v664 = vpack.c.b16 %v614, %v589
  %v665 = vpack.c.b16 %v615, %v590
  %v666 = vpack.c.b16 %v616, %v591
  %v667 = vpack.c.b16 %v617, %v592
  %v668 = vpack.c.b16 %v618, %v593
  %v669 = vpack.c.b16 %v619, %v594
  %v670 = vpack.c.b16 %v620, %v595
  %v671 = vpack.c.b16 %v621, %v596
  %v672 = vpack.c.b16 %v622, %v597
  %v673 = vpack.c.b16 %v623, %v598
  %v674 = vpack.c.b16 %v624, %v599
  %v675 = vpack.c.b16 %v625, %v600
  %v676 = vpack.c.b16 %v626, %v601
  %v677 = vpack.c.b16 %v627, %v602
  %v678 = vpack.c.b16 %v628, %v603
  %v679 = vpack.c.b16 %v629, %v604
  %v680 = vpack.c.b16 %v630, %v605
  %v1131 = vunpack.c.l.b16 %v67
  %v1132 = vunpack.c.h.b16 %v67
  %v1133 = vunpack.c.l.b16 %v68
  %v1134 = vunpack.c.h.b16 %v68
  %v1135 = vunpack.c.l.b16 %v69
  %v1136 = vunpack.c.h.b16 %v69
  %v1137 = vunpack.c.l.b16 %v70
  %v1138 = vunpack.c.h.b16 %v70
  %v1139 = vunpack.c.l.b16 %v71
  %v1140 = vunpack.c.h.b16 %v71
  %v1141 = vunpack.c.l.b16 %v72
  %v1142 = vunpack.c.h.b16 %v72
  %v1143 = vunpack.c.l.b16 %v73
  %v1144 = vunpack.c.h.b16 %v73
  %v1145 = vunpack.c.l.b16 %v74
  %v1146 = vunpack.c.h.b16 %v74
  %v1147 = vunpack.c.l.b16 %v75
  %v1148 = vunpack.c.h.b16 %v75
  %v1149 = vunpack.c.l.b16 %v76
  %v1150 = vunpack.c.h.b16 %v76
  %v1151 = vunpack.c.l.b16 %v77
  %v1152 = vunpack.c.h.b16 %v77
  %v1153 = vunpack.c.l.b16 %v78
  %v1154 = vunpack.c.h.b16 %v78
  %v1155 = vunpack.c.l.b16 %v79
  %v1156 = vunpack.c.h.b16 %v79
  %v1157 = vunpack.c.l.b16 %v80
  %v1158 = vunpack.c.h.b16 %v80
  %v1159 = vunpack.c.l.b16 %v81
  %v1160 = vunpack.c.h.b16 %v81
  %v1161 = vunpack.c.l.b16 %v82
  %v1162 = vunpack.c.h.b16 %v82
  %v1163 = vunpack.c.l.b16 %v83
  %v1164 = vunpack.c.h.b16 %v83
  %v1165 = vunpack.c.l.b16 %v84
  %v1166 = vunpack.c.h.b16 %v84
  %v1167 = vunpack.c.l.b16 %v85
  %v1168 = vunpack.c.h.b16 %v85
  %v1169 = vunpack.c.l.b16 %v86
  %v1170 = vunpack.c.h.b16 %v86
  %v1171 = vunpack.c.l.b16 %v87
  %v1172 = vunpack.c.h.b16 %v87
  %v1173 = vunpack.c.l.b16 %v88
  %v1174 = vunpack.c.h.b16 %v88
  %v1175 = vunpack.c.l.b16 %v89
  %v1176 = vunpack.c.h.b16 %v89
  %v1177 = vunpack.c.l.b16 %v90
  %v1178 = vunpack.c.h.b16 %v90
  %v1179 = vunpack.c.l.b16 %v91
  %v1180 = vunpack.c.h.b16 %v91
  %v1181 = vunpack.c.l.b16 %v92
  %v1182 = vunpack.c.h.b16 %v92
  %v1183 = vunpack.c.l.b16 %v93
  %v1184 = vunpack.c.h.b16 %v93
  %v1185 = vunpack.c.l.b16 %v94
  %v1186 = vunpack.c.h.b16 %v94
  %v1187 = vunpack.c.l.b16 %v95
  %v1188 = vunpack.c.h.b16 %v95
  %v1189 = vunpack.c.l.b16 %v96
  %v1190 = vunpack.c.h.b16 %v96
  %v1191 = vunpack.c.l.b16 %v97
  %v1192 = vunpack.c.h.b16 %v97
  %v1193 = vunpack.c.l.b16 %v98
  %v1194 = vunpack.c.h.b16 %v98
  %v1195 = vunpack.c.l.b16 %v99
  %v1196 = vunpack.c.h.b16 %v99
  %v1197 = vunpack.c.l.b16 %v100
  %v1198 = vunpack.c.h.b16 %v100
  %v1199 = vunpack.c.l.b16 %v101
  %v1200 = vunpack.c.h.b16 %v101
  %v1201 = vunpack.c.l.b16 %v102
  %v1202 = vunpack.c.h.b16 %v102
  %v1203 = vunpack.c.l.b16 %v103
  %v1204 = vunpack.c.h.b16 %v103
  %v1205 = vunpack.c.l.b16 %v104
  %v1206 = vunpack.c.h.b16 %v104
  %v1207 = vunpack.c.l.b16 %v105
  %v1208 = vunpack.c.h.b16 %v105
  %v1209 = vunpack.c.l.b16 %v106
  %v1210 = vunpack.c.h.b16 %v106
  %v1211 = vunpack.c.l.b16 %v107
  %v1212 = vunpack.c.h.b16 %v107
  %v1213 = vunpack.c.l.b16 %v108
  %v1214 = vunpack.c.h.b16 %v108
  %v1215 = vunpack.c.l.b16 %v109
  %v1216 = vunpack.c.h.b16 %v109
  %v1217 = vunpack.c.l.b16 %v110
  %v1218 = vunpack.c.h.b16 %v110
  %v1219 = vunpack.c.l.b16 %v111
  %v1220 = vunpack.c.h.b16 %v111
  %v1221 = vunpack.c.l.b16 %v112
  %v1222 = vunpack.c.h.b16 %v112
  %v1223 = vunpack.c.l.b16 %v113
  %v1224 = vunpack.c.h.b16 %v113
  %v1225 = vunpack.c.l.b16 %v114
  %v1226 = vunpack.c.h.b16 %v114
  %v1227 = vunpack.c.l.b16 %v115
  %v1228 = vunpack.c.h.b16 %v115
  %v1229 = vunpack.c.l.b16 %v116
  %v1230 = vunpack.c.h.b16 %v116
  %v1231 = vunpack.c.l.b16 %v117
  %v1232 = vunpack.c.h.b16 %v117
  %v1233 = vunpack.c.l.b16 %v118
  %v1234 = vunpack.c.h.b16 %v118
  %v1235 = vunpack.c.l.b16 %v119
  %v1236 = vunpack.c.h.b16 %v119
  %v1237 = vunpack.c.l.b16 %v120
  %v1238 = vunpack.c.h.b16 %v120
  %v1239 = vunpack.c.l.b16 %v121
  %v1240 = vunpack.c.h.b16 %v121
  %v1241 = vunpack.c.l.b16 %v122
  %v1242 = vunpack.c.h.b16 %v122
  %v1243 = vunpack.c.l.b16 %v123
  %v1244 = vunpack.c.h.b16 %v123
  %v1245 = vunpack.c.l.b16 %v124
  %v1246 = vunpack.c.h.b16 %v124
  %v1247 = vunpack.c.l.b16 %v125
  %v1248 = vunpack.c.h.b16 %v125
  %v1249 = vunpack.c.l.b16 %v126
  %v1250 = vunpack.c.h.b16 %v126
  %v1251 = vunpack.c.l.b16 %v127
  %v1252 = vunpack.c.h.b16 %v127
  %v1253 = vunpack.c.l.b16 %v128
  %v1254 = vunpack.c.h.b16 %v128
  %v1255 = vunpack.c.l.b16 %v129
  %v1256 = vunpack.c.h.b16 %v129
  %v1257 = vunpack.c.l.b16 %v130
  %v1258 = vunpack.c.h.b16 %v130
  %v1259 = vunpack.c.l.b16 %v131
  %v1260 = vunpack.c.h.b16 %v131
  %v1261 = vunpack.c.l.b16 %v132
  %v1262 = vunpack.c.h.b16 %v132
  %v1263 = vunpack.c.l.b16 %v133
  %v1264 = vunpack.c.h.b16 %v133
  %v1265 = vunpack.c.l.b16 %v134
  %v1266 = vunpack.c.h.b16 %v134
  %v1267 = vunpack.c.l.b16 %v135
  %v1268 = vunpack.c.h.b16 %v135
  %v1269 = vunpack.c.l.b16 %v136
  %v1270 = vunpack.c.h.b16 %v136
  %v1271 = vunpack.c.l.b16 %v137
  %v1272 = vunpack.c.h.b16 %v137
  %v1273 = vunpack.c.l.b16 %v138
  %v1274 = vunpack.c.h.b16 %v138
  %v1275 = vunpack.c.l.b16 %v139
  %v1276 = vunpack.c.h.b16 %v139
  %v1277 = vunpack.c.l.b16 %v140
  %v1278 = vunpack.c.h.b16 %v140
  %v1279 = vunpack.c.l.b16 %v141
  %v1280 = vunpack.c.h.b16 %v141
  %v1281 = vunpack.c.l.b16 %v142
  %v1282 = vunpack.c.h.b16 %v142
  %v1283 = vunpack.c.l.b16 %v143
  %v1284 = vunpack.c.h.b16 %v143
  %v1285 = vunpack.c.l.b16 %v144
  %v1286 = vunpack.c.h.b16 %v144
  %v1287 = vunpack.c.l.b16 %v145
  %v1288 = vunpack.c.h.b16 %v145
  %v1289 = vunpack.c.l.b16 %v146
  %v1290 = vunpack.c.h.b16 %v146
  %v1291 = vunpack.c.l.b16 %v147
  %v1292 = vunpack.c.h.b16 %v147
  %v1293 = vunpack.c.l.b16 %v148
  %v1294 = vunpack.c.h.b16 %v148
  %v1295 = vunpack.c.l.b16 %v149
  %v1296 = vunpack.c.h.b16 %v149
  %v1297 = vunpack.c.l.b16 %v150
  %v1298 = vunpack.c.h.b16 %v150
  %v1299 = vunpack.c.l.b16 %v151
  %v1300 = vunpack.c.h.b16 %v151
  %v1301 = vunpack.c.l.b16 %v152
  %v1302 = vunpack.c.h.b16 %v152
  %v1303 = vunpack.c.l.b16 %v153
  %v1304 = vunpack.c.h.b16 %v153
  %v1305 = vunpack.c.l.b16 %v154
  %v1306 = vunpack.c.h.b16 %v154
  %v1307 = vunpack.c.l.b16 %v155
  %v1308 = vunpack.c.h.b16 %v155
  %v1309 = vunpack.c.l.b16 %v156
  %v1310 = vunpack.c.h.b16 %v156
  %v1311 = vunpack.c.l.b16 %v157
  %v1312 = vunpack.c.h.b16 %v157
  %v1313 = vunpack.c.l.b16 %v158
  %v1314 = vunpack.c.h.b16 %v158
  %v1315 = vunpack.c.l.b16 %v159
  %v1316 = vunpack.c.h.b16 %v159
  %v1317 = vunpack.c.l.b16 %v160
  %v1318 = vunpack.c.h.b16 %v160
  %v1319 = vunpack.c.l.b16 %v161
  %v1320 = vunpack.c.h.b16 %v161
  %v1321 = vunpack.c.l.b16 %v162
  %v1322 = vunpack.c.h.b16 %v162
  %v1323 = vunpack.c.l.b16 %v163
  %v1324 = vunpack.c.h.b16 %v163
  %v1325 = vunpack.c.l.b16 %v164
  %v1326 = vunpack.c.h.b16 %v164
  %v1327 = vunpack.c.l.b16 %v165
  %v1328 = vunpack.c.h.b16 %v165
  %v1329 = vunpack.c.l.b16 %v166
  %v1330 = vunpack.c.h.b16 %v166
  %v1331 = vunpack.c.l.b16 %v167
  %v1332 = vunpack.c.h.b16 %v167
  %v1333 = vunpack.c.l.b16 %v168
  %v1334 = vunpack.c.h.b16 %v168
  %v1335 = vunpack.c.l.b16 %v169
  %v1336 = vunpack.c.h.b16 %v169
  %v1337 = vunpack.c.l.b16 %v170
  %v1338 = vunpack.c.h.b16 %v170
  %v1339 = vunpack.c.l.b16 %v171
  %v1340 = vunpack.c.h.b16 %v171
  %v1341 = vunpack.c.l.b16 %v172
  %v1342 = vunpack.c.h.b16 %v172
  %v1343 = vunpack.c.l.b16 %v173
  %v1344 = vunpack.c.h.b16 %v173
  %v1345 = vunpack.c.l.b16 %v174
  %v1346 = vunpack.c.h.b16 %v174
  %v1347 = vunpack.c.l.b16 %v175
  %v1348 = vunpack.c.h.b16 %v175
  %v1349 = vunpack.c.l.b16 %v176
  %v1350 = vunpack.c.h.b16 %v176
  %v1351 = vunpack.c.l.b16 %v177
  %v1352 = vunpack.c.h.b16 %v177
  %v1353 = vunpack.c.l.b16 %v178
  %v1354 = vunpack.c.h.b16 %v178
  %v1355 = vunpack.c.l.b16 %v179
  %v1356 = vunpack.c.h.b16 %v179
  %v1357 = vunpack.c.l.b16 %v180
  %v1358 = vunpack.c.h.b16 %v180
  %v1359 = vunpack.c.l.b16 %v181
  %v1360 = vunpack.c.h.b16 %v181
  %v1361 = vunpack.c.l.b16 %v182
  %v1362 = vunpack.c.h.b16 %v182
  %v1363 = vunpack.c.l.b16 %v183
  %v1364 = vunpack.c.h.b16 %v183
  %v1365 = vunpack.c.l.b16 %v184
  %v1366 = vunpack.c.h.b16 %v184
  %v1367 = vunpack.c.l.b16 %v185
  %v1368 = vunpack.c.h.b16 %v185
  %v1369 = vunpack.c.l.b16 %v186
  %v1370 = vunpack.c.h.b16 %v186
  %v1371 = vunpack.c.l.b16 %v187
  %v1372 = vunpack.c.h.b16 %v187
  %v1373 = vunpack.c.l.b16 %v188
  %v1374 = vunpack.c.h.b16 %v188
  %v1375 = vunpack.c.l.b16 %v189
  %v1376 = vunpack.c.h.b16 %v189
  %v1377 = vunpack.c.l.b16 %v190
  %v1378 = vunpack.c.h.b16 %v190
  %v1379 = vunpack.c.l.b16 %v191
  %v1380 = vunpack.c.h.b16 %v191
  %v1381 = vunpack.c.l.b16 %v192
  %v1382 = vunpack.c.h.b16 %v192
  %v1383 = vunpack.c.l.b16 %v193
  %v1384 = vunpack.c.h.b16 %v193
  %v1385 = vunpack.c.l.b16 %v194
  %v1386 = vunpack.c.h.b16 %v194
  %v1387 = vunpack.c.l.b16 %v195
  %v1388 = vunpack.c.h.b16 %v195
  %v1389 = vunpack.c.l.b16 %v196
  %v1390 = vunpack.c.h.b16 %v196
  %v1391 = vunpack.c.l.b16 %v197
  %v1392 = vunpack.c.h.b16 %v197
  %v1393 = vunpack.c.l.b16 %v198
  %v1394 = vunpack.c.h.b16 %v198
  %v1395 = vunpack.c.l.b16 %v199
  %v1396 = vunpack.c.h.b16 %v199
  %v1397 = vunpack.c.l.b16 %v200
  %v1398 = vunpack.c.h.b16 %v200
  %v1399 = vunpack.c.l.b16 %v201
  %v1400 = vunpack.c.h.b16 %v201
  %v1401 = vunpack.c.l.b16 %v202
  %v1402 = vunpack.c.h.b16 %v202
  %v1403 = vunpack.c.l.b16 %v203
  %v1404 = vunpack.c.h.b16 %v203
  %v1405 = vunpack.c.l.b16 %v204
  %v1406 = vunpack.c.h.b16 %v204
  %v1407 = vunpack.c.l.b16 %v205
  %v1408 = vunpack.c.h.b16 %v205
  %v1409 = vunpack.c.l.b16 %v206
  %v1410 = vunpack.c.h.b16 %v206
  %v1411 = vunpack.c.l.b16 %v207
  %v1412 = vunpack.c.h.b16 %v207
  %v1413 = vunpack.c.l.b16 %v208
  %v1414 = vunpack.c.h.b16 %v208
  %v1415 = vunpack.c.l.b16 %v209
  %v1416 = vunpack.c.h.b16 %v209
  %v1417 = vunpack.c.l.b16 %v210
  %v1418 = vunpack.c.h.b16 %v210
  %v1419 = vunpack.c.l.b16 %v211
  %v1420 = vunpack.c.h.b16 %v211
  %v1421 = vunpack.c.l.b16 %v212
  %v1422 = vunpack.c.h.b16 %v212
  %v1423 = vunpack.c.l.b16 %v213
  %v1424 = vunpack.c.h.b16 %v213
  %v1425 = vunpack.c.l.b16 %v214
  %v1426 = vunpack.c.h.b16 %v214
  %v1427 = vunpack.c.l.b16 %v215
  %v1428 = vunpack.c.h.b16 %v215
  %v1429 = vunpack.c.l.b16 %v216
  %v1430 = vunpack.c.h.b16 %v216
  %v1431 = vunpack.c.l.b16 %v217
  %v1432 = vunpack.c.h.b16 %v217
  %v1433 = vunpack.c.l.b16 %v218
  %v1434 = vunpack.c.h.b16 %v218
  %v1435 = vunpack.c.l.b16 %v219
  %v1436 = vunpack.c.h.b16 %v219
  %v1437 = vunpack.c.l.b16 %v220
  %v1438 = vunpack.c.h.b16 %v220
  %v1439 = vunpack.c.l.b16 %v221
  %v1440 = vunpack.c.h.b16 %v221
  %v1441 = vunpack.c.l.b16 %v222
  %v1442 = vunpack.c.h.b16 %v222
  %v1443 = vunpack.c.l.b16 %v223
  %v1444 = vunpack.c.h.b16 %v223
  %v1445 = vunpack.c.l.b16 %v224
  %v1446 = vunpack.c.h.b16 %v224
  %v1447 = vunpack.c.l.b16 %v225
  %v1448 = vunpack.c.h.b16 %v225
  %v1449 = vunpack.c.l.b16 %v226
  %v1450 = vunpack.c.h.b16 %v226
  %v1451 = vunpack.c.l.b16 %v227
  %v1452 = vunpack.c.h.b16 %v227
  %v1453 = vunpack.c.l.b16 %v228
  %v1454 = vunpack.c.h.b16 %v228
  %v1455 = vunpack.c.l.b16 %v229
  %v1456 = vunpack.c.h.b16 %v229
  %v1457 = vunpack.c.l.b16 %v230
  %v1458 = vunpack.c.h.b16 %v230
  %v1459 = vunpack.c.l.b16 %v231
  %v1460 = vunpack.c.h.b16 %v231
  %v1461 = vunpack.c.l.b16 %v232
  %v1462 = vunpack.c.h.b16 %v232
  %v1463 = vunpack.c.l.b16 %v233
  %v1464 = vunpack.c.h.b16 %v233
  %v1465 = vunpack.c.l.b16 %v234
  %v1466 = vunpack.c.h.b16 %v234
  %v1467 = vunpack.c.l.b16 %v235
  %v1468 = vunpack.c.h.b16 %v235
  %v1469 = vunpack.c.l.b16 %v236
  %v1470 = vunpack.c.h.b16 %v236
  %v1471 = vunpack.c.l.b16 %v237
  %v1472 = vunpack.c.h.b16 %v237
  %v1473 = vunpack.c.l.b16 %v238
  %v1474 = vunpack.c.h.b16 %v238
  %v1475 = vunpack.c.l.b16 %v239
  %v1476 = vunpack.c.h.b16 %v239
  %v1477 = vunpack.c.l.b16 %v240
  %v1478 = vunpack.c.h.b16 %v240
  %v1479 = vunpack.c.l.b16 %v241
  %v1480 = vunpack.c.h.b16 %v241
  %v1481 = vunpack.c.l.b16 %v242
  %v1482 = vunpack.c.h.b16 %v242
  %v1483 = vunpack.c.l.b16 %v243
  %v1484 = vunpack.c.h.b16 %v243
  %v1485 = vunpack.c.l.b16 %v244
  %v1486 = vunpack.c.h.b16 %v244
  %v1487 = vunpack.c.l.b16 %v245
  %v1488 = vunpack.c.h.b16 %v245
  %v1489 = vunpack.c.l.b16 %v246
  %v1490 = vunpack.c.h.b16 %v246
  %v1491 = vunpack.c.l.b16 %v247
  %v1492 = vunpack.c.h.b16 %v247
  %v1493 = vunpack.c.l.b16 %v248
  %v1494 = vunpack.c.h.b16 %v248
  %v1495 = vunpack.c.l.b16 %v249
  %v1496 = vunpack.c.h.b16 %v249
  %v1497 = vunpack.c.l.b16 %v250
  %v1498 = vunpack.c.h.b16 %v250
  %v1499 = vunpack.c.l.b16 %v251
  %v1500 = vunpack.c.h.b16 %v251
  %v1501 = vunpack.c.l.b16 %v252
  %v1502 = vunpack.c.h.b16 %v252
  %v1503 = vunpack.c.l.b16 %v253
  %v1504 = vunpack.c.h.b16 %v253
  %v1505 = vunpack.c.l.b16 %v254
  %v1506 = vunpack.c.h.b16 %v254
  %v1507 = vunpack.c.l.b16 %v255
  %v1508 = vunpack.c.h.b16 %v255
  %v1509 = vunpack.c.l.b16 %v256
  %v1510 = vunpack.c.h.b16 %v256
  %v1511 = vunpack.c.l.b16 %v257
  %v1512 = vunpack.c.h.b16 %v257
  %v1513 = vunpack.c.l.b16 %v258
  %v1514 = vunpack.c.h.b16 %v258
  %v1515 = vunpack.c.l.b16 %v259
  %v1516 = vunpack.c.h.b16 %v259
  %v1517 = vunpack.c.l.b16 %v260
  %v1518 = vunpack.c.h.b16 %v260
  %v1519 = vunpack.c.l.b16 %v261
  %v1520 = vunpack.c.h.b16 %v261
  %v1521 = vunpack.c.l.b16 %v262
  %v1522 = vunpack.c.h.b16 %v262
  %v1523 = vunpack.c.l.b16 %v263
  %v1524 = vunpack.c.h.b16 %v263
  %v1525 = vunpack.c.l.b16 %v264
  %v1526 = vunpack.c.h.b16 %v264
  %v1527 = vunpack.c.l.b16 %v265
  %v1528 = vunpack.c.h.b16 %v265
  %v1529 = vunpack.c.l.b16 %v266
  %v1530 = vunpack.c.h.b16 %v266
  %v1531 = vunpack.c.l.b16 %v267
  %v1532 = vunpack.c.h.b16 %v267
  %v1533 = vunpack.c.l.b16 %v268
  %v1534 = vunpack.c.h.b16 %v268
  %v1535 = vunpack.c.l.b16 %v269
  %v1536 = vunpack.c.h.b16 %v269
  %v1537 = vunpack.c.l.b16 %v270
  %v1538 = vunpack.c.h.b16 %v270
  %v1539 = vunpack.c.l.b16 %v271
  %v1540 = vunpack.c.h.b16 %v271
  %v1541 = vunpack.c.l.b16 %v272
  %v1542 = vunpack.c.h.b16 %v272
  %v1543 = vunpack.c.l.b16 %v273
  %v1544 = vunpack.c.h.b16 %v273
  %v1545 = vunpack.c.l.b16 %v274
  %v1546 = vunpack.c.h.b16 %v274
  %v1547 = vunpack.c.l.b16 %v275
  %v1548 = vunpack.c.h.b16 %v275
  %v1549 = vunpack.c.l.b16 %v276
  %v1550 = vunpack.c.h.b16 %v276
  %v1551 = vunpack.c.l.b16 %v277
  %v1552 = vunpack.c.h.b16 %v277
  %v1553 = vunpack.c.l.b16 %v278
  %v1554 = vunpack.c.h.b16 %v278
  %v1555 = vunpack.c.l.b16 %v279
  %v1556 = vunpack.c.h.b16 %v279
  %v1557 = vunpack.c.l.b16 %v280
  %v1558 = vunpack.c.h.b16 %v280
  %v1559 = vunpack.c.l.b16 %v281
  %v1560 = vunpack.c.h.b16 %v281
  %v1561 = vunpack.c.l.b16 %v282
  %v1562 = vunpack.c.h.b16 %v282
  %v1563 = vunpack.c.l.b16 %v283
  %v1564 = vunpack.c.h.b16 %v283
  %v1565 = vunpack.c.l.b16 %v284
  %v1566 = vunpack.c.h.b16 %v284
  %v1567 = vunpack.c.l.b16 %v285
  %v1568 = vunpack.c.h.b16 %v285
  %v1569 = vunpack.c.l.b16 %v286
  %v1570 = vunpack.c.h.b16 %v286
  %v1571 = vunpack.c.l.b16 %v287
  %v1572 = vunpack.c.h.b16 %v287
  %v1573 = vunpack.c.l.b16 %v288
  %v1574 = vunpack.c.h.b16 %v288
  %v1575 = vunpack.c.l.b16 %v289
  %v1576 = vunpack.c.h.b16 %v289
  %v1577 = vunpack.c.l.b16 %v290
  %v1578 = vunpack.c.h.b16 %v290
  %v1579 = vunpack.c.l.b16 %v291
  %v1580 = vunpack.c.h.b16 %v291
  %v1581 = vunpack.c.l.b16 %v292
  %v1582 = vunpack.c.h.b16 %v292
  %v1583 = vunpack.c.l.b16 %v293
  %v1584 = vunpack.c.h.b16 %v293
  %v1585 = vunpack.c.l.b16 %v294
  %v1586 = vunpack.c.h.b16 %v294
  %v1587 = vunpack.c.l.b16 %v295
  %v1588 = vunpack.c.h.b16 %v295
  %v1589 = vunpack.c.l.b16 %v296
  %v1590 = vunpack.c.h.b16 %v296
  %v1591 = vunpack.c.l.b16 %v297
  %v1592 = vunpack.c.h.b16 %v297
  %v1593 = vunpack.c.l.b16 %v298
  %v1594 = vunpack.c.h.b16 %v298
  %v1595 = vunpack.c.l.b16 %v299
  %v1596 = vunpack.c.h.b16 %v299
  %v1597 = vunpack.c.l.b16 %v300
  %v1598 = vunpack.c.h.b16 %v300
  %v1599 = vunpack.c.l.b16 %v301
  %v1600 = vunpack.c.h.b16 %v301
  %v1601 = vunpack.c.l.b16 %v302
  %v1602 = vunpack.c.h.b16 %v302
  %v1603 = vunpack.c.l.b16 %v303
  %v1604 = vunpack.c.h.b16 %v303
  %v1605 = vunpack.c.l.b16 %v304
  %v1606 = vunpack.c.h.b16 %v304
  %v1607 = vunpack.c.l.b16 %v305
  %v1608 = vunpack.c.h.b16 %v305
  %v1609 = vunpack.c.l.b16 %v306
  %v1610 = vunpack.c.h.b16 %v306
  %v1611 = vunpack.c.l.b16 %v307
  %v1612 = vunpack.c.h.b16 %v307
  %v1613 = vunpack.c.l.b16 %v308
  %v1614 = vunpack.c.h.b16 %v308
  %v1615 = vunpack.c.l.b16 %v309
  %v1616 = vunpack.c.h.b16 %v309
  %v1617 = vunpack.c.l.b16 %v310
  %v1618 = vunpack.c.h.b16 %v310
  %v1619 = vunpack.c.l.b16 %v311
  %v1620 = vunpack.c.h.b16 %v311
  %v1621 = vunpack.c.l.b16 %v312
  %v1622 = vunpack.c.h.b16 %v312
  %v1623 = vunpack.c.l.b16 %v313
  %v1624 = vunpack.c.h.b16 %v313
  %v1625 = vunpack.c.l.b16 %v314
  %v1626 = vunpack.c.h.b16 %v314
  %v1627 = vunpack.c.l.b16 %v315
  %v1628 = vunpack.c.h.b16 %v315
  %v1629 = vunpack.c.l.b16 %v316
  %v1630 = vunpack.c.h.b16 %v316
  %v1631 = vunpack.c.l.b16 %v317
  %v1632 = vunpack.c.h.b16 %v317
  %v1633 = vunpack.c.l.b16 %v318
  %v1634 = vunpack.c.h.b16 %v318
  %v1635 = vunpack.c.l.b16 %v319
  %v1636 = vunpack.c.h.b16 %v319
  %v1637 = vunpack.c.l.b16 %v320
  %v1638 = vunpack.c.h.b16 %v320
  %v1639 = vunpack.c.l.b16 %v321
  %v1640 = vunpack.c.h.b16 %v321
  %v1641 = vunpack.c.l.b16 %v322
  %v1642 = vunpack.c.h.b16 %v322
  %v1643 = vunpack.c.l.b16 %v323
  %v1644 = vunpack.c.h.b16 %v323
  %v1645 = vunpack.c.l.b16 %v324
  %v1646 = vunpack.c.h.b16 %v324
  %v1647 = vunpack.c.l.b16 %v325
  %v1648 = vunpack.c.h.b16 %v325
  %v1649 = vunpack.c.l.b16 %v326
  %v1650 = vunpack.c.h.b16 %v326
  %v1651 = vunpack.c.l.b16 %v327
  %v1652 = vunpack.c.h.b16 %v327
  %v1653 = vunpack.c.l.b16 %v328
  %v1654 = vunpack.c.h.b16 %v328
  %v1655 = vunpack.c.l.b16 %v329
  %v1656 = vunpack.c.h.b16 %v329
  %v1657 = vunpack.c.l.b16 %v330
  %v1658 = vunpack.c.h.b16 %v330
  %v1659 = vunpack.c.l.b16 %v331
  %v1660 = vunpack.c.h.b16 %v331
  %v1661 = vunpack.c.l.b16 %v332
  %v1662 = vunpack.c.h.b16 %v332
  %v1663 = vunpack.c.l.b16 %v333
  %v1664 = vunpack.c.h.b16 %v333
  %v1665 = vunpack.c.l.b16 %v334
  %v1666 = vunpack.c.h.b16 %v334
  %v1667 = vunpack.c.l.b16 %v335
  %v1668 = vunpack.c.h.b16 %v335
  %v1669 = vunpack.c.l.b16 %v336
  %v1670 = vunpack.c.h.b16 %v336
  %v1671 = vunpack.c.l.b16 %v337
  %v1672 = vunpack.c.h.b16 %v337
  %v1673 = vunpack.c.l.b16 %v338
  %v1674 = vunpack.c.h.b16 %v338
  %v1675 = vunpack.c.l.b16 %v339
  %v1676 = vunpack.c.h.b16 %v339
  %v1677 = vunpack.c.l.b16 %v340
  %v1678 = vunpack.c.h.b16 %v340
  %v1679 = vunpack.c.l.b16 %v341
  %v1680 = vunpack.c.h.b16 %v341
  %v1681 = vunpack.c.l.b16 %v342
  %v1682 = vunpack.c.h.b16 %v342
  %v1683 = vunpack.c.l.b16 %v343
  %v1684 = vunpack.c.h.b16 %v343
  %v1685 = vunpack.c.l.b16 %v344
  %v1686 = vunpack.c.h.b16 %v344
  %v1687 = vunpack.c.l.b16 %v345
  %v1688 = vunpack.c.h.b16 %v345
  %v1689 = vunpack.c.l.b16 %v346
  %v1690 = vunpack.c.h.b16 %v346
  %v1691 = vunpack.c.l.b16 %v347
  %v1692 = vunpack.c.h.b16 %v347
  %v1693 = vunpack.c.l.b16 %v348
  %v1694 = vunpack.c.h.b16 %v348
  %v1695 = vunpack.c.l.b16 %v349
  %v1696 = vunpack.c.h.b16 %v349
  %v1697 = vunpack.c.l.b16 %v350
  %v1698 = vunpack.c.h.b16 %v350
  %v1699 = vunpack.c.l.b16 %v351
  %v1700 = vunpack.c.h.b16 %v351
  %v1701 = vunpack.c.l.b16 %v352
  %v1702 = vunpack.c.h.b16 %v352
  %v1703 = vunpack.c.l.b16 %v353
  %v1704 = vunpack.c.h.b16 %v353
  %v1705 = vunpack.c.l.b16 %v354
  %v1706 = vunpack.c.h.b16 %v354
  %v1707 = vunpack.c.l.b16 %v355
  %v1708 = vunpack.c.h.b16 %v355
  %v1709 = vunpack.c.l.b16 %v356
  %v1710 = vunpack.c.h.b16 %v356
  %v1711 = vunpack.c.l.b16 %v357
  %v1712 = vunpack.c.h.b16 %v357
  %v1713 = vunpack.c.l.b16 %v358
  %v1714 = vunpack.c.h.b16 %v358
  %v1715 = vunpack.c.l.b16 %v359
  %v1716 = vunpack.c.h.b16 %v359
  %v1717 = vunpack.c.l.b16 %v360
  %v1718 = vunpack.c.h.b16 %v360
  %v1719 = vunpack.c.l.b16 %v361
  %v1720 = vunpack.c.h.b16 %v361
  %v1721 = vunpack.c.l.b16 %v362
  %v1722 = vunpack.c.h.b16 %v362
  %v1723 = vunpack.c.l.b16 %v363
  %v1724 = vunpack.c.h.b16 %v363
  %v1725 = vunpack.c.l.b16 %v364
  %v1726 = vunpack.c.h.b16 %v364
  %v1727 = vunpack.c.l.b16 %v365
  %v1728 = vunpack.c.h.b16 %v365
  %v1729 = vunpack.c.l.b16 %v366
  %v1730 = vunpack.c.h.b16 %v366
  %v1731 = vunpack.c.l.b16 %v367
  %v1732 = vunpack.c.h.b16 %v367
  %v1733 = vunpack.c.l.b16 %v368
  %v1734 = vunpack.c.h.b16 %v368
  %v1735 = vunpack.c.l.b16 %v369
  %v1736 = vunpack.c.h.b16 %v369
  %v1737 = vunpack.c.l.b16 %v370
  %v1738 = vunpack.c.h.b16 %v370
  %v1739 = vunpack.c.l.b16 %v371
  %v1740 = vunpack.c.h.b16 %v371
  %v1741 = vunpack.c.l.b16 %v372
  %v1742 = vunpack.c.h.b16 %v372
  %v1743 = vunpack.c.l.b16 %v373
  %v1744 = vunpack.c.h.b16 %v373
  %v1745 = vunpack.c.l.b16 %v374
  %v1746 = vunpack.c.h.b16 %v374
  %v1747 = vunpack.c.l.b16 %v375
  %v1748 = vunpack.c.h.b16 %v375
  %v1749 = vunpack.c.l.b16 %v376
  %v1750 = vunpack.c.h.b16 %v376
  %v1751 = vunpack.c.l.b16 %v377
  %v1752 = vunpack.c.h.b16 %v377
  %v1753 = vunpack.c.l.b16 %v378
  %v1754 = vunpack.c.h.b16 %v378
  %v1755 = vunpack.c.l.b16 %v379
  %v1756 = vunpack.c.h.b16 %v379
  %v1757 = vunpack.c.l.b16 %v380
  %v1758 = vunpack.c.h.b16 %v380
  %v1759 = vunpack.c.l.b16 %v381
  %v1760 = vunpack.c.h.b16 %v381
  %v1761 = vunpack.c.l.b16 %v382
  %v1762 = vunpack.c.h.b16 %v382
  %v1763 = vunpack.c.l.b16 %v383
  %v1764 = vunpack.c.h.b16 %v383
  %v1765 = vunpack.c.l.b16 %v384
  %v1766 = vunpack.c.h.b16 %v384
  %v1767 = vunpack.c.l.b16 %v385
  %v1768 = vunpack.c.h.b16 %v385
  %v1769 = vunpack.c.l.b16 %v386
  %v1770 = vunpack.c.h.b16 %v386
  %v1771 = vunpack.c.l.b16 %v387
  %v1772 = vunpack.c.h.b16 %v387
  %v1773 = vunpack.c.l.b16 %v388
  %v1774 = vunpack.c.h.b16 %v388
  %v1775 = vunpack.c.l.b16 %v389
  %v1776 = vunpack.c.h.b16 %v389
  %v1777 = vunpack.c.l.b16 %v390
  %v1778 = vunpack.c.h.b16 %v390
  %v1779 = vunpack.c.l.b16 %v391
  %v1780 = vunpack.c.h.b16 %v391
  %v1781 = vunpack.c.l.b16 %v392
  %v1782 = vunpack.c.h.b16 %v392
  %v1783 = vunpack.c.l.b16 %v393
  %v1784 = vunpack.c.h.b16 %v393
  %v1785 = vunpack.c.l.b16 %v394
  %v1786 = vunpack.c.h.b16 %v394
  %v1787 = vunpack.c.l.b16 %v395
  %v1788 = vunpack.c.h.b16 %v395
  %v1789 = vunpack.c.l.b16 %v396
  %v1790 = vunpack.c.h.b16 %v396
  %v1791 = vunpack.c.l.b16 %v397
  %v1792 = vunpack.c.h.b16 %v397
  %v1793 = vunpack.c.l.b16 %v398
  %v1794 = vunpack.c.h.b16 %v398
  %v1795 = vunpack.c.l.b16 %v399
  %v1796 = vunpack.c.h.b16 %v399
  %v1797 = vunpack.c.l.b16 %v400
  %v1798 = vunpack.c.h.b16 %v400
  %v1799 = vunpack.c.l.b16 %v401
  %v1800 = vunpack.c.h.b16 %v401
  %v1801 = vunpack.c.l.b16 %v402
  %v1802 = vunpack.c.h.b16 %v402
  %v1803 = vunpack.c.l.b16 %v403
  %v1804 = vunpack.c.h.b16 %v403
  %v1805 = vunpack.c.l.b16 %v404
  %v1806 = vunpack.c.h.b16 %v404
  %v1807 = vunpack.c.l.b16 %v405
  %v1808 = vunpack.c.h.b16 %v405
  %v1809 = vunpack.c.l.b16 %v406
  %v1810 = vunpack.c.h.b16 %v406
  %v1811 = vunpack.c.l.b16 %v407
  %v1812 = vunpack.c.h.b16 %v407
  %v1813 = vunpack.c.l.b16 %v408
  %v1814 = vunpack.c.h.b16 %v408
  %v1815 = vunpack.c.l.b16 %v409
  %v1816 = vunpack.c.h.b16 %v409
  %v1817 = vunpack.c.l.b16 %v410
  %v1818 = vunpack.c.h.b16 %v410
  %v1819 = vunpack.c.l.b16 %v411
  %v1820 = vunpack.c.h.b16 %v411
  %v1821 = vunpack.c.l.b16 %v412
  %v1822 = vunpack.c.h.b16 %v412
  %v1823 = vunpack.c.l.b16 %v413
  %v1824 = vunpack.c.h.b16 %v413
  %v1825 = vunpack.c.l.b16 %v414
  %v1826 = vunpack.c.h.b16 %v414
  %v1827 = vunpack.c.l.b16 %v415
  %v1828 = vunpack.c.h.b16 %v415
  %v1829 = vunpack.c.l.b16 %v416
  %v1830 = vunpack.c.h.b16 %v416
  %v1831 = vunpack.c.l.b16 %v417
  %v1832 = vunpack.c.h.b16 %v417
  %v1833 = vunpack.c.l.b16 %v418
  %v1834 = vunpack.c.h.b16 %v418
  %v1835 = vunpack.c.l.b16 %v419
  %v1836 = vunpack.c.h.b16 %v419
  %v1837 = vunpack.c.l.b16 %v420
  %v1838 = vunpack.c.h.b16 %v420
  %v1839 = vunpack.c.l.b16 %v421
  %v1840 = vunpack.c.h.b16 %v421
  %v1841 = vunpack.c.l.b16 %v422
  %v1842 = vunpack.c.h.b16 %v422
  %v1843 = vunpack.c.l.b16 %v423
  %v1844 = vunpack.c.h.b16 %v423
  %v1845 = vunpack.c.l.b16 %v424
  %v1846 = vunpack.c.h.b16 %v424
  %v1847 = vunpack.c.l.b16 %v425
  %v1848 = vunpack.c.h.b16 %v425
  %v1849 = vunpack.c.l.b16 %v426
  %v1850 = vunpack.c.h.b16 %v426
  %v1851 = vunpack.c.l.b16 %v427
  %v1852 = vunpack.c.h.b16 %v427
  %v1853 = vunpack.c.l.b16 %v428
  %v1854 = vunpack.c.h.b16 %v428
  %v1855 = vunpack.c.l.b16 %v429
  %v1856 = vunpack.c.h.b16 %v429
  %v1857 = vunpack.c.l.b16 %v430
  %v1858 = vunpack.c.h.b16 %v430
  %v1859 = vunpack.c.l.b16 %v431
  %v1860 = vunpack.c.h.b16 %v431
  %v1861 = vunpack.c.l.b16 %v432
  %v1862 = vunpack.c.h.b16 %v432
  %v1863 = vunpack.c.l.b16 %v433
  %v1864 = vunpack.c.h.b16 %v433
  %v1865 = vunpack.c.l.b16 %v434
  %v1866 = vunpack.c.h.b16 %v434
  %v1867 = vunpack.c.l.b16 %v435
  %v1868 = vunpack.c.h.b16 %v435
  %v1869 = vunpack.c.l.b16 %v436
  %v1870 = vunpack.c.h.b16 %v436
  %v1871 = vunpack.c.l.b16 %v437
  %v1872 = vunpack.c.h.b16 %v437
  %v1873 = vunpack.c.l.b16 %v438
  %v1874 = vunpack.c.h.b16 %v438
  %v1875 = vunpack.c.l.b16 %v439
  %v1876 = vunpack.c.h.b16 %v439
  %v1877 = vunpack.c.l.b16 %v440
  %v1878 = vunpack.c.h.b16 %v440
  %v1879 = vunpack.c.l.b16 %v441
  %v1880 = vunpack.c.h.b16 %v441
  %v1881 = vunpack.c.l.b16 %v442
  %v1882 = vunpack.c.h.b16 %v442
  %v1883 = vunpack.c.l.b16 %v443
  %v1884 = vunpack.c.h.b16 %v443
  %v1885 = vunpack.c.l.b16 %v444
  %v1886 = vunpack.c.h.b16 %v444
  %v1887 = vunpack.c.l.b16 %v445
  %v1888 = vunpack.c.h.b16 %v445
  %v1889 = vunpack.c.l.b16 %v446
  %v1890 = vunpack.c.h.b16 %v446
  %v1891 = vunpack.c.l.b16 %v447
  %v1892 = vunpack.c.h.b16 %v447
  %v1893 = vunpack.c.l.b16 %v448
  %v1894 = vunpack.c.h.b16 %v448
  %v1895 = vunpack.c.l.b16 %v449
  %v1896 = vunpack.c.h.b16 %v449
  %v1897 = vunpack.c.l.b16 %v450
  %v1898 = vunpack.c.h.b16 %v450
  %v1899 = vunpack.c.l.b16 %v451
  %v1900 = vunpack.c.h.b16 %v451
  %v1901 = vunpack.c.l.b16 %v452
  %v1902 = vunpack.c.h.b16 %v452
  %v1903 = vunpack.c.l.b16 %v453
  %v1904 = vunpack.c.h.b16 %v453
  %v1905 = vunpack.c.l.b16 %v454
  %v1906 = vunpack.c.h.b16 %v454
  %v1907 = vunpack.c.l.b16 %v455
  %v1908 = vunpack.c.h.b16 %v455
  %v1909 = vunpack.c.l.b16 %v456
  %v1910 = vunpack.c.h.b16 %v456
  %v1911 = vunpack.c.l.b16 %v457
  %v1912 = vunpack.c.h.b16 %v457
  %v1913 = vunpack.c.l.b16 %v458
  %v1914 = vunpack.c.h.b16 %v458
  %v1915 = vunpack.c.l.b16 %v459
  %v1916 = vunpack.c.h.b16 %v459
  %v1917 = vunpack.c.l.b16 %v460
  %v1918 = vunpack.c.h.b16 %v460
  %v1919 = vunpack.c.l.b16 %v461
  %v1920 = vunpack.c.h.b16 %v461
  %v1921 = vunpack.c.l.b16 %v462
  %v1922 = vunpack.c.h.b16 %v462
  %v1923 = vunpack.c.l.b16 %v463
  %v1924 = vunpack.c.h.b16 %v463
  %v1925 = vunpack.c.l.b16 %v464
  %v1926 = vunpack.c.h.b16 %v464
  %v1927 = vunpack.c.l.b16 %v465
  %v1928 = vunpack.c.h.b16 %v465
  %v1929 = vunpack.c.l.b16 %v466
  %v1930 = vunpack.c.h.b16 %v466
  %v1931 = vpack.c.b16 %v1133, %v1131
  %v1932 = vpack.c.b16 %v1134, %v1132
  %v1933 = vpack.c.b16 %v1137, %v1135
  %v1934 = vpack.c.b16 %v1138, %v1136
  %v1935 = vpack.c.b16 %v1141, %v1139
  %v1936 = vpack.c.b16 %v1142, %v1140
  %v1937 = vpack.c.b16 %v1145, %v1143
  %v1938 = vpack.c.b16 %v1146, %v1144
  %v1939 = vpack.c.b16 %v1149, %v1147
  %v1940 = vpack.c.b16 %v1150, %v1148
  %v1941 = vpack.c.b16 %v1153, %v1151
  %v1942 = vpack.c.b16 %v1154, %v1152
  %v1943 = vpack.c.b16 %v1157, %v1155
  %v1944 = vpack.c.b16 %v1158, %v1156
  %v1945 = vpack.c.b16 %v1161, %v1159
  %v1946 = vpack.c.b16 %v1162, %v1160
  %v1947 = vpack.c.b16 %v1165, %v1163
  %v1948 = vpack.c.b16 %v1166, %v1164
  %v1949 = vpack.c.b16 %v1169, %v1167
  %v1950 = vpack.c.b16 %v1170, %v1168
  %v1951 = vpack.c.b16 %v1173, %v1171
  %v1952 = vpack.c.b16 %v1174, %v1172
  %v1953 = vpack.c.b16 %v1177, %v1175
  %v1954 = vpack.c.b16 %v1178, %v1176
  %v1955 = vpack.c.b16 %v1181, %v1179
  %v1956 = vpack.c.b16 %v1182, %v1180
  %v1957 = vpack.c.b16 %v1185, %v1183
  %v1958 = vpack.c.b16 %v1186, %v1184
  %v1959 = vpack.c.b16 %v1189, %v1187
  %v1960 = vpack.c.b16 %v1190, %v1188
  %v1961 = vpack.c.b16 %v1193, %v1191
  %v1962 = vpack.c.b16 %v1194, %v1192
  %v1963 = vpack.c.b16 %v1197, %v1195
  %v1964 = vpack.c.b16 %v1198, %v1196
  %v1965 = vpack.c.b16 %v1201, %v1199
  %v1966 = vpack.c.b16 %v1202, %v1200
  %v1967 = vpack.c.b16 %v1205, %v1203
  %v1968 = vpack.c.b16 %v1206, %v1204
  %v1969 = vpack.c.b16 %v1209, %v1207
  %v1970 = vpack.c.b16 %v1210, %v1208
  %v1971 = vpack.c.b16 %v1213, %v1211
  %v1972 = vpack.c.b16 %v1214, %v1212
  %v1973 = vpack.c.b16 %v1217, %v1215
  %v1974 = vpack.c.b16 %v1218, %v1216
  %v1975 = vpack.c.b16 %v1221, %v1219
  %v1976 = vpack.c.b16 %v1222, %v1220
  %v1977 = vpack.c.b16 %v1225, %v1223
  %v1978 = vpack.c.b16 %v1226, %v1224
  %v1979 = vpack.c.b16 %v1229, %v1227
  %v1980 = vpack.c.b16 %v1230, %v1228
  %v1981 = vpack.c.b16 %v1233, %v1231
  %v1982 = vpack.c.b16 %v1234, %v1232
  %v1983 = vpack.c.b16 %v1237, %v1235
  %v1984 = vpack.c.b16 %v1238, %v1236
  %v1985 = vpack.c.b16 %v1241, %v1239
  %v1986 = vpack.c.b16 %v1242, %v1240
  %v1987 = vpack.c.b16 %v1245, %v1243
  %v1988 = vpack.c.b16 %v1246, %v1244
  %v1989 = vpack.c.b16 %v1249, %v1247
  %v1990 = vpack.c.b16 %v1250, %v1248
  %v1991 = vpack.c.b16 %v1253, %v1251
  %v1992 = vpack.c.b16 %v1254, %v1252
  %v1993 = vpack.c.b16 %v1257, %v1255
  %v1994 = vpack.c.b16 %v1258, %v1256
  %v1995 = vpack.c.b16 %v1261, %v1259
  %v1996 = vpack.c.b16 %v1262, %v1260
  %v1997 = vpack.c.b16 %v1265, %v1263
  %v1998 = vpack.c.b16 %v1266, %v1264
  %v1999 = vpack.c.b16 %v1269, %v1267
  %v2000 = vpack.c.b16 %v1270, %v1268
  %v2001 = vpack.c.b16 %v1273, %v1271
  %v2002 = vpack.c.b16 %v1274, %v1272
  %v2003 = vpack.c.b16 %v1277, %v1275
  %v2004 = vpack.c.b16 %v1278, %v1276
  %v2005 = vpack.c.b16 %v1281, %v1279
  %v2006 = vpack.c.b16 %v1282, %v1280
  %v2007 = vpack.c.b16 %v1285, %v1283
  %v2008 = vpack.c.b16 %v1286, %v1284
  %v2009 = vpack.c.b16 %v1289, %v1287
  %v2010 = vpack.c.b16 %v1290, %v1288
  %v2011 = vpack.c.b16 %v1293, %v1291
  %v2012 = vpack.c.b16 %v1294, %v1292
  %v2013 = vpack.c.b16 %v1297, %v1295
  %v2014 = vpack.c.b16 %v1298, %v1296
  %v2015 = vpack.c.b16 %v1301, %v1299
  %v2016 = vpack.c.b16 %v1302, %v1300
  %v2017 = vpack.c.b16 %v1305, %v1303
  %v2018 = vpack.c.b16 %v1306, %v1304
  %v2019 = vpack.c.b16 %v1309, %v1307
  %v2020 = vpack.c.b16 %v1310, %v1308
  %v2021 = vpack.c.b16 %v1313, %v1311
  %v2022 = vpack.c.b16 %v1314, %v1312
  %v2023 = vpack.c.b16 %v1317, %v1315
  %v2024 = vpack.c.b16 %v1318, %v1316
  %v2025 = vpack.c.b16 %v1321, %v1319
  %v2026 = vpack.c.b16 %v1322, %v1320
  %v2027 = vpack.c.b16 %v1325, %v1323
  %v2028 = vpack.c.b16 %v1326, %v1324
  %v2029 = vpack.c.b16 %v1329, %v1327
  %v2030 = vpack.c.b16 %v1330, %v1328
  %v2031 = vpack.c.b16 %v1333, %v1331
  %v2032 = vpack.c.b16 %v1334, %v1332
  %v2033 = vpack.c.b16 %v1337, %v1335
  %v2034 = vpack.c.b16 %v1338, %v1336
  %v2035 = vpack.c.b16 %v1341, %v1339
  %v2036 = vpack.c.b16 %v1342, %v1340
  %v2037 = vpack.c.b16 %v1345, %v1343
  %v2038 = vpack.c.b16 %v1346, %v1344
  %v2039 = vpack.c.b16 %v1349, %v1347
  %v2040 = vpack.c.b16 %v1350, %v1348
  %v2041 = vpack.c.b16 %v1353, %v1351
  %v2042 = vpack.c.b16 %v1354, %v1352
  %v2043 = vpack.c.b16 %v1357, %v1355
  %v2044 = vpack.c.b16 %v1358, %v1356
  %v2045 = vpack.c.b16 %v1361, %v1359
  %v2046 = vpack.c.b16 %v1362, %v1360
  %v2047 = vpack.c.b16 %v1365, %v1363
  %v2048 = vpack.c.b16 %v1366, %v1364
  %v2049 = vpack.c.b16 %v1369, %v1367
  %v2050 = vpack.c.b16 %v1370, %v1368
  %v2051 = vpack.c.b16 %v1373, %v1371
  %v2052 = vpack.c.b16 %v1374, %v1372
  %v2053 = vpack.c.b16 %v1377, %v1375
  %v2054 = vpack.c.b16 %v1378, %v1376
  %v2055 = vpack.c.b16 %v1381, %v1379
  %v2056 = vpack.c.b16 %v1382, %v1380
  %v2057 = vpack.c.b16 %v1385, %v1383
  %v2058 = vpack.c.b16 %v1386, %v1384
  %v2059 = vpack.c.b16 %v1389, %v1387
  %v2060 = vpack.c.b16 %v1390, %v1388
  %v2061 = vpack.c.b16 %v1393, %v1391
  %v2062 = vpack.c.b16 %v1394, %v1392
  %v2063 = vpack.c.b16 %v1397, %v1395
  %v2064 = vpack.c.b16 %v1398, %v1396
  %v2065 = vpack.c.b16 %v1401, %v1399
  %v2066 = vpack.c.b16 %v1402, %v1400
  %v2067 = vpack.c.b16 %v1405, %v1403
  %v2068 = vpack.c.b16 %v1406, %v1404
  %v2069 = vpack.c.b16 %v1409, %v1407
  %v2070 = vpack.c.b16 %v1410, %v1408
  %v2071 = vpack.c.b16 %v1413, %v1411
  %v2072 = vpack.c.b16 %v1414, %v1412
  %v2073 = vpack.c.b16 %v1417, %v1415
  %v2074 = vpack.c.b16 %v1418, %v1416
  %v2075 = vpack.c.b16 %v1421, %v1419
  %v2076 = vpack.c.b16 %v1422, %v1420
  %v2077 = vpack.c.b16 %v1425, %v1423
  %v2078 = vpack.c.b16 %v1426, %v1424
  %v2079 = vpack.c.b16 %v1429, %v1427
  %v2080 = vpack.c.b16 %v1430, %v1428
  %v2081 = vpack.c.b16 %v1433, %v1431
  %v2082 = vpack.c.b16 %v1434, %v1432
  %v2083 = vpack.c.b16 %v1437, %v1435
  %v2084 = vpack.c.b16 %v1438, %v1436
  %v2085 = vpack.c.b16 %v1441, %v1439
  %v2086 = vpack.c.b16 %v1442, %v1440
  %v2087 = vpack.c.b16 %v1445, %v1443
  %v2088 = vpack.c.b16 %v1446, %v1444
  %v2089 = vpack.c.b16 %v1449, %v1447
  %v2090 = vpack.c.b16 %v1450, %v1448
  %v2091 = vpack.c.b16 %v1453, %v1451
  %v2092 = vpack.c.b16 %v1454, %v1452
  %v2093 = vpack.c.b16 %v1457, %v1455
  %v2094 = vpack.c.b16 %v1458, %v1456
  %v2095 = vpack.c.b16 %v1461, %v1459
  %v2096 = vpack.c.b16 %v1462, %v1460
  %v2097 = vpack.c.b16 %v1465, %v1463
  %v2098 = vpack.c.b16 %v1466, %v1464
  %v2099 = vpack.c.b16 %v1469, %v1467
  %v2100 = vpack.c.b16 %v1470, %v1468
  %v2101 = vpack.c.b16 %v1473, %v1471
  %v2102 = vpack.c.b16 %v1474, %v1472
  %v2103 = vpack.c.b16 %v1477, %v1475
  %v2104 = vpack.c.b16 %v1478, %v1476
  %v2105 = vpack.c.b16 %v1481, %v1479
  %v2106 = vpack.c.b16 %v1482, %v1480
  %v2107 = vpack.c.b16 %v1485, %v1483
  %v2108 = vpack.c.b16 %v1486, %v1484
  %v2109 = vpack.c.b16 %v1489, %v1487
  %v2110 = vpack.c.b16 %v1490, %v1488
  %v2111 = vpack.c.b16 %v1493, %v1491
  %v2112 = vpack.c.b16 %v1494, %v1492
  %v2113 = vpack.c.b16 %v1497, %v1495
  %v2114 = vpack.c.b16 %v1498, %v1496
  %v2115 = vpack.c.b16 %v1501, %v1499
  %v2116 = vpack.c.b16 %v1502, %v1500
  %v2117 = vpack.c.b16 %v1505, %v1503
  %v2118 = vpack.c.b16 %v1506, %v1504
  %v2119 = vpack.c.b16 %v1509, %v1507
  %v2120 = vpack.c.b16 %v1510, %v1508
  %v2121 = vpack.c.b16 %v1513, %v1511
  %v2122 = vpack.c.b16 %v1514, %v1512
  %v2123 = vpack.c.b16 %v1517, %v1515
  %v2124 = vpack.c.b16 %v1518, %v1516
  %v2125 = vpack.c.b16 %v1521, %v1519
  %v2126 = vpack.c.b16 %v1522, %v1520
  %v2127 = vpack.c.b16 %v1525, %v1523
  %v2128 = vpack.c.b16 %v1526, %v1524
  %v2129 = vpack.c.b16 %v1529, %v1527
  %v2130 = vpack.c.b16 %v1530, %v1528
  %v2131 = vpack.c.b16 %v1533, %v1531
  %v2132 = vpack.c.b16 %v1534, %v1532
  %v2133 = vpack.c.b16 %v1537, %v1535
  %v2134 = vpack.c.b16 %v1538, %v1536
  %v2135 = vpack.c.b16 %v1541, %v1539
  %v2136 = vpack.c.b16 %v1542, %v1540
  %v2137 = vpack.c.b16 %v1545, %v1543
  %v2138 = vpack.c.b16 %v1546, %v1544
  %v2139 = vpack.c.b16 %v1549, %v1547
  %v2140 = vpack.c.b16 %v1550, %v1548
  %v2141 = vpack.c.b16 %v1553, %v1551
  %v2142 = vpack.c.b16 %v1554, %v1552
  %v2143 = vpack.c.b16 %v1557, %v1555
  %v2144 = vpack.c.b16 %v1558, %v1556
  %v2145 = vpack.c.b16 %v1561, %v1559
  %v2146 = vpack.c.b16 %v1562, %v1560
  %v2147 = vpack.c.b16 %v1565, %v1563
  %v2148 = vpack.c.b16 %v1566, %v1564
  %v2149 = vpack.c.b16 %v1569, %v1567
  %v2150 = vpack.c.b16 %v1570, %v1568
  %v2151 = vpack.c.b16 %v1573, %v1571
  %v2152 = vpack.c.b16 %v1574, %v1572
  %v2153 = vpack.c.b16 %v1577, %v1575
  %v2154 = vpack.c.b16 %v1578, %v1576
  %v2155 = vpack.c.b16 %v1581, %v1579
  %v2156 = vpack.c.b16 %v1582, %v1580
  %v2157 = vpack.c.b16 %v1585, %v1583
  %v2158 = vpack.c.b16 %v1586, %v1584
  %v2159 = vpack.c.b16 %v1589, %v1587
  %v2160 = vpack.c.b16 %v1590, %v1588
  %v2161 = vpack.c.b16 %v1593, %v1591
  %v2162 = vpack.c.b16 %v1594, %v1592
  %v2163 = vpack.c.b16 %v1597, %v1595
  %v2164 = vpack.c.b16 %v1598, %v1596
  %v2165 = vpack.c.b16 %v1601, %v1599
  %v2166 = vpack.c.b16 %v1602, %v1600
  %v2167 = vpack.c.b16 %v1605, %v1603
  %v2168 = vpack.c.b16 %v1606, %v1604
  %v2169 = vpack.c.b16 %v1609, %v1607
  %v2170 = vpack.c.b16 %v1610, %v1608
  %v2171 = vpack.c.b16 %v1613, %v1611
  %v2172 = vpack.c.b16 %v1614, %v1612
  %v2173 = vpack.c.b16 %v1617, %v1615
  %v2174 = vpack.c.b16 %v1618, %v1616
  %v2175 = vpack.c.b16 %v1621, %v1619
  %v2176 = vpack.c.b16 %v1622, %v1620
  %v2177 = vpack.c.b16 %v1625, %v1623
  %v2178 = vpack.c.b16 %v1626, %v1624
  %v2179 = vpack.c.b16 %v1629, %v1627
  %v2180 = vpack.c.b16 %v1630, %v1628
  %v2181 = vpack.c.b16 %v1633, %v1631
  %v2182 = vpack.c.b16 %v1634, %v1632
  %v2183 = vpack.c.b16 %v1637, %v1635
  %v2184 = vpack.c.b16 %v1638, %v1636
  %v2185 = vpack.c.b16 %v1641, %v1639
  %v2186 = vpack.c.b16 %v1642, %v1640
  %v2187 = vpack.c.b16 %v1645, %v1643
  %v2188 = vpack.c.b16 %v1646, %v1644
  %v2189 = vpack.c.b16 %v1649, %v1647
  %v2190 = vpack.c.b16 %v1650, %v1648
  %v2191 = vpack.c.b16 %v1653, %v1651
  %v2192 = vpack.c.b16 %v1654, %v1652
  %v2193 = vpack.c.b16 %v1657, %v1655
  %v2194 = vpack.c.b16 %v1658, %v1656
  %v2195 = vpack.c.b16 %v1661, %v1659
  %v2196 = vpack.c.b16 %v1662, %v1660
  %v2197 = vpack.c.b16 %v1665, %v1663
  %v2198 = vpack.c.b16 %v1666, %v1664
  %v2199 = vpack.c.b16 %v1669, %v1667
  %v2200 = vpack.c.b16 %v1670, %v1668
  %v2201 = vpack.c.b16 %v1673, %v1671
  %v2202 = vpack.c.b16 %v1674, %v1672
  %v2203 = vpack.c.b16 %v1677, %v1675
  %v2204 = vpack.c.b16 %v1678, %v1676
  %v2205 = vpack.c.b16 %v1681, %v1679
  %v2206 = vpack.c.b16 %v1682, %v1680
  %v2207 = vpack.c.b16 %v1685, %v1683
  %v2208 = vpack.c.b16 %v1686, %v1684
  %v2209 = vpack.c.b16 %v1689, %v1687
  %v2210 = vpack.c.b16 %v1690, %v1688
  %v2211 = vpack.c.b16 %v1693, %v1691
  %v2212 = vpack.c.b16 %v1694, %v1692
  %v2213 = vpack.c.b16 %v1697, %v1695
  %v2214 = vpack.c.b16 %v1698, %v1696
  %v2215 = vpack.c.b16 %v1701, %v1699
  %v2216 = vpack.c.b16 %v1702, %v1700
  %v2217 = vpack.c.b16 %v1705, %v1703
  %v2218 = vpack.c.b16 %v1706, %v1704
  %v2219 = vpack.c.b16 %v1709, %v1707
  %v2220 = vpack.c.b16 %v1710, %v1708
  %v2221 = vpack.c.b16 %v1713, %v1711
  %v2222 = vpack.c.b16 %v1714, %v1712
  %v2223 = vpack.c.b16 %v1717, %v1715
  %v2224 = vpack.c.b16 %v1718, %v1716
  %v2225 = vpack.c.b16 %v1721, %v1719
  %v2226 = vpack.c.b16 %v1722, %v1720
  %v2227 = vpack.c.b16 %v1725, %v1723
  %v2228 = vpack.c.b16 %v1726, %v1724
  %v2229 = vpack.c.b16 %v1729, %v1727
  %v2230 = vpack.c.b16 %v1730, %v1728
  %v2231 = vpack.c.b16 %v1733, %v1731
  %v2232 = vpack.c.b16 %v1734, %v1732
  %v2233 = vpack.c.b16 %v1737, %v1735
  %v2234 = vpack.c.b16 %v1738, %v1736
  %v2235 = vpack.c.b16 %v1741, %v1739
  %v2236 = vpack.c.b16 %v1742, %v1740
  %v2237 = vpack.c.b16 %v1745, %v1743
  %v2238 = vpack.c.b16 %v1746, %v1744
  %v2239 = vpack.c.b16 %v1749, %v1747
  %v2240 = vpack.c.b16 %v1750, %v1748
  %v2241 = vpack.c.b16 %v1753, %v1751
  %v2242 = vpack.c.b16 %v1754, %v1752
  %v2243 = vpack.c.b16 %v1757, %v1755
  %v2244 = vpack.c.b16 %v1758, %v1756
  %v2245 = vpack.c.b16 %v1761, %v1759
  %v2246 = vpack.c.b16 %v1762, %v1760
  %v2247 = vpack.c.b16 %v1765, %v1763
  %v2248 = vpack.c.b16 %v1766, %v1764
  %v2249 = vpack.c.b16 %v1769, %v1767
  %v2250 = vpack.c.b16 %v1770, %v1768
  %v2251 = vpack.c.b16 %v1773, %v1771
  %v2252 = vpack.c.b16 %v1774, %v1772
  %v2253 = vpack.c.b16 %v1777, %v1775
  %v2254 = vpack.c.b16 %v1778, %v1776
  %v2255 = vpack.c.b16 %v1781, %v1779
  %v2256 = vpack.c.b16 %v1782, %v1780
  %v2257 = vpack.c.b16 %v1785, %v1783
  %v2258 = vpack.c.b16 %v1786, %v1784
  %v2259 = vpack.c.b16 %v1789, %v1787
  %v2260 = vpack.c.b16 %v1790, %v1788
  %v2261 = vpack.c.b16 %v1793, %v1791
  %v2262 = vpack.c.b16 %v1794, %v1792
  %v2263 = vpack.c.b16 %v1797, %v1795
  %v2264 = vpack.c.b16 %v1798, %v1796
  %v2265 = vpack.c.b16 %v1801, %v1799
  %v2266 = vpack.c.b16 %v1802, %v1800
  %v2267 = vpack.c.b16 %v1805, %v1803
  %v2268 = vpack.c.b16 %v1806, %v1804
  %v2269 = vpack.c.b16 %v1809, %v1807
  %v2270 = vpack.c.b16 %v1810, %v1808
  %v2271 = vpack.c.b16 %v1813, %v1811
  %v2272 = vpack.c.b16 %v1814, %v1812
  %v2273 = vpack.c.b16 %v1817, %v1815
  %v2274 = vpack.c.b16 %v1818, %v1816
  %v2275 = vpack.c.b16 %v1821, %v1819
  %v2276 = vpack.c.b16 %v1822, %v1820
  %v2277 = vpack.c.b16 %v1825, %v1823
  %v2278 = vpack.c.b16 %v1826, %v1824
  %v2279 = vpack.c.b16 %v1829, %v1827
  %v2280 = vpack.c.b16 %v1830, %v1828
  %v2281 = vpack.c.b16 %v1833, %v1831
  %v2282 = vpack.c.b16 %v1834, %v1832
  %v2283 = vpack.c.b16 %v1837, %v1835
  %v2284 = vpack.c.b16 %v1838, %v1836
  %v2285 = vpack.c.b16 %v1841, %v1839
  %v2286 = vpack.c.b16 %v1842, %v1840
  %v2287 = vpack.c.b16 %v1845, %v1843
  %v2288 = vpack.c.b16 %v1846, %v1844
  %v2289 = vpack.c.b16 %v1849, %v1847
  %v2290 = vpack.c.b16 %v1850, %v1848
  %v2291 = vpack.c.b16 %v1853, %v1851
  %v2292 = vpack.c.b16 %v1854, %v1852
  %v2293 = vpack.c.b16 %v1857, %v1855
  %v2294 = vpack.c.b16 %v1858, %v1856
  %v2295 = vpack.c.b16 %v1861, %v1859
  %v2296 = vpack.c.b16 %v1862, %v1860
  %v2297 = vpack.c.b16 %v1865, %v1863
  %v2298 = vpack.c.b16 %v1866, %v1864
  %v2299 = vpack.c.b16 %v1869, %v1867
  %v2300 = vpack.c.b16 %v1870, %v1868
  %v2301 = vpack.c.b16 %v1873, %v1871
  %v2302 = vpack.c.b16 %v1874, %v1872
  %v2303 = vpack.c.b16 %v1877, %v1875
  %v2304 = vpack.c.b16 %v1878, %v1876
  %v2305 = vpack.c.b16 %v1881, %v1879
  %v2306 = vpack.c.b16 %v1882, %v1880
  %v2307 = vpack.c.b16 %v1885, %v1883
  %v2308 = vpack.c.b16 %v1886, %v1884
  %v2309 = vpack.c.b16 %v1889, %v1887
  %v2310 = vpack.c.b16 %v1890, %v1888
  %v2311 = vpack.c.b16 %v1893, %v1891
  %v2312 = vpack.c.b16 %v1894, %v1892
  %v2313 = vpack.c.b16 %v1897, %v1895
  %v2314 = vpack.c.b16 %v1898, %v1896
  %v2315 = vpack.c.b16 %v1901, %v1899
  %v2316 = vpack.c.b16 %v1902, %v1900
  %v2317 = vpack.c.b16 %v1905, %v1903
  %v2318 = vpack.c.b16 %v1906, %v1904
  %v2319 = vpack.c.b16 %v1909, %v1907
  %v2320 = vpack.c.b16 %v1910, %v1908
  %v2321 = vpack.c.b16 %v1913, %v1911
  %v2322 = vpack.c.b16 %v1914, %v1912
  %v2323 = vpack.c.b16 %v1917, %v1915
  %v2324 = vpack.c.b16 %v1918, %v1916
  %v2325 = vpack.c.b16 %v1921, %v1919
  %v2326 = vpack.c.b16 %v1922, %v1920
  %v2327 = vpack.c.b16 %v1925, %v1923
  %v2328 = vpack.c.b16 %v1926, %v1924
  %v2329 = vpack.c.b16 %v1929, %v1927
  %v2330 = vpack.c.b16 %v1930, %v1928
  %2731 = vmatprep.subr.bf16.mxu0 %v1932
  %2732 = vmatpush1.bf16.msra.mxu0 %v1931
  %2733 = vmatprep.subr.bf16.mxu0 %v1934
  %2734 = vmatpush1.bf16.msra.mxu0 %v1933
  %2735 = vmatprep.subr.bf16.mxu0 %v1936
  %2736 = vmatpush1.bf16.msra.mxu0 %v1935
  %2737 = vmatprep.subr.bf16.mxu0 %v1938
  %2738 = vmatpush1.bf16.msra.mxu0 %v1937
  %2739 = vmatprep.subr.bf16.mxu0 %v1940
  %2740 = vmatpush1.bf16.msra.mxu0 %v1939
  %2741 = vmatprep.subr.bf16.mxu0 %v1942
  %2742 = vmatpush1.bf16.msra.mxu0 %v1941
  %2743 = vmatprep.subr.bf16.mxu0 %v1944
  %2744 = vmatpush1.bf16.msra.mxu0 %v1943
  %2745 = vmatprep.subr.bf16.mxu0 %v1946
  %2746 = vmatpush1.bf16.msra.mxu0 %v1945
  %2747 = vmatprep.subr.bf16.mxu0 %v1948
  %2748 = vmatpush1.bf16.msra.mxu0 %v1947
  %2749 = vmatprep.subr.bf16.mxu0 %v1950
  %2750 = vmatpush1.bf16.msra.mxu0 %v1949
  %2751 = vmatprep.subr.bf16.mxu0 %v1952
  %2752 = vmatpush1.bf16.msra.mxu0 %v1951
  %2753 = vmatprep.subr.bf16.mxu0 %v1954
  %2754 = vmatpush1.bf16.msra.mxu0 %v1953
  %2755 = vmatprep.subr.bf16.mxu0 %v1956
  %2756 = vmatpush1.bf16.msra.mxu0 %v1955
  %2757 = vmatprep.subr.bf16.mxu0 %v1958
  %2758 = vmatpush1.bf16.msra.mxu0 %v1957
  %2759 = vmatprep.subr.bf16.mxu0 %v1960
  %2760 = vmatpush1.bf16.msra.mxu0 %v1959
  %2761 = vmatprep.subr.bf16.mxu0 %v1962
  %2762 = vmatpush1.bf16.msra.mxu0 %v1961
  %2763 = vmatprep.mubr.bf16.mxu0 %v632
  %2764 = vmatmul.mubr.bf16.gmra.mrb[0].mxu0 %v631
  %v2765 = vpop.f32.mrb[0].mxu0
  %v2766 = vadd.f32 %v472, %v2765
  %v2767 = vpop.f32.mrb[0].mxu0
  %v2768 = vadd.f32 %v476, %v2767
  %v2769 = vpop.f32.mrb[0].mxu0
  %v2770 = vadd.f32 %v472, %v2769
  %v2771 = vpop.f32.mrb[0].mxu0
  %v2772 = vadd.f32 %v476, %v2771
  %2773 = vmatprep.mubr.bf16.mxu0 %v657
  %2774 = vmatmul.mubr.bf16.gmra.mrb[0].mxu0 %v656
  %v2775 = vpop.f32.mrb[0].mxu0
  %v2776 = vadd.f32 %v472, %v2775
  %v2777 = vpop.f32.mrb[0].mxu0
  %v2778 = vadd.f32 %v476, %v2777
  %v2779 = vpop.f32.mrb[0].mxu0
  %v2780 = vadd.f32 %v472, %v2779
  %v2781 = vpop.f32.mrb[0].mxu0
  %v2782 = vadd.f32 %v476, %v2781
  %2783 = vdwg.mxu0
  %2784 = vmatprep.subr.bf16.mxu0 %v1964
  %2785 = vmatpush1.bf16.msra.mxu0 %v1963
  %2786 = vmatprep.subr.bf16.mxu0 %v1966
  %2787 = vmatpush1.bf16.msra.mxu0 %v1965
  %2788 = vmatprep.subr.bf16.mxu0 %v1968
  %2789 = vmatpush1.bf16.msra.mxu0 %v1967
  %2790 = vmatprep.subr.bf16.mxu0 %v1970
  %2791 = vmatpush1.bf16.msra.mxu0 %v1969
  %2792 = vmatprep.subr.bf16.mxu0 %v1972
  %2793 = vmatpush1.bf16.msra.mxu0 %v1971
  %2794 = vmatprep.subr.bf16.mxu0 %v1974
  %2795 = vmatpush1.bf16.msra.mxu0 %v1973
  %2796 = vmatprep.subr.bf16.mxu0 %v1976
  %2797 = vmatpush1.bf16.msra.mxu0 %v1975
  %2798 = vmatprep.subr.bf16.mxu0 %v1978
  %2799 = vmatpush1.bf16.msra.mxu0 %v1977
  %2800 = vmatprep.subr.bf16.mxu0 %v1980
  %2801 = vmatpush1.bf16.msra.mxu0 %v1979
  %2802 = vmatprep.subr.bf16.mxu0 %v1982
  %2803 = vmatpush1.bf16.msra.mxu0 %v1981
  %2804 = vmatprep.subr.bf16.mxu0 %v1984
  %2805 = vmatpush1.bf16.msra.mxu0 %v1983
  %2806 = vmatprep.subr.bf16.mxu0 %v1986
  %2807 = vmatpush1.bf16.msra.mxu0 %v1985
  %2808 = vmatprep.subr.bf16.mxu0 %v1988
  %2809 = vmatpush1.bf16.msra.mxu0 %v1987
  %2810 = vmatprep.subr.bf16.mxu0 %v1990
  %2811 = vmatpush1.bf16.msra.mxu0 %v1989
  %2812 = vmatprep.subr.bf16.mxu0 %v1992
  %2813 = vmatpush1.bf16.msra.mxu0 %v1991
  %2814 = vmatprep.subr.bf16.mxu0 %v1994
  %2815 = vmatpush1.bf16.msra.mxu0 %v1993
  %2816 = vmatprep.mubr.bf16.mxu0 %v634
  %2817 = vmatmul.mubr.bf16.gmra.mrb[0].mxu0 %v633
  %v2818 = vpop.f32.mrb[0].mxu0
  %v2819 = vadd.f32 %v2766, %v2818
  %v2820 = vpop.f32.mrb[0].mxu0
  %v2821 = vadd.f32 %v2768, %v2820
  %v2822 = vpop.f32.mrb[0].mxu0
  %v2823 = vadd.f32 %v2770, %v2822
  %v2824 = vpop.f32.mrb[0].mxu0
  %v2825 = vadd.f32 %v2772, %v2824
  %2826 = vmatprep.mubr.bf16.mxu0 %v659
  %2827 = vmatmul.mubr.bf16.gmra.mrb[0].mxu0 %v658
  %v2828 = vpop.f32.mrb[0].mxu0
  %v2829 = vadd.f32 %v2776, %v2828
  %v2830 = vpop.f32.mrb[0].mxu0
  %v2831 = vadd.f32 %v2778, %v2830
  %v2832 = vpop.f32.mrb[0].mxu0
  %v2833 = vadd.f32 %v2780, %v2832
  %v2834 = vpop.f32.mrb[0].mxu0
  %v2835 = vadd.f32 %v2782, %v2834
  %2836 = vdwg.mxu0
  %2837 = vmatprep.subr.bf16.mxu0 %v1996
  %2838 = vmatpush1.bf16.msra.mxu0 %v1995
  %2839 = vmatprep.subr.bf16.mxu0 %v1998
  %2840 = vmatpush1.bf16.msra.mxu0 %v1997
  %2841 = vmatprep.subr.bf16.mxu0 %v2000
  %2842 = vmatpush1.bf16.msra.mxu0 %v1999
  %2843 = vmatprep.subr.bf16.mxu0 %v2002
  %2844 = vmatpush1.bf16.msra.mxu0 %v2001
  %2845 = vmatprep.subr.bf16.mxu0 %v2004
  %2846 = vmatpush1.bf16.msra.mxu0 %v2003
  %2847 = vmatprep.subr.bf16.mxu0 %v2006
  %2848 = vmatpush1.bf16.msra.mxu0 %v2005
  %2849 = vmatprep.subr.bf16.mxu0 %v2008
  %2850 = vmatpush1.bf16.msra.mxu0 %v2007
  %2851 = vmatprep.subr.bf16.mxu0 %v2010
  %2852 = vmatpush1.bf16.msra.mxu0 %v2009
  %2853 = vmatprep.subr.bf16.mxu0 %v2012
  %2854 = vmatpush1.bf16.msra.mxu0 %v2011
  %2855 = vmatprep.subr.bf16.mxu0 %v2014
  %2856 = vmatpush1.bf16.msra.mxu0 %v2013
  %2857 = vmatprep.subr.bf16.mxu0 %v2016
  %2858 = vmatpush1.bf16.msra.mxu0 %v2015
  %2859 = vmatprep.subr.bf16.mxu0 %v2018
  %2860 = vmatpush1.bf16.msra.mxu0 %v2017
  %2861 = vmatprep.subr.bf16.mxu0 %v2020
  %2862 = vmatpush1.bf16.msra.mxu0 %v2019
  %2863 = vmatprep.subr.bf16.mxu0 %v2022
  %2864 = vmatpush1.bf16.msra.mxu0 %v2021
  %2865 = vmatprep.subr.bf16.mxu0 %v2024
  %2866 = vmatpush1.bf16.msra.mxu0 %v2023
  %2867 = vmatprep.subr.bf16.mxu0 %v2026
  %2868 = vmatpush1.bf16.msra.mxu0 %v2025
  %2869 = vmatprep.mubr.bf16.mxu0 %v636
  %2870 = vmatmul.mubr.bf16.gmra.mrb[0].mxu0 %v635
  %v2871 = vpop.f32.mrb[0].mxu0
  %v2872 = vadd.f32 %v2819, %v2871
  %v2873 = vpop.f32.mrb[0].mxu0
  %v2874 = vadd.f32 %v2821, %v2873
  %v2875 = vpop.f32.mrb[0].mxu0
  %v2876 = vadd.f32 %v2823, %v2875
  %v2877 = vpop.f32.mrb[0].mxu0
  %v2878 = vadd.f32 %v2825, %v2877
  %2879 = vmatprep.mubr.bf16.mxu0 %v661
  %2880 = vmatmul.mubr.bf16.gmra.mrb[0].mxu0 %v660
  %v2881 = vpop.f32.mrb[0].mxu0
  %v2882 = vadd.f32 %v2829, %v2881
  %v2883 = vpop.f32.mrb[0].mxu0
  %v2884 = vadd.f32 %v2831, %v2883
  %v2885 = vpop.f32.mrb[0].mxu0
  %v2886 = vadd.f32 %v2833, %v2885
  %v2887 = vpop.f32.mrb[0].mxu0
  %v2888 = vadd.f32 %v2835, %v2887
  %2889 = vdwg.mxu0
  %2890 = vmatprep.subr.bf16.mxu0 %v2028
  %2891 = vmatpush1.bf16.msra.mxu0 %v2027
  %2892 = vmatprep.subr.bf16.mxu0 %v2030
  %2893 = vmatpush1.bf16.msra.mxu0 %v2029
  %2894 = vmatprep.subr.bf16.mxu0 %v2032
  %2895 = vmatpush1.bf16.msra.mxu0 %v2031
  %2896 = vmatprep.subr.bf16.mxu0 %v2034
  %2897 = vmatpush1.bf16.msra.mxu0 %v2033
  %2898 = vmatprep.subr.bf16.mxu0 %v2036
  %2899 = vmatpush1.bf16.msra.mxu0 %v2035
  %2900 = vmatprep.subr.bf16.mxu0 %v2038
  %2901 = vmatpush1.bf16.msra.mxu0 %v2037
  %2902 = vmatprep.subr.bf16.mxu0 %v2040
  %2903 = vmatpush1.bf16.msra.mxu0 %v2039
  %2904 = vmatprep.subr.bf16.mxu0 %v2042
  %2905 = vmatpush1.bf16.msra.mxu0 %v2041
  %2906 = vmatprep.subr.bf16.mxu0 %v2044
  %2907 = vmatpush1.bf16.msra.mxu0 %v2043
  %2908 = vmatprep.subr.bf16.mxu0 %v2046
  %2909 = vmatpush1.bf16.msra.mxu0 %v2045
  %2910 = vmatprep.subr.bf16.mxu0 %v2048
  %2911 = vmatpush1.bf16.msra.mxu0 %v2047
  %2912 = vmatprep.subr.bf16.mxu0 %v2050
  %2913 = vmatpush1.bf16.msra.mxu0 %v2049
  %2914 = vmatprep.subr.bf16.mxu0 %v2052
  %2915 = vmatpush1.bf16.msra.mxu0 %v2051
  %2916 = vmatprep.subr.bf16.mxu0 %v2054
  %2917 = vmatpush1.bf16.msra.mxu0 %v2053
  %2918 = vmatprep.subr.bf16.mxu0 %v2056
  %2919 = vmatpush1.bf16.msra.mxu0 %v2055
  %2920 = vmatprep.subr.bf16.mxu0 %v2058
  %2921 = vmatpush1.bf16.msra.mxu0 %v2057
  %2922 = vmatprep.mubr.bf16.mxu0 %v638
  %2923 = vmatmul.mubr.bf16.gmra.mrb[0].mxu0 %v637
  %v2924 = vpop.f32.mrb[0].mxu0
  %v2925 = vadd.f32 %v2872, %v2924
  %v2926 = vpop.f32.mrb[0].mxu0
  %v2927 = vadd.f32 %v2874, %v2926
  %v2928 = vpop.f32.mrb[0].mxu0
  %v2929 = vadd.f32 %v2876, %v2928
  %v2930 = vpop.f32.mrb[0].mxu0
  %v2931 = vadd.f32 %v2878, %v2930
  %2932 = vmatprep.mubr.bf16.mxu0 %v663
  %2933 = vmatmul.mubr.bf16.gmra.mrb[0].mxu0 %v662
  %v2934 = vpop.f32.mrb[0].mxu0
  %v2935 = vadd.f32 %v2882, %v2934
  %v2936 = vpop.f32.mrb[0].mxu0
  %v2937 = vadd.f32 %v2884, %v2936
  %v2938 = vpop.f32.mrb[0].mxu0
  %v2939 = vadd.f32 %v2886, %v2938
  %v2940 = vpop.f32.mrb[0].mxu0
  %v2941 = vadd.f32 %v2888, %v2940
  %2942 = vdwg.mxu0
  %2943 = vmatprep.subr.bf16.mxu0 %v2060
  %2944 = vmatpush1.bf16.msra.mxu0 %v2059
  %2945 = vmatprep.subr.bf16.mxu0 %v2062
  %2946 = vmatpush1.bf16.msra.mxu0 %v2061
  %2947 = vmatprep.subr.bf16.mxu0 %v2064
  %2948 = vmatpush1.bf16.msra.mxu0 %v2063
  %2949 = vmatprep.subr.bf16.mxu0 %v2066
  %2950 = vmatpush1.bf16.msra.mxu0 %v2065
  %2951 = vmatprep.subr.bf16.mxu0 %v2068
  %2952 = vmatpush1.bf16.msra.mxu0 %v2067
  %2953 = vmatprep.subr.bf16.mxu0 %v2070
  %2954 = vmatpush1.bf16.msra.mxu0 %v2069
  %2955 = vmatprep.subr.bf16.mxu0 %v2072
  %2956 = vmatpush1.bf16.msra.mxu0 %v2071
  %2957 = vmatprep.subr.bf16.mxu0 %v2074
  %2958 = vmatpush1.bf16.msra.mxu0 %v2073
  %2959 = vmatprep.subr.bf16.mxu0 %v2076
  %2960 = vmatpush1.bf16.msra.mxu0 %v2075
  %2961 = vmatprep.subr.bf16.mxu0 %v2078
  %2962 = vmatpush1.bf16.msra.mxu0 %v2077
  %2963 = vmatprep.subr.bf16.mxu0 %v2080
  %2964 = vmatpush1.bf16.msra.mxu0 %v2079
  %2965 = vmatprep.subr.bf16.mxu0 %v2082
  %2966 = vmatpush1.bf16.msra.mxu0 %v2081
  %2967 = vmatprep.subr.bf16.mxu0 %v2084
  %2968 = vmatpush1.bf16.msra.mxu0 %v2083
  %2969 = vmatprep.subr.bf16.mxu0 %v2086
  %2970 = vmatpush1.bf16.msra.mxu0 %v2085
  %2971 = vmatprep.subr.bf16.mxu0 %v2088
  %2972 = vmatpush1.bf16.msra.mxu0 %v2087
  %2973 = vmatprep.subr.bf16.mxu0 %v2090
  %2974 = vmatpush1.bf16.msra.mxu0 %v2089
  %2975 = vmatprep.mubr.bf16.mxu0 %v640
  %2976 = vmatmul.mubr.bf16.gmra.mrb[0].mxu0 %v639
  %v2977 = vpop.f32.mrb[0].mxu0
  %v2978 = vadd.f32 %v2925, %v2977
  %v2979 = vpop.f32.mrb[0].mxu0
  %v2980 = vadd.f32 %v2927, %v2979
  %v2981 = vpop.f32.mrb[0].mxu0
  %v2982 = vadd.f32 %v2929, %v2981
  %v2983 = vpop.f32.mrb[0].mxu0
  %v2984 = vadd.f32 %v2931, %v2983
  %2985 = vmatprep.mubr.bf16.mxu0 %v665
  %2986 = vmatmul.mubr.bf16.gmra.mrb[0].mxu0 %v664
  %v2987 = vpop.f32.mrb[0].mxu0
  %v2988 = vadd.f32 %v2935, %v2987
  %v2989 = vpop.f32.mrb[0].mxu0
  %v2990 = vadd.f32 %v2937, %v2989
  %v2991 = vpop.f32.mrb[0].mxu0
  %v2992 = vadd.f32 %v2939, %v2991
  %v2993 = vpop.f32.mrb[0].mxu0
  %v2994 = vadd.f32 %v2941, %v2993
  %2995 = vdwg.mxu0
  %2996 = vmatprep.subr.bf16.mxu0 %v2092
  %2997 = vmatpush1.bf16.msra.mxu0 %v2091
  %2998 = vmatprep.subr.bf16.mxu0 %v2094
  %2999 = vmatpush1.bf16.msra.mxu0 %v2093
  %3000 = vmatprep.subr.bf16.mxu0 %v2096
  %3001 = vmatpush1.bf16.msra.mxu0 %v2095
  %3002 = vmatprep.subr.bf16.mxu0 %v2098
  %3003 = vmatpush1.bf16.msra.mxu0 %v2097
  %3004 = vmatprep.subr.bf16.mxu0 %v2100
  %3005 = vmatpush1.bf16.msra.mxu0 %v2099
  %3006 = vmatprep.subr.bf16.mxu0 %v2102
  %3007 = vmatpush1.bf16.msra.mxu0 %v2101
  %3008 = vmatprep.subr.bf16.mxu0 %v2104
  %3009 = vmatpush1.bf16.msra.mxu0 %v2103
  %3010 = vmatprep.subr.bf16.mxu0 %v2106
  %3011 = vmatpush1.bf16.msra.mxu0 %v2105
  %3012 = vmatprep.subr.bf16.mxu0 %v2108
  %3013 = vmatpush1.bf16.msra.mxu0 %v2107
  %3014 = vmatprep.subr.bf16.mxu0 %v2110
  %3015 = vmatpush1.bf16.msra.mxu0 %v2109
  %3016 = vmatprep.subr.bf16.mxu0 %v2112
  %3017 = vmatpush1.bf16.msra.mxu0 %v2111
  %3018 = vmatprep.subr.bf16.mxu0 %v2114
  %3019 = vmatpush1.bf16.msra.mxu0 %v2113
  %3020 = vmatprep.subr.bf16.mxu0 %v2116
  %3021 = vmatpush1.bf16.msra.mxu0 %v2115
  %3022 = vmatprep.subr.bf16.mxu0 %v2118
  %3023 = vmatpush1.bf16.msra.mxu0 %v2117
  %3024 = vmatprep.subr.bf16.mxu0 %v2120
  %3025 = vmatpush1.bf16.msra.mxu0 %v2119
  %3026 = vmatprep.subr.bf16.mxu0 %v2122
  %3027 = vmatpush1.bf16.msra.mxu0 %v2121
  %3028 = vmatprep.mubr.bf16.mxu0 %v642
  %3029 = vmatmul.mubr.bf16.gmra.mrb[0].mxu0 %v641
  %v3030 = vpop.f32.mrb[0].mxu0
  %v3031 = vadd.f32 %v2978, %v3030
  %v3032 = vpop.f32.mrb[0].mxu0
  %v3033 = vadd.f32 %v2980, %v3032
  %v3034 = vpop.f32.mrb[0].mxu0
  %v3035 = vadd.f32 %v2982, %v3034
  %v3036 = vpop.f32.mrb[0].mxu0
  %v3037 = vadd.f32 %v2984, %v3036
  %3038 = vmatprep.mubr.bf16.mxu0 %v667
  %3039 = vmatmul.mubr.bf16.gmra.mrb[0].mxu0 %v666
  %v3040 = vpop.f32.mrb[0].mxu0
  %v3041 = vadd.f32 %v2988, %v3040
  %v3042 = vpop.f32.mrb[0].mxu0
  %v3043 = vadd.f32 %v2990, %v3042
  %v3044 = vpop.f32.mrb[0].mxu0
  %v3045 = vadd.f32 %v2992, %v3044
  %v3046 = vpop.f32.mrb[0].mxu0
  %v3047 = vadd.f32 %v2994, %v3046
  %3048 = vdwg.mxu0
  %3049 = vmatprep.subr.bf16.mxu0 %v2124
  %3050 = vmatpush1.bf16.msra.mxu0 %v2123
  %3051 = vmatprep.subr.bf16.mxu0 %v2126
  %3052 = vmatpush1.bf16.msra.mxu0 %v2125
  %3053 = vmatprep.subr.bf16.mxu0 %v2128
  %3054 = vmatpush1.bf16.msra.mxu0 %v2127
  %3055 = vmatprep.subr.bf16.mxu0 %v2130
  %3056 = vmatpush1.bf16.msra.mxu0 %v2129
  %3057 = vmatprep.subr.bf16.mxu0 %v2132
  %3058 = vmatpush1.bf16.msra.mxu0 %v2131
  %3059 = vmatprep.subr.bf16.mxu0 %v2134
  %3060 = vmatpush1.bf16.msra.mxu0 %v2133
  %3061 = vmatprep.subr.bf16.mxu0 %v2136
  %3062 = vmatpush1.bf16.msra.mxu0 %v2135
  %3063 = vmatprep.subr.bf16.mxu0 %v2138
  %3064 = vmatpush1.bf16.msra.mxu0 %v2137
  %3065 = vmatprep.subr.bf16.mxu0 %v2140
  %3066 = vmatpush1.bf16.msra.mxu0 %v2139
  %3067 = vmatprep.subr.bf16.mxu0 %v2142
  %3068 = vmatpush1.bf16.msra.mxu0 %v2141
  %3069 = vmatprep.subr.bf16.mxu0 %v2144
  %3070 = vmatpush1.bf16.msra.mxu0 %v2143
  %3071 = vmatprep.subr.bf16.mxu0 %v2146
  %3072 = vmatpush1.bf16.msra.mxu0 %v2145
  %3073 = vmatprep.subr.bf16.mxu0 %v2148
  %3074 = vmatpush1.bf16.msra.mxu0 %v2147
  %3075 = vmatprep.subr.bf16.mxu0 %v2150
  %3076 = vmatpush1.bf16.msra.mxu0 %v2149
  %3077 = vmatprep.subr.bf16.mxu0 %v2152
  %3078 = vmatpush1.bf16.msra.mxu0 %v2151
  %3079 = vmatprep.subr.bf16.mxu0 %v2154
  %3080 = vmatpush1.bf16.msra.mxu0 %v2153
  %3081 = vmatprep.mubr.bf16.mxu0 %v644
  %3082 = vmatmul.mubr.bf16.gmra.mrb[0].mxu0 %v643
  %v3083 = vpop.f32.mrb[0].mxu0
  %v3084 = vadd.f32 %v3031, %v3083
  %v3085 = vpop.f32.mrb[0].mxu0
  %v3086 = vadd.f32 %v3033, %v3085
  %v3087 = vpop.f32.mrb[0].mxu0
  %v3088 = vadd.f32 %v3035, %v3087
  %v3089 = vpop.f32.mrb[0].mxu0
  %v3090 = vadd.f32 %v3037, %v3089
  %3091 = vmatprep.mubr.bf16.mxu0 %v669
  %3092 = vmatmul.mubr.bf16.gmra.mrb[0].mxu0 %v668
  %v3093 = vpop.f32.mrb[0].mxu0
  %v3094 = vadd.f32 %v3041, %v3093
  %v3095 = vpop.f32.mrb[0].mxu0
  %v3096 = vadd.f32 %v3043, %v3095
  %v3097 = vpop.f32.mrb[0].mxu0
  %v3098 = vadd.f32 %v3045, %v3097
  %v3099 = vpop.f32.mrb[0].mxu0
  %v3100 = vadd.f32 %v3047, %v3099
  %3101 = vdwg.mxu0
  %3102 = vmatprep.subr.bf16.mxu0 %v2156
  %3103 = vmatpush1.bf16.msra.mxu0 %v2155
  %3104 = vmatprep.subr.bf16.mxu0 %v2158
  %3105 = vmatpush1.bf16.msra.mxu0 %v2157
  %3106 = vmatprep.subr.bf16.mxu0 %v2160
  %3107 = vmatpush1.bf16.msra.mxu0 %v2159
  %3108 = vmatprep.subr.bf16.mxu0 %v2162
  %3109 = vmatpush1.bf16.msra.mxu0 %v2161
  %3110 = vmatprep.subr.bf16.mxu0 %v2164
  %3111 = vmatpush1.bf16.msra.mxu0 %v2163
  %3112 = vmatprep.subr.bf16.mxu0 %v2166
  %3113 = vmatpush1.bf16.msra.mxu0 %v2165
  %3114 = vmatprep.subr.bf16.mxu0 %v2168
  %3115 = vmatpush1.bf16.msra.mxu0 %v2167
  %3116 = vmatprep.subr.bf16.mxu0 %v2170
  %3117 = vmatpush1.bf16.msra.mxu0 %v2169
  %3118 = vmatprep.subr.bf16.mxu0 %v2172
  %3119 = vmatpush1.bf16.msra.mxu0 %v2171
  %3120 = vmatprep.subr.bf16.mxu0 %v2174
  %3121 = vmatpush1.bf16.msra.mxu0 %v2173
  %3122 = vmatprep.subr.bf16.mxu0 %v2176
  %3123 = vmatpush1.bf16.msra.mxu0 %v2175
  %3124 = vmatprep.subr.bf16.mxu0 %v2178
  %3125 = vmatpush1.bf16.msra.mxu0 %v2177
  %3126 = vmatprep.subr.bf16.mxu0 %v2180
  %3127 = vmatpush1.bf16.msra.mxu0 %v2179
  %3128 = vmatprep.subr.bf16.mxu0 %v2182
  %3129 = vmatpush1.bf16.msra.mxu0 %v2181
  %3130 = vmatprep.subr.bf16.mxu0 %v2184
  %3131 = vmatpush1.bf16.msra.mxu0 %v2183
  %3132 = vmatprep.subr.bf16.mxu0 %v2186
  %3133 = vmatpush1.bf16.msra.mxu0 %v2185
  %3134 = vmatprep.mubr.bf16.mxu0 %v646
  %3135 = vmatmul.mubr.bf16.gmra.mrb[0].mxu0 %v645
  %v3136 = vpop.f32.mrb[0].mxu0
  %v3137 = vadd.f32 %v3084, %v3136
  %v3138 = vpop.f32.mrb[0].mxu0
  %v3139 = vadd.f32 %v3086, %v3138
  %v3140 = vpop.f32.mrb[0].mxu0
  %v3141 = vadd.f32 %v3088, %v3140
  %v3142 = vpop.f32.mrb[0].mxu0
  %v3143 = vadd.f32 %v3090, %v3142
  %3144 = vmatprep.mubr.bf16.mxu0 %v671
  %3145 = vmatmul.mubr.bf16.gmra.mrb[0].mxu0 %v670
  %v3146 = vpop.f32.mrb[0].mxu0
  %v3147 = vadd.f32 %v3094, %v3146
  %v3148 = vpop.f32.mrb[0].mxu0
  %v3149 = vadd.f32 %v3096, %v3148
  %v3150 = vpop.f32.mrb[0].mxu0
  %v3151 = vadd.f32 %v3098, %v3150
  %v3152 = vpop.f32.mrb[0].mxu0
  %v3153 = vadd.f32 %v3100, %v3152
  %3154 = vdwg.mxu0
  %3155 = vmatprep.subr.bf16.mxu0 %v2188
  %3156 = vmatpush1.bf16.msra.mxu0 %v2187
  %3157 = vmatprep.subr.bf16.mxu0 %v2190
  %3158 = vmatpush1.bf16.msra.mxu0 %v2189
  %3159 = vmatprep.subr.bf16.mxu0 %v2192
  %3160 = vmatpush1.bf16.msra.mxu0 %v2191
  %3161 = vmatprep.subr.bf16.mxu0 %v2194
  %3162 = vmatpush1.bf16.msra.mxu0 %v2193
  %3163 = vmatprep.subr.bf16.mxu0 %v2196
  %3164 = vmatpush1.bf16.msra.mxu0 %v2195
  %3165 = vmatprep.subr.bf16.mxu0 %v2198
  %3166 = vmatpush1.bf16.msra.mxu0 %v2197
  %3167 = vmatprep.subr.bf16.mxu0 %v2200
  %3168 = vmatpush1.bf16.msra.mxu0 %v2199
  %3169 = vmatprep.subr.bf16.mxu0 %v2202
  %3170 = vmatpush1.bf16.msra.mxu0 %v2201
  %3171 = vmatprep.subr.bf16.mxu0 %v2204
  %3172 = vmatpush1.bf16.msra.mxu0 %v2203
  %3173 = vmatprep.subr.bf16.mxu0 %v2206
  %3174 = vmatpush1.bf16.msra.mxu0 %v2205
  %3175 = vmatprep.subr.bf16.mxu0 %v2208
  %3176 = vmatpush1.bf16.msra.mxu0 %v2207
  %3177 = vmatprep.subr.bf16.mxu0 %v2210
  %3178 = vmatpush1.bf16.msra.mxu0 %v2209
  %3179 = vmatprep.subr.bf16.mxu0 %v2212
  %3180 = vmatpush1.bf16.msra.mxu0 %v2211
  %3181 = vmatprep.subr.bf16.mxu0 %v2214
  %3182 = vmatpush1.bf16.msra.mxu0 %v2213
  %3183 = vmatprep.subr.bf16.mxu0 %v2216
  %3184 = vmatpush1.bf16.msra.mxu0 %v2215
  %3185 = vmatprep.subr.bf16.mxu0 %v2218
  %3186 = vmatpush1.bf16.msra.mxu0 %v2217
  %3187 = vmatprep.mubr.bf16.mxu0 %v648
  %3188 = vmatmul.mubr.bf16.gmra.mrb[0].mxu0 %v647
  %v3189 = vpop.f32.mrb[0].mxu0
  %v3190 = vadd.f32 %v3137, %v3189
  %v3191 = vpop.f32.mrb[0].mxu0
  %v3192 = vadd.f32 %v3139, %v3191
  %v3193 = vpop.f32.mrb[0].mxu0
  %v3194 = vadd.f32 %v3141, %v3193
  %v3195 = vpop.f32.mrb[0].mxu0
  %v3196 = vadd.f32 %v3143, %v3195
  %3197 = vmatprep.mubr.bf16.mxu0 %v673
  %3198 = vmatmul.mubr.bf16.gmra.mrb[0].mxu0 %v672
  %v3199 = vpop.f32.mrb[0].mxu0
  %v3200 = vadd.f32 %v3147, %v3199
  %v3201 = vpop.f32.mrb[0].mxu0
  %v3202 = vadd.f32 %v3149, %v3201
  %v3203 = vpop.f32.mrb[0].mxu0
  %v3204 = vadd.f32 %v3151, %v3203
  %v3205 = vpop.f32.mrb[0].mxu0
  %v3206 = vadd.f32 %v3153, %v3205
  %3207 = vdwg.mxu0
  %3208 = vmatprep.subr.bf16.mxu0 %v2220
  %3209 = vmatpush1.bf16.msra.mxu0 %v2219
  %3210 = vmatprep.subr.bf16.mxu0 %v2222
  %3211 = vmatpush1.bf16.msra.mxu0 %v2221
  %3212 = vmatprep.subr.bf16.mxu0 %v2224
  %3213 = vmatpush1.bf16.msra.mxu0 %v2223
  %3214 = vmatprep.subr.bf16.mxu0 %v2226
  %3215 = vmatpush1.bf16.msra.mxu0 %v2225
  %3216 = vmatprep.subr.bf16.mxu0 %v2228
  %3217 = vmatpush1.bf16.msra.mxu0 %v2227
  %3218 = vmatprep.subr.bf16.mxu0 %v2230
  %3219 = vmatpush1.bf16.msra.mxu0 %v2229
  %3220 = vmatprep.subr.bf16.mxu0 %v2232
  %3221 = vmatpush1.bf16.msra.mxu0 %v2231
  %3222 = vmatprep.subr.bf16.mxu0 %v2234
  %3223 = vmatpush1.bf16.msra.mxu0 %v2233
  %3224 = vmatprep.subr.bf16.mxu0 %v2236
  %3225 = vmatpush1.bf16.msra.mxu0 %v2235
  %3226 = vmatprep.subr.bf16.mxu0 %v2238
  %3227 = vmatpush1.bf16.msra.mxu0 %v2237
  %3228 = vmatprep.subr.bf16.mxu0 %v2240
  %3229 = vmatpush1.bf16.msra.mxu0 %v2239
  %3230 = vmatprep.subr.bf16.mxu0 %v2242
  %3231 = vmatpush1.bf16.msra.mxu0 %v2241
  %3232 = vmatprep.subr.bf16.mxu0 %v2244
  %3233 = vmatpush1.bf16.msra.mxu0 %v2243
  %3234 = vmatprep.subr.bf16.mxu0 %v2246
  %3235 = vmatpush1.bf16.msra.mxu0 %v2245
  %3236 = vmatprep.subr.bf16.mxu0 %v2248
  %3237 = vmatpush1.bf16.msra.mxu0 %v2247
  %3238 = vmatprep.subr.bf16.mxu0 %v2250
  %3239 = vmatpush1.bf16.msra.mxu0 %v2249
  %3240 = vmatprep.mubr.bf16.mxu0 %v650
  %3241 = vmatmul.mubr.bf16.gmra.mrb[0].mxu0 %v649
  %v3242 = vpop.f32.mrb[0].mxu0
  %v3243 = vadd.f32 %v3190, %v3242
  %v3244 = vpop.f32.mrb[0].mxu0
  %v3245 = vadd.f32 %v3192, %v3244
  %v3246 = vpop.f32.mrb[0].mxu0
  %v3247 = vadd.f32 %v3194, %v3246
  %v3248 = vpop.f32.mrb[0].mxu0
  %v3249 = vadd.f32 %v3196, %v3248
  %3250 = vmatprep.mubr.bf16.mxu0 %v675
  %3251 = vmatmul.mubr.bf16.gmra.mrb[0].mxu0 %v674
  %v3252 = vpop.f32.mrb[0].mxu0
  %v3253 = vadd.f32 %v3200, %v3252
  %v3254 = vpop.f32.mrb[0].mxu0
  %v3255 = vadd.f32 %v3202, %v3254
  %v3256 = vpop.f32.mrb[0].mxu0
  %v3257 = vadd.f32 %v3204, %v3256
  %v3258 = vpop.f32.mrb[0].mxu0
  %v3259 = vadd.f32 %v3206, %v3258
  %3260 = vdwg.mxu0
  %3261 = vmatprep.subr.bf16.mxu0 %v2252
  %3262 = vmatpush1.bf16.msra.mxu0 %v2251
  %3263 = vmatprep.subr.bf16.mxu0 %v2254
  %3264 = vmatpush1.bf16.msra.mxu0 %v2253
  %3265 = vmatprep.subr.bf16.mxu0 %v2256
  %3266 = vmatpush1.bf16.msra.mxu0 %v2255
  %3267 = vmatprep.subr.bf16.mxu0 %v2258
  %3268 = vmatpush1.bf16.msra.mxu0 %v2257
  %3269 = vmatprep.subr.bf16.mxu0 %v2260
  %3270 = vmatpush1.bf16.msra.mxu0 %v2259
  %3271 = vmatprep.subr.bf16.mxu0 %v2262
  %3272 = vmatpush1.bf16.msra.mxu0 %v2261
  %3273 = vmatprep.subr.bf16.mxu0 %v2264
  %3274 = vmatpush1.bf16.msra.mxu0 %v2263
  %3275 = vmatprep.subr.bf16.mxu0 %v2266
  %3276 = vmatpush1.bf16.msra.mxu0 %v2265
  %3277 = vmatprep.subr.bf16.mxu0 %v2268
  %3278 = vmatpush1.bf16.msra.mxu0 %v2267
  %3279 = vmatprep.subr.bf16.mxu0 %v2270
  %3280 = vmatpush1.bf16.msra.mxu0 %v2269
  %3281 = vmatprep.subr.bf16.mxu0 %v2272
  %3282 = vmatpush1.bf16.msra.mxu0 %v2271
  %3283 = vmatprep.subr.bf16.mxu0 %v2274
  %3284 = vmatpush1.bf16.msra.mxu0 %v2273
  %3285 = vmatprep.subr.bf16.mxu0 %v2276
  %3286 = vmatpush1.bf16.msra.mxu0 %v2275
  %3287 = vmatprep.subr.bf16.mxu0 %v2278
  %3288 = vmatpush1.bf16.msra.mxu0 %v2277
  %3289 = vmatprep.subr.bf16.mxu0 %v2280
  %3290 = vmatpush1.bf16.msra.mxu0 %v2279
  %3291 = vmatprep.subr.bf16.mxu0 %v2282
  %3292 = vmatpush1.bf16.msra.mxu0 %v2281
  %3293 = vmatprep.mubr.bf16.mxu0 %v652
  %3294 = vmatmul.mubr.bf16.gmra.mrb[0].mxu0 %v651
  %v3295 = vpop.f32.mrb[0].mxu0
  %v3296 = vadd.f32 %v3243, %v3295
  %v3297 = vpop.f32.mrb[0].mxu0
  %v3298 = vadd.f32 %v3245, %v3297
  %v3299 = vpop.f32.mrb[0].mxu0
  %v3300 = vadd.f32 %v3247, %v3299
  %v3301 = vpop.f32.mrb[0].mxu0
  %v3302 = vadd.f32 %v3249, %v3301
  %3303 = vmatprep.mubr.bf16.mxu0 %v677
  %3304 = vmatmul.mubr.bf16.gmra.mrb[0].mxu0 %v676
  %v3305 = vpop.f32.mrb[0].mxu0
  %v3306 = vadd.f32 %v3253, %v3305
  %v3307 = vpop.f32.mrb[0].mxu0
  %v3308 = vadd.f32 %v3255, %v3307
  %v3309 = vpop.f32.mrb[0].mxu0
  %v3310 = vadd.f32 %v3257, %v3309
  %v3311 = vpop.f32.mrb[0].mxu0
  %v3312 = vadd.f32 %v3259, %v3311
  %3313 = vdwg.mxu0
  %3314 = vmatprep.subr.bf16.mxu0 %v2284
  %3315 = vmatpush1.bf16.msra.mxu0 %v2283
  %3316 = vmatprep.subr.bf16.mxu0 %v2286
  %3317 = vmatpush1.bf16.msra.mxu0 %v2285
  %3318 = vmatprep.subr.bf16.mxu0 %v2288
  %3319 = vmatpush1.bf16.msra.mxu0 %v2287
  %3320 = vmatprep.subr.bf16.mxu0 %v2290
  %3321 = vmatpush1.bf16.msra.mxu0 %v2289
  %3322 = vmatprep.subr.bf16.mxu0 %v2292
  %3323 = vmatpush1.bf16.msra.mxu0 %v2291
  %3324 = vmatprep.subr.bf16.mxu0 %v2294
  %3325 = vmatpush1.bf16.msra.mxu0 %v2293
  %3326 = vmatprep.subr.bf16.mxu0 %v2296
  %3327 = vmatpush1.bf16.msra.mxu0 %v2295
  %3328 = vmatprep.subr.bf16.mxu0 %v2298
  %3329 = vmatpush1.bf16.msra.mxu0 %v2297
  %3330 = vmatprep.subr.bf16.mxu0 %v2300
  %3331 = vmatpush1.bf16.msra.mxu0 %v2299
  %3332 = vmatprep.subr.bf16.mxu0 %v2302
  %3333 = vmatpush1.bf16.msra.mxu0 %v2301
  %3334 = vmatprep.subr.bf16.mxu0 %v2304
  %3335 = vmatpush1.bf16.msra.mxu0 %v2303
  %3336 = vmatprep.subr.bf16.mxu0 %v2306
  %3337 = vmatpush1.bf16.msra.mxu0 %v2305
  %3338 = vmatprep.subr.bf16.mxu0 %v2308
  %3339 = vmatpush1.bf16.msra.mxu0 %v2307
  %3340 = vmatprep.subr.bf16.mxu0 %v2310
  %3341 = vmatpush1.bf16.msra.mxu0 %v2309
  %3342 = vmatprep.subr.bf16.mxu0 %v2312
  %3343 = vmatpush1.bf16.msra.mxu0 %v2311
  %3344 = vmatprep.subr.bf16.mxu0 %v2314
  %3345 = vmatpush1.bf16.msra.mxu0 %v2313
  %3346 = vmatprep.mubr.bf16.mxu0 %v654
  %3347 = vmatmul.mubr.bf16.gmra.mrb[0].mxu0 %v653
  %v3348 = vpop.f32.mrb[0].mxu0
  %v3349 = vadd.f32 %v3296, %v3348
  %v3350 = vpop.f32.mrb[0].mxu0
  %v3351 = vadd.f32 %v3298, %v3350
  %v3352 = vpop.f32.mrb[0].mxu0
  %v3353 = vadd.f32 %v3300, %v3352
  %v3354 = vpop.f32.mrb[0].mxu0
  %v3355 = vadd.f32 %v3302, %v3354
  %3356 = vmatprep.mubr.bf16.mxu0 %v679
  %3357 = vmatmul.mubr.bf16.gmra.mrb[0].mxu0 %v678
  %v3358 = vpop.f32.mrb[0].mxu0
  %v3359 = vadd.f32 %v3306, %v3358
  %v3360 = vpop.f32.mrb[0].mxu0
  %v3361 = vadd.f32 %v3308, %v3360
  %v3362 = vpop.f32.mrb[0].mxu0
  %v3363 = vadd.f32 %v3310, %v3362
  %v3364 = vpop.f32.mrb[0].mxu0
  %v3365 = vadd.f32 %v3312, %v3364
  %3366 = vdwg.mxu0
  %3367 = vmatprep.subr.bf16.mxu0 %v2316
  %3368 = vmatpush1.bf16.msra.mxu0 %v2315
  %3369 = vmatprep.subr.bf16.mxu0 %v2318
  %3370 = vmatpush1.bf16.msra.mxu0 %v2317
  %3371 = vmatprep.subr.bf16.mxu0 %v2320
  %3372 = vmatpush1.bf16.msra.mxu0 %v2319
  %3373 = vmatprep.subr.bf16.mxu0 %v2322
  %3374 = vmatpush1.bf16.msra.mxu0 %v2321
  %3375 = vmatprep.subr.bf16.mxu0 %v2324
  %3376 = vmatpush1.bf16.msra.mxu0 %v2323
  %3377 = vmatprep.subr.bf16.mxu0 %v2326
  %3378 = vmatpush1.bf16.msra.mxu0 %v2325
  %3379 = vmatprep.subr.bf16.mxu0 %v2328
  %3380 = vmatpush1.bf16.msra.mxu0 %v2327
  %3381 = vmatprep.subr.bf16.mxu0 %v2330
  %3382 = vmatpush1.bf16.msra.mxu0 %v2329
  %3383 = vmatprep.subr.bf16.mxu0 0
  %3384 = vmatpush1.bf16.msra.mxu0 0
  %3385 = vmatprep.subr.bf16.mxu0 0
  %3386 = vmatpush1.bf16.msra.mxu0 0
  %3387 = vmatprep.subr.bf16.mxu0 0
  %3388 = vmatpush1.bf16.msra.mxu0 0
  %3389 = vmatprep.subr.bf16.mxu0 0
  %3390 = vmatpush1.bf16.msra.mxu0 0
  %3391 = vmatprep.subr.bf16.mxu0 0
  %3392 = vmatpush1.bf16.msra.mxu0 0
  %3393 = vmatprep.subr.bf16.mxu0 0
  %3394 = vmatpush1.bf16.msra.mxu0 0
  %3395 = vmatprep.subr.bf16.mxu0 0
  %3396 = vmatpush1.bf16.msra.mxu0 0
  %3397 = vmatprep.subr.bf16.mxu0 0
  %3398 = vmatpush1.bf16.msra.mxu0 0
  %3399 = vmatprep.mubr.bf16.mxu0 0
  %3400 = vmatmul.mubr.bf16.gmra.mrb[0].mxu0 %v655
  %v3401 = vpop.f32.mrb[0].mxu0
  %v3402 = vadd.f32 %v3349, %v3401
  %v3403 = vpop.f32.mrb[0].mxu0
  %v3404 = vadd.f32 %v3351, %v3403
  %v3405 = vpop.f32.mrb[0].mxu0
  %v3406 = vadd.f32 %v3353, %v3405
  %v3407 = vpop.f32.mrb[0].mxu0
  %v3408 = vadd.f32 %v3355, %v3407
  %3409 = vmatprep.mubr.bf16.mxu0 0
  %3410 = vmatmul.mubr.bf16.gmra.mrb[0].mxu0 %v680
  %v3411 = vpop.f32.mrb[0].mxu0
  %v3412 = vadd.f32 %v3359, %v3411
  %v3413 = vpop.f32.mrb[0].mxu0
  %v3414 = vadd.f32 %v3361, %v3413
  %v3415 = vpop.f32.mrb[0].mxu0
  %v3416 = vadd.f32 %v3363, %v3415
  %v3417 = vpop.f32.mrb[0].mxu0
  %v3418 = vadd.f32 %v3365, %v3417
  %3419 = vdwg.mxu0
  %v3420 = vmax.f32 %v3402, 0.0
  %v3421 = vmax.f32 %v3404, 0.0
  %v3422 = vmax.f32 %v3406, 0.0
  %v3423 = vmax.f32 %v3408, 0.0
  %v3424 = vmax.f32 %v3412, 0.0
  %v3425 = vmax.f32 %v3414, 0.0
  %v3426 = vmax.f32 %v3416, 0.0
  %v3427 = vmax.f32 %v3418, 0.0
  %v3428 = vpack.c.bf16 %v3422, %v3420
  %v3429 = vpack.c.bf16 %v3423, %v3421
  %v3430 = vpack.c.bf16 %v3426, %v3424
  %v3431 = vpack.c.bf16 %v3427, %v3425
  %v3436 = vunpack.c.l.b16 %v3428
  %v3437 = vunpack.c.l.b16 %v3429
  %v3438 = vunpack.c.h.b16 %v3428
  %v3439 = vunpack.c.h.b16 %v3429
  %v3440 = vunpack.c.l.b16 %v3430
  %v3441 = vunpack.c.l.b16 %v3431
  %v3442 = vunpack.c.h.b16 %v3430
  %v3443 = vunpack.c.h.b16 %v3431
  %v3444 = vpack.c.b16 %v3437, %v3436
  %v3445 = vpack.c.b16 %v3439, %v3438
  %v3446 = vpack.c.b16 %v3441, %v3440
  %v3447 = vpack.c.b16 %v3443, %v3442
  %3452 = vst [vmem:[%s3] sm:$0xff] %v3444
  %3453 = vst [vmem:[%s3 + $0x8] sm:$0xff] %v3445
  %3454 = vst [vmem:[%s3 + $0x10] sm:$0xff] %v3446
  %3455 = vst [vmem:[%s3 + $0x18] sm:$0xff] %v3447
  // Predicated region
  $region14: #{mini_alexnet_forward.7} parent=0 // pred_check
    _
  $region15: #{mini_alexnet_forward.7} parent=0 // pred_check_branch
    %3457 = sbr.rel (0) target = $region17
  $region16: #{mini_alexnet_forward.7} parent=0 // pred_region
    _
  $region17: #{mini_alexnet_forward.7} parent=0 // pred_fallthru
    _
  // Predicated region
  $region18: #{mini_alexnet_forward.7} parent=0 // pred_check
    _
  $region19: #{mini_alexnet_forward.7} parent=0 // pred_check_branch
    %3459 = sbr.rel (0) target = $region21
  $region20: #{mini_alexnet_forward.7} parent=0 // pred_region
    _
  $region21: #{mini_alexnet_forward.7} parent=0 // pred_fallthru
    _

// kernel: mini_alexnet_forward.9
$region0: #{mini_alexnet_forward.9}
  #allocation0 [shape = 'u32[]', space=smem, size = 0x4, offset = 0x4, fixed_abs, tag = 'smem constant byte address 0x4 - core index']
  #allocation1 [shape = 'u32[144,128]{1,0:T(1,128)}', space=vmem, size = 0x12000, scoped, tag = 'internal scratch']
  %s0 = inlined_call_operand.vmem [shape: bf16[16,4096], index: 0, kind: input, shape index: {}]
  %s1 = inlined_call_operand.vmem [shape: bf16[4096,384], index: 1, kind: input, shape index: {}]
  %s2 = inlined_call_operand.vmem [shape: f32[1,384], index: 2, kind: input, shape index: {}]
  %s3 = inlined_call_operand.vmem [shape: bf16[384,256], index: 3, kind: input, shape index: {}]
  %s4 = inlined_call_operand.vmem [shape: f32[1,256], index: 4, kind: input, shape index: {}]
  %s5 = inlined_call_operand.vmem [shape: bf16[256,128], index: 5, kind: input, shape index: {}]
  %s6 = inlined_call_operand.vmem [shape: f32[1,128], index: 6, kind: input, shape index: {}]
  %s7 = inlined_call_operand.vmem [shape: f32[16,128], index: 7, kind: output, shape index: {}]
  %s8 = sld [smem:[#allocation0]]
  $region38: #{mini_alexnet_forward.9} parent=0
    _
  %s10 = ssub.s32 1, %s8
  %s11 = scalar_select 0, %s10, %s8
  // Predicated region
  $region2: #{mini_alexnet_forward.9} parent=0 // pred_check
    _
  $region3: #{mini_alexnet_forward.9} parent=0 // pred_check_branch
    %13 = sbr.rel (0) target = $region5
  $region4: #{mini_alexnet_forward.9} parent=0 // pred_region
    _
  $region5: #{mini_alexnet_forward.9} parent=0 // pred_fallthru
    _
  // Predicated region
  $region6: #{mini_alexnet_forward.9} parent=0 // pred_check
    _
  $region7: #{mini_alexnet_forward.9} parent=0 // pred_check_branch
    %15 = sbr.rel (0) target = $region9
  $region8: #{mini_alexnet_forward.9} parent=0 // pred_region
    _
  $region9: #{mini_alexnet_forward.9} parent=0 // pred_fallthru
    _
  // Predicated region
  $region10: #{mini_alexnet_forward.9} parent=0 // pred_check
    _
  $region11: #{mini_alexnet_forward.9} parent=0 // pred_check_branch
    %17 = sbr.rel (0) target = $region13
  $region12: #{mini_alexnet_forward.9} parent=0 // pred_region
    _
  $region13: #{mini_alexnet_forward.9} parent=0 // pred_fallthru
    _
  // Predicated region
  $region14: #{mini_alexnet_forward.9} parent=0 // pred_check
    _
  $region15: #{mini_alexnet_forward.9} parent=0 // pred_check_branch
    %19 = sbr.rel (0) target = $region17
  $region16: #{mini_alexnet_forward.9} parent=0 // pred_region
    _
  $region17: #{mini_alexnet_forward.9} parent=0 // pred_fallthru
    _
  // Predicated region
  $region18: #{mini_alexnet_forward.9} parent=0 // pred_check
    _
  $region19: #{mini_alexnet_forward.9} parent=0 // pred_check_branch
    %21 = sbr.rel (0) target = $region21
  $region20: #{mini_alexnet_forward.9} parent=0 // pred_region
    _
  $region21: #{mini_alexnet_forward.9} parent=0 // pred_fallthru
    _
  // Predicated region
  $region22: #{mini_alexnet_forward.9} parent=0 // pred_check
    _
  $region23: #{mini_alexnet_forward.9} parent=0 // pred_check_branch
    %23 = sbr.rel (0) target = $region25
  $region24: #{mini_alexnet_forward.9} parent=0 // pred_region
    _
  $region25: #{mini_alexnet_forward.9} parent=0 // pred_fallthru
    _
  // Predicated region
  $region26: #{mini_alexnet_forward.9} parent=0 // pred_check
    _
  $region27: #{mini_alexnet_forward.9} parent=0 // pred_check_branch
    %25 = sbr.rel (0) target = $region29
  $region28: #{mini_alexnet_forward.9} parent=0 // pred_region
    _
  $region29: #{mini_alexnet_forward.9} parent=0 // pred_fallthru
    _
  %v27 = vld [vmem:[%s0] sm:$0xff]
  %v28 = vld [vmem:[%s0 + $0x8] sm:$0xff]
  %v29 = vld [vmem:[%s0 + $0x10] sm:$0xff]
  %v30 = vld [vmem:[%s0 + $0x18] sm:$0xff]
  %v31 = vld [vmem:[%s0 + $0x20] sm:$0xff]
  %v32 = vld [vmem:[%s0 + $0x28] sm:$0xff]
  %v33 = vld [vmem:[%s0 + $0x30] sm:$0xff]
  %v34 = vld [vmem:[%s0 + $0x38] sm:$0xff]
  %v35 = vld [vmem:[%s0 + $0x40] sm:$0xff]
  %v36 = vld [vmem:[%s0 + $0x48] sm:$0xff]
  %v37 = vld [vmem:[%s0 + $0x50] sm:$0xff]
  %v38 = vld [vmem:[%s0 + $0x58] sm:$0xff]
  %v39 = vld [vmem:[%s0 + $0x60] sm:$0xff]
  %v40 = vld [vmem:[%s0 + $0x68] sm:$0xff]
  %v41 = vld [vmem:[%s0 + $0x70] sm:$0xff]
  %v42 = vld [vmem:[%s0 + $0x78] sm:$0xff]
  %v43 = vld [vmem:[%s0 + $0x80] sm:$0xff]
  %v44 = vld [vmem:[%s0 + $0x88] sm:$0xff]
  %v45 = vld [vmem:[%s0 + $0x90] sm:$0xff]
  %v46 = vld [vmem:[%s0 + $0x98] sm:$0xff]
  %v47 = vld [vmem:[%s0 + $0xa0] sm:$0xff]
  %v48 = vld [vmem:[%s0 + $0xa8] sm:$0xff]
  %v49 = vld [vmem:[%s0 + $0xb0] sm:$0xff]
  %v50 = vld [vmem:[%s0 + $0xb8] sm:$0xff]
  %v51 = vld [vmem:[%s0 + $0xc0] sm:$0xff]
  %v52 = vld [vmem:[%s0 + $0xc8] sm:$0xff]
  %v53 = vld [vmem:[%s0 + $0xd0] sm:$0xff]
  %v54 = vld [vmem:[%s0 + $0xd8] sm:$0xff]
  %v55 = vld [vmem:[%s0 + $0xe0] sm:$0xff]
  %v56 = vld [vmem:[%s0 + $0xe8] sm:$0xff]
  %v57 = vld [vmem:[%s0 + $0xf0] sm:$0xff]
  %v58 = vld [vmem:[%s0 + $0xf8] sm:$0xff]
  %v59 = vld [vmem:[%s1] sm:$0xff]
  %v60 = vld [vmem:[%s1 + $0x8] sm:$0xf]
  %v61 = vld [vmem:[%s1 + $0xc] sm:$0xff]
  %v62 = vld [vmem:[%s1 + $0x14] sm:$0xf]
  %v63 = vld [vmem:[%s1 + $0x18] sm:$0xff]
  %v64 = vld [vmem:[%s1 + $0x20] sm:$0xf]
  %v65 = vld [vmem:[%s1 + $0x24] sm:$0xff]
  %v66 = vld [vmem:[%s1 + $0x2c] sm:$0xf]
  %v67 = vld [vmem:[%s1 + $0x30] sm:$0xff]
  %v68 = vld [vmem:[%s1 + $0x38] sm:$0xf]
  %v69 = vld [vmem:[%s1 + $0x3c] sm:$0xff]
  %v70 = vld [vmem:[%s1 + $0x44] sm:$0xf]
  %v71 = vld [vmem:[%s1 + $0x48] sm:$0xff]
  %v72 = vld [vmem:[%s1 + $0x50] sm:$0xf]
  %v73 = vld [vmem:[%s1 + $0x54] sm:$0xff]
  %v74 = vld [vmem:[%s1 + $0x5c] sm:$0xf]
  %v75 = vld [vmem:[%s1 + $0x60] sm:$0xff]
  %v76 = vld [vmem:[%s1 + $0x68] sm:$0xf]
  %v77 = vld [vmem:[%s1 + $0x6c] sm:$0xff]
  %v78 = vld [vmem:[%s1 + $0x74] sm:$0xf]
  %v79 = vld [vmem:[%s1 + $0x78] sm:$0xff]
  %v80 = vld [vmem:[%s1 + $0x80] sm:$0xf]
  %v81 = vld [vmem:[%s1 + $0x84] sm:$0xff]
  %v82 = vld [vmem:[%s1 + $0x8c] sm:$0xf]
  %v83 = vld [vmem:[%s1 + $0x90] sm:$0xff]
  %v84 = vld [vmem:[%s1 + $0x98] sm:$0xf]
  %v85 = vld [vmem:[%s1 + $0x9c] sm:$0xff]
  %v86 = vld [vmem:[%s1 + $0xa4] sm:$0xf]
  %v87 = vld [vmem:[%s1 + $0xa8] sm:$0xff]
  %v88 = vld [vmem:[%s1 + $0xb0] sm:$0xf]
  %v89 = vld [vmem:[%s1 + $0xb4] sm:$0xff]
  %v90 = vld [vmem:[%s1 + $0xbc] sm:$0xf]
  %v91 = vld [vmem:[%s1 + $0xc0] sm:$0xff]
  %v92 = vld [vmem:[%s1 + $0xc8] sm:$0xf]
  %v93 = vld [vmem:[%s1 + $0xcc] sm:$0xff]
  %v94 = vld [vmem:[%s1 + $0xd4] sm:$0xf]
  %v95 = vld [vmem:[%s1 + $0xd8] sm:$0xff]
  %v96 = vld [vmem:[%s1 + $0xe0] sm:$0xf]
  %v97 = vld [vmem:[%s1 + $0xe4] sm:$0xff]
  %v98 = vld [vmem:[%s1 + $0xec] sm:$0xf]
  %v99 = vld [vmem:[%s1 + $0xf0] sm:$0xff]
  %v100 = vld [vmem:[%s1 + $0xf8] sm:$0xf]
  %v101 = vld [vmem:[%s1 + $0xfc] sm:$0xff]
  %v102 = vld [vmem:[%s1 + $0x104] sm:$0xf]
  %v103 = vld [vmem:[%s1 + $0x108] sm:$0xff]
  %v104 = vld [vmem:[%s1 + $0x110] sm:$0xf]
  %v105 = vld [vmem:[%s1 + $0x114] sm:$0xff]
  %v106 = vld [vmem:[%s1 + $0x11c] sm:$0xf]
  %v107 = vld [vmem:[%s1 + $0x120] sm:$0xff]
  %v108 = vld [vmem:[%s1 + $0x128] sm:$0xf]
  %v109 = vld [vmem:[%s1 + $0x12c] sm:$0xff]
  %v110 = vld [vmem:[%s1 + $0x134] sm:$0xf]
  %v111 = vld [vmem:[%s1 + $0x138] sm:$0xff]
  %v112 = vld [vmem:[%s1 + $0x140] sm:$0xf]
  %v113 = vld [vmem:[%s1 + $0x144] sm:$0xff]
  %v114 = vld [vmem:[%s1 + $0x14c] sm:$0xf]
  %v115 = vld [vmem:[%s1 + $0x150] sm:$0xff]
  %v116 = vld [vmem:[%s1 + $0x158] sm:$0xf]
  %v117 = vld [vmem:[%s1 + $0x15c] sm:$0xff]
  %v118 = vld [vmem:[%s1 + $0x164] sm:$0xf]
  %v119 = vld [vmem:[%s1 + $0x168] sm:$0xff]
  %v120 = vld [vmem:[%s1 + $0x170] sm:$0xf]
  %v121 = vld [vmem:[%s1 + $0x174] sm:$0xff]
  %v122 = vld [vmem:[%s1 + $0x17c] sm:$0xf]
  %v123 = vld [vmem:[%s1 + $0x180] sm:$0xff]
  %v124 = vld [vmem:[%s1 + $0x188] sm:$0xf]
  %v125 = vld [vmem:[%s1 + $0x18c] sm:$0xff]
  %v126 = vld [vmem:[%s1 + $0x194] sm:$0xf]
  %v127 = vld [vmem:[%s1 + $0x198] sm:$0xff]
  %v128 = vld [vmem:[%s1 + $0x1a0] sm:$0xf]
  %v129 = vld [vmem:[%s1 + $0x1a4] sm:$0xff]
  %v130 = vld [vmem:[%s1 + $0x1ac] sm:$0xf]
  %v131 = vld [vmem:[%s1 + $0x1b0] sm:$0xff]
  %v132 = vld [vmem:[%s1 + $0x1b8] sm:$0xf]
  %v133 = vld [vmem:[%s1 + $0x1bc] sm:$0xff]
  %v134 = vld [vmem:[%s1 + $0x1c4] sm:$0xf]
  %v135 = vld [vmem:[%s1 + $0x1c8] sm:$0xff]
  %v136 = vld [vmem:[%s1 + $0x1d0] sm:$0xf]
  %v137 = vld [vmem:[%s1 + $0x1d4] sm:$0xff]
  %v138 = vld [vmem:[%s1 + $0x1dc] sm:$0xf]
  %v139 = vld [vmem:[%s1 + $0x1e0] sm:$0xff]
  %v140 = vld [vmem:[%s1 + $0x1e8] sm:$0xf]
  %v141 = vld [vmem:[%s1 + $0x1ec] sm:$0xff]
  %v142 = vld [vmem:[%s1 + $0x1f4] sm:$0xf]
  %v143 = vld [vmem:[%s1 + $0x1f8] sm:$0xff]
  %v144 = vld [vmem:[%s1 + $0x200] sm:$0xf]
  %v145 = vld [vmem:[%s1 + $0x204] sm:$0xff]
  %v146 = vld [vmem:[%s1 + $0x20c] sm:$0xf]
  %v147 = vld [vmem:[%s1 + $0x210] sm:$0xff]
  %v148 = vld [vmem:[%s1 + $0x218] sm:$0xf]
  %v149 = vld [vmem:[%s1 + $0x21c] sm:$0xff]
  %v150 = vld [vmem:[%s1 + $0x224] sm:$0xf]
  %v151 = vld [vmem:[%s1 + $0x228] sm:$0xff]
  %v152 = vld [vmem:[%s1 + $0x230] sm:$0xf]
  %v153 = vld [vmem:[%s1 + $0x234] sm:$0xff]
  %v154 = vld [vmem:[%s1 + $0x23c] sm:$0xf]
  %v155 = vld [vmem:[%s1 + $0x240] sm:$0xff]
  %v156 = vld [vmem:[%s1 + $0x248] sm:$0xf]
  %v157 = vld [vmem:[%s1 + $0x24c] sm:$0xff]
  %v158 = vld [vmem:[%s1 + $0x254] sm:$0xf]
  %v159 = vld [vmem:[%s1 + $0x258] sm:$0xff]
  %v160 = vld [vmem:[%s1 + $0x260] sm:$0xf]
  %v161 = vld [vmem:[%s1 + $0x264] sm:$0xff]
  %v162 = vld [vmem:[%s1 + $0x26c] sm:$0xf]
  %v163 = vld [vmem:[%s1 + $0x270] sm:$0xff]
  %v164 = vld [vmem:[%s1 + $0x278] sm:$0xf]
  %v165 = vld [vmem:[%s1 + $0x27c] sm:$0xff]
  %v166 = vld [vmem:[%s1 + $0x284] sm:$0xf]
  %v167 = vld [vmem:[%s1 + $0x288] sm:$0xff]
  %v168 = vld [vmem:[%s1 + $0x290] sm:$0xf]
  %v169 = vld [vmem:[%s1 + $0x294] sm:$0xff]
  %v170 = vld [vmem:[%s1 + $0x29c] sm:$0xf]
  %v171 = vld [vmem:[%s1 + $0x2a0] sm:$0xff]
  %v172 = vld [vmem:[%s1 + $0x2a8] sm:$0xf]
  %v173 = vld [vmem:[%s1 + $0x2ac] sm:$0xff]
  %v174 = vld [vmem:[%s1 + $0x2b4] sm:$0xf]
  %v175 = vld [vmem:[%s1 + $0x2b8] sm:$0xff]
  %v176 = vld [vmem:[%s1 + $0x2c0] sm:$0xf]
  %v177 = vld [vmem:[%s1 + $0x2c4] sm:$0xff]
  %v178 = vld [vmem:[%s1 + $0x2cc] sm:$0xf]
  %v179 = vld [vmem:[%s1 + $0x2d0] sm:$0xff]
  %v180 = vld [vmem:[%s1 + $0x2d8] sm:$0xf]
  %v181 = vld [vmem:[%s1 + $0x2dc] sm:$0xff]
  %v182 = vld [vmem:[%s1 + $0x2e4] sm:$0xf]
  %v183 = vld [vmem:[%s1 + $0x2e8] sm:$0xff]
  %v184 = vld [vmem:[%s1 + $0x2f0] sm:$0xf]
  %v185 = vld [vmem:[%s1 + $0x2f4] sm:$0xff]
  %v186 = vld [vmem:[%s1 + $0x2fc] sm:$0xf]
  %v187 = vld [vmem:[%s1 + $0x300] sm:$0xff]
  %v188 = vld [vmem:[%s1 + $0x308] sm:$0xf]
  %v189 = vld [vmem:[%s1 + $0x30c] sm:$0xff]
  %v190 = vld [vmem:[%s1 + $0x314] sm:$0xf]
  %v191 = vld [vmem:[%s1 + $0x318] sm:$0xff]
  %v192 = vld [vmem:[%s1 + $0x320] sm:$0xf]
  %v193 = vld [vmem:[%s1 + $0x324] sm:$0xff]
  %v194 = vld [vmem:[%s1 + $0x32c] sm:$0xf]
  %v195 = vld [vmem:[%s1 + $0x330] sm:$0xff]
  %v196 = vld [vmem:[%s1 + $0x338] sm:$0xf]
  %v197 = vld [vmem:[%s1 + $0x33c] sm:$0xff]
  %v198 = vld [vmem:[%s1 + $0x344] sm:$0xf]
  %v199 = vld [vmem:[%s1 + $0x348] sm:$0xff]
  %v200 = vld [vmem:[%s1 + $0x350] sm:$0xf]
  %v201 = vld [vmem:[%s1 + $0x354] sm:$0xff]
  %v202 = vld [vmem:[%s1 + $0x35c] sm:$0xf]
  %v203 = vld [vmem:[%s1 + $0x360] sm:$0xff]
  %v204 = vld [vmem:[%s1 + $0x368] sm:$0xf]
  %v205 = vld [vmem:[%s1 + $0x36c] sm:$0xff]
  %v206 = vld [vmem:[%s1 + $0x374] sm:$0xf]
  %v207 = vld [vmem:[%s1 + $0x378] sm:$0xff]
  %v208 = vld [vmem:[%s1 + $0x380] sm:$0xf]
  %v209 = vld [vmem:[%s1 + $0x384] sm:$0xff]
  %v210 = vld [vmem:[%s1 + $0x38c] sm:$0xf]
  %v211 = vld [vmem:[%s1 + $0x390] sm:$0xff]
  %v212 = vld [vmem:[%s1 + $0x398] sm:$0xf]
  %v213 = vld [vmem:[%s1 + $0x39c] sm:$0xff]
  %v214 = vld [vmem:[%s1 + $0x3a4] sm:$0xf]
  %v215 = vld [vmem:[%s1 + $0x3a8] sm:$0xff]
  %v216 = vld [vmem:[%s1 + $0x3b0] sm:$0xf]
  %v217 = vld [vmem:[%s1 + $0x3b4] sm:$0xff]
  %v218 = vld [vmem:[%s1 + $0x3bc] sm:$0xf]
  %v219 = vld [vmem:[%s1 + $0x3c0] sm:$0xff]
  %v220 = vld [vmem:[%s1 + $0x3c8] sm:$0xf]
  %v221 = vld [vmem:[%s1 + $0x3cc] sm:$0xff]
  %v222 = vld [vmem:[%s1 + $0x3d4] sm:$0xf]
  %v223 = vld [vmem:[%s1 + $0x3d8] sm:$0xff]
  %v224 = vld [vmem:[%s1 + $0x3e0] sm:$0xf]
  %v225 = vld [vmem:[%s1 + $0x3e4] sm:$0xff]
  %v226 = vld [vmem:[%s1 + $0x3ec] sm:$0xf]
  %v227 = vld [vmem:[%s1 + $0x3f0] sm:$0xff]
  %v228 = vld [vmem:[%s1 + $0x3f8] sm:$0xf]
  %v229 = vld [vmem:[%s1 + $0x3fc] sm:$0xff]
  %v230 = vld [vmem:[%s1 + $0x404] sm:$0xf]
  %v231 = vld [vmem:[%s1 + $0x408] sm:$0xff]
  %v232 = vld [vmem:[%s1 + $0x410] sm:$0xf]
  %v233 = vld [vmem:[%s1 + $0x414] sm:$0xff]
  %v234 = vld [vmem:[%s1 + $0x41c] sm:$0xf]
  %v235 = vld [vmem:[%s1 + $0x420] sm:$0xff]
  %v236 = vld [vmem:[%s1 + $0x428] sm:$0xf]
  %v237 = vld [vmem:[%s1 + $0x42c] sm:$0xff]
  %v238 = vld [vmem:[%s1 + $0x434] sm:$0xf]
  %v239 = vld [vmem:[%s1 + $0x438] sm:$0xff]
  %v240 = vld [vmem:[%s1 + $0x440] sm:$0xf]
  %v241 = vld [vmem:[%s1 + $0x444] sm:$0xff]
  %v242 = vld [vmem:[%s1 + $0x44c] sm:$0xf]
  %v243 = vld [vmem:[%s1 + $0x450] sm:$0xff]
  %v244 = vld [vmem:[%s1 + $0x458] sm:$0xf]
  %v245 = vld [vmem:[%s1 + $0x45c] sm:$0xff]
  %v246 = vld [vmem:[%s1 + $0x464] sm:$0xf]
  %v247 = vld [vmem:[%s1 + $0x468] sm:$0xff]
  %v248 = vld [vmem:[%s1 + $0x470] sm:$0xf]
  %v249 = vld [vmem:[%s1 + $0x474] sm:$0xff]
  %v250 = vld [vmem:[%s1 + $0x47c] sm:$0xf]
  %v251 = vld [vmem:[%s1 + $0x480] sm:$0xff]
  %v252 = vld [vmem:[%s1 + $0x488] sm:$0xf]
  %v253 = vld [vmem:[%s1 + $0x48c] sm:$0xff]
  %v254 = vld [vmem:[%s1 + $0x494] sm:$0xf]
  %v255 = vld [vmem:[%s1 + $0x498] sm:$0xff]
  %v256 = vld [vmem:[%s1 + $0x4a0] sm:$0xf]
  %v257 = vld [vmem:[%s1 + $0x4a4] sm:$0xff]
  %v258 = vld [vmem:[%s1 + $0x4ac] sm:$0xf]
  %v259 = vld [vmem:[%s1 + $0x4b0] sm:$0xff]
  %v260 = vld [vmem:[%s1 + $0x4b8] sm:$0xf]
  %v261 = vld [vmem:[%s1 + $0x4bc] sm:$0xff]
  %v262 = vld [vmem:[%s1 + $0x4c4] sm:$0xf]
  %v263 = vld [vmem:[%s1 + $0x4c8] sm:$0xff]
  %v264 = vld [vmem:[%s1 + $0x4d0] sm:$0xf]
  %v265 = vld [vmem:[%s1 + $0x4d4] sm:$0xff]
  %v266 = vld [vmem:[%s1 + $0x4dc] sm:$0xf]
  %v267 = vld [vmem:[%s1 + $0x4e0] sm:$0xff]
  %v268 = vld [vmem:[%s1 + $0x4e8] sm:$0xf]
  %v269 = vld [vmem:[%s1 + $0x4ec] sm:$0xff]
  %v270 = vld [vmem:[%s1 + $0x4f4] sm:$0xf]
  %v271 = vld [vmem:[%s1 + $0x4f8] sm:$0xff]
  %v272 = vld [vmem:[%s1 + $0x500] sm:$0xf]
  %v273 = vld [vmem:[%s1 + $0x504] sm:$0xff]
  %v274 = vld [vmem:[%s1 + $0x50c] sm:$0xf]
  %v275 = vld [vmem:[%s1 + $0x510] sm:$0xff]
  %v276 = vld [vmem:[%s1 + $0x518] sm:$0xf]
  %v277 = vld [vmem:[%s1 + $0x51c] sm:$0xff]
  %v278 = vld [vmem:[%s1 + $0x524] sm:$0xf]
  %v279 = vld [vmem:[%s1 + $0x528] sm:$0xff]
  %v280 = vld [vmem:[%s1 + $0x530] sm:$0xf]
  %v281 = vld [vmem:[%s1 + $0x534] sm:$0xff]
  %v282 = vld [vmem:[%s1 + $0x53c] sm:$0xf]
  %v283 = vld [vmem:[%s1 + $0x540] sm:$0xff]
  %v284 = vld [vmem:[%s1 + $0x548] sm:$0xf]
  %v285 = vld [vmem:[%s1 + $0x54c] sm:$0xff]
  %v286 = vld [vmem:[%s1 + $0x554] sm:$0xf]
  %v287 = vld [vmem:[%s1 + $0x558] sm:$0xff]
  %v288 = vld [vmem:[%s1 + $0x560] sm:$0xf]
  %v289 = vld [vmem:[%s1 + $0x564] sm:$0xff]
  %v290 = vld [vmem:[%s1 + $0x56c] sm:$0xf]
  %v291 = vld [vmem:[%s1 + $0x570] sm:$0xff]
  %v292 = vld [vmem:[%s1 + $0x578] sm:$0xf]
  %v293 = vld [vmem:[%s1 + $0x57c] sm:$0xff]
  %v294 = vld [vmem:[%s1 + $0x584] sm:$0xf]
  %v295 = vld [vmem:[%s1 + $0x588] sm:$0xff]
  %v296 = vld [vmem:[%s1 + $0x590] sm:$0xf]
  %v297 = vld [vmem:[%s1 + $0x594] sm:$0xff]
  %v298 = vld [vmem:[%s1 + $0x59c] sm:$0xf]
  %v299 = vld [vmem:[%s1 + $0x5a0] sm:$0xff]
  %v300 = vld [vmem:[%s1 + $0x5a8] sm:$0xf]
  %v301 = vld [vmem:[%s1 + $0x5ac] sm:$0xff]
  %v302 = vld [vmem:[%s1 + $0x5b4] sm:$0xf]
  %v303 = vld [vmem:[%s1 + $0x5b8] sm:$0xff]
  %v304 = vld [vmem:[%s1 + $0x5c0] sm:$0xf]
  %v305 = vld [vmem:[%s1 + $0x5c4] sm:$0xff]
  %v306 = vld [vmem:[%s1 + $0x5cc] sm:$0xf]
  %v307 = vld [vmem:[%s1 + $0x5d0] sm:$0xff]
  %v308 = vld [vmem:[%s1 + $0x5d8] sm:$0xf]
  %v309 = vld [vmem:[%s1 + $0x5dc] sm:$0xff]
  %v310 = vld [vmem:[%s1 + $0x5e4] sm:$0xf]
  %v311 = vld [vmem:[%s1 + $0x5e8] sm:$0xff]
  %v312 = vld [vmem:[%s1 + $0x5f0] sm:$0xf]
  %v313 = vld [vmem:[%s1 + $0x5f4] sm:$0xff]
  %v314 = vld [vmem:[%s1 + $0x5fc] sm:$0xf]
  %v315 = vld [vmem:[%s1 + $0x600] sm:$0xff]
  %v316 = vld [vmem:[%s1 + $0x608] sm:$0xf]
  %v317 = vld [vmem:[%s1 + $0x60c] sm:$0xff]
  %v318 = vld [vmem:[%s1 + $0x614] sm:$0xf]
  %v319 = vld [vmem:[%s1 + $0x618] sm:$0xff]
  %v320 = vld [vmem:[%s1 + $0x620] sm:$0xf]
  %v321 = vld [vmem:[%s1 + $0x624] sm:$0xff]
  %v322 = vld [vmem:[%s1 + $0x62c] sm:$0xf]
  %v323 = vld [vmem:[%s1 + $0x630] sm:$0xff]
  %v324 = vld [vmem:[%s1 + $0x638] sm:$0xf]
  %v325 = vld [vmem:[%s1 + $0x63c] sm:$0xff]
  %v326 = vld [vmem:[%s1 + $0x644] sm:$0xf]
  %v327 = vld [vmem:[%s1 + $0x648] sm:$0xff]
  %v328 = vld [vmem:[%s1 + $0x650] sm:$0xf]
  %v329 = vld [vmem:[%s1 + $0x654] sm:$0xff]
  %v330 = vld [vmem:[%s1 + $0x65c] sm:$0xf]
  %v331 = vld [vmem:[%s1 + $0x660] sm:$0xff]
  %v332 = vld [vmem:[%s1 + $0x668] sm:$0xf]
  %v333 = vld [vmem:[%s1 + $0x66c] sm:$0xff]
  %v334 = vld [vmem:[%s1 + $0x674] sm:$0xf]
  %v335 = vld [vmem:[%s1 + $0x678] sm:$0xff]
  %v336 = vld [vmem:[%s1 + $0x680] sm:$0xf]
  %v337 = vld [vmem:[%s1 + $0x684] sm:$0xff]
  %v338 = vld [vmem:[%s1 + $0x68c] sm:$0xf]
  %v339 = vld [vmem:[%s1 + $0x690] sm:$0xff]
  %v340 = vld [vmem:[%s1 + $0x698] sm:$0xf]
  %v341 = vld [vmem:[%s1 + $0x69c] sm:$0xff]
  %v342 = vld [vmem:[%s1 + $0x6a4] sm:$0xf]
  %v343 = vld [vmem:[%s1 + $0x6a8] sm:$0xff]
  %v344 = vld [vmem:[%s1 + $0x6b0] sm:$0xf]
  %v345 = vld [vmem:[%s1 + $0x6b4] sm:$0xff]
  %v346 = vld [vmem:[%s1 + $0x6bc] sm:$0xf]
  %v347 = vld [vmem:[%s1 + $0x6c0] sm:$0xff]
  %v348 = vld [vmem:[%s1 + $0x6c8] sm:$0xf]
  %v349 = vld [vmem:[%s1 + $0x6cc] sm:$0xff]
  %v350 = vld [vmem:[%s1 + $0x6d4] sm:$0xf]
  %v351 = vld [vmem:[%s1 + $0x6d8] sm:$0xff]
  %v352 = vld [vmem:[%s1 + $0x6e0] sm:$0xf]
  %v353 = vld [vmem:[%s1 + $0x6e4] sm:$0xff]
  %v354 = vld [vmem:[%s1 + $0x6ec] sm:$0xf]
  %v355 = vld [vmem:[%s1 + $0x6f0] sm:$0xff]
  %v356 = vld [vmem:[%s1 + $0x6f8] sm:$0xf]
  %v357 = vld [vmem:[%s1 + $0x6fc] sm:$0xff]
  %v358 = vld [vmem:[%s1 + $0x704] sm:$0xf]
  %v359 = vld [vmem:[%s1 + $0x708] sm:$0xff]
  %v360 = vld [vmem:[%s1 + $0x710] sm:$0xf]
  %v361 = vld [vmem:[%s1 + $0x714] sm:$0xff]
  %v362 = vld [vmem:[%s1 + $0x71c] sm:$0xf]
  %v363 = vld [vmem:[%s1 + $0x720] sm:$0xff]
  %v364 = vld [vmem:[%s1 + $0x728] sm:$0xf]
  %v365 = vld [vmem:[%s1 + $0x72c] sm:$0xff]
  %v366 = vld [vmem:[%s1 + $0x734] sm:$0xf]
  %v367 = vld [vmem:[%s1 + $0x738] sm:$0xff]
  %v368 = vld [vmem:[%s1 + $0x740] sm:$0xf]
  %v369 = vld [vmem:[%s1 + $0x744] sm:$0xff]
  %v370 = vld [vmem:[%s1 + $0x74c] sm:$0xf]
  %v371 = vld [vmem:[%s1 + $0x750] sm:$0xff]
  %v372 = vld [vmem:[%s1 + $0x758] sm:$0xf]
  %v373 = vld [vmem:[%s1 + $0x75c] sm:$0xff]
  %v374 = vld [vmem:[%s1 + $0x764] sm:$0xf]
  %v375 = vld [vmem:[%s1 + $0x768] sm:$0xff]
  %v376 = vld [vmem:[%s1 + $0x770] sm:$0xf]
  %v377 = vld [vmem:[%s1 + $0x774] sm:$0xff]
  %v378 = vld [vmem:[%s1 + $0x77c] sm:$0xf]
  %v379 = vld [vmem:[%s1 + $0x780] sm:$0xff]
  %v380 = vld [vmem:[%s1 + $0x788] sm:$0xf]
  %v381 = vld [vmem:[%s1 + $0x78c] sm:$0xff]
  %v382 = vld [vmem:[%s1 + $0x794] sm:$0xf]
  %v383 = vld [vmem:[%s1 + $0x798] sm:$0xff]
  %v384 = vld [vmem:[%s1 + $0x7a0] sm:$0xf]
  %v385 = vld [vmem:[%s1 + $0x7a4] sm:$0xff]
  %v386 = vld [vmem:[%s1 + $0x7ac] sm:$0xf]
  %v387 = vld [vmem:[%s1 + $0x7b0] sm:$0xff]
  %v388 = vld [vmem:[%s1 + $0x7b8] sm:$0xf]
  %v389 = vld [vmem:[%s1 + $0x7bc] sm:$0xff]
  %v390 = vld [vmem:[%s1 + $0x7c4] sm:$0xf]
  %v391 = vld [vmem:[%s1 + $0x7c8] sm:$0xff]
  %v392 = vld [vmem:[%s1 + $0x7d0] sm:$0xf]
  %v393 = vld [vmem:[%s1 + $0x7d4] sm:$0xff]
  %v394 = vld [vmem:[%s1 + $0x7dc] sm:$0xf]
  %v395 = vld [vmem:[%s1 + $0x7e0] sm:$0xff]
  %v396 = vld [vmem:[%s1 + $0x7e8] sm:$0xf]
  %v397 = vld [vmem:[%s1 + $0x7ec] sm:$0xff]
  %v398 = vld [vmem:[%s1 + $0x7f4] sm:$0xf]
  %v399 = vld [vmem:[%s1 + $0x7f8] sm:$0xff]
  %v400 = vld [vmem:[%s1 + $0x800] sm:$0xf]
  %v401 = vld [vmem:[%s1 + $0x804] sm:$0xff]
  %v402 = vld [vmem:[%s1 + $0x80c] sm:$0xf]
  %v403 = vld [vmem:[%s1 + $0x810] sm:$0xff]
  %v404 = vld [vmem:[%s1 + $0x818] sm:$0xf]
  %v405 = vld [vmem:[%s1 + $0x81c] sm:$0xff]
  %v406 = vld [vmem:[%s1 + $0x824] sm:$0xf]
  %v407 = vld [vmem:[%s1 + $0x828] sm:$0xff]
  %v408 = vld [vmem:[%s1 + $0x830] sm:$0xf]
  %v409 = vld [vmem:[%s1 + $0x834] sm:$0xff]
  %v410 = vld [vmem:[%s1 + $0x83c] sm:$0xf]
  %v411 = vld [vmem:[%s1 + $0x840] sm:$0xff]
  %v412 = vld [vmem:[%s1 + $0x848] sm:$0xf]
  %v413 = vld [vmem:[%s1 + $0x84c] sm:$0xff]
  %v414 = vld [vmem:[%s1 + $0x854] sm:$0xf]
  %v415 = vld [vmem:[%s1 + $0x858] sm:$0xff]
  %v416 = vld [vmem:[%s1 + $0x860] sm:$0xf]
  %v417 = vld [vmem:[%s1 + $0x864] sm:$0xff]
  %v418 = vld [vmem:[%s1 + $0x86c] sm:$0xf]
  %v419 = vld [vmem:[%s1 + $0x870] sm:$0xff]
  %v420 = vld [vmem:[%s1 + $0x878] sm:$0xf]
  %v421 = vld [vmem:[%s1 + $0x87c] sm:$0xff]
  %v422 = vld [vmem:[%s1 + $0x884] sm:$0xf]
  %v423 = vld [vmem:[%s1 + $0x888] sm:$0xff]
  %v424 = vld [vmem:[%s1 + $0x890] sm:$0xf]
  %v425 = vld [vmem:[%s1 + $0x894] sm:$0xff]
  %v426 = vld [vmem:[%s1 + $0x89c] sm:$0xf]
  %v427 = vld [vmem:[%s1 + $0x8a0] sm:$0xff]
  %v428 = vld [vmem:[%s1 + $0x8a8] sm:$0xf]
  %v429 = vld [vmem:[%s1 + $0x8ac] sm:$0xff]
  %v430 = vld [vmem:[%s1 + $0x8b4] sm:$0xf]
  %v431 = vld [vmem:[%s1 + $0x8b8] sm:$0xff]
  %v432 = vld [vmem:[%s1 + $0x8c0] sm:$0xf]
  %v433 = vld [vmem:[%s1 + $0x8c4] sm:$0xff]
  %v434 = vld [vmem:[%s1 + $0x8cc] sm:$0xf]
  %v435 = vld [vmem:[%s1 + $0x8d0] sm:$0xff]
  %v436 = vld [vmem:[%s1 + $0x8d8] sm:$0xf]
  %v437 = vld [vmem:[%s1 + $0x8dc] sm:$0xff]
  %v438 = vld [vmem:[%s1 + $0x8e4] sm:$0xf]
  %v439 = vld [vmem:[%s1 + $0x8e8] sm:$0xff]
  %v440 = vld [vmem:[%s1 + $0x8f0] sm:$0xf]
  %v441 = vld [vmem:[%s1 + $0x8f4] sm:$0xff]
  %v442 = vld [vmem:[%s1 + $0x8fc] sm:$0xf]
  %v443 = vld [vmem:[%s1 + $0x900] sm:$0xff]
  %v444 = vld [vmem:[%s1 + $0x908] sm:$0xf]
  %v445 = vld [vmem:[%s1 + $0x90c] sm:$0xff]
  %v446 = vld [vmem:[%s1 + $0x914] sm:$0xf]
  %v447 = vld [vmem:[%s1 + $0x918] sm:$0xff]
  %v448 = vld [vmem:[%s1 + $0x920] sm:$0xf]
  %v449 = vld [vmem:[%s1 + $0x924] sm:$0xff]
  %v450 = vld [vmem:[%s1 + $0x92c] sm:$0xf]
  %v451 = vld [vmem:[%s1 + $0x930] sm:$0xff]
  %v452 = vld [vmem:[%s1 + $0x938] sm:$0xf]
  %v453 = vld [vmem:[%s1 + $0x93c] sm:$0xff]
  %v454 = vld [vmem:[%s1 + $0x944] sm:$0xf]
  %v455 = vld [vmem:[%s1 + $0x948] sm:$0xff]
  %v456 = vld [vmem:[%s1 + $0x950] sm:$0xf]
  %v457 = vld [vmem:[%s1 + $0x954] sm:$0xff]
  %v458 = vld [vmem:[%s1 + $0x95c] sm:$0xf]
  %v459 = vld [vmem:[%s1 + $0x960] sm:$0xff]
  %v460 = vld [vmem:[%s1 + $0x968] sm:$0xf]
  %v461 = vld [vmem:[%s1 + $0x96c] sm:$0xff]
  %v462 = vld [vmem:[%s1 + $0x974] sm:$0xf]
  %v463 = vld [vmem:[%s1 + $0x978] sm:$0xff]
  %v464 = vld [vmem:[%s1 + $0x980] sm:$0xf]
  %v465 = vld [vmem:[%s1 + $0x984] sm:$0xff]
  %v466 = vld [vmem:[%s1 + $0x98c] sm:$0xf]
  %v467 = vld [vmem:[%s1 + $0x990] sm:$0xff]
  %v468 = vld [vmem:[%s1 + $0x998] sm:$0xf]
  %v469 = vld [vmem:[%s1 + $0x99c] sm:$0xff]
  %v470 = vld [vmem:[%s1 + $0x9a4] sm:$0xf]
  %v471 = vld [vmem:[%s1 + $0x9a8] sm:$0xff]
  %v472 = vld [vmem:[%s1 + $0x9b0] sm:$0xf]
  %v473 = vld [vmem:[%s1 + $0x9b4] sm:$0xff]
  %v474 = vld [vmem:[%s1 + $0x9bc] sm:$0xf]
  %v475 = vld [vmem:[%s1 + $0x9c0] sm:$0xff]
  %v476 = vld [vmem:[%s1 + $0x9c8] sm:$0xf]
  %v477 = vld [vmem:[%s1 + $0x9cc] sm:$0xff]
  %v478 = vld [vmem:[%s1 + $0x9d4] sm:$0xf]
  %v479 = vld [vmem:[%s1 + $0x9d8] sm:$0xff]
  %v480 = vld [vmem:[%s1 + $0x9e0] sm:$0xf]
  %v481 = vld [vmem:[%s1 + $0x9e4] sm:$0xff]
  %v482 = vld [vmem:[%s1 + $0x9ec] sm:$0xf]
  %v483 = vld [vmem:[%s1 + $0x9f0] sm:$0xff]
  %v484 = vld [vmem:[%s1 + $0x9f8] sm:$0xf]
  %v485 = vld [vmem:[%s1 + $0x9fc] sm:$0xff]
  %v486 = vld [vmem:[%s1 + $0xa04] sm:$0xf]
  %v487 = vld [vmem:[%s1 + $0xa08] sm:$0xff]
  %v488 = vld [vmem:[%s1 + $0xa10] sm:$0xf]
  %v489 = vld [vmem:[%s1 + $0xa14] sm:$0xff]
  %v490 = vld [vmem:[%s1 + $0xa1c] sm:$0xf]
  %v491 = vld [vmem:[%s1 + $0xa20] sm:$0xff]
  %v492 = vld [vmem:[%s1 + $0xa28] sm:$0xf]
  %v493 = vld [vmem:[%s1 + $0xa2c] sm:$0xff]
  %v494 = vld [vmem:[%s1 + $0xa34] sm:$0xf]
  %v495 = vld [vmem:[%s1 + $0xa38] sm:$0xff]
  %v496 = vld [vmem:[%s1 + $0xa40] sm:$0xf]
  %v497 = vld [vmem:[%s1 + $0xa44] sm:$0xff]
  %v498 = vld [vmem:[%s1 + $0xa4c] sm:$0xf]
  %v499 = vld [vmem:[%s1 + $0xa50] sm:$0xff]
  %v500 = vld [vmem:[%s1 + $0xa58] sm:$0xf]
  %v501 = vld [vmem:[%s1 + $0xa5c] sm:$0xff]
  %v502 = vld [vmem:[%s1 + $0xa64] sm:$0xf]
  %v503 = vld [vmem:[%s1 + $0xa68] sm:$0xff]
  %v504 = vld [vmem:[%s1 + $0xa70] sm:$0xf]
  %v505 = vld [vmem:[%s1 + $0xa74] sm:$0xff]
  %v506 = vld [vmem:[%s1 + $0xa7c] sm:$0xf]
  %v507 = vld [vmem:[%s1 + $0xa80] sm:$0xff]
  %v508 = vld [vmem:[%s1 + $0xa88] sm:$0xf]
  %v509 = vld [vmem:[%s1 + $0xa8c] sm:$0xff]
  %v510 = vld [vmem:[%s1 + $0xa94] sm:$0xf]
  %v511 = vld [vmem:[%s1 + $0xa98] sm:$0xff]
  %v512 = vld [vmem:[%s1 + $0xaa0] sm:$0xf]
  %v513 = vld [vmem:[%s1 + $0xaa4] sm:$0xff]
  %v514 = vld [vmem:[%s1 + $0xaac] sm:$0xf]
  %v515 = vld [vmem:[%s1 + $0xab0] sm:$0xff]
  %v516 = vld [vmem:[%s1 + $0xab8] sm:$0xf]
  %v517 = vld [vmem:[%s1 + $0xabc] sm:$0xff]
  %v518 = vld [vmem:[%s1 + $0xac4] sm:$0xf]
  %v519 = vld [vmem:[%s1 + $0xac8] sm:$0xff]
  %v520 = vld [vmem:[%s1 + $0xad0] sm:$0xf]
  %v521 = vld [vmem:[%s1 + $0xad4] sm:$0xff]
  %v522 = vld [vmem:[%s1 + $0xadc] sm:$0xf]
  %v523 = vld [vmem:[%s1 + $0xae0] sm:$0xff]
  %v524 = vld [vmem:[%s1 + $0xae8] sm:$0xf]
  %v525 = vld [vmem:[%s1 + $0xaec] sm:$0xff]
  %v526 = vld [vmem:[%s1 + $0xaf4] sm:$0xf]
  %v527 = vld [vmem:[%s1 + $0xaf8] sm:$0xff]
  %v528 = vld [vmem:[%s1 + $0xb00] sm:$0xf]
  %v529 = vld [vmem:[%s1 + $0xb04] sm:$0xff]
  %v530 = vld [vmem:[%s1 + $0xb0c] sm:$0xf]
  %v531 = vld [vmem:[%s1 + $0xb10] sm:$0xff]
  %v532 = vld [vmem:[%s1 + $0xb18] sm:$0xf]
  %v533 = vld [vmem:[%s1 + $0xb1c] sm:$0xff]
  %v534 = vld [vmem:[%s1 + $0xb24] sm:$0xf]
  %v535 = vld [vmem:[%s1 + $0xb28] sm:$0xff]
  %v536 = vld [vmem:[%s1 + $0xb30] sm:$0xf]
  %v537 = vld [vmem:[%s1 + $0xb34] sm:$0xff]
  %v538 = vld [vmem:[%s1 + $0xb3c] sm:$0xf]
  %v539 = vld [vmem:[%s1 + $0xb40] sm:$0xff]
  %v540 = vld [vmem:[%s1 + $0xb48] sm:$0xf]
  %v541 = vld [vmem:[%s1 + $0xb4c] sm:$0xff]
  %v542 = vld [vmem:[%s1 + $0xb54] sm:$0xf]
  %v543 = vld [vmem:[%s1 + $0xb58] sm:$0xff]
  %v544 = vld [vmem:[%s1 + $0xb60] sm:$0xf]
  %v545 = vld [vmem:[%s1 + $0xb64] sm:$0xff]
  %v546 = vld [vmem:[%s1 + $0xb6c] sm:$0xf]
  %v547 = vld [vmem:[%s1 + $0xb70] sm:$0xff]
  %v548 = vld [vmem:[%s1 + $0xb78] sm:$0xf]
  %v549 = vld [vmem:[%s1 + $0xb7c] sm:$0xff]
  %v550 = vld [vmem:[%s1 + $0xb84] sm:$0xf]
  %v551 = vld [vmem:[%s1 + $0xb88] sm:$0xff]
  %v552 = vld [vmem:[%s1 + $0xb90] sm:$0xf]
  %v553 = vld [vmem:[%s1 + $0xb94] sm:$0xff]
  %v554 = vld [vmem:[%s1 + $0xb9c] sm:$0xf]
  %v555 = vld [vmem:[%s1 + $0xba0] sm:$0xff]
  %v556 = vld [vmem:[%s1 + $0xba8] sm:$0xf]
  %v557 = vld [vmem:[%s1 + $0xbac] sm:$0xff]
  %v558 = vld [vmem:[%s1 + $0xbb4] sm:$0xf]
  %v559 = vld [vmem:[%s1 + $0xbb8] sm:$0xff]
  %v560 = vld [vmem:[%s1 + $0xbc0] sm:$0xf]
  %v561 = vld [vmem:[%s1 + $0xbc4] sm:$0xff]
  %v562 = vld [vmem:[%s1 + $0xbcc] sm:$0xf]
  %v563 = vld [vmem:[%s1 + $0xbd0] sm:$0xff]
  %v564 = vld [vmem:[%s1 + $0xbd8] sm:$0xf]
  %v565 = vld [vmem:[%s1 + $0xbdc] sm:$0xff]
  %v566 = vld [vmem:[%s1 + $0xbe4] sm:$0xf]
  %v567 = vld [vmem:[%s1 + $0xbe8] sm:$0xff]
  %v568 = vld [vmem:[%s1 + $0xbf0] sm:$0xf]
  %v569 = vld [vmem:[%s1 + $0xbf4] sm:$0xff]
  %v570 = vld [vmem:[%s1 + $0xbfc] sm:$0xf]
  %v571 = vld [vmem:[%s1 + $0xc00] sm:$0xff]
  %v572 = vld [vmem:[%s1 + $0xc08] sm:$0xf]
  %v573 = vld [vmem:[%s1 + $0xc0c] sm:$0xff]
  %v574 = vld [vmem:[%s1 + $0xc14] sm:$0xf]
  %v575 = vld [vmem:[%s1 + $0xc18] sm:$0xff]
  %v576 = vld [vmem:[%s1 + $0xc20] sm:$0xf]
  %v577 = vld [vmem:[%s1 + $0xc24] sm:$0xff]
  %v578 = vld [vmem:[%s1 + $0xc2c] sm:$0xf]
  %v579 = vld [vmem:[%s1 + $0xc30] sm:$0xff]
  %v580 = vld [vmem:[%s1 + $0xc38] sm:$0xf]
  %v581 = vld [vmem:[%s1 + $0xc3c] sm:$0xff]
  %v582 = vld [vmem:[%s1 + $0xc44] sm:$0xf]
  %v583 = vld [vmem:[%s1 + $0xc48] sm:$0xff]
  %v584 = vld [vmem:[%s1 + $0xc50] sm:$0xf]
  %v585 = vld [vmem:[%s1 + $0xc54] sm:$0xff]
  %v586 = vld [vmem:[%s1 + $0xc5c] sm:$0xf]
  %v587 = vld [vmem:[%s1 + $0xc60] sm:$0xff]
  %v588 = vld [vmem:[%s1 + $0xc68] sm:$0xf]
  %v589 = vld [vmem:[%s1 + $0xc6c] sm:$0xff]
  %v590 = vld [vmem:[%s1 + $0xc74] sm:$0xf]
  %v591 = vld [vmem:[%s1 + $0xc78] sm:$0xff]
  %v592 = vld [vmem:[%s1 + $0xc80] sm:$0xf]
  %v593 = vld [vmem:[%s1 + $0xc84] sm:$0xff]
  %v594 = vld [vmem:[%s1 + $0xc8c] sm:$0xf]
  %v595 = vld [vmem:[%s1 + $0xc90] sm:$0xff]
  %v596 = vld [vmem:[%s1 + $0xc98] sm:$0xf]
  %v597 = vld [vmem:[%s1 + $0xc9c] sm:$0xff]
  %v598 = vld [vmem:[%s1 + $0xca4] sm:$0xf]
  %v599 = vld [vmem:[%s1 + $0xca8] sm:$0xff]
  %v600 = vld [vmem:[%s1 + $0xcb0] sm:$0xf]
  %v601 = vld [vmem:[%s1 + $0xcb4] sm:$0xff]
  %v602 = vld [vmem:[%s1 + $0xcbc] sm:$0xf]
  %v603 = vld [vmem:[%s1 + $0xcc0] sm:$0xff]
  %v604 = vld [vmem:[%s1 + $0xcc8] sm:$0xf]
  %v605 = vld [vmem:[%s1 + $0xccc] sm:$0xff]
  %v606 = vld [vmem:[%s1 + $0xcd4] sm:$0xf]
  %v607 = vld [vmem:[%s1 + $0xcd8] sm:$0xff]
  %v608 = vld [vmem:[%s1 + $0xce0] sm:$0xf]
  %v609 = vld [vmem:[%s1 + $0xce4] sm:$0xff]
  %v610 = vld [vmem:[%s1 + $0xcec] sm:$0xf]
  %v611 = vld [vmem:[%s1 + $0xcf0] sm:$0xff]
  %v612 = vld [vmem:[%s1 + $0xcf8] sm:$0xf]
  %v613 = vld [vmem:[%s1 + $0xcfc] sm:$0xff]
  %v614 = vld [vmem:[%s1 + $0xd04] sm:$0xf]
  %v615 = vld [vmem:[%s1 + $0xd08] sm:$0xff]
  %v616 = vld [vmem:[%s1 + $0xd10] sm:$0xf]
  %v617 = vld [vmem:[%s1 + $0xd14] sm:$0xff]
  %v618 = vld [vmem:[%s1 + $0xd1c] sm:$0xf]
  %v619 = vld [vmem:[%s1 + $0xd20] sm:$0xff]
  %v620 = vld [vmem:[%s1 + $0xd28] sm:$0xf]
  %v621 = vld [vmem:[%s1 + $0xd2c] sm:$0xff]
  %v622 = vld [vmem:[%s1 + $0xd34] sm:$0xf]
  %v623 = vld [vmem:[%s1 + $0xd38] sm:$0xff]
  %v624 = vld [vmem:[%s1 + $0xd40] sm:$0xf]
  %v625 = vld [vmem:[%s1 + $0xd44] sm:$0xff]
  %v626 = vld [vmem:[%s1 + $0xd4c] sm:$0xf]
  %v627 = vld [vmem:[%s1 + $0xd50] sm:$0xff]
  %v628 = vld [vmem:[%s1 + $0xd58] sm:$0xf]
  %v629 = vld [vmem:[%s1 + $0xd5c] sm:$0xff]
  %v630 = vld [vmem:[%s1 + $0xd64] sm:$0xf]
  %v631 = vld [vmem:[%s1 + $0xd68] sm:$0xff]
  %v632 = vld [vmem:[%s1 + $0xd70] sm:$0xf]
  %v633 = vld [vmem:[%s1 + $0xd74] sm:$0xff]
  %v634 = vld [vmem:[%s1 + $0xd7c] sm:$0xf]
  %v635 = vld [vmem:[%s1 + $0xd80] sm:$0xff]
  %v636 = vld [vmem:[%s1 + $0xd88] sm:$0xf]
  %v637 = vld [vmem:[%s1 + $0xd8c] sm:$0xff]
  %v638 = vld [vmem:[%s1 + $0xd94] sm:$0xf]
  %v639 = vld [vmem:[%s1 + $0xd98] sm:$0xff]
  %v640 = vld [vmem:[%s1 + $0xda0] sm:$0xf]
  %v641 = vld [vmem:[%s1 + $0xda4] sm:$0xff]
  %v642 = vld [vmem:[%s1 + $0xdac] sm:$0xf]
  %v643 = vld [vmem:[%s1 + $0xdb0] sm:$0xff]
  %v644 = vld [vmem:[%s1 + $0xdb8] sm:$0xf]
  %v645 = vld [vmem:[%s1 + $0xdbc] sm:$0xff]
  %v646 = vld [vmem:[%s1 + $0xdc4] sm:$0xf]
  %v647 = vld [vmem:[%s1 + $0xdc8] sm:$0xff]
  %v648 = vld [vmem:[%s1 + $0xdd0] sm:$0xf]
  %v649 = vld [vmem:[%s1 + $0xdd4] sm:$0xff]
  %v650 = vld [vmem:[%s1 + $0xddc] sm:$0xf]
  %v651 = vld [vmem:[%s1 + $0xde0] sm:$0xff]
  %v652 = vld [vmem:[%s1 + $0xde8] sm:$0xf]
  %v653 = vld [vmem:[%s1 + $0xdec] sm:$0xff]
  %v654 = vld [vmem:[%s1 + $0xdf4] sm:$0xf]
  %v655 = vld [vmem:[%s1 + $0xdf8] sm:$0xff]
  %v656 = vld [vmem:[%s1 + $0xe00] sm:$0xf]
  %v657 = vld [vmem:[%s1 + $0xe04] sm:$0xff]
  %v658 = vld [vmem:[%s1 + $0xe0c] sm:$0xf]
  %v659 = vld [vmem:[%s1 + $0xe10] sm:$0xff]
  %v660 = vld [vmem:[%s1 + $0xe18] sm:$0xf]
  %v661 = vld [vmem:[%s1 + $0xe1c] sm:$0xff]
  %v662 = vld [vmem:[%s1 + $0xe24] sm:$0xf]
  %v663 = vld [vmem:[%s1 + $0xe28] sm:$0xff]
  %v664 = vld [vmem:[%s1 + $0xe30] sm:$0xf]
  %v665 = vld [vmem:[%s1 + $0xe34] sm:$0xff]
  %v666 = vld [vmem:[%s1 + $0xe3c] sm:$0xf]
  %v667 = vld [vmem:[%s1 + $0xe40] sm:$0xff]
  %v668 = vld [vmem:[%s1 + $0xe48] sm:$0xf]
  %v669 = vld [vmem:[%s1 + $0xe4c] sm:$0xff]
  %v670 = vld [vmem:[%s1 + $0xe54] sm:$0xf]
  %v671 = vld [vmem:[%s1 + $0xe58] sm:$0xff]
  %v672 = vld [vmem:[%s1 + $0xe60] sm:$0xf]
  %v673 = vld [vmem:[%s1 + $0xe64] sm:$0xff]
  %v674 = vld [vmem:[%s1 + $0xe6c] sm:$0xf]
  %v675 = vld [vmem:[%s1 + $0xe70] sm:$0xff]
  %v676 = vld [vmem:[%s1 + $0xe78] sm:$0xf]
  %v677 = vld [vmem:[%s1 + $0xe7c] sm:$0xff]
  %v678 = vld [vmem:[%s1 + $0xe84] sm:$0xf]
  %v679 = vld [vmem:[%s1 + $0xe88] sm:$0xff]
  %v680 = vld [vmem:[%s1 + $0xe90] sm:$0xf]
  %v681 = vld [vmem:[%s1 + $0xe94] sm:$0xff]
  %v682 = vld [vmem:[%s1 + $0xe9c] sm:$0xf]
  %v683 = vld [vmem:[%s1 + $0xea0] sm:$0xff]
  %v684 = vld [vmem:[%s1 + $0xea8] sm:$0xf]
  %v685 = vld [vmem:[%s1 + $0xeac] sm:$0xff]
  %v686 = vld [vmem:[%s1 + $0xeb4] sm:$0xf]
  %v687 = vld [vmem:[%s1 + $0xeb8] sm:$0xff]
  %v688 = vld [vmem:[%s1 + $0xec0] sm:$0xf]
  %v689 = vld [vmem:[%s1 + $0xec4] sm:$0xff]
  %v690 = vld [vmem:[%s1 + $0xecc] sm:$0xf]
  %v691 = vld [vmem:[%s1 + $0xed0] sm:$0xff]
  %v692 = vld [vmem:[%s1 + $0xed8] sm:$0xf]
  %v693 = vld [vmem:[%s1 + $0xedc] sm:$0xff]
  %v694 = vld [vmem:[%s1 + $0xee4] sm:$0xf]
  %v695 = vld [vmem:[%s1 + $0xee8] sm:$0xff]
  %v696 = vld [vmem:[%s1 + $0xef0] sm:$0xf]
  %v697 = vld [vmem:[%s1 + $0xef4] sm:$0xff]
  %v698 = vld [vmem:[%s1 + $0xefc] sm:$0xf]
  %v699 = vld [vmem:[%s1 + $0xf00] sm:$0xff]
  %v700 = vld [vmem:[%s1 + $0xf08] sm:$0xf]
  %v701 = vld [vmem:[%s1 + $0xf0c] sm:$0xff]
  %v702 = vld [vmem:[%s1 + $0xf14] sm:$0xf]
  %v703 = vld [vmem:[%s1 + $0xf18] sm:$0xff]
  %v704 = vld [vmem:[%s1 + $0xf20] sm:$0xf]
  %v705 = vld [vmem:[%s1 + $0xf24] sm:$0xff]
  %v706 = vld [vmem:[%s1 + $0xf2c] sm:$0xf]
  %v707 = vld [vmem:[%s1 + $0xf30] sm:$0xff]
  %v708 = vld [vmem:[%s1 + $0xf38] sm:$0xf]
  %v709 = vld [vmem:[%s1 + $0xf3c] sm:$0xff]
  %v710 = vld [vmem:[%s1 + $0xf44] sm:$0xf]
  %v711 = vld [vmem:[%s1 + $0xf48] sm:$0xff]
  %v712 = vld [vmem:[%s1 + $0xf50] sm:$0xf]
  %v713 = vld [vmem:[%s1 + $0xf54] sm:$0xff]
  %v714 = vld [vmem:[%s1 + $0xf5c] sm:$0xf]
  %v715 = vld [vmem:[%s1 + $0xf60] sm:$0xff]
  %v716 = vld [vmem:[%s1 + $0xf68] sm:$0xf]
  %v717 = vld [vmem:[%s1 + $0xf6c] sm:$0xff]
  %v718 = vld [vmem:[%s1 + $0xf74] sm:$0xf]
  %v719 = vld [vmem:[%s1 + $0xf78] sm:$0xff]
  %v720 = vld [vmem:[%s1 + $0xf80] sm:$0xf]
  %v721 = vld [vmem:[%s1 + $0xf84] sm:$0xff]
  %v722 = vld [vmem:[%s1 + $0xf8c] sm:$0xf]
  %v723 = vld [vmem:[%s1 + $0xf90] sm:$0xff]
  %v724 = vld [vmem:[%s1 + $0xf98] sm:$0xf]
  %v725 = vld [vmem:[%s1 + $0xf9c] sm:$0xff]
  %v726 = vld [vmem:[%s1 + $0xfa4] sm:$0xf]
  %v727 = vld [vmem:[%s1 + $0xfa8] sm:$0xff]
  %v728 = vld [vmem:[%s1 + $0xfb0] sm:$0xf]
  %v729 = vld [vmem:[%s1 + $0xfb4] sm:$0xff]
  %v730 = vld [vmem:[%s1 + $0xfbc] sm:$0xf]
  %v731 = vld [vmem:[%s1 + $0xfc0] sm:$0xff]
  %v732 = vld [vmem:[%s1 + $0xfc8] sm:$0xf]
  %v733 = vld [vmem:[%s1 + $0xfcc] sm:$0xff]
  %v734 = vld [vmem:[%s1 + $0xfd4] sm:$0xf]
  %v735 = vld [vmem:[%s1 + $0xfd8] sm:$0xff]
  %v736 = vld [vmem:[%s1 + $0xfe0] sm:$0xf]
  %v737 = vld [vmem:[%s1 + $0xfe4] sm:$0xff]
  %v738 = vld [vmem:[%s1 + $0xfec] sm:$0xf]
  %v739 = vld [vmem:[%s1 + $0xff0] sm:$0xff]
  %v740 = vld [vmem:[%s1 + $0xff8] sm:$0xf]
  %v741 = vld [vmem:[%s1 + $0xffc] sm:$0xff]
  %v742 = vld [vmem:[%s1 + $0x1004] sm:$0xf]
  %v743 = vld [vmem:[%s1 + $0x1008] sm:$0xff]
  %v744 = vld [vmem:[%s1 + $0x1010] sm:$0xf]
  %v745 = vld [vmem:[%s1 + $0x1014] sm:$0xff]
  %v746 = vld [vmem:[%s1 + $0x101c] sm:$0xf]
  %v747 = vld [vmem:[%s1 + $0x1020] sm:$0xff]
  %v748 = vld [vmem:[%s1 + $0x1028] sm:$0xf]
  %v749 = vld [vmem:[%s1 + $0x102c] sm:$0xff]
  %v750 = vld [vmem:[%s1 + $0x1034] sm:$0xf]
  %v751 = vld [vmem:[%s1 + $0x1038] sm:$0xff]
  %v752 = vld [vmem:[%s1 + $0x1040] sm:$0xf]
  %v753 = vld [vmem:[%s1 + $0x1044] sm:$0xff]
  %v754 = vld [vmem:[%s1 + $0x104c] sm:$0xf]
  %v755 = vld [vmem:[%s1 + $0x1050] sm:$0xff]
  %v756 = vld [vmem:[%s1 + $0x1058] sm:$0xf]
  %v757 = vld [vmem:[%s1 + $0x105c] sm:$0xff]
  %v758 = vld [vmem:[%s1 + $0x1064] sm:$0xf]
  %v759 = vld [vmem:[%s1 + $0x1068] sm:$0xff]
  %v760 = vld [vmem:[%s1 + $0x1070] sm:$0xf]
  %v761 = vld [vmem:[%s1 + $0x1074] sm:$0xff]
  %v762 = vld [vmem:[%s1 + $0x107c] sm:$0xf]
  %v763 = vld [vmem:[%s1 + $0x1080] sm:$0xff]
  %v764 = vld [vmem:[%s1 + $0x1088] sm:$0xf]
  %v765 = vld [vmem:[%s1 + $0x108c] sm:$0xff]
  %v766 = vld [vmem:[%s1 + $0x1094] sm:$0xf]
  %v767 = vld [vmem:[%s1 + $0x1098] sm:$0xff]
  %v768 = vld [vmem:[%s1 + $0x10a0] sm:$0xf]
  %v769 = vld [vmem:[%s1 + $0x10a4] sm:$0xff]
  %v770 = vld [vmem:[%s1 + $0x10ac] sm:$0xf]
  %v771 = vld [vmem:[%s1 + $0x10b0] sm:$0xff]
  %v772 = vld [vmem:[%s1 + $0x10b8] sm:$0xf]
  %v773 = vld [vmem:[%s1 + $0x10bc] sm:$0xff]
  %v774 = vld [vmem:[%s1 + $0x10c4] sm:$0xf]
  %v775 = vld [vmem:[%s1 + $0x10c8] sm:$0xff]
  %v776 = vld [vmem:[%s1 + $0x10d0] sm:$0xf]
  %v777 = vld [vmem:[%s1 + $0x10d4] sm:$0xff]
  %v778 = vld [vmem:[%s1 + $0x10dc] sm:$0xf]
  %v779 = vld [vmem:[%s1 + $0x10e0] sm:$0xff]
  %v780 = vld [vmem:[%s1 + $0x10e8] sm:$0xf]
  %v781 = vld [vmem:[%s1 + $0x10ec] sm:$0xff]
  %v782 = vld [vmem:[%s1 + $0x10f4] sm:$0xf]
  %v783 = vld [vmem:[%s1 + $0x10f8] sm:$0xff]
  %v784 = vld [vmem:[%s1 + $0x1100] sm:$0xf]
  %v785 = vld [vmem:[%s1 + $0x1104] sm:$0xff]
  %v786 = vld [vmem:[%s1 + $0x110c] sm:$0xf]
  %v787 = vld [vmem:[%s1 + $0x1110] sm:$0xff]
  %v788 = vld [vmem:[%s1 + $0x1118] sm:$0xf]
  %v789 = vld [vmem:[%s1 + $0x111c] sm:$0xff]
  %v790 = vld [vmem:[%s1 + $0x1124] sm:$0xf]
  %v791 = vld [vmem:[%s1 + $0x1128] sm:$0xff]
  %v792 = vld [vmem:[%s1 + $0x1130] sm:$0xf]
  %v793 = vld [vmem:[%s1 + $0x1134] sm:$0xff]
  %v794 = vld [vmem:[%s1 + $0x113c] sm:$0xf]
  %v795 = vld [vmem:[%s1 + $0x1140] sm:$0xff]
  %v796 = vld [vmem:[%s1 + $0x1148] sm:$0xf]
  %v797 = vld [vmem:[%s1 + $0x114c] sm:$0xff]
  %v798 = vld [vmem:[%s1 + $0x1154] sm:$0xf]
  %v799 = vld [vmem:[%s1 + $0x1158] sm:$0xff]
  %v800 = vld [vmem:[%s1 + $0x1160] sm:$0xf]
  %v801 = vld [vmem:[%s1 + $0x1164] sm:$0xff]
  %v802 = vld [vmem:[%s1 + $0x116c] sm:$0xf]
  %v803 = vld [vmem:[%s1 + $0x1170] sm:$0xff]
  %v804 = vld [vmem:[%s1 + $0x1178] sm:$0xf]
  %v805 = vld [vmem:[%s1 + $0x117c] sm:$0xff]
  %v806 = vld [vmem:[%s1 + $0x1184] sm:$0xf]
  %v807 = vld [vmem:[%s1 + $0x1188] sm:$0xff]
  %v808 = vld [vmem:[%s1 + $0x1190] sm:$0xf]
  %v809 = vld [vmem:[%s1 + $0x1194] sm:$0xff]
  %v810 = vld [vmem:[%s1 + $0x119c] sm:$0xf]
  %v811 = vld [vmem:[%s1 + $0x11a0] sm:$0xff]
  %v812 = vld [vmem:[%s1 + $0x11a8] sm:$0xf]
  %v813 = vld [vmem:[%s1 + $0x11ac] sm:$0xff]
  %v814 = vld [vmem:[%s1 + $0x11b4] sm:$0xf]
  %v815 = vld [vmem:[%s1 + $0x11b8] sm:$0xff]
  %v816 = vld [vmem:[%s1 + $0x11c0] sm:$0xf]
  %v817 = vld [vmem:[%s1 + $0x11c4] sm:$0xff]
  %v818 = vld [vmem:[%s1 + $0x11cc] sm:$0xf]
  %v819 = vld [vmem:[%s1 + $0x11d0] sm:$0xff]
  %v820 = vld [vmem:[%s1 + $0x11d8] sm:$0xf]
  %v821 = vld [vmem:[%s1 + $0x11dc] sm:$0xff]
  %v822 = vld [vmem:[%s1 + $0x11e4] sm:$0xf]
  %v823 = vld [vmem:[%s1 + $0x11e8] sm:$0xff]
  %v824 = vld [vmem:[%s1 + $0x11f0] sm:$0xf]
  %v825 = vld [vmem:[%s1 + $0x11f4] sm:$0xff]
  %v826 = vld [vmem:[%s1 + $0x11fc] sm:$0xf]
  %v827 = vld [vmem:[%s1 + $0x1200] sm:$0xff]
  %v828 = vld [vmem:[%s1 + $0x1208] sm:$0xf]
  %v829 = vld [vmem:[%s1 + $0x120c] sm:$0xff]
  %v830 = vld [vmem:[%s1 + $0x1214] sm:$0xf]
  %v831 = vld [vmem:[%s1 + $0x1218] sm:$0xff]
  %v832 = vld [vmem:[%s1 + $0x1220] sm:$0xf]
  %v833 = vld [vmem:[%s1 + $0x1224] sm:$0xff]
  %v834 = vld [vmem:[%s1 + $0x122c] sm:$0xf]
  %v835 = vld [vmem:[%s1 + $0x1230] sm:$0xff]
  %v836 = vld [vmem:[%s1 + $0x1238] sm:$0xf]
  %v837 = vld [vmem:[%s1 + $0x123c] sm:$0xff]
  %v838 = vld [vmem:[%s1 + $0x1244] sm:$0xf]
  %v839 = vld [vmem:[%s1 + $0x1248] sm:$0xff]
  %v840 = vld [vmem:[%s1 + $0x1250] sm:$0xf]
  %v841 = vld [vmem:[%s1 + $0x1254] sm:$0xff]
  %v842 = vld [vmem:[%s1 + $0x125c] sm:$0xf]
  %v843 = vld [vmem:[%s1 + $0x1260] sm:$0xff]
  %v844 = vld [vmem:[%s1 + $0x1268] sm:$0xf]
  %v845 = vld [vmem:[%s1 + $0x126c] sm:$0xff]
  %v846 = vld [vmem:[%s1 + $0x1274] sm:$0xf]
  %v847 = vld [vmem:[%s1 + $0x1278] sm:$0xff]
  %v848 = vld [vmem:[%s1 + $0x1280] sm:$0xf]
  %v849 = vld [vmem:[%s1 + $0x1284] sm:$0xff]
  %v850 = vld [vmem:[%s1 + $0x128c] sm:$0xf]
  %v851 = vld [vmem:[%s1 + $0x1290] sm:$0xff]
  %v852 = vld [vmem:[%s1 + $0x1298] sm:$0xf]
  %v853 = vld [vmem:[%s1 + $0x129c] sm:$0xff]
  %v854 = vld [vmem:[%s1 + $0x12a4] sm:$0xf]
  %v855 = vld [vmem:[%s1 + $0x12a8] sm:$0xff]
  %v856 = vld [vmem:[%s1 + $0x12b0] sm:$0xf]
  %v857 = vld [vmem:[%s1 + $0x12b4] sm:$0xff]
  %v858 = vld [vmem:[%s1 + $0x12bc] sm:$0xf]
  %v859 = vld [vmem:[%s1 + $0x12c0] sm:$0xff]
  %v860 = vld [vmem:[%s1 + $0x12c8] sm:$0xf]
  %v861 = vld [vmem:[%s1 + $0x12cc] sm:$0xff]
  %v862 = vld [vmem:[%s1 + $0x12d4] sm:$0xf]
  %v863 = vld [vmem:[%s1 + $0x12d8] sm:$0xff]
  %v864 = vld [vmem:[%s1 + $0x12e0] sm:$0xf]
  %v865 = vld [vmem:[%s1 + $0x12e4] sm:$0xff]
  %v866 = vld [vmem:[%s1 + $0x12ec] sm:$0xf]
  %v867 = vld [vmem:[%s1 + $0x12f0] sm:$0xff]
  %v868 = vld [vmem:[%s1 + $0x12f8] sm:$0xf]
  %v869 = vld [vmem:[%s1 + $0x12fc] sm:$0xff]
  %v870 = vld [vmem:[%s1 + $0x1304] sm:$0xf]
  %v871 = vld [vmem:[%s1 + $0x1308] sm:$0xff]
  %v872 = vld [vmem:[%s1 + $0x1310] sm:$0xf]
  %v873 = vld [vmem:[%s1 + $0x1314] sm:$0xff]
  %v874 = vld [vmem:[%s1 + $0x131c] sm:$0xf]
  %v875 = vld [vmem:[%s1 + $0x1320] sm:$0xff]
  %v876 = vld [vmem:[%s1 + $0x1328] sm:$0xf]
  %v877 = vld [vmem:[%s1 + $0x132c] sm:$0xff]
  %v878 = vld [vmem:[%s1 + $0x1334] sm:$0xf]
  %v879 = vld [vmem:[%s1 + $0x1338] sm:$0xff]
  %v880 = vld [vmem:[%s1 + $0x1340] sm:$0xf]
  %v881 = vld [vmem:[%s1 + $0x1344] sm:$0xff]
  %v882 = vld [vmem:[%s1 + $0x134c] sm:$0xf]
  %v883 = vld [vmem:[%s1 + $0x1350] sm:$0xff]
  %v884 = vld [vmem:[%s1 + $0x1358] sm:$0xf]
  %v885 = vld [vmem:[%s1 + $0x135c] sm:$0xff]
  %v886 = vld [vmem:[%s1 + $0x1364] sm:$0xf]
  %v887 = vld [vmem:[%s1 + $0x1368] sm:$0xff]
  %v888 = vld [vmem:[%s1 + $0x1370] sm:$0xf]
  %v889 = vld [vmem:[%s1 + $0x1374] sm:$0xff]
  %v890 = vld [vmem:[%s1 + $0x137c] sm:$0xf]
  %v891 = vld [vmem:[%s1 + $0x1380] sm:$0xff]
  %v892 = vld [vmem:[%s1 + $0x1388] sm:$0xf]
  %v893 = vld [vmem:[%s1 + $0x138c] sm:$0xff]
  %v894 = vld [vmem:[%s1 + $0x1394] sm:$0xf]
  %v895 = vld [vmem:[%s1 + $0x1398] sm:$0xff]
  %v896 = vld [vmem:[%s1 + $0x13a0] sm:$0xf]
  %v897 = vld [vmem:[%s1 + $0x13a4] sm:$0xff]
  %v898 = vld [vmem:[%s1 + $0x13ac] sm:$0xf]
  %v899 = vld [vmem:[%s1 + $0x13b0] sm:$0xff]
  %v900 = vld [vmem:[%s1 + $0x13b8] sm:$0xf]
  %v901 = vld [vmem:[%s1 + $0x13bc] sm:$0xff]
  %v902 = vld [vmem:[%s1 + $0x13c4] sm:$0xf]
  %v903 = vld [vmem:[%s1 + $0x13c8] sm:$0xff]
  %v904 = vld [vmem:[%s1 + $0x13d0] sm:$0xf]
  %v905 = vld [vmem:[%s1 + $0x13d4] sm:$0xff]
  %v906 = vld [vmem:[%s1 + $0x13dc] sm:$0xf]
  %v907 = vld [vmem:[%s1 + $0x13e0] sm:$0xff]
  %v908 = vld [vmem:[%s1 + $0x13e8] sm:$0xf]
  %v909 = vld [vmem:[%s1 + $0x13ec] sm:$0xff]
  %v910 = vld [vmem:[%s1 + $0x13f4] sm:$0xf]
  %v911 = vld [vmem:[%s1 + $0x13f8] sm:$0xff]
  %v912 = vld [vmem:[%s1 + $0x1400] sm:$0xf]
  %v913 = vld [vmem:[%s1 + $0x1404] sm:$0xff]
  %v914 = vld [vmem:[%s1 + $0x140c] sm:$0xf]
  %v915 = vld [vmem:[%s1 + $0x1410] sm:$0xff]
  %v916 = vld [vmem:[%s1 + $0x1418] sm:$0xf]
  %v917 = vld [vmem:[%s1 + $0x141c] sm:$0xff]
  %v918 = vld [vmem:[%s1 + $0x1424] sm:$0xf]
  %v919 = vld [vmem:[%s1 + $0x1428] sm:$0xff]
  %v920 = vld [vmem:[%s1 + $0x1430] sm:$0xf]
  %v921 = vld [vmem:[%s1 + $0x1434] sm:$0xff]
  %v922 = vld [vmem:[%s1 + $0x143c] sm:$0xf]
  %v923 = vld [vmem:[%s1 + $0x1440] sm:$0xff]
  %v924 = vld [vmem:[%s1 + $0x1448] sm:$0xf]
  %v925 = vld [vmem:[%s1 + $0x144c] sm:$0xff]
  %v926 = vld [vmem:[%s1 + $0x1454] sm:$0xf]
  %v927 = vld [vmem:[%s1 + $0x1458] sm:$0xff]
  %v928 = vld [vmem:[%s1 + $0x1460] sm:$0xf]
  %v929 = vld [vmem:[%s1 + $0x1464] sm:$0xff]
  %v930 = vld [vmem:[%s1 + $0x146c] sm:$0xf]
  %v931 = vld [vmem:[%s1 + $0x1470] sm:$0xff]
  %v932 = vld [vmem:[%s1 + $0x1478] sm:$0xf]
  %v933 = vld [vmem:[%s1 + $0x147c] sm:$0xff]
  %v934 = vld [vmem:[%s1 + $0x1484] sm:$0xf]
  %v935 = vld [vmem:[%s1 + $0x1488] sm:$0xff]
  %v936 = vld [vmem:[%s1 + $0x1490] sm:$0xf]
  %v937 = vld [vmem:[%s1 + $0x1494] sm:$0xff]
  %v938 = vld [vmem:[%s1 + $0x149c] sm:$0xf]
  %v939 = vld [vmem:[%s1 + $0x14a0] sm:$0xff]
  %v940 = vld [vmem:[%s1 + $0x14a8] sm:$0xf]
  %v941 = vld [vmem:[%s1 + $0x14ac] sm:$0xff]
  %v942 = vld [vmem:[%s1 + $0x14b4] sm:$0xf]
  %v943 = vld [vmem:[%s1 + $0x14b8] sm:$0xff]
  %v944 = vld [vmem:[%s1 + $0x14c0] sm:$0xf]
  %v945 = vld [vmem:[%s1 + $0x14c4] sm:$0xff]
  %v946 = vld [vmem:[%s1 + $0x14cc] sm:$0xf]
  %v947 = vld [vmem:[%s1 + $0x14d0] sm:$0xff]
  %v948 = vld [vmem:[%s1 + $0x14d8] sm:$0xf]
  %v949 = vld [vmem:[%s1 + $0x14dc] sm:$0xff]
  %v950 = vld [vmem:[%s1 + $0x14e4] sm:$0xf]
  %v951 = vld [vmem:[%s1 + $0x14e8] sm:$0xff]
  %v952 = vld [vmem:[%s1 + $0x14f0] sm:$0xf]
  %v953 = vld [vmem:[%s1 + $0x14f4] sm:$0xff]
  %v954 = vld [vmem:[%s1 + $0x14fc] sm:$0xf]
  %v955 = vld [vmem:[%s1 + $0x1500] sm:$0xff]
  %v956 = vld [vmem:[%s1 + $0x1508] sm:$0xf]
  %v957 = vld [vmem:[%s1 + $0x150c] sm:$0xff]
  %v958 = vld [vmem:[%s1 + $0x1514] sm:$0xf]
  %v959 = vld [vmem:[%s1 + $0x1518] sm:$0xff]
  %v960 = vld [vmem:[%s1 + $0x1520] sm:$0xf]
  %v961 = vld [vmem:[%s1 + $0x1524] sm:$0xff]
  %v962 = vld [vmem:[%s1 + $0x152c] sm:$0xf]
  %v963 = vld [vmem:[%s1 + $0x1530] sm:$0xff]
  %v964 = vld [vmem:[%s1 + $0x1538] sm:$0xf]
  %v965 = vld [vmem:[%s1 + $0x153c] sm:$0xff]
  %v966 = vld [vmem:[%s1 + $0x1544] sm:$0xf]
  %v967 = vld [vmem:[%s1 + $0x1548] sm:$0xff]
  %v968 = vld [vmem:[%s1 + $0x1550] sm:$0xf]
  %v969 = vld [vmem:[%s1 + $0x1554] sm:$0xff]
  %v970 = vld [vmem:[%s1 + $0x155c] sm:$0xf]
  %v971 = vld [vmem:[%s1 + $0x1560] sm:$0xff]
  %v972 = vld [vmem:[%s1 + $0x1568] sm:$0xf]
  %v973 = vld [vmem:[%s1 + $0x156c] sm:$0xff]
  %v974 = vld [vmem:[%s1 + $0x1574] sm:$0xf]
  %v975 = vld [vmem:[%s1 + $0x1578] sm:$0xff]
  %v976 = vld [vmem:[%s1 + $0x1580] sm:$0xf]
  %v977 = vld [vmem:[%s1 + $0x1584] sm:$0xff]
  %v978 = vld [vmem:[%s1 + $0x158c] sm:$0xf]
  %v979 = vld [vmem:[%s1 + $0x1590] sm:$0xff]
  %v980 = vld [vmem:[%s1 + $0x1598] sm:$0xf]
  %v981 = vld [vmem:[%s1 + $0x159c] sm:$0xff]
  %v982 = vld [vmem:[%s1 + $0x15a4] sm:$0xf]
  %v983 = vld [vmem:[%s1 + $0x15a8] sm:$0xff]
  %v984 = vld [vmem:[%s1 + $0x15b0] sm:$0xf]
  %v985 = vld [vmem:[%s1 + $0x15b4] sm:$0xff]
  %v986 = vld [vmem:[%s1 + $0x15bc] sm:$0xf]
  %v987 = vld [vmem:[%s1 + $0x15c0] sm:$0xff]
  %v988 = vld [vmem:[%s1 + $0x15c8] sm:$0xf]
  %v989 = vld [vmem:[%s1 + $0x15cc] sm:$0xff]
  %v990 = vld [vmem:[%s1 + $0x15d4] sm:$0xf]
  %v991 = vld [vmem:[%s1 + $0x15d8] sm:$0xff]
  %v992 = vld [vmem:[%s1 + $0x15e0] sm:$0xf]
  %v993 = vld [vmem:[%s1 + $0x15e4] sm:$0xff]
  %v994 = vld [vmem:[%s1 + $0x15ec] sm:$0xf]
  %v995 = vld [vmem:[%s1 + $0x15f0] sm:$0xff]
  %v996 = vld [vmem:[%s1 + $0x15f8] sm:$0xf]
  %v997 = vld [vmem:[%s1 + $0x15fc] sm:$0xff]
  %v998 = vld [vmem:[%s1 + $0x1604] sm:$0xf]
  %v999 = vld [vmem:[%s1 + $0x1608] sm:$0xff]
  %v1000 = vld [vmem:[%s1 + $0x1610] sm:$0xf]
  %v1001 = vld [vmem:[%s1 + $0x1614] sm:$0xff]
  %v1002 = vld [vmem:[%s1 + $0x161c] sm:$0xf]
  %v1003 = vld [vmem:[%s1 + $0x1620] sm:$0xff]
  %v1004 = vld [vmem:[%s1 + $0x1628] sm:$0xf]
  %v1005 = vld [vmem:[%s1 + $0x162c] sm:$0xff]
  %v1006 = vld [vmem:[%s1 + $0x1634] sm:$0xf]
  %v1007 = vld [vmem:[%s1 + $0x1638] sm:$0xff]
  %v1008 = vld [vmem:[%s1 + $0x1640] sm:$0xf]
  %v1009 = vld [vmem:[%s1 + $0x1644] sm:$0xff]
  %v1010 = vld [vmem:[%s1 + $0x164c] sm:$0xf]
  %v1011 = vld [vmem:[%s1 + $0x1650] sm:$0xff]
  %v1012 = vld [vmem:[%s1 + $0x1658] sm:$0xf]
  %v1013 = vld [vmem:[%s1 + $0x165c] sm:$0xff]
  %v1014 = vld [vmem:[%s1 + $0x1664] sm:$0xf]
  %v1015 = vld [vmem:[%s1 + $0x1668] sm:$0xff]
  %v1016 = vld [vmem:[%s1 + $0x1670] sm:$0xf]
  %v1017 = vld [vmem:[%s1 + $0x1674] sm:$0xff]
  %v1018 = vld [vmem:[%s1 + $0x167c] sm:$0xf]
  %v1019 = vld [vmem:[%s1 + $0x1680] sm:$0xff]
  %v1020 = vld [vmem:[%s1 + $0x1688] sm:$0xf]
  %v1021 = vld [vmem:[%s1 + $0x168c] sm:$0xff]
  %v1022 = vld [vmem:[%s1 + $0x1694] sm:$0xf]
  %v1023 = vld [vmem:[%s1 + $0x1698] sm:$0xff]
  %v1024 = vld [vmem:[%s1 + $0x16a0] sm:$0xf]
  %v1025 = vld [vmem:[%s1 + $0x16a4] sm:$0xff]
  %v1026 = vld [vmem:[%s1 + $0x16ac] sm:$0xf]
  %v1027 = vld [vmem:[%s1 + $0x16b0] sm:$0xff]
  %v1028 = vld [vmem:[%s1 + $0x16b8] sm:$0xf]
  %v1029 = vld [vmem:[%s1 + $0x16bc] sm:$0xff]
  %v1030 = vld [vmem:[%s1 + $0x16c4] sm:$0xf]
  %v1031 = vld [vmem:[%s1 + $0x16c8] sm:$0xff]
  %v1032 = vld [vmem:[%s1 + $0x16d0] sm:$0xf]
  %v1033 = vld [vmem:[%s1 + $0x16d4] sm:$0xff]
  %v1034 = vld [vmem:[%s1 + $0x16dc] sm:$0xf]
  %v1035 = vld [vmem:[%s1 + $0x16e0] sm:$0xff]
  %v1036 = vld [vmem:[%s1 + $0x16e8] sm:$0xf]
  %v1037 = vld [vmem:[%s1 + $0x16ec] sm:$0xff]
  %v1038 = vld [vmem:[%s1 + $0x16f4] sm:$0xf]
  %v1039 = vld [vmem:[%s1 + $0x16f8] sm:$0xff]
  %v1040 = vld [vmem:[%s1 + $0x1700] sm:$0xf]
  %v1041 = vld [vmem:[%s1 + $0x1704] sm:$0xff]
  %v1042 = vld [vmem:[%s1 + $0x170c] sm:$0xf]
  %v1043 = vld [vmem:[%s1 + $0x1710] sm:$0xff]
  %v1044 = vld [vmem:[%s1 + $0x1718] sm:$0xf]
  %v1045 = vld [vmem:[%s1 + $0x171c] sm:$0xff]
  %v1046 = vld [vmem:[%s1 + $0x1724] sm:$0xf]
  %v1047 = vld [vmem:[%s1 + $0x1728] sm:$0xff]
  %v1048 = vld [vmem:[%s1 + $0x1730] sm:$0xf]
  %v1049 = vld [vmem:[%s1 + $0x1734] sm:$0xff]
  %v1050 = vld [vmem:[%s1 + $0x173c] sm:$0xf]
  %v1051 = vld [vmem:[%s1 + $0x1740] sm:$0xff]
  %v1052 = vld [vmem:[%s1 + $0x1748] sm:$0xf]
  %v1053 = vld [vmem:[%s1 + $0x174c] sm:$0xff]
  %v1054 = vld [vmem:[%s1 + $0x1754] sm:$0xf]
  %v1055 = vld [vmem:[%s1 + $0x1758] sm:$0xff]
  %v1056 = vld [vmem:[%s1 + $0x1760] sm:$0xf]
  %v1057 = vld [vmem:[%s1 + $0x1764] sm:$0xff]
  %v1058 = vld [vmem:[%s1 + $0x176c] sm:$0xf]
  %v1059 = vld [vmem:[%s1 + $0x1770] sm:$0xff]
  %v1060 = vld [vmem:[%s1 + $0x1778] sm:$0xf]
  %v1061 = vld [vmem:[%s1 + $0x177c] sm:$0xff]
  %v1062 = vld [vmem:[%s1 + $0x1784] sm:$0xf]
  %v1063 = vld [vmem:[%s1 + $0x1788] sm:$0xff]
  %v1064 = vld [vmem:[%s1 + $0x1790] sm:$0xf]
  %v1065 = vld [vmem:[%s1 + $0x1794] sm:$0xff]
  %v1066 = vld [vmem:[%s1 + $0x179c] sm:$0xf]
  %v1067 = vld [vmem:[%s1 + $0x17a0] sm:$0xff]
  %v1068 = vld [vmem:[%s1 + $0x17a8] sm:$0xf]
  %v1069 = vld [vmem:[%s1 + $0x17ac] sm:$0xff]
  %v1070 = vld [vmem:[%s1 + $0x17b4] sm:$0xf]
  %v1071 = vld [vmem:[%s1 + $0x17b8] sm:$0xff]
  %v1072 = vld [vmem:[%s1 + $0x17c0] sm:$0xf]
  %v1073 = vld [vmem:[%s1 + $0x17c4] sm:$0xff]
  %v1074 = vld [vmem:[%s1 + $0x17cc] sm:$0xf]
  %v1075 = vld [vmem:[%s1 + $0x17d0] sm:$0xff]
  %v1076 = vld [vmem:[%s1 + $0x17d8] sm:$0xf]
  %v1077 = vld [vmem:[%s1 + $0x17dc] sm:$0xff]
  %v1078 = vld [vmem:[%s1 + $0x17e4] sm:$0xf]
  %v1079 = vld [vmem:[%s1 + $0x17e8] sm:$0xff]
  %v1080 = vld [vmem:[%s1 + $0x17f0] sm:$0xf]
  %v1081 = vld [vmem:[%s1 + $0x17f4] sm:$0xff]
  %v1082 = vld [vmem:[%s1 + $0x17fc] sm:$0xf]
  %v1083 = vld [vmem:[%s2] sm:$0x7]
  %v1085 = vlaneseq
  %v1086 = vshrl.u32 %v1085, 7
  %v1087 = vsub.s32 0, %v1086
  %v1088 = vrot.slane %v1083, %v1087
  %v1089 = vlaneseq
  %v1090 = vshrl.u32 %v1089, 7
  %v1091 = vsub.s32 1, %v1090
  %v1092 = vrot.slane %v1083, %v1091
  %v1093 = vlaneseq
  %v1094 = vshrl.u32 %v1093, 7
  %v1095 = vsub.s32 2, %v1094
  %v1096 = vrot.slane %v1083, %v1095
  %v1132 = vunpack.c.l.b16 %v27
  %v1133 = vunpack.c.h.b16 %v27
  %v1134 = vunpack.c.l.b16 %v28
  %v1135 = vunpack.c.h.b16 %v28
  %v1136 = vunpack.c.l.b16 %v29
  %v1137 = vunpack.c.h.b16 %v29
  %v1138 = vunpack.c.l.b16 %v30
  %v1139 = vunpack.c.h.b16 %v30
  %v1140 = vunpack.c.l.b16 %v31
  %v1141 = vunpack.c.h.b16 %v31
  %v1142 = vunpack.c.l.b16 %v32
  %v1143 = vunpack.c.h.b16 %v32
  %v1144 = vunpack.c.l.b16 %v33
  %v1145 = vunpack.c.h.b16 %v33
  %v1146 = vunpack.c.l.b16 %v34
  %v1147 = vunpack.c.h.b16 %v34
  %v1148 = vunpack.c.l.b16 %v35
  %v1149 = vunpack.c.h.b16 %v35
  %v1150 = vunpack.c.l.b16 %v36
  %v1151 = vunpack.c.h.b16 %v36
  %v1152 = vunpack.c.l.b16 %v37
  %v1153 = vunpack.c.h.b16 %v37
  %v1154 = vunpack.c.l.b16 %v38
  %v1155 = vunpack.c.h.b16 %v38
  %v1156 = vunpack.c.l.b16 %v39
  %v1157 = vunpack.c.h.b16 %v39
  %v1158 = vunpack.c.l.b16 %v40
  %v1159 = vunpack.c.h.b16 %v40
  %v1160 = vunpack.c.l.b16 %v41
  %v1161 = vunpack.c.h.b16 %v41
  %v1162 = vunpack.c.l.b16 %v42
  %v1163 = vunpack.c.h.b16 %v42
  %v1164 = vunpack.c.l.b16 %v43
  %v1165 = vunpack.c.h.b16 %v43
  %v1166 = vunpack.c.l.b16 %v44
  %v1167 = vunpack.c.h.b16 %v44
  %v1168 = vunpack.c.l.b16 %v45
  %v1169 = vunpack.c.h.b16 %v45
  %v1170 = vunpack.c.l.b16 %v46
  %v1171 = vunpack.c.h.b16 %v46
  %v1172 = vunpack.c.l.b16 %v47
  %v1173 = vunpack.c.h.b16 %v47
  %v1174 = vunpack.c.l.b16 %v48
  %v1175 = vunpack.c.h.b16 %v48
  %v1176 = vunpack.c.l.b16 %v49
  %v1177 = vunpack.c.h.b16 %v49
  %v1178 = vunpack.c.l.b16 %v50
  %v1179 = vunpack.c.h.b16 %v50
  %v1180 = vunpack.c.l.b16 %v51
  %v1181 = vunpack.c.h.b16 %v51
  %v1182 = vunpack.c.l.b16 %v52
  %v1183 = vunpack.c.h.b16 %v52
  %v1184 = vunpack.c.l.b16 %v53
  %v1185 = vunpack.c.h.b16 %v53
  %v1186 = vunpack.c.l.b16 %v54
  %v1187 = vunpack.c.h.b16 %v54
  %v1188 = vunpack.c.l.b16 %v55
  %v1189 = vunpack.c.h.b16 %v55
  %v1190 = vunpack.c.l.b16 %v56
  %v1191 = vunpack.c.h.b16 %v56
  %v1192 = vunpack.c.l.b16 %v57
  %v1193 = vunpack.c.h.b16 %v57
  %v1194 = vunpack.c.l.b16 %v58
  %v1195 = vunpack.c.h.b16 %v58
  %v1196 = vpack.c.b16 %v1164, %v1132
  %v1197 = vpack.c.b16 %v1165, %v1133
  %v1198 = vpack.c.b16 %v1166, %v1134
  %v1199 = vpack.c.b16 %v1167, %v1135
  %v1200 = vpack.c.b16 %v1168, %v1136
  %v1201 = vpack.c.b16 %v1169, %v1137
  %v1202 = vpack.c.b16 %v1170, %v1138
  %v1203 = vpack.c.b16 %v1171, %v1139
  %v1204 = vpack.c.b16 %v1172, %v1140
  %v1205 = vpack.c.b16 %v1173, %v1141
  %v1206 = vpack.c.b16 %v1174, %v1142
  %v1207 = vpack.c.b16 %v1175, %v1143
  %v1208 = vpack.c.b16 %v1176, %v1144
  %v1209 = vpack.c.b16 %v1177, %v1145
  %v1210 = vpack.c.b16 %v1178, %v1146
  %v1211 = vpack.c.b16 %v1179, %v1147
  %v1212 = vpack.c.b16 %v1180, %v1148
  %v1213 = vpack.c.b16 %v1181, %v1149
  %v1214 = vpack.c.b16 %v1182, %v1150
  %v1215 = vpack.c.b16 %v1183, %v1151
  %v1216 = vpack.c.b16 %v1184, %v1152
  %v1217 = vpack.c.b16 %v1185, %v1153
  %v1218 = vpack.c.b16 %v1186, %v1154
  %v1219 = vpack.c.b16 %v1187, %v1155
  %v1220 = vpack.c.b16 %v1188, %v1156
  %v1221 = vpack.c.b16 %v1189, %v1157
  %v1222 = vpack.c.b16 %v1190, %v1158
  %v1223 = vpack.c.b16 %v1191, %v1159
  %v1224 = vpack.c.b16 %v1192, %v1160
  %v1225 = vpack.c.b16 %v1193, %v1161
  %v1226 = vpack.c.b16 %v1194, %v1162
  %v1227 = vpack.c.b16 %v1195, %v1163
  %v2284 = vunpack.c.l.b16 %v59
  %v2285 = vunpack.c.h.b16 %v59
  %v2286 = vunpack.c.l.b16 %v60
  %v2287 = vunpack.c.l.b16 %v61
  %v2288 = vunpack.c.h.b16 %v61
  %v2289 = vunpack.c.l.b16 %v62
  %v2290 = vunpack.c.l.b16 %v63
  %v2291 = vunpack.c.h.b16 %v63
  %v2292 = vunpack.c.l.b16 %v64
  %v2293 = vunpack.c.l.b16 %v65
  %v2294 = vunpack.c.h.b16 %v65
  %v2295 = vunpack.c.l.b16 %v66
  %v2296 = vunpack.c.l.b16 %v67
  %v2297 = vunpack.c.h.b16 %v67
  %v2298 = vunpack.c.l.b16 %v68
  %v2299 = vunpack.c.l.b16 %v69
  %v2300 = vunpack.c.h.b16 %v69
  %v2301 = vunpack.c.l.b16 %v70
  %v2302 = vunpack.c.l.b16 %v71
  %v2303 = vunpack.c.h.b16 %v71
  %v2304 = vunpack.c.l.b16 %v72
  %v2305 = vunpack.c.l.b16 %v73
  %v2306 = vunpack.c.h.b16 %v73
  %v2307 = vunpack.c.l.b16 %v74
  %v2308 = vunpack.c.l.b16 %v75
  %v2309 = vunpack.c.h.b16 %v75
  %v2310 = vunpack.c.l.b16 %v76
  %v2311 = vunpack.c.l.b16 %v77
  %v2312 = vunpack.c.h.b16 %v77
  %v2313 = vunpack.c.l.b16 %v78
  %v2314 = vunpack.c.l.b16 %v79
  %v2315 = vunpack.c.h.b16 %v79
  %v2316 = vunpack.c.l.b16 %v80
  %v2317 = vunpack.c.l.b16 %v81
  %v2318 = vunpack.c.h.b16 %v81
  %v2319 = vunpack.c.l.b16 %v82
  %v2320 = vunpack.c.l.b16 %v83
  %v2321 = vunpack.c.h.b16 %v83
  %v2322 = vunpack.c.l.b16 %v84
  %v2323 = vunpack.c.l.b16 %v85
  %v2324 = vunpack.c.h.b16 %v85
  %v2325 = vunpack.c.l.b16 %v86
  %v2326 = vunpack.c.l.b16 %v87
  %v2327 = vunpack.c.h.b16 %v87
  %v2328 = vunpack.c.l.b16 %v88
  %v2329 = vunpack.c.l.b16 %v89
  %v2330 = vunpack.c.h.b16 %v89
  %v2331 = vunpack.c.l.b16 %v90
  %v2332 = vunpack.c.l.b16 %v91
  %v2333 = vunpack.c.h.b16 %v91
  %v2334 = vunpack.c.l.b16 %v92
  %v2335 = vunpack.c.l.b16 %v93
  %v2336 = vunpack.c.h.b16 %v93
  %v2337 = vunpack.c.l.b16 %v94
  %v2338 = vunpack.c.l.b16 %v95
  %v2339 = vunpack.c.h.b16 %v95
  %v2340 = vunpack.c.l.b16 %v96
  %v2341 = vunpack.c.l.b16 %v97
  %v2342 = vunpack.c.h.b16 %v97
  %v2343 = vunpack.c.l.b16 %v98
  %v2344 = vunpack.c.l.b16 %v99
  %v2345 = vunpack.c.h.b16 %v99
  %v2346 = vunpack.c.l.b16 %v100
  %v2347 = vunpack.c.l.b16 %v101
  %v2348 = vunpack.c.h.b16 %v101
  %v2349 = vunpack.c.l.b16 %v102
  %v2350 = vunpack.c.l.b16 %v103
  %v2351 = vunpack.c.h.b16 %v103
  %v2352 = vunpack.c.l.b16 %v104
  %v2353 = vunpack.c.l.b16 %v105
  %v2354 = vunpack.c.h.b16 %v105
  %v2355 = vunpack.c.l.b16 %v106
  %v2356 = vunpack.c.l.b16 %v107
  %v2357 = vunpack.c.h.b16 %v107
  %v2358 = vunpack.c.l.b16 %v108
  %v2359 = vunpack.c.l.b16 %v109
  %v2360 = vunpack.c.h.b16 %v109
  %v2361 = vunpack.c.l.b16 %v110
  %v2362 = vunpack.c.l.b16 %v111
  %v2363 = vunpack.c.h.b16 %v111
  %v2364 = vunpack.c.l.b16 %v112
  %v2365 = vunpack.c.l.b16 %v113
  %v2366 = vunpack.c.h.b16 %v113
  %v2367 = vunpack.c.l.b16 %v114
  %v2368 = vunpack.c.l.b16 %v115
  %v2369 = vunpack.c.h.b16 %v115
  %v2370 = vunpack.c.l.b16 %v116
  %v2371 = vunpack.c.l.b16 %v117
  %v2372 = vunpack.c.h.b16 %v117
  %v2373 = vunpack.c.l.b16 %v118
  %v2374 = vunpack.c.l.b16 %v119
  %v2375 = vunpack.c.h.b16 %v119
  %v2376 = vunpack.c.l.b16 %v120
  %v2377 = vunpack.c.l.b16 %v121
  %v2378 = vunpack.c.h.b16 %v121
  %v2379 = vunpack.c.l.b16 %v122
  %v2380 = vunpack.c.l.b16 %v123
  %v2381 = vunpack.c.h.b16 %v123
  %v2382 = vunpack.c.l.b16 %v124
  %v2383 = vunpack.c.l.b16 %v125
  %v2384 = vunpack.c.h.b16 %v125
  %v2385 = vunpack.c.l.b16 %v126
  %v2386 = vunpack.c.l.b16 %v127
  %v2387 = vunpack.c.h.b16 %v127
  %v2388 = vunpack.c.l.b16 %v128
  %v2389 = vunpack.c.l.b16 %v129
  %v2390 = vunpack.c.h.b16 %v129
  %v2391 = vunpack.c.l.b16 %v130
  %v2392 = vunpack.c.l.b16 %v131
  %v2393 = vunpack.c.h.b16 %v131
  %v2394 = vunpack.c.l.b16 %v132
  %v2395 = vunpack.c.l.b16 %v133
  %v2396 = vunpack.c.h.b16 %v133
  %v2397 = vunpack.c.l.b16 %v134
  %v2398 = vunpack.c.l.b16 %v135
  %v2399 = vunpack.c.h.b16 %v135
  %v2400 = vunpack.c.l.b16 %v136
  %v2401 = vunpack.c.l.b16 %v137
  %v2402 = vunpack.c.h.b16 %v137
  %v2403 = vunpack.c.l.b16 %v138
  %v2404 = vunpack.c.l.b16 %v139
  %v2405 = vunpack.c.h.b16 %v139
  %v2406 = vunpack.c.l.b16 %v140
  %v2407 = vunpack.c.l.b16 %v141
  %v2408 = vunpack.c.h.b16 %v141
  %v2409 = vunpack.c.l.b16 %v142
  %v2410 = vunpack.c.l.b16 %v143
  %v2411 = vunpack.c.h.b16 %v143
  %v2412 = vunpack.c.l.b16 %v144
  %v2413 = vunpack.c.l.b16 %v145
  %v2414 = vunpack.c.h.b16 %v145
  %v2415 = vunpack.c.l.b16 %v146
  %v2416 = vunpack.c.l.b16 %v147
  %v2417 = vunpack.c.h.b16 %v147
  %v2418 = vunpack.c.l.b16 %v148
  %v2419 = vunpack.c.l.b16 %v149
  %v2420 = vunpack.c.h.b16 %v149
  %v2421 = vunpack.c.l.b16 %v150
  %v2422 = vunpack.c.l.b16 %v151
  %v2423 = vunpack.c.h.b16 %v151
  %v2424 = vunpack.c.l.b16 %v152
  %v2425 = vunpack.c.l.b16 %v153
  %v2426 = vunpack.c.h.b16 %v153
  %v2427 = vunpack.c.l.b16 %v154
  %v2428 = vunpack.c.l.b16 %v155
  %v2429 = vunpack.c.h.b16 %v155
  %v2430 = vunpack.c.l.b16 %v156
  %v2431 = vunpack.c.l.b16 %v157
  %v2432 = vunpack.c.h.b16 %v157
  %v2433 = vunpack.c.l.b16 %v158
  %v2434 = vunpack.c.l.b16 %v159
  %v2435 = vunpack.c.h.b16 %v159
  %v2436 = vunpack.c.l.b16 %v160
  %v2437 = vunpack.c.l.b16 %v161
  %v2438 = vunpack.c.h.b16 %v161
  %v2439 = vunpack.c.l.b16 %v162
  %v2440 = vunpack.c.l.b16 %v163
  %v2441 = vunpack.c.h.b16 %v163
  %v2442 = vunpack.c.l.b16 %v164
  %v2443 = vunpack.c.l.b16 %v165
  %v2444 = vunpack.c.h.b16 %v165
  %v2445 = vunpack.c.l.b16 %v166
  %v2446 = vunpack.c.l.b16 %v167
  %v2447 = vunpack.c.h.b16 %v167
  %v2448 = vunpack.c.l.b16 %v168
  %v2449 = vunpack.c.l.b16 %v169
  %v2450 = vunpack.c.h.b16 %v169
  %v2451 = vunpack.c.l.b16 %v170
  %v2452 = vunpack.c.l.b16 %v171
  %v2453 = vunpack.c.h.b16 %v171
  %v2454 = vunpack.c.l.b16 %v172
  %v2455 = vunpack.c.l.b16 %v173
  %v2456 = vunpack.c.h.b16 %v173
  %v2457 = vunpack.c.l.b16 %v174
  %v2458 = vunpack.c.l.b16 %v175
  %v2459 = vunpack.c.h.b16 %v175
  %v2460 = vunpack.c.l.b16 %v176
  %v2461 = vunpack.c.l.b16 %v177
  %v2462 = vunpack.c.h.b16 %v177
  %v2463 = vunpack.c.l.b16 %v178
  %v2464 = vunpack.c.l.b16 %v179
  %v2465 = vunpack.c.h.b16 %v179
  %v2466 = vunpack.c.l.b16 %v180
  %v2467 = vunpack.c.l.b16 %v181
  %v2468 = vunpack.c.h.b16 %v181
  %v2469 = vunpack.c.l.b16 %v182
  %v2470 = vunpack.c.l.b16 %v183
  %v2471 = vunpack.c.h.b16 %v183
  %v2472 = vunpack.c.l.b16 %v184
  %v2473 = vunpack.c.l.b16 %v185
  %v2474 = vunpack.c.h.b16 %v185
  %v2475 = vunpack.c.l.b16 %v186
  %v2476 = vunpack.c.l.b16 %v187
  %v2477 = vunpack.c.h.b16 %v187
  %v2478 = vunpack.c.l.b16 %v188
  %v2479 = vunpack.c.l.b16 %v189
  %v2480 = vunpack.c.h.b16 %v189
  %v2481 = vunpack.c.l.b16 %v190
  %v2482 = vunpack.c.l.b16 %v191
  %v2483 = vunpack.c.h.b16 %v191
  %v2484 = vunpack.c.l.b16 %v192
  %v2485 = vunpack.c.l.b16 %v193
  %v2486 = vunpack.c.h.b16 %v193
  %v2487 = vunpack.c.l.b16 %v194
  %v2488 = vunpack.c.l.b16 %v195
  %v2489 = vunpack.c.h.b16 %v195
  %v2490 = vunpack.c.l.b16 %v196
  %v2491 = vunpack.c.l.b16 %v197
  %v2492 = vunpack.c.h.b16 %v197
  %v2493 = vunpack.c.l.b16 %v198
  %v2494 = vunpack.c.l.b16 %v199
  %v2495 = vunpack.c.h.b16 %v199
  %v2496 = vunpack.c.l.b16 %v200
  %v2497 = vunpack.c.l.b16 %v201
  %v2498 = vunpack.c.h.b16 %v201
  %v2499 = vunpack.c.l.b16 %v202
  %v2500 = vunpack.c.l.b16 %v203
  %v2501 = vunpack.c.h.b16 %v203
  %v2502 = vunpack.c.l.b16 %v204
  %v2503 = vunpack.c.l.b16 %v205
  %v2504 = vunpack.c.h.b16 %v205
  %v2505 = vunpack.c.l.b16 %v206
  %v2506 = vunpack.c.l.b16 %v207
  %v2507 = vunpack.c.h.b16 %v207
  %v2508 = vunpack.c.l.b16 %v208
  %v2509 = vunpack.c.l.b16 %v209
  %v2510 = vunpack.c.h.b16 %v209
  %v2511 = vunpack.c.l.b16 %v210
  %v2512 = vunpack.c.l.b16 %v211
  %v2513 = vunpack.c.h.b16 %v211
  %v2514 = vunpack.c.l.b16 %v212
  %v2515 = vunpack.c.l.b16 %v213
  %v2516 = vunpack.c.h.b16 %v213
  %v2517 = vunpack.c.l.b16 %v214
  %v2518 = vunpack.c.l.b16 %v215
  %v2519 = vunpack.c.h.b16 %v215
  %v2520 = vunpack.c.l.b16 %v216
  %v2521 = vunpack.c.l.b16 %v217
  %v2522 = vunpack.c.h.b16 %v217
  %v2523 = vunpack.c.l.b16 %v218
  %v2524 = vunpack.c.l.b16 %v219
  %v2525 = vunpack.c.h.b16 %v219
  %v2526 = vunpack.c.l.b16 %v220
  %v2527 = vunpack.c.l.b16 %v221
  %v2528 = vunpack.c.h.b16 %v221
  %v2529 = vunpack.c.l.b16 %v222
  %v2530 = vunpack.c.l.b16 %v223
  %v2531 = vunpack.c.h.b16 %v223
  %v2532 = vunpack.c.l.b16 %v224
  %v2533 = vunpack.c.l.b16 %v225
  %v2534 = vunpack.c.h.b16 %v225
  %v2535 = vunpack.c.l.b16 %v226
  %v2536 = vunpack.c.l.b16 %v227
  %v2537 = vunpack.c.h.b16 %v227
  %v2538 = vunpack.c.l.b16 %v228
  %v2539 = vunpack.c.l.b16 %v229
  %v2540 = vunpack.c.h.b16 %v229
  %v2541 = vunpack.c.l.b16 %v230
  %v2542 = vunpack.c.l.b16 %v231
  %v2543 = vunpack.c.h.b16 %v231
  %v2544 = vunpack.c.l.b16 %v232
  %v2545 = vunpack.c.l.b16 %v233
  %v2546 = vunpack.c.h.b16 %v233
  %v2547 = vunpack.c.l.b16 %v234
  %v2548 = vunpack.c.l.b16 %v235
  %v2549 = vunpack.c.h.b16 %v235
  %v2550 = vunpack.c.l.b16 %v236
  %v2551 = vunpack.c.l.b16 %v237
  %v2552 = vunpack.c.h.b16 %v237
  %v2553 = vunpack.c.l.b16 %v238
  %v2554 = vunpack.c.l.b16 %v239
  %v2555 = vunpack.c.h.b16 %v239
  %v2556 = vunpack.c.l.b16 %v240
  %v2557 = vunpack.c.l.b16 %v241
  %v2558 = vunpack.c.h.b16 %v241
  %v2559 = vunpack.c.l.b16 %v242
  %v2560 = vunpack.c.l.b16 %v243
  %v2561 = vunpack.c.h.b16 %v243
  %v2562 = vunpack.c.l.b16 %v244
  %v2563 = vunpack.c.l.b16 %v245
  %v2564 = vunpack.c.h.b16 %v245
  %v2565 = vunpack.c.l.b16 %v246
  %v2566 = vunpack.c.l.b16 %v247
  %v2567 = vunpack.c.h.b16 %v247
  %v2568 = vunpack.c.l.b16 %v248
  %v2569 = vunpack.c.l.b16 %v249
  %v2570 = vunpack.c.h.b16 %v249
  %v2571 = vunpack.c.l.b16 %v250
  %v2572 = vunpack.c.l.b16 %v251
  %v2573 = vunpack.c.h.b16 %v251
  %v2574 = vunpack.c.l.b16 %v252
  %v2575 = vunpack.c.l.b16 %v253
  %v2576 = vunpack.c.h.b16 %v253
  %v2577 = vunpack.c.l.b16 %v254
  %v2578 = vunpack.c.l.b16 %v255
  %v2579 = vunpack.c.h.b16 %v255
  %v2580 = vunpack.c.l.b16 %v256
  %v2581 = vunpack.c.l.b16 %v257
  %v2582 = vunpack.c.h.b16 %v257
  %v2583 = vunpack.c.l.b16 %v258
  %v2584 = vunpack.c.l.b16 %v259
  %v2585 = vunpack.c.h.b16 %v259
  %v2586 = vunpack.c.l.b16 %v260
  %v2587 = vunpack.c.l.b16 %v261
  %v2588 = vunpack.c.h.b16 %v261
  %v2589 = vunpack.c.l.b16 %v262
  %v2590 = vunpack.c.l.b16 %v263
  %v2591 = vunpack.c.h.b16 %v263
  %v2592 = vunpack.c.l.b16 %v264
  %v2593 = vunpack.c.l.b16 %v265
  %v2594 = vunpack.c.h.b16 %v265
  %v2595 = vunpack.c.l.b16 %v266
  %v2596 = vunpack.c.l.b16 %v267
  %v2597 = vunpack.c.h.b16 %v267
  %v2598 = vunpack.c.l.b16 %v268
  %v2599 = vunpack.c.l.b16 %v269
  %v2600 = vunpack.c.h.b16 %v269
  %v2601 = vunpack.c.l.b16 %v270
  %v2602 = vunpack.c.l.b16 %v271
  %v2603 = vunpack.c.h.b16 %v271
  %v2604 = vunpack.c.l.b16 %v272
  %v2605 = vunpack.c.l.b16 %v273
  %v2606 = vunpack.c.h.b16 %v273
  %v2607 = vunpack.c.l.b16 %v274
  %v2608 = vunpack.c.l.b16 %v275
  %v2609 = vunpack.c.h.b16 %v275
  %v2610 = vunpack.c.l.b16 %v276
  %v2611 = vunpack.c.l.b16 %v277
  %v2612 = vunpack.c.h.b16 %v277
  %v2613 = vunpack.c.l.b16 %v278
  %v2614 = vunpack.c.l.b16 %v279
  %v2615 = vunpack.c.h.b16 %v279
  %v2616 = vunpack.c.l.b16 %v280
  %v2617 = vunpack.c.l.b16 %v281
  %v2618 = vunpack.c.h.b16 %v281
  %v2619 = vunpack.c.l.b16 %v282
  %v2620 = vunpack.c.l.b16 %v283
  %v2621 = vunpack.c.h.b16 %v283
  %v2622 = vunpack.c.l.b16 %v284
  %v2623 = vunpack.c.l.b16 %v285
  %v2624 = vunpack.c.h.b16 %v285
  %v2625 = vunpack.c.l.b16 %v286
  %v2626 = vunpack.c.l.b16 %v287
  %v2627 = vunpack.c.h.b16 %v287
  %v2628 = vunpack.c.l.b16 %v288
  %v2629 = vunpack.c.l.b16 %v289
  %v2630 = vunpack.c.h.b16 %v289
  %v2631 = vunpack.c.l.b16 %v290
  %v2632 = vunpack.c.l.b16 %v291
  %v2633 = vunpack.c.h.b16 %v291
  %v2634 = vunpack.c.l.b16 %v292
  %v2635 = vunpack.c.l.b16 %v293
  %v2636 = vunpack.c.h.b16 %v293
  %v2637 = vunpack.c.l.b16 %v294
  %v2638 = vunpack.c.l.b16 %v295
  %v2639 = vunpack.c.h.b16 %v295
  %v2640 = vunpack.c.l.b16 %v296
  %v2641 = vunpack.c.l.b16 %v297
  %v2642 = vunpack.c.h.b16 %v297
  %v2643 = vunpack.c.l.b16 %v298
  %v2644 = vunpack.c.l.b16 %v299
  %v2645 = vunpack.c.h.b16 %v299
  %v2646 = vunpack.c.l.b16 %v300
  %v2647 = vunpack.c.l.b16 %v301
  %v2648 = vunpack.c.h.b16 %v301
  %v2649 = vunpack.c.l.b16 %v302
  %v2650 = vunpack.c.l.b16 %v303
  %v2651 = vunpack.c.h.b16 %v303
  %v2652 = vunpack.c.l.b16 %v304
  %v2653 = vunpack.c.l.b16 %v305
  %v2654 = vunpack.c.h.b16 %v305
  %v2655 = vunpack.c.l.b16 %v306
  %v2656 = vunpack.c.l.b16 %v307
  %v2657 = vunpack.c.h.b16 %v307
  %v2658 = vunpack.c.l.b16 %v308
  %v2659 = vunpack.c.l.b16 %v309
  %v2660 = vunpack.c.h.b16 %v309
  %v2661 = vunpack.c.l.b16 %v310
  %v2662 = vunpack.c.l.b16 %v311
  %v2663 = vunpack.c.h.b16 %v311
  %v2664 = vunpack.c.l.b16 %v312
  %v2665 = vunpack.c.l.b16 %v313
  %v2666 = vunpack.c.h.b16 %v313
  %v2667 = vunpack.c.l.b16 %v314
  %v2668 = vunpack.c.l.b16 %v315
  %v2669 = vunpack.c.h.b16 %v315
  %v2670 = vunpack.c.l.b16 %v316
  %v2671 = vunpack.c.l.b16 %v317
  %v2672 = vunpack.c.h.b16 %v317
  %v2673 = vunpack.c.l.b16 %v318
  %v2674 = vunpack.c.l.b16 %v319
  %v2675 = vunpack.c.h.b16 %v319
  %v2676 = vunpack.c.l.b16 %v320
  %v2677 = vunpack.c.l.b16 %v321
  %v2678 = vunpack.c.h.b16 %v321
  %v2679 = vunpack.c.l.b16 %v322
  %v2680 = vunpack.c.l.b16 %v323
  %v2681 = vunpack.c.h.b16 %v323
  %v2682 = vunpack.c.l.b16 %v324
  %v2683 = vunpack.c.l.b16 %v325
  %v2684 = vunpack.c.h.b16 %v325
  %v2685 = vunpack.c.l.b16 %v326
  %v2686 = vunpack.c.l.b16 %v327
  %v2687 = vunpack.c.h.b16 %v327
  %v2688 = vunpack.c.l.b16 %v328
  %v2689 = vunpack.c.l.b16 %v329
  %v2690 = vunpack.c.h.b16 %v329
  %v2691 = vunpack.c.l.b16 %v330
  %v2692 = vunpack.c.l.b16 %v331
  %v2693 = vunpack.c.h.b16 %v331
  %v2694 = vunpack.c.l.b16 %v332
  %v2695 = vunpack.c.l.b16 %v333
  %v2696 = vunpack.c.h.b16 %v333
  %v2697 = vunpack.c.l.b16 %v334
  %v2698 = vunpack.c.l.b16 %v335
  %v2699 = vunpack.c.h.b16 %v335
  %v2700 = vunpack.c.l.b16 %v336
  %v2701 = vunpack.c.l.b16 %v337
  %v2702 = vunpack.c.h.b16 %v337
  %v2703 = vunpack.c.l.b16 %v338
  %v2704 = vunpack.c.l.b16 %v339
  %v2705 = vunpack.c.h.b16 %v339
  %v2706 = vunpack.c.l.b16 %v340
  %v2707 = vunpack.c.l.b16 %v341
  %v2708 = vunpack.c.h.b16 %v341
  %v2709 = vunpack.c.l.b16 %v342
  %v2710 = vunpack.c.l.b16 %v343
  %v2711 = vunpack.c.h.b16 %v343
  %v2712 = vunpack.c.l.b16 %v344
  %v2713 = vunpack.c.l.b16 %v345
  %v2714 = vunpack.c.h.b16 %v345
  %v2715 = vunpack.c.l.b16 %v346
  %v2716 = vunpack.c.l.b16 %v347
  %v2717 = vunpack.c.h.b16 %v347
  %v2718 = vunpack.c.l.b16 %v348
  %v2719 = vunpack.c.l.b16 %v349
  %v2720 = vunpack.c.h.b16 %v349
  %v2721 = vunpack.c.l.b16 %v350
  %v2722 = vunpack.c.l.b16 %v351
  %v2723 = vunpack.c.h.b16 %v351
  %v2724 = vunpack.c.l.b16 %v352
  %v2725 = vunpack.c.l.b16 %v353
  %v2726 = vunpack.c.h.b16 %v353
  %v2727 = vunpack.c.l.b16 %v354
  %v2728 = vunpack.c.l.b16 %v355
  %v2729 = vunpack.c.h.b16 %v355
  %v2730 = vunpack.c.l.b16 %v356
  %v2731 = vunpack.c.l.b16 %v357
  %v2732 = vunpack.c.h.b16 %v357
  %v2733 = vunpack.c.l.b16 %v358
  %v2734 = vunpack.c.l.b16 %v359
  %v2735 = vunpack.c.h.b16 %v359
  %v2736 = vunpack.c.l.b16 %v360
  %v2737 = vunpack.c.l.b16 %v361
  %v2738 = vunpack.c.h.b16 %v361
  %v2739 = vunpack.c.l.b16 %v362
  %v2740 = vunpack.c.l.b16 %v363
  %v2741 = vunpack.c.h.b16 %v363
  %v2742 = vunpack.c.l.b16 %v364
  %v2743 = vunpack.c.l.b16 %v365
  %v2744 = vunpack.c.h.b16 %v365
  %v2745 = vunpack.c.l.b16 %v366
  %v2746 = vunpack.c.l.b16 %v367
  %v2747 = vunpack.c.h.b16 %v367
  %v2748 = vunpack.c.l.b16 %v368
  %v2749 = vunpack.c.l.b16 %v369
  %v2750 = vunpack.c.h.b16 %v369
  %v2751 = vunpack.c.l.b16 %v370
  %v2752 = vunpack.c.l.b16 %v371
  %v2753 = vunpack.c.h.b16 %v371
  %v2754 = vunpack.c.l.b16 %v372
  %v2755 = vunpack.c.l.b16 %v373
  %v2756 = vunpack.c.h.b16 %v373
  %v2757 = vunpack.c.l.b16 %v374
  %v2758 = vunpack.c.l.b16 %v375
  %v2759 = vunpack.c.h.b16 %v375
  %v2760 = vunpack.c.l.b16 %v376
  %v2761 = vunpack.c.l.b16 %v377
  %v2762 = vunpack.c.h.b16 %v377
  %v2763 = vunpack.c.l.b16 %v378
  %v2764 = vunpack.c.l.b16 %v379
  %v2765 = vunpack.c.h.b16 %v379
  %v2766 = vunpack.c.l.b16 %v380
  %v2767 = vunpack.c.l.b16 %v381
  %v2768 = vunpack.c.h.b16 %v381
  %v2769 = vunpack.c.l.b16 %v382
  %v2770 = vunpack.c.l.b16 %v383
  %v2771 = vunpack.c.h.b16 %v383
  %v2772 = vunpack.c.l.b16 %v384
  %v2773 = vunpack.c.l.b16 %v385
  %v2774 = vunpack.c.h.b16 %v385
  %v2775 = vunpack.c.l.b16 %v386
  %v2776 = vunpack.c.l.b16 %v387
  %v2777 = vunpack.c.h.b16 %v387
  %v2778 = vunpack.c.l.b16 %v388
  %v2779 = vunpack.c.l.b16 %v389
  %v2780 = vunpack.c.h.b16 %v389
  %v2781 = vunpack.c.l.b16 %v390
  %v2782 = vunpack.c.l.b16 %v391
  %v2783 = vunpack.c.h.b16 %v391
  %v2784 = vunpack.c.l.b16 %v392
  %v2785 = vunpack.c.l.b16 %v393
  %v2786 = vunpack.c.h.b16 %v393
  %v2787 = vunpack.c.l.b16 %v394
  %v2788 = vunpack.c.l.b16 %v395
  %v2789 = vunpack.c.h.b16 %v395
  %v2790 = vunpack.c.l.b16 %v396
  %v2791 = vunpack.c.l.b16 %v397
  %v2792 = vunpack.c.h.b16 %v397
  %v2793 = vunpack.c.l.b16 %v398
  %v2794 = vunpack.c.l.b16 %v399
  %v2795 = vunpack.c.h.b16 %v399
  %v2796 = vunpack.c.l.b16 %v400
  %v2797 = vunpack.c.l.b16 %v401
  %v2798 = vunpack.c.h.b16 %v401
  %v2799 = vunpack.c.l.b16 %v402
  %v2800 = vunpack.c.l.b16 %v403
  %v2801 = vunpack.c.h.b16 %v403
  %v2802 = vunpack.c.l.b16 %v404
  %v2803 = vunpack.c.l.b16 %v405
  %v2804 = vunpack.c.h.b16 %v405
  %v2805 = vunpack.c.l.b16 %v406
  %v2806 = vunpack.c.l.b16 %v407
  %v2807 = vunpack.c.h.b16 %v407
  %v2808 = vunpack.c.l.b16 %v408
  %v2809 = vunpack.c.l.b16 %v409
  %v2810 = vunpack.c.h.b16 %v409
  %v2811 = vunpack.c.l.b16 %v410
  %v2812 = vunpack.c.l.b16 %v411
  %v2813 = vunpack.c.h.b16 %v411
  %v2814 = vunpack.c.l.b16 %v412
  %v2815 = vunpack.c.l.b16 %v413
  %v2816 = vunpack.c.h.b16 %v413
  %v2817 = vunpack.c.l.b16 %v414
  %v2818 = vunpack.c.l.b16 %v415
  %v2819 = vunpack.c.h.b16 %v415
  %v2820 = vunpack.c.l.b16 %v416
  %v2821 = vunpack.c.l.b16 %v417
  %v2822 = vunpack.c.h.b16 %v417
  %v2823 = vunpack.c.l.b16 %v418
  %v2824 = vunpack.c.l.b16 %v419
  %v2825 = vunpack.c.h.b16 %v419
  %v2826 = vunpack.c.l.b16 %v420
  %v2827 = vunpack.c.l.b16 %v421
  %v2828 = vunpack.c.h.b16 %v421
  %v2829 = vunpack.c.l.b16 %v422
  %v2830 = vunpack.c.l.b16 %v423
  %v2831 = vunpack.c.h.b16 %v423
  %v2832 = vunpack.c.l.b16 %v424
  %v2833 = vunpack.c.l.b16 %v425
  %v2834 = vunpack.c.h.b16 %v425
  %v2835 = vunpack.c.l.b16 %v426
  %v2836 = vunpack.c.l.b16 %v427
  %v2837 = vunpack.c.h.b16 %v427
  %v2838 = vunpack.c.l.b16 %v428
  %v2839 = vunpack.c.l.b16 %v429
  %v2840 = vunpack.c.h.b16 %v429
  %v2841 = vunpack.c.l.b16 %v430
  %v2842 = vunpack.c.l.b16 %v431
  %v2843 = vunpack.c.h.b16 %v431
  %v2844 = vunpack.c.l.b16 %v432
  %v2845 = vunpack.c.l.b16 %v433
  %v2846 = vunpack.c.h.b16 %v433
  %v2847 = vunpack.c.l.b16 %v434
  %v2848 = vunpack.c.l.b16 %v435
  %v2849 = vunpack.c.h.b16 %v435
  %v2850 = vunpack.c.l.b16 %v436
  %v2851 = vunpack.c.l.b16 %v437
  %v2852 = vunpack.c.h.b16 %v437
  %v2853 = vunpack.c.l.b16 %v438
  %v2854 = vunpack.c.l.b16 %v439
  %v2855 = vunpack.c.h.b16 %v439
  %v2856 = vunpack.c.l.b16 %v440
  %v2857 = vunpack.c.l.b16 %v441
  %v2858 = vunpack.c.h.b16 %v441
  %v2859 = vunpack.c.l.b16 %v442
  %v2860 = vunpack.c.l.b16 %v443
  %v2861 = vunpack.c.h.b16 %v443
  %v2862 = vunpack.c.l.b16 %v444
  %v2863 = vunpack.c.l.b16 %v445
  %v2864 = vunpack.c.h.b16 %v445
  %v2865 = vunpack.c.l.b16 %v446
  %v2866 = vunpack.c.l.b16 %v447
  %v2867 = vunpack.c.h.b16 %v447
  %v2868 = vunpack.c.l.b16 %v448
  %v2869 = vunpack.c.l.b16 %v449
  %v2870 = vunpack.c.h.b16 %v449
  %v2871 = vunpack.c.l.b16 %v450
  %v2872 = vunpack.c.l.b16 %v451
  %v2873 = vunpack.c.h.b16 %v451
  %v2874 = vunpack.c.l.b16 %v452
  %v2875 = vunpack.c.l.b16 %v453
  %v2876 = vunpack.c.h.b16 %v453
  %v2877 = vunpack.c.l.b16 %v454
  %v2878 = vunpack.c.l.b16 %v455
  %v2879 = vunpack.c.h.b16 %v455
  %v2880 = vunpack.c.l.b16 %v456
  %v2881 = vunpack.c.l.b16 %v457
  %v2882 = vunpack.c.h.b16 %v457
  %v2883 = vunpack.c.l.b16 %v458
  %v2884 = vunpack.c.l.b16 %v459
  %v2885 = vunpack.c.h.b16 %v459
  %v2886 = vunpack.c.l.b16 %v460
  %v2887 = vunpack.c.l.b16 %v461
  %v2888 = vunpack.c.h.b16 %v461
  %v2889 = vunpack.c.l.b16 %v462
  %v2890 = vunpack.c.l.b16 %v463
  %v2891 = vunpack.c.h.b16 %v463
  %v2892 = vunpack.c.l.b16 %v464
  %v2893 = vunpack.c.l.b16 %v465
  %v2894 = vunpack.c.h.b16 %v465
  %v2895 = vunpack.c.l.b16 %v466
  %v2896 = vunpack.c.l.b16 %v467
  %v2897 = vunpack.c.h.b16 %v467
  %v2898 = vunpack.c.l.b16 %v468
  %v2899 = vunpack.c.l.b16 %v469
  %v2900 = vunpack.c.h.b16 %v469
  %v2901 = vunpack.c.l.b16 %v470
  %v2902 = vunpack.c.l.b16 %v471
  %v2903 = vunpack.c.h.b16 %v471
  %v2904 = vunpack.c.l.b16 %v472
  %v2905 = vunpack.c.l.b16 %v473
  %v2906 = vunpack.c.h.b16 %v473
  %v2907 = vunpack.c.l.b16 %v474
  %v2908 = vunpack.c.l.b16 %v475
  %v2909 = vunpack.c.h.b16 %v475
  %v2910 = vunpack.c.l.b16 %v476
  %v2911 = vunpack.c.l.b16 %v477
  %v2912 = vunpack.c.h.b16 %v477
  %v2913 = vunpack.c.l.b16 %v478
  %v2914 = vunpack.c.l.b16 %v479
  %v2915 = vunpack.c.h.b16 %v479
  %v2916 = vunpack.c.l.b16 %v480
  %v2917 = vunpack.c.l.b16 %v481
  %v2918 = vunpack.c.h.b16 %v481
  %v2919 = vunpack.c.l.b16 %v482
  %v2920 = vunpack.c.l.b16 %v483
  %v2921 = vunpack.c.h.b16 %v483
  %v2922 = vunpack.c.l.b16 %v484
  %v2923 = vunpack.c.l.b16 %v485
  %v2924 = vunpack.c.h.b16 %v485
  %v2925 = vunpack.c.l.b16 %v486
  %v2926 = vunpack.c.l.b16 %v487
  %v2927 = vunpack.c.h.b16 %v487
  %v2928 = vunpack.c.l.b16 %v488
  %v2929 = vunpack.c.l.b16 %v489
  %v2930 = vunpack.c.h.b16 %v489
  %v2931 = vunpack.c.l.b16 %v490
  %v2932 = vunpack.c.l.b16 %v491
  %v2933 = vunpack.c.h.b16 %v491
  %v2934 = vunpack.c.l.b16 %v492
  %v2935 = vunpack.c.l.b16 %v493
  %v2936 = vunpack.c.h.b16 %v493
  %v2937 = vunpack.c.l.b16 %v494
  %v2938 = vunpack.c.l.b16 %v495
  %v2939 = vunpack.c.h.b16 %v495
  %v2940 = vunpack.c.l.b16 %v496
  %v2941 = vunpack.c.l.b16 %v497
  %v2942 = vunpack.c.h.b16 %v497
  %v2943 = vunpack.c.l.b16 %v498
  %v2944 = vunpack.c.l.b16 %v499
  %v2945 = vunpack.c.h.b16 %v499
  %v2946 = vunpack.c.l.b16 %v500
  %v2947 = vunpack.c.l.b16 %v501
  %v2948 = vunpack.c.h.b16 %v501
  %v2949 = vunpack.c.l.b16 %v502
  %v2950 = vunpack.c.l.b16 %v503
  %v2951 = vunpack.c.h.b16 %v503
  %v2952 = vunpack.c.l.b16 %v504
  %v2953 = vunpack.c.l.b16 %v505
  %v2954 = vunpack.c.h.b16 %v505
  %v2955 = vunpack.c.l.b16 %v506
  %v2956 = vunpack.c.l.b16 %v507
  %v2957 = vunpack.c.h.b16 %v507
  %v2958 = vunpack.c.l.b16 %v508
  %v2959 = vunpack.c.l.b16 %v509
  %v2960 = vunpack.c.h.b16 %v509
  %v2961 = vunpack.c.l.b16 %v510
  %v2962 = vunpack.c.l.b16 %v511
  %v2963 = vunpack.c.h.b16 %v511
  %v2964 = vunpack.c.l.b16 %v512
  %v2965 = vunpack.c.l.b16 %v513
  %v2966 = vunpack.c.h.b16 %v513
  %v2967 = vunpack.c.l.b16 %v514
  %v2968 = vunpack.c.l.b16 %v515
  %v2969 = vunpack.c.h.b16 %v515
  %v2970 = vunpack.c.l.b16 %v516
  %v2971 = vunpack.c.l.b16 %v517
  %v2972 = vunpack.c.h.b16 %v517
  %v2973 = vunpack.c.l.b16 %v518
  %v2974 = vunpack.c.l.b16 %v519
  %v2975 = vunpack.c.h.b16 %v519
  %v2976 = vunpack.c.l.b16 %v520
  %v2977 = vunpack.c.l.b16 %v521
  %v2978 = vunpack.c.h.b16 %v521
  %v2979 = vunpack.c.l.b16 %v522
  %v2980 = vunpack.c.l.b16 %v523
  %v2981 = vunpack.c.h.b16 %v523
  %v2982 = vunpack.c.l.b16 %v524
  %v2983 = vunpack.c.l.b16 %v525
  %v2984 = vunpack.c.h.b16 %v525
  %v2985 = vunpack.c.l.b16 %v526
  %v2986 = vunpack.c.l.b16 %v527
  %v2987 = vunpack.c.h.b16 %v527
  %v2988 = vunpack.c.l.b16 %v528
  %v2989 = vunpack.c.l.b16 %v529
  %v2990 = vunpack.c.h.b16 %v529
  %v2991 = vunpack.c.l.b16 %v530
  %v2992 = vunpack.c.l.b16 %v531
  %v2993 = vunpack.c.h.b16 %v531
  %v2994 = vunpack.c.l.b16 %v532
  %v2995 = vunpack.c.l.b16 %v533
  %v2996 = vunpack.c.h.b16 %v533
  %v2997 = vunpack.c.l.b16 %v534
  %v2998 = vunpack.c.l.b16 %v535
  %v2999 = vunpack.c.h.b16 %v535
  %v3000 = vunpack.c.l.b16 %v536
  %v3001 = vunpack.c.l.b16 %v537
  %v3002 = vunpack.c.h.b16 %v537
  %v3003 = vunpack.c.l.b16 %v538
  %v3004 = vunpack.c.l.b16 %v539
  %v3005 = vunpack.c.h.b16 %v539
  %v3006 = vunpack.c.l.b16 %v540
  %v3007 = vunpack.c.l.b16 %v541
  %v3008 = vunpack.c.h.b16 %v541
  %v3009 = vunpack.c.l.b16 %v542
  %v3010 = vunpack.c.l.b16 %v543
  %v3011 = vunpack.c.h.b16 %v543
  %v3012 = vunpack.c.l.b16 %v544
  %v3013 = vunpack.c.l.b16 %v545
  %v3014 = vunpack.c.h.b16 %v545
  %v3015 = vunpack.c.l.b16 %v546
  %v3016 = vunpack.c.l.b16 %v547
  %v3017 = vunpack.c.h.b16 %v547
  %v3018 = vunpack.c.l.b16 %v548
  %v3019 = vunpack.c.l.b16 %v549
  %v3020 = vunpack.c.h.b16 %v549
  %v3021 = vunpack.c.l.b16 %v550
  %v3022 = vunpack.c.l.b16 %v551
  %v3023 = vunpack.c.h.b16 %v551
  %v3024 = vunpack.c.l.b16 %v552
  %v3025 = vunpack.c.l.b16 %v553
  %v3026 = vunpack.c.h.b16 %v553
  %v3027 = vunpack.c.l.b16 %v554
  %v3028 = vunpack.c.l.b16 %v555
  %v3029 = vunpack.c.h.b16 %v555
  %v3030 = vunpack.c.l.b16 %v556
  %v3031 = vunpack.c.l.b16 %v557
  %v3032 = vunpack.c.h.b16 %v557
  %v3033 = vunpack.c.l.b16 %v558
  %v3034 = vunpack.c.l.b16 %v559
  %v3035 = vunpack.c.h.b16 %v559
  %v3036 = vunpack.c.l.b16 %v560
  %v3037 = vunpack.c.l.b16 %v561
  %v3038 = vunpack.c.h.b16 %v561
  %v3039 = vunpack.c.l.b16 %v562
  %v3040 = vunpack.c.l.b16 %v563
  %v3041 = vunpack.c.h.b16 %v563
  %v3042 = vunpack.c.l.b16 %v564
  %v3043 = vunpack.c.l.b16 %v565
  %v3044 = vunpack.c.h.b16 %v565
  %v3045 = vunpack.c.l.b16 %v566
  %v3046 = vunpack.c.l.b16 %v567
  %v3047 = vunpack.c.h.b16 %v567
  %v3048 = vunpack.c.l.b16 %v568
  %v3049 = vunpack.c.l.b16 %v569
  %v3050 = vunpack.c.h.b16 %v569
  %v3051 = vunpack.c.l.b16 %v570
  %v3052 = vunpack.c.l.b16 %v571
  %v3053 = vunpack.c.h.b16 %v571
  %v3054 = vunpack.c.l.b16 %v572
  %v3055 = vunpack.c.l.b16 %v573
  %v3056 = vunpack.c.h.b16 %v573
  %v3057 = vunpack.c.l.b16 %v574
  %v3058 = vunpack.c.l.b16 %v575
  %v3059 = vunpack.c.h.b16 %v575
  %v3060 = vunpack.c.l.b16 %v576
  %v3061 = vunpack.c.l.b16 %v577
  %v3062 = vunpack.c.h.b16 %v577
  %v3063 = vunpack.c.l.b16 %v578
  %v3064 = vunpack.c.l.b16 %v579
  %v3065 = vunpack.c.h.b16 %v579
  %v3066 = vunpack.c.l.b16 %v580
  %v3067 = vunpack.c.l.b16 %v581
  %v3068 = vunpack.c.h.b16 %v581
  %v3069 = vunpack.c.l.b16 %v582
  %v3070 = vunpack.c.l.b16 %v583
  %v3071 = vunpack.c.h.b16 %v583
  %v3072 = vunpack.c.l.b16 %v584
  %v3073 = vunpack.c.l.b16 %v585
  %v3074 = vunpack.c.h.b16 %v585
  %v3075 = vunpack.c.l.b16 %v586
  %v3076 = vunpack.c.l.b16 %v587
  %v3077 = vunpack.c.h.b16 %v587
  %v3078 = vunpack.c.l.b16 %v588
  %v3079 = vunpack.c.l.b16 %v589
  %v3080 = vunpack.c.h.b16 %v589
  %v3081 = vunpack.c.l.b16 %v590
  %v3082 = vunpack.c.l.b16 %v591
  %v3083 = vunpack.c.h.b16 %v591
  %v3084 = vunpack.c.l.b16 %v592
  %v3085 = vunpack.c.l.b16 %v593
  %v3086 = vunpack.c.h.b16 %v593
  %v3087 = vunpack.c.l.b16 %v594
  %v3088 = vunpack.c.l.b16 %v595
  %v3089 = vunpack.c.h.b16 %v595
  %v3090 = vunpack.c.l.b16 %v596
  %v3091 = vunpack.c.l.b16 %v597
  %v3092 = vunpack.c.h.b16 %v597
  %v3093 = vunpack.c.l.b16 %v598
  %v3094 = vunpack.c.l.b16 %v599
  %v3095 = vunpack.c.h.b16 %v599
  %v3096 = vunpack.c.l.b16 %v600
  %v3097 = vunpack.c.l.b16 %v601
  %v3098 = vunpack.c.h.b16 %v601
  %v3099 = vunpack.c.l.b16 %v602
  %v3100 = vunpack.c.l.b16 %v603
  %v3101 = vunpack.c.h.b16 %v603
  %v3102 = vunpack.c.l.b16 %v604
  %v3103 = vunpack.c.l.b16 %v605
  %v3104 = vunpack.c.h.b16 %v605
  %v3105 = vunpack.c.l.b16 %v606
  %v3106 = vunpack.c.l.b16 %v607
  %v3107 = vunpack.c.h.b16 %v607
  %v3108 = vunpack.c.l.b16 %v608
  %v3109 = vunpack.c.l.b16 %v609
  %v3110 = vunpack.c.h.b16 %v609
  %v3111 = vunpack.c.l.b16 %v610
  %v3112 = vunpack.c.l.b16 %v611
  %v3113 = vunpack.c.h.b16 %v611
  %v3114 = vunpack.c.l.b16 %v612
  %v3115 = vunpack.c.l.b16 %v613
  %v3116 = vunpack.c.h.b16 %v613
  %v3117 = vunpack.c.l.b16 %v614
  %v3118 = vunpack.c.l.b16 %v615
  %v3119 = vunpack.c.h.b16 %v615
  %v3120 = vunpack.c.l.b16 %v616
  %v3121 = vunpack.c.l.b16 %v617
  %v3122 = vunpack.c.h.b16 %v617
  %v3123 = vunpack.c.l.b16 %v618
  %v3124 = vunpack.c.l.b16 %v619
  %v3125 = vunpack.c.h.b16 %v619
  %v3126 = vunpack.c.l.b16 %v620
  %v3127 = vunpack.c.l.b16 %v621
  %v3128 = vunpack.c.h.b16 %v621
  %v3129 = vunpack.c.l.b16 %v622
  %v3130 = vunpack.c.l.b16 %v623
  %v3131 = vunpack.c.h.b16 %v623
  %v3132 = vunpack.c.l.b16 %v624
  %v3133 = vunpack.c.l.b16 %v625
  %v3134 = vunpack.c.h.b16 %v625
  %v3135 = vunpack.c.l.b16 %v626
  %v3136 = vunpack.c.l.b16 %v627
  %v3137 = vunpack.c.h.b16 %v627
  %v3138 = vunpack.c.l.b16 %v628
  %v3139 = vunpack.c.l.b16 %v629
  %v3140 = vunpack.c.h.b16 %v629
  %v3141 = vunpack.c.l.b16 %v630
  %v3142 = vunpack.c.l.b16 %v631
  %v3143 = vunpack.c.h.b16 %v631
  %v3144 = vunpack.c.l.b16 %v632
  %v3145 = vunpack.c.l.b16 %v633
  %v3146 = vunpack.c.h.b16 %v633
  %v3147 = vunpack.c.l.b16 %v634
  %v3148 = vunpack.c.l.b16 %v635
  %v3149 = vunpack.c.h.b16 %v635
  %v3150 = vunpack.c.l.b16 %v636
  %v3151 = vunpack.c.l.b16 %v637
  %v3152 = vunpack.c.h.b16 %v637
  %v3153 = vunpack.c.l.b16 %v638
  %v3154 = vunpack.c.l.b16 %v639
  %v3155 = vunpack.c.h.b16 %v639
  %v3156 = vunpack.c.l.b16 %v640
  %v3157 = vunpack.c.l.b16 %v641
  %v3158 = vunpack.c.h.b16 %v641
  %v3159 = vunpack.c.l.b16 %v642
  %v3160 = vunpack.c.l.b16 %v643
  %v3161 = vunpack.c.h.b16 %v643
  %v3162 = vunpack.c.l.b16 %v644
  %v3163 = vunpack.c.l.b16 %v645
  %v3164 = vunpack.c.h.b16 %v645
  %v3165 = vunpack.c.l.b16 %v646
  %v3166 = vunpack.c.l.b16 %v647
  %v3167 = vunpack.c.h.b16 %v647
  %v3168 = vunpack.c.l.b16 %v648
  %v3169 = vunpack.c.l.b16 %v649
  %v3170 = vunpack.c.h.b16 %v649
  %v3171 = vunpack.c.l.b16 %v650
  %v3172 = vunpack.c.l.b16 %v651
  %v3173 = vunpack.c.h.b16 %v651
  %v3174 = vunpack.c.l.b16 %v652
  %v3175 = vunpack.c.l.b16 %v653
  %v3176 = vunpack.c.h.b16 %v653
  %v3177 = vunpack.c.l.b16 %v654
  %v3178 = vunpack.c.l.b16 %v655
  %v3179 = vunpack.c.h.b16 %v655
  %v3180 = vunpack.c.l.b16 %v656
  %v3181 = vunpack.c.l.b16 %v657
  %v3182 = vunpack.c.h.b16 %v657
  %v3183 = vunpack.c.l.b16 %v658
  %v3184 = vunpack.c.l.b16 %v659
  %v3185 = vunpack.c.h.b16 %v659
  %v3186 = vunpack.c.l.b16 %v660
  %v3187 = vunpack.c.l.b16 %v661
  %v3188 = vunpack.c.h.b16 %v661
  %v3189 = vunpack.c.l.b16 %v662
  %v3190 = vunpack.c.l.b16 %v663
  %v3191 = vunpack.c.h.b16 %v663
  %v3192 = vunpack.c.l.b16 %v664
  %v3193 = vunpack.c.l.b16 %v665
  %v3194 = vunpack.c.h.b16 %v665
  %v3195 = vunpack.c.l.b16 %v666
  %v3196 = vunpack.c.l.b16 %v667
  %v3197 = vunpack.c.h.b16 %v667
  %v3198 = vunpack.c.l.b16 %v668
  %v3199 = vunpack.c.l.b16 %v669
  %v3200 = vunpack.c.h.b16 %v669
  %v3201 = vunpack.c.l.b16 %v670
  %v3202 = vunpack.c.l.b16 %v671
  %v3203 = vunpack.c.h.b16 %v671
  %v3204 = vunpack.c.l.b16 %v672
  %v3205 = vunpack.c.l.b16 %v673
  %v3206 = vunpack.c.h.b16 %v673
  %v3207 = vunpack.c.l.b16 %v674
  %v3208 = vunpack.c.l.b16 %v675
  %v3209 = vunpack.c.h.b16 %v675
  %v3210 = vunpack.c.l.b16 %v676
  %v3211 = vunpack.c.l.b16 %v677
  %v3212 = vunpack.c.h.b16 %v677
  %v3213 = vunpack.c.l.b16 %v678
  %v3214 = vunpack.c.l.b16 %v679
  %v3215 = vunpack.c.h.b16 %v679
  %v3216 = vunpack.c.l.b16 %v680
  %v3217 = vunpack.c.l.b16 %v681
  %v3218 = vunpack.c.h.b16 %v681
  %v3219 = vunpack.c.l.b16 %v682
  %v3220 = vunpack.c.l.b16 %v683
  %v3221 = vunpack.c.h.b16 %v683
  %v3222 = vunpack.c.l.b16 %v684
  %v3223 = vunpack.c.l.b16 %v685
  %v3224 = vunpack.c.h.b16 %v685
  %v3225 = vunpack.c.l.b16 %v686
  %v3226 = vunpack.c.l.b16 %v687
  %v3227 = vunpack.c.h.b16 %v687
  %v3228 = vunpack.c.l.b16 %v688
  %v3229 = vunpack.c.l.b16 %v689
  %v3230 = vunpack.c.h.b16 %v689
  %v3231 = vunpack.c.l.b16 %v690
  %v3232 = vunpack.c.l.b16 %v691
  %v3233 = vunpack.c.h.b16 %v691
  %v3234 = vunpack.c.l.b16 %v692
  %v3235 = vunpack.c.l.b16 %v693
  %v3236 = vunpack.c.h.b16 %v693
  %v3237 = vunpack.c.l.b16 %v694
  %v3238 = vunpack.c.l.b16 %v695
  %v3239 = vunpack.c.h.b16 %v695
  %v3240 = vunpack.c.l.b16 %v696
  %v3241 = vunpack.c.l.b16 %v697
  %v3242 = vunpack.c.h.b16 %v697
  %v3243 = vunpack.c.l.b16 %v698
  %v3244 = vunpack.c.l.b16 %v699
  %v3245 = vunpack.c.h.b16 %v699
  %v3246 = vunpack.c.l.b16 %v700
  %v3247 = vunpack.c.l.b16 %v701
  %v3248 = vunpack.c.h.b16 %v701
  %v3249 = vunpack.c.l.b16 %v702
  %v3250 = vunpack.c.l.b16 %v703
  %v3251 = vunpack.c.h.b16 %v703
  %v3252 = vunpack.c.l.b16 %v704
  %v3253 = vunpack.c.l.b16 %v705
  %v3254 = vunpack.c.h.b16 %v705
  %v3255 = vunpack.c.l.b16 %v706
  %v3256 = vunpack.c.l.b16 %v707
  %v3257 = vunpack.c.h.b16 %v707
  %v3258 = vunpack.c.l.b16 %v708
  %v3259 = vunpack.c.l.b16 %v709
  %v3260 = vunpack.c.h.b16 %v709
  %v3261 = vunpack.c.l.b16 %v710
  %v3262 = vunpack.c.l.b16 %v711
  %v3263 = vunpack.c.h.b16 %v711
  %v3264 = vunpack.c.l.b16 %v712
  %v3265 = vunpack.c.l.b16 %v713
  %v3266 = vunpack.c.h.b16 %v713
  %v3267 = vunpack.c.l.b16 %v714
  %v3268 = vunpack.c.l.b16 %v715
  %v3269 = vunpack.c.h.b16 %v715
  %v3270 = vunpack.c.l.b16 %v716
  %v3271 = vunpack.c.l.b16 %v717
  %v3272 = vunpack.c.h.b16 %v717
  %v3273 = vunpack.c.l.b16 %v718
  %v3274 = vunpack.c.l.b16 %v719
  %v3275 = vunpack.c.h.b16 %v719
  %v3276 = vunpack.c.l.b16 %v720
  %v3277 = vunpack.c.l.b16 %v721
  %v3278 = vunpack.c.h.b16 %v721
  %v3279 = vunpack.c.l.b16 %v722
  %v3280 = vunpack.c.l.b16 %v723
  %v3281 = vunpack.c.h.b16 %v723
  %v3282 = vunpack.c.l.b16 %v724
  %v3283 = vunpack.c.l.b16 %v725
  %v3284 = vunpack.c.h.b16 %v725
  %v3285 = vunpack.c.l.b16 %v726
  %v3286 = vunpack.c.l.b16 %v727
  %v3287 = vunpack.c.h.b16 %v727
  %v3288 = vunpack.c.l.b16 %v728
  %v3289 = vunpack.c.l.b16 %v729
  %v3290 = vunpack.c.h.b16 %v729
  %v3291 = vunpack.c.l.b16 %v730
  %v3292 = vunpack.c.l.b16 %v731
  %v3293 = vunpack.c.h.b16 %v731
  %v3294 = vunpack.c.l.b16 %v732
  %v3295 = vunpack.c.l.b16 %v733
  %v3296 = vunpack.c.h.b16 %v733
  %v3297 = vunpack.c.l.b16 %v734
  %v3298 = vunpack.c.l.b16 %v735
  %v3299 = vunpack.c.h.b16 %v735
  %v3300 = vunpack.c.l.b16 %v736
  %v3301 = vunpack.c.l.b16 %v737
  %v3302 = vunpack.c.h.b16 %v737
  %v3303 = vunpack.c.l.b16 %v738
  %v3304 = vunpack.c.l.b16 %v739
  %v3305 = vunpack.c.h.b16 %v739
  %v3306 = vunpack.c.l.b16 %v740
  %v3307 = vunpack.c.l.b16 %v741
  %v3308 = vunpack.c.h.b16 %v741
  %v3309 = vunpack.c.l.b16 %v742
  %v3310 = vunpack.c.l.b16 %v743
  %v3311 = vunpack.c.h.b16 %v743
  %v3312 = vunpack.c.l.b16 %v744
  %v3313 = vunpack.c.l.b16 %v745
  %v3314 = vunpack.c.h.b16 %v745
  %v3315 = vunpack.c.l.b16 %v746
  %v3316 = vunpack.c.l.b16 %v747
  %v3317 = vunpack.c.h.b16 %v747
  %v3318 = vunpack.c.l.b16 %v748
  %v3319 = vunpack.c.l.b16 %v749
  %v3320 = vunpack.c.h.b16 %v749
  %v3321 = vunpack.c.l.b16 %v750
  %v3322 = vunpack.c.l.b16 %v751
  %v3323 = vunpack.c.h.b16 %v751
  %v3324 = vunpack.c.l.b16 %v752
  %v3325 = vunpack.c.l.b16 %v753
  %v3326 = vunpack.c.h.b16 %v753
  %v3327 = vunpack.c.l.b16 %v754
  %v3328 = vunpack.c.l.b16 %v755
  %v3329 = vunpack.c.h.b16 %v755
  %v3330 = vunpack.c.l.b16 %v756
  %v3331 = vunpack.c.l.b16 %v757
  %v3332 = vunpack.c.h.b16 %v757
  %v3333 = vunpack.c.l.b16 %v758
  %v3334 = vunpack.c.l.b16 %v759
  %v3335 = vunpack.c.h.b16 %v759
  %v3336 = vunpack.c.l.b16 %v760
  %v3337 = vunpack.c.l.b16 %v761
  %v3338 = vunpack.c.h.b16 %v761
  %v3339 = vunpack.c.l.b16 %v762
  %v3340 = vunpack.c.l.b16 %v763
  %v3341 = vunpack.c.h.b16 %v763
  %v3342 = vunpack.c.l.b16 %v764
  %v3343 = vunpack.c.l.b16 %v765
  %v3344 = vunpack.c.h.b16 %v765
  %v3345 = vunpack.c.l.b16 %v766
  %v3346 = vunpack.c.l.b16 %v767
  %v3347 = vunpack.c.h.b16 %v767
  %v3348 = vunpack.c.l.b16 %v768
  %v3349 = vunpack.c.l.b16 %v769
  %v3350 = vunpack.c.h.b16 %v769
  %v3351 = vunpack.c.l.b16 %v770
  %v3352 = vunpack.c.l.b16 %v771
  %v3353 = vunpack.c.h.b16 %v771
  %v3354 = vunpack.c.l.b16 %v772
  %v3355 = vunpack.c.l.b16 %v773
  %v3356 = vunpack.c.h.b16 %v773
  %v3357 = vunpack.c.l.b16 %v774
  %v3358 = vunpack.c.l.b16 %v775
  %v3359 = vunpack.c.h.b16 %v775
  %v3360 = vunpack.c.l.b16 %v776
  %v3361 = vunpack.c.l.b16 %v777
  %v3362 = vunpack.c.h.b16 %v777
  %v3363 = vunpack.c.l.b16 %v778
  %v3364 = vunpack.c.l.b16 %v779
  %v3365 = vunpack.c.h.b16 %v779
  %v3366 = vunpack.c.l.b16 %v780
  %v3367 = vunpack.c.l.b16 %v781
  %v3368 = vunpack.c.h.b16 %v781
  %v3369 = vunpack.c.l.b16 %v782
  %v3370 = vunpack.c.l.b16 %v783
  %v3371 = vunpack.c.h.b16 %v783
  %v3372 = vunpack.c.l.b16 %v784
  %v3373 = vunpack.c.l.b16 %v785
  %v3374 = vunpack.c.h.b16 %v785
  %v3375 = vunpack.c.l.b16 %v786
  %v3376 = vunpack.c.l.b16 %v787
  %v3377 = vunpack.c.h.b16 %v787
  %v3378 = vunpack.c.l.b16 %v788
  %v3379 = vunpack.c.l.b16 %v789
  %v3380 = vunpack.c.h.b16 %v789
  %v3381 = vunpack.c.l.b16 %v790
  %v3382 = vunpack.c.l.b16 %v791
  %v3383 = vunpack.c.h.b16 %v791
  %v3384 = vunpack.c.l.b16 %v792
  %v3385 = vunpack.c.l.b16 %v793
  %v3386 = vunpack.c.h.b16 %v793
  %v3387 = vunpack.c.l.b16 %v794
  %v3388 = vunpack.c.l.b16 %v795
  %v3389 = vunpack.c.h.b16 %v795
  %v3390 = vunpack.c.l.b16 %v796
  %v3391 = vunpack.c.l.b16 %v797
  %v3392 = vunpack.c.h.b16 %v797
  %v3393 = vunpack.c.l.b16 %v798
  %v3394 = vunpack.c.l.b16 %v799
  %v3395 = vunpack.c.h.b16 %v799
  %v3396 = vunpack.c.l.b16 %v800
  %v3397 = vunpack.c.l.b16 %v801
  %v3398 = vunpack.c.h.b16 %v801
  %v3399 = vunpack.c.l.b16 %v802
  %v3400 = vunpack.c.l.b16 %v803
  %v3401 = vunpack.c.h.b16 %v803
  %v3402 = vunpack.c.l.b16 %v804
  %v3403 = vunpack.c.l.b16 %v805
  %v3404 = vunpack.c.h.b16 %v805
  %v3405 = vunpack.c.l.b16 %v806
  %v3406 = vunpack.c.l.b16 %v807
  %v3407 = vunpack.c.h.b16 %v807
  %v3408 = vunpack.c.l.b16 %v808
  %v3409 = vunpack.c.l.b16 %v809
  %v3410 = vunpack.c.h.b16 %v809
  %v3411 = vunpack.c.l.b16 %v810
  %v3412 = vunpack.c.l.b16 %v811
  %v3413 = vunpack.c.h.b16 %v811
  %v3414 = vunpack.c.l.b16 %v812
  %v3415 = vunpack.c.l.b16 %v813
  %v3416 = vunpack.c.h.b16 %v813
  %v3417 = vunpack.c.l.b16 %v814
  %v3418 = vunpack.c.l.b16 %v815
  %v3419 = vunpack.c.h.b16 %v815
  %v3420 = vunpack.c.l.b16 %v816
  %v3421 = vunpack.c.l.b16 %v817
  %v3422 = vunpack.c.h.b16 %v817
  %v3423 = vunpack.c.l.b16 %v818
  %v3424 = vunpack.c.l.b16 %v819
  %v3425 = vunpack.c.h.b16 %v819
  %v3426 = vunpack.c.l.b16 %v820
  %v3427 = vunpack.c.l.b16 %v821
  %v3428 = vunpack.c.h.b16 %v821
  %v3429 = vunpack.c.l.b16 %v822
  %v3430 = vunpack.c.l.b16 %v823
  %v3431 = vunpack.c.h.b16 %v823
  %v3432 = vunpack.c.l.b16 %v824
  %v3433 = vunpack.c.l.b16 %v825
  %v3434 = vunpack.c.h.b16 %v825
  %v3435 = vunpack.c.l.b16 %v826
  %v3436 = vunpack.c.l.b16 %v827
  %v3437 = vunpack.c.h.b16 %v827
  %v3438 = vunpack.c.l.b16 %v828
  %v3439 = vunpack.c.l.b16 %v829
  %v3440 = vunpack.c.h.b16 %v829
  %v3441 = vunpack.c.l.b16 %v830
  %v3442 = vunpack.c.l.b16 %v831
  %v3443 = vunpack.c.h.b16 %v831
  %v3444 = vunpack.c.l.b16 %v832
  %v3445 = vunpack.c.l.b16 %v833
  %v3446 = vunpack.c.h.b16 %v833
  %v3447 = vunpack.c.l.b16 %v834
  %v3448 = vunpack.c.l.b16 %v835
  %v3449 = vunpack.c.h.b16 %v835
  %v3450 = vunpack.c.l.b16 %v836
  %v3451 = vunpack.c.l.b16 %v837
  %v3452 = vunpack.c.h.b16 %v837
  %v3453 = vunpack.c.l.b16 %v838
  %v3454 = vunpack.c.l.b16 %v839
  %v3455 = vunpack.c.h.b16 %v839
  %v3456 = vunpack.c.l.b16 %v840
  %v3457 = vunpack.c.l.b16 %v841
  %v3458 = vunpack.c.h.b16 %v841
  %v3459 = vunpack.c.l.b16 %v842
  %v3460 = vunpack.c.l.b16 %v843
  %v3461 = vunpack.c.h.b16 %v843
  %v3462 = vunpack.c.l.b16 %v844
  %v3463 = vunpack.c.l.b16 %v845
  %v3464 = vunpack.c.h.b16 %v845
  %v3465 = vunpack.c.l.b16 %v846
  %v3466 = vunpack.c.l.b16 %v847
  %v3467 = vunpack.c.h.b16 %v847
  %v3468 = vunpack.c.l.b16 %v848
  %v3469 = vunpack.c.l.b16 %v849
  %v3470 = vunpack.c.h.b16 %v849
  %v3471 = vunpack.c.l.b16 %v850
  %v3472 = vunpack.c.l.b16 %v851
  %v3473 = vunpack.c.h.b16 %v851
  %v3474 = vunpack.c.l.b16 %v852
  %v3475 = vunpack.c.l.b16 %v853
  %v3476 = vunpack.c.h.b16 %v853
  %v3477 = vunpack.c.l.b16 %v854
  %v3478 = vunpack.c.l.b16 %v855
  %v3479 = vunpack.c.h.b16 %v855
  %v3480 = vunpack.c.l.b16 %v856
  %v3481 = vunpack.c.l.b16 %v857
  %v3482 = vunpack.c.h.b16 %v857
  %v3483 = vunpack.c.l.b16 %v858
  %v3484 = vunpack.c.l.b16 %v859
  %v3485 = vunpack.c.h.b16 %v859
  %v3486 = vunpack.c.l.b16 %v860
  %v3487 = vunpack.c.l.b16 %v861
  %v3488 = vunpack.c.h.b16 %v861
  %v3489 = vunpack.c.l.b16 %v862
  %v3490 = vunpack.c.l.b16 %v863
  %v3491 = vunpack.c.h.b16 %v863
  %v3492 = vunpack.c.l.b16 %v864
  %v3493 = vunpack.c.l.b16 %v865
  %v3494 = vunpack.c.h.b16 %v865
  %v3495 = vunpack.c.l.b16 %v866
  %v3496 = vunpack.c.l.b16 %v867
  %v3497 = vunpack.c.h.b16 %v867
  %v3498 = vunpack.c.l.b16 %v868
  %v3499 = vunpack.c.l.b16 %v869
  %v3500 = vunpack.c.h.b16 %v869
  %v3501 = vunpack.c.l.b16 %v870
  %v3502 = vunpack.c.l.b16 %v871
  %v3503 = vunpack.c.h.b16 %v871
  %v3504 = vunpack.c.l.b16 %v872
  %v3505 = vunpack.c.l.b16 %v873
  %v3506 = vunpack.c.h.b16 %v873
  %v3507 = vunpack.c.l.b16 %v874
  %v3508 = vunpack.c.l.b16 %v875
  %v3509 = vunpack.c.h.b16 %v875
  %v3510 = vunpack.c.l.b16 %v876
  %v3511 = vunpack.c.l.b16 %v877
  %v3512 = vunpack.c.h.b16 %v877
  %v3513 = vunpack.c.l.b16 %v878
  %v3514 = vunpack.c.l.b16 %v879
  %v3515 = vunpack.c.h.b16 %v879
  %v3516 = vunpack.c.l.b16 %v880
  %v3517 = vunpack.c.l.b16 %v881
  %v3518 = vunpack.c.h.b16 %v881
  %v3519 = vunpack.c.l.b16 %v882
  %v3520 = vunpack.c.l.b16 %v883
  %v3521 = vunpack.c.h.b16 %v883
  %v3522 = vunpack.c.l.b16 %v884
  %v3523 = vunpack.c.l.b16 %v885
  %v3524 = vunpack.c.h.b16 %v885
  %v3525 = vunpack.c.l.b16 %v886
  %v3526 = vunpack.c.l.b16 %v887
  %v3527 = vunpack.c.h.b16 %v887
  %v3528 = vunpack.c.l.b16 %v888
  %v3529 = vunpack.c.l.b16 %v889
  %v3530 = vunpack.c.h.b16 %v889
  %v3531 = vunpack.c.l.b16 %v890
  %v3532 = vunpack.c.l.b16 %v891
  %v3533 = vunpack.c.h.b16 %v891
  %v3534 = vunpack.c.l.b16 %v892
  %v3535 = vunpack.c.l.b16 %v893
  %v3536 = vunpack.c.h.b16 %v893
  %v3537 = vunpack.c.l.b16 %v894
  %v3538 = vunpack.c.l.b16 %v895
  %v3539 = vunpack.c.h.b16 %v895
  %v3540 = vunpack.c.l.b16 %v896
  %v3541 = vunpack.c.l.b16 %v897
  %v3542 = vunpack.c.h.b16 %v897
  %v3543 = vunpack.c.l.b16 %v898
  %v3544 = vunpack.c.l.b16 %v899
  %v3545 = vunpack.c.h.b16 %v899
  %v3546 = vunpack.c.l.b16 %v900
  %v3547 = vunpack.c.l.b16 %v901
  %v3548 = vunpack.c.h.b16 %v901
  %v3549 = vunpack.c.l.b16 %v902
  %v3550 = vunpack.c.l.b16 %v903
  %v3551 = vunpack.c.h.b16 %v903
  %v3552 = vunpack.c.l.b16 %v904
  %v3553 = vunpack.c.l.b16 %v905
  %v3554 = vunpack.c.h.b16 %v905
  %v3555 = vunpack.c.l.b16 %v906
  %v3556 = vunpack.c.l.b16 %v907
  %v3557 = vunpack.c.h.b16 %v907
  %v3558 = vunpack.c.l.b16 %v908
  %v3559 = vunpack.c.l.b16 %v909
  %v3560 = vunpack.c.h.b16 %v909
  %v3561 = vunpack.c.l.b16 %v910
  %v3562 = vunpack.c.l.b16 %v911
  %v3563 = vunpack.c.h.b16 %v911
  %v3564 = vunpack.c.l.b16 %v912
  %v3565 = vunpack.c.l.b16 %v913
  %v3566 = vunpack.c.h.b16 %v913
  %v3567 = vunpack.c.l.b16 %v914
  %v3568 = vunpack.c.l.b16 %v915
  %v3569 = vunpack.c.h.b16 %v915
  %v3570 = vunpack.c.l.b16 %v916
  %v3571 = vunpack.c.l.b16 %v917
  %v3572 = vunpack.c.h.b16 %v917
  %v3573 = vunpack.c.l.b16 %v918
  %v3574 = vunpack.c.l.b16 %v919
  %v3575 = vunpack.c.h.b16 %v919
  %v3576 = vunpack.c.l.b16 %v920
  %v3577 = vunpack.c.l.b16 %v921
  %v3578 = vunpack.c.h.b16 %v921
  %v3579 = vunpack.c.l.b16 %v922
  %v3580 = vunpack.c.l.b16 %v923
  %v3581 = vunpack.c.h.b16 %v923
  %v3582 = vunpack.c.l.b16 %v924
  %v3583 = vunpack.c.l.b16 %v925
  %v3584 = vunpack.c.h.b16 %v925
  %v3585 = vunpack.c.l.b16 %v926
  %v3586 = vunpack.c.l.b16 %v927
  %v3587 = vunpack.c.h.b16 %v927
  %v3588 = vunpack.c.l.b16 %v928
  %v3589 = vunpack.c.l.b16 %v929
  %v3590 = vunpack.c.h.b16 %v929
  %v3591 = vunpack.c.l.b16 %v930
  %v3592 = vunpack.c.l.b16 %v931
  %v3593 = vunpack.c.h.b16 %v931
  %v3594 = vunpack.c.l.b16 %v932
  %v3595 = vunpack.c.l.b16 %v933
  %v3596 = vunpack.c.h.b16 %v933
  %v3597 = vunpack.c.l.b16 %v934
  %v3598 = vunpack.c.l.b16 %v935
  %v3599 = vunpack.c.h.b16 %v935
  %v3600 = vunpack.c.l.b16 %v936
  %v3601 = vunpack.c.l.b16 %v937
  %v3602 = vunpack.c.h.b16 %v937
  %v3603 = vunpack.c.l.b16 %v938
  %v3604 = vunpack.c.l.b16 %v939
  %v3605 = vunpack.c.h.b16 %v939
  %v3606 = vunpack.c.l.b16 %v940
  %v3607 = vunpack.c.l.b16 %v941
  %v3608 = vunpack.c.h.b16 %v941
  %v3609 = vunpack.c.l.b16 %v942
  %v3610 = vunpack.c.l.b16 %v943
  %v3611 = vunpack.c.h.b16 %v943
  %v3612 = vunpack.c.l.b16 %v944
  %v3613 = vunpack.c.l.b16 %v945
  %v3614 = vunpack.c.h.b16 %v945
  %v3615 = vunpack.c.l.b16 %v946
  %v3616 = vunpack.c.l.b16 %v947
  %v3617 = vunpack.c.h.b16 %v947
  %v3618 = vunpack.c.l.b16 %v948
  %v3619 = vunpack.c.l.b16 %v949
  %v3620 = vunpack.c.h.b16 %v949
  %v3621 = vunpack.c.l.b16 %v950
  %v3622 = vunpack.c.l.b16 %v951
  %v3623 = vunpack.c.h.b16 %v951
  %v3624 = vunpack.c.l.b16 %v952
  %v3625 = vunpack.c.l.b16 %v953
  %v3626 = vunpack.c.h.b16 %v953
  %v3627 = vunpack.c.l.b16 %v954
  %v3628 = vunpack.c.l.b16 %v955
  %v3629 = vunpack.c.h.b16 %v955
  %v3630 = vunpack.c.l.b16 %v956
  %v3631 = vunpack.c.l.b16 %v957
  %v3632 = vunpack.c.h.b16 %v957
  %v3633 = vunpack.c.l.b16 %v958
  %v3634 = vunpack.c.l.b16 %v959
  %v3635 = vunpack.c.h.b16 %v959
  %v3636 = vunpack.c.l.b16 %v960
  %v3637 = vunpack.c.l.b16 %v961
  %v3638 = vunpack.c.h.b16 %v961
  %v3639 = vunpack.c.l.b16 %v962
  %v3640 = vunpack.c.l.b16 %v963
  %v3641 = vunpack.c.h.b16 %v963
  %v3642 = vunpack.c.l.b16 %v964
  %v3643 = vunpack.c.l.b16 %v965
  %v3644 = vunpack.c.h.b16 %v965
  %v3645 = vunpack.c.l.b16 %v966
  %v3646 = vunpack.c.l.b16 %v967
  %v3647 = vunpack.c.h.b16 %v967
  %v3648 = vunpack.c.l.b16 %v968
  %v3649 = vunpack.c.l.b16 %v969
  %v3650 = vunpack.c.h.b16 %v969
  %v3651 = vunpack.c.l.b16 %v970
  %v3652 = vunpack.c.l.b16 %v971
  %v3653 = vunpack.c.h.b16 %v971
  %v3654 = vunpack.c.l.b16 %v972
  %v3655 = vunpack.c.l.b16 %v973
  %v3656 = vunpack.c.h.b16 %v973
  %v3657 = vunpack.c.l.b16 %v974
  %v3658 = vunpack.c.l.b16 %v975
  %v3659 = vunpack.c.h.b16 %v975
  %v3660 = vunpack.c.l.b16 %v976
  %v3661 = vunpack.c.l.b16 %v977
  %v3662 = vunpack.c.h.b16 %v977
  %v3663 = vunpack.c.l.b16 %v978
  %v3664 = vunpack.c.l.b16 %v979
  %v3665 = vunpack.c.h.b16 %v979
  %v3666 = vunpack.c.l.b16 %v980
  %v3667 = vunpack.c.l.b16 %v981
  %v3668 = vunpack.c.h.b16 %v981
  %v3669 = vunpack.c.l.b16 %v982
  %v3670 = vunpack.c.l.b16 %v983
  %v3671 = vunpack.c.h.b16 %v983
  %v3672 = vunpack.c.l.b16 %v984
  %v3673 = vunpack.c.l.b16 %v985
  %v3674 = vunpack.c.h.b16 %v985
  %v3675 = vunpack.c.l.b16 %v986
  %v3676 = vunpack.c.l.b16 %v987
  %v3677 = vunpack.c.h.b16 %v987
  %v3678 = vunpack.c.l.b16 %v988
  %v3679 = vunpack.c.l.b16 %v989
  %v3680 = vunpack.c.h.b16 %v989
  %v3681 = vunpack.c.l.b16 %v990
  %v3682 = vunpack.c.l.b16 %v991
  %v3683 = vunpack.c.h.b16 %v991
  %v3684 = vunpack.c.l.b16 %v992
  %v3685 = vunpack.c.l.b16 %v993
  %v3686 = vunpack.c.h.b16 %v993
  %v3687 = vunpack.c.l.b16 %v994
  %v3688 = vunpack.c.l.b16 %v995
  %v3689 = vunpack.c.h.b16 %v995
  %v3690 = vunpack.c.l.b16 %v996
  %v3691 = vunpack.c.l.b16 %v997
  %v3692 = vunpack.c.h.b16 %v997
  %v3693 = vunpack.c.l.b16 %v998
  %v3694 = vunpack.c.l.b16 %v999
  %v3695 = vunpack.c.h.b16 %v999
  %v3696 = vunpack.c.l.b16 %v1000
  %v3697 = vunpack.c.l.b16 %v1001
  %v3698 = vunpack.c.h.b16 %v1001
  %v3699 = vunpack.c.l.b16 %v1002
  %v3700 = vunpack.c.l.b16 %v1003
  %v3701 = vunpack.c.h.b16 %v1003
  %v3702 = vunpack.c.l.b16 %v1004
  %v3703 = vunpack.c.l.b16 %v1005
  %v3704 = vunpack.c.h.b16 %v1005
  %v3705 = vunpack.c.l.b16 %v1006
  %v3706 = vunpack.c.l.b16 %v1007
  %v3707 = vunpack.c.h.b16 %v1007
  %v3708 = vunpack.c.l.b16 %v1008
  %v3709 = vunpack.c.l.b16 %v1009
  %v3710 = vunpack.c.h.b16 %v1009
  %v3711 = vunpack.c.l.b16 %v1010
  %v3712 = vunpack.c.l.b16 %v1011
  %v3713 = vunpack.c.h.b16 %v1011
  %v3714 = vunpack.c.l.b16 %v1012
  %v3715 = vunpack.c.l.b16 %v1013
  %v3716 = vunpack.c.h.b16 %v1013
  %v3717 = vunpack.c.l.b16 %v1014
  %v3718 = vunpack.c.l.b16 %v1015
  %v3719 = vunpack.c.h.b16 %v1015
  %v3720 = vunpack.c.l.b16 %v1016
  %v3721 = vunpack.c.l.b16 %v1017
  %v3722 = vunpack.c.h.b16 %v1017
  %v3723 = vunpack.c.l.b16 %v1018
  %v3724 = vunpack.c.l.b16 %v1019
  %v3725 = vunpack.c.h.b16 %v1019
  %v3726 = vunpack.c.l.b16 %v1020
  %v3727 = vunpack.c.l.b16 %v1021
  %v3728 = vunpack.c.h.b16 %v1021
  %v3729 = vunpack.c.l.b16 %v1022
  %v3730 = vunpack.c.l.b16 %v1023
  %v3731 = vunpack.c.h.b16 %v1023
  %v3732 = vunpack.c.l.b16 %v1024
  %v3733 = vunpack.c.l.b16 %v1025
  %v3734 = vunpack.c.h.b16 %v1025
  %v3735 = vunpack.c.l.b16 %v1026
  %v3736 = vunpack.c.l.b16 %v1027
  %v3737 = vunpack.c.h.b16 %v1027
  %v3738 = vunpack.c.l.b16 %v1028
  %v3739 = vunpack.c.l.b16 %v1029
  %v3740 = vunpack.c.h.b16 %v1029
  %v3741 = vunpack.c.l.b16 %v1030
  %v3742 = vunpack.c.l.b16 %v1031
  %v3743 = vunpack.c.h.b16 %v1031
  %v3744 = vunpack.c.l.b16 %v1032
  %v3745 = vunpack.c.l.b16 %v1033
  %v3746 = vunpack.c.h.b16 %v1033
  %v3747 = vunpack.c.l.b16 %v1034
  %v3748 = vunpack.c.l.b16 %v1035
  %v3749 = vunpack.c.h.b16 %v1035
  %v3750 = vunpack.c.l.b16 %v1036
  %v3751 = vunpack.c.l.b16 %v1037
  %v3752 = vunpack.c.h.b16 %v1037
  %v3753 = vunpack.c.l.b16 %v1038
  %v3754 = vunpack.c.l.b16 %v1039
  %v3755 = vunpack.c.h.b16 %v1039
  %v3756 = vunpack.c.l.b16 %v1040
  %v3757 = vunpack.c.l.b16 %v1041
  %v3758 = vunpack.c.h.b16 %v1041
  %v3759 = vunpack.c.l.b16 %v1042
  %v3760 = vunpack.c.l.b16 %v1043
  %v3761 = vunpack.c.h.b16 %v1043
  %v3762 = vunpack.c.l.b16 %v1044
  %v3763 = vunpack.c.l.b16 %v1045
  %v3764 = vunpack.c.h.b16 %v1045
  %v3765 = vunpack.c.l.b16 %v1046
  %v3766 = vunpack.c.l.b16 %v1047
  %v3767 = vunpack.c.h.b16 %v1047
  %v3768 = vunpack.c.l.b16 %v1048
  %v3769 = vunpack.c.l.b16 %v1049
  %v3770 = vunpack.c.h.b16 %v1049
  %v3771 = vunpack.c.l.b16 %v1050
  %v3772 = vunpack.c.l.b16 %v1051
  %v3773 = vunpack.c.h.b16 %v1051
  %v3774 = vunpack.c.l.b16 %v1052
  %v3775 = vunpack.c.l.b16 %v1053
  %v3776 = vunpack.c.h.b16 %v1053
  %v3777 = vunpack.c.l.b16 %v1054
  %v3778 = vunpack.c.l.b16 %v1055
  %v3779 = vunpack.c.h.b16 %v1055
  %v3780 = vunpack.c.l.b16 %v1056
  %v3781 = vunpack.c.l.b16 %v1057
  %v3782 = vunpack.c.h.b16 %v1057
  %v3783 = vunpack.c.l.b16 %v1058
  %v3784 = vunpack.c.l.b16 %v1059
  %v3785 = vunpack.c.h.b16 %v1059
  %v3786 = vunpack.c.l.b16 %v1060
  %v3787 = vunpack.c.l.b16 %v1061
  %v3788 = vunpack.c.h.b16 %v1061
  %v3789 = vunpack.c.l.b16 %v1062
  %v3790 = vunpack.c.l.b16 %v1063
  %v3791 = vunpack.c.h.b16 %v1063
  %v3792 = vunpack.c.l.b16 %v1064
  %v3793 = vunpack.c.l.b16 %v1065
  %v3794 = vunpack.c.h.b16 %v1065
  %v3795 = vunpack.c.l.b16 %v1066
  %v3796 = vunpack.c.l.b16 %v1067
  %v3797 = vunpack.c.h.b16 %v1067
  %v3798 = vunpack.c.l.b16 %v1068
  %v3799 = vunpack.c.l.b16 %v1069
  %v3800 = vunpack.c.h.b16 %v1069
  %v3801 = vunpack.c.l.b16 %v1070
  %v3802 = vunpack.c.l.b16 %v1071
  %v3803 = vunpack.c.h.b16 %v1071
  %v3804 = vunpack.c.l.b16 %v1072
  %v3805 = vunpack.c.l.b16 %v1073
  %v3806 = vunpack.c.h.b16 %v1073
  %v3807 = vunpack.c.l.b16 %v1074
  %v3808 = vunpack.c.l.b16 %v1075
  %v3809 = vunpack.c.h.b16 %v1075
  %v3810 = vunpack.c.l.b16 %v1076
  %v3811 = vunpack.c.l.b16 %v1077
  %v3812 = vunpack.c.h.b16 %v1077
  %v3813 = vunpack.c.l.b16 %v1078
  %v3814 = vunpack.c.l.b16 %v1079
  %v3815 = vunpack.c.h.b16 %v1079
  %v3816 = vunpack.c.l.b16 %v1080
  %v3817 = vunpack.c.l.b16 %v1081
  %v3818 = vunpack.c.h.b16 %v1081
  %v3819 = vunpack.c.l.b16 %v1082
  %v3820 = vpack.c.b16 %v2287, %v2284
  %v3821 = vpack.c.b16 %v2288, %v2285
  %v3822 = vpack.c.b16 %v2289, %v2286
  %v3823 = vpack.c.b16 %v2293, %v2290
  %v3824 = vpack.c.b16 %v2294, %v2291
  %v3825 = vpack.c.b16 %v2295, %v2292
  %v3826 = vpack.c.b16 %v2299, %v2296
  %v3827 = vpack.c.b16 %v2300, %v2297
  %v3828 = vpack.c.b16 %v2301, %v2298
  %v3829 = vpack.c.b16 %v2305, %v2302
  %v3830 = vpack.c.b16 %v2306, %v2303
  %v3831 = vpack.c.b16 %v2307, %v2304
  %v3832 = vpack.c.b16 %v2311, %v2308
  %v3833 = vpack.c.b16 %v2312, %v2309
  %v3834 = vpack.c.b16 %v2313, %v2310
  %v3835 = vpack.c.b16 %v2317, %v2314
  %v3836 = vpack.c.b16 %v2318, %v2315
  %v3837 = vpack.c.b16 %v2319, %v2316
  %v3838 = vpack.c.b16 %v2323, %v2320
  %v3839 = vpack.c.b16 %v2324, %v2321
  %v3840 = vpack.c.b16 %v2325, %v2322
  %v3841 = vpack.c.b16 %v2329, %v2326
  %v3842 = vpack.c.b16 %v2330, %v2327
  %v3843 = vpack.c.b16 %v2331, %v2328
  %v3844 = vpack.c.b16 %v2335, %v2332
  %v3845 = vpack.c.b16 %v2336, %v2333
  %v3846 = vpack.c.b16 %v2337, %v2334
  %v3847 = vpack.c.b16 %v2341, %v2338
  %v3848 = vpack.c.b16 %v2342, %v2339
  %v3849 = vpack.c.b16 %v2343, %v2340
  %v3850 = vpack.c.b16 %v2347, %v2344
  %v3851 = vpack.c.b16 %v2348, %v2345
  %v3852 = vpack.c.b16 %v2349, %v2346
  %v3853 = vpack.c.b16 %v2353, %v2350
  %v3854 = vpack.c.b16 %v2354, %v2351
  %v3855 = vpack.c.b16 %v2355, %v2352
  %v3856 = vpack.c.b16 %v2359, %v2356
  %v3857 = vpack.c.b16 %v2360, %v2357
  %v3858 = vpack.c.b16 %v2361, %v2358
  %v3859 = vpack.c.b16 %v2365, %v2362
  %v3860 = vpack.c.b16 %v2366, %v2363
  %v3861 = vpack.c.b16 %v2367, %v2364
  %v3862 = vpack.c.b16 %v2371, %v2368
  %v3863 = vpack.c.b16 %v2372, %v2369
  %v3864 = vpack.c.b16 %v2373, %v2370
  %v3865 = vpack.c.b16 %v2377, %v2374
  %v3866 = vpack.c.b16 %v2378, %v2375
  %v3867 = vpack.c.b16 %v2379, %v2376
  %v3868 = vpack.c.b16 %v2383, %v2380
  %v3869 = vpack.c.b16 %v2384, %v2381
  %v3870 = vpack.c.b16 %v2385, %v2382
  %v3871 = vpack.c.b16 %v2389, %v2386
  %v3872 = vpack.c.b16 %v2390, %v2387
  %v3873 = vpack.c.b16 %v2391, %v2388
  %v3874 = vpack.c.b16 %v2395, %v2392
  %v3875 = vpack.c.b16 %v2396, %v2393
  %v3876 = vpack.c.b16 %v2397, %v2394
  %v3877 = vpack.c.b16 %v2401, %v2398
  %v3878 = vpack.c.b16 %v2402, %v2399
  %v3879 = vpack.c.b16 %v2403, %v2400
  %v3880 = vpack.c.b16 %v2407, %v2404
  %v3881 = vpack.c.b16 %v2408, %v2405
  %v3882 = vpack.c.b16 %v2409, %v2406
  %v3883 = vpack.c.b16 %v2413, %v2410
  %v3884 = vpack.c.b16 %v2414, %v2411
  %v3885 = vpack.c.b16 %v2415, %v2412
  %v3886 = vpack.c.b16 %v2419, %v2416
  %v3887 = vpack.c.b16 %v2420, %v2417
  %v3888 = vpack.c.b16 %v2421, %v2418
  %v3889 = vpack.c.b16 %v2425, %v2422
  %v3890 = vpack.c.b16 %v2426, %v2423
  %v3891 = vpack.c.b16 %v2427, %v2424
  %v3892 = vpack.c.b16 %v2431, %v2428
  %v3893 = vpack.c.b16 %v2432, %v2429
  %v3894 = vpack.c.b16 %v2433, %v2430
  %v3895 = vpack.c.b16 %v2437, %v2434
  %v3896 = vpack.c.b16 %v2438, %v2435
  %v3897 = vpack.c.b16 %v2439, %v2436
  %v3898 = vpack.c.b16 %v2443, %v2440
  %v3899 = vpack.c.b16 %v2444, %v2441
  %v3900 = vpack.c.b16 %v2445, %v2442
  %v3901 = vpack.c.b16 %v2449, %v2446
  %v3902 = vpack.c.b16 %v2450, %v2447
  %v3903 = vpack.c.b16 %v2451, %v2448
  %v3904 = vpack.c.b16 %v2455, %v2452
  %v3905 = vpack.c.b16 %v2456, %v2453
  %v3906 = vpack.c.b16 %v2457, %v2454
  %v3907 = vpack.c.b16 %v2461, %v2458
  %v3908 = vpack.c.b16 %v2462, %v2459
  %v3909 = vpack.c.b16 %v2463, %v2460
  %v3910 = vpack.c.b16 %v2467, %v2464
  %v3911 = vpack.c.b16 %v2468, %v2465
  %v3912 = vpack.c.b16 %v2469, %v2466
  %v3913 = vpack.c.b16 %v2473, %v2470
  %v3914 = vpack.c.b16 %v2474, %v2471
  %v3915 = vpack.c.b16 %v2475, %v2472
  %v3916 = vpack.c.b16 %v2479, %v2476
  %v3917 = vpack.c.b16 %v2480, %v2477
  %v3918 = vpack.c.b16 %v2481, %v2478
  %v3919 = vpack.c.b16 %v2485, %v2482
  %v3920 = vpack.c.b16 %v2486, %v2483
  %v3921 = vpack.c.b16 %v2487, %v2484
  %v3922 = vpack.c.b16 %v2491, %v2488
  %v3923 = vpack.c.b16 %v2492, %v2489
  %v3924 = vpack.c.b16 %v2493, %v2490
  %v3925 = vpack.c.b16 %v2497, %v2494
  %v3926 = vpack.c.b16 %v2498, %v2495
  %v3927 = vpack.c.b16 %v2499, %v2496
  %v3928 = vpack.c.b16 %v2503, %v2500
  %v3929 = vpack.c.b16 %v2504, %v2501
  %v3930 = vpack.c.b16 %v2505, %v2502
  %v3931 = vpack.c.b16 %v2509, %v2506
  %v3932 = vpack.c.b16 %v2510, %v2507
  %v3933 = vpack.c.b16 %v2511, %v2508
  %v3934 = vpack.c.b16 %v2515, %v2512
  %v3935 = vpack.c.b16 %v2516, %v2513
  %v3936 = vpack.c.b16 %v2517, %v2514
  %v3937 = vpack.c.b16 %v2521, %v2518
  %v3938 = vpack.c.b16 %v2522, %v2519
  %v3939 = vpack.c.b16 %v2523, %v2520
  %v3940 = vpack.c.b16 %v2527, %v2524
  %v3941 = vpack.c.b16 %v2528, %v2525
  %v3942 = vpack.c.b16 %v2529, %v2526
  %v3943 = vpack.c.b16 %v2533, %v2530
  %v3944 = vpack.c.b16 %v2534, %v2531
  %v3945 = vpack.c.b16 %v2535, %v2532
  %v3946 = vpack.c.b16 %v2539, %v2536
  %v3947 = vpack.c.b16 %v2540, %v2537
  %v3948 = vpack.c.b16 %v2541, %v2538
  %v3949 = vpack.c.b16 %v2545, %v2542
  %v3950 = vpack.c.b16 %v2546, %v2543
  %v3951 = vpack.c.b16 %v2547, %v2544
  %v3952 = vpack.c.b16 %v2551, %v2548
  %v3953 = vpack.c.b16 %v2552, %v2549
  %v3954 = vpack.c.b16 %v2553, %v2550
  %v3955 = vpack.c.b16 %v2557, %v2554
  %v3956 = vpack.c.b16 %v2558, %v2555
  %v3957 = vpack.c.b16 %v2559, %v2556
  %v3958 = vpack.c.b16 %v2563, %v2560
  %v3959 = vpack.c.b16 %v2564, %v2561
  %v3960 = vpack.c.b16 %v2565, %v2562
  %v3961 = vpack.c.b16 %v2569, %v2566
  %v3962 = vpack.c.b16 %v2570, %v2567
  %v3963 = vpack.c.b16 %v2571, %v2568
  %v3964 = vpack.c.b16 %v2575, %v2572
  %v3965 = vpack.c.b16 %v2576, %v2573
  %v3966 = vpack.c.b16 %v2577, %v2574
  %v3967 = vpack.c.b16 %v2581, %v2578
  %v3968 = vpack.c.b16 %v2582, %v2579
  %v3969 = vpack.c.b16 %v2583, %v2580
  %v3970 = vpack.c.b16 %v2587, %v2584
  %v3971 = vpack.c.b16 %v2588, %v2585
  %v3972 = vpack.c.b16 %v2589, %v2586
  %v3973 = vpack.c.b16 %v2593, %v2590
  %v3974 = vpack.c.b16 %v2594, %v2591
  %v3975 = vpack.c.b16 %v2595, %v2592
  %v3976 = vpack.c.b16 %v2599, %v2596
  %v3977 = vpack.c.b16 %v2600, %v2597
  %v3978 = vpack.c.b16 %v2601, %v2598
  %v3979 = vpack.c.b16 %v2605, %v2602
  %v3980 = vpack.c.b16 %v2606, %v2603
  %v3981 = vpack.c.b16 %v2607, %v2604
  %v3982 = vpack.c.b16 %v2611, %v2608
  %v3983 = vpack.c.b16 %v2612, %v2609
  %v3984 = vpack.c.b16 %v2613, %v2610
  %v3985 = vpack.c.b16 %v2617, %v2614
  %v3986 = vpack.c.b16 %v2618, %v2615
  %v3987 = vpack.c.b16 %v2619, %v2616
  %v3988 = vpack.c.b16 %v2623, %v2620
  %v3989 = vpack.c.b16 %v2624, %v2621
  %v3990 = vpack.c.b16 %v2625, %v2622
  %v3991 = vpack.c.b16 %v2629, %v2626
  %v3992 = vpack.c.b16 %v2630, %v2627
  %v3993 = vpack.c.b16 %v2631, %v2628
  %v3994 = vpack.c.b16 %v2635, %v2632
  %v3995 = vpack.c.b16 %v2636, %v2633
  %v3996 = vpack.c.b16 %v2637, %v2634
  %v3997 = vpack.c.b16 %v2641, %v2638
  %v3998 = vpack.c.b16 %v2642, %v2639
  %v3999 = vpack.c.b16 %v2643, %v2640
  %v4000 = vpack.c.b16 %v2647, %v2644
  %v4001 = vpack.c.b16 %v2648, %v2645
  %v4002 = vpack.c.b16 %v2649, %v2646
  %v4003 = vpack.c.b16 %v2653, %v2650
  %v4004 = vpack.c.b16 %v2654, %v2651
  %v4005 = vpack.c.b16 %v2655, %v2652
  %v4006 = vpack.c.b16 %v2659, %v2656
  %v4007 = vpack.c.b16 %v2660, %v2657
  %v4008 = vpack.c.b16 %v2661, %v2658
  %v4009 = vpack.c.b16 %v2665, %v2662
  %v4010 = vpack.c.b16 %v2666, %v2663
  %v4011 = vpack.c.b16 %v2667, %v2664
  %v4012 = vpack.c.b16 %v2671, %v2668
  %v4013 = vpack.c.b16 %v2672, %v2669
  %v4014 = vpack.c.b16 %v2673, %v2670
  %v4015 = vpack.c.b16 %v2677, %v2674
  %v4016 = vpack.c.b16 %v2678, %v2675
  %v4017 = vpack.c.b16 %v2679, %v2676
  %v4018 = vpack.c.b16 %v2683, %v2680
  %v4019 = vpack.c.b16 %v2684, %v2681
  %v4020 = vpack.c.b16 %v2685, %v2682
  %v4021 = vpack.c.b16 %v2689, %v2686
  %v4022 = vpack.c.b16 %v2690, %v2687
  %v4023 = vpack.c.b16 %v2691, %v2688
  %v4024 = vpack.c.b16 %v2695, %v2692
  %v4025 = vpack.c.b16 %v2696, %v2693
  %v4026 = vpack.c.b16 %v2697, %v2694
  %v4027 = vpack.c.b16 %v2701, %v2698
  %v4028 = vpack.c.b16 %v2702, %v2699
  %v4029 = vpack.c.b16 %v2703, %v2700
  %v4030 = vpack.c.b16 %v2707, %v2704
  %v4031 = vpack.c.b16 %v2708, %v2705
  %v4032 = vpack.c.b16 %v2709, %v2706
  %v4033 = vpack.c.b16 %v2713, %v2710
  %v4034 = vpack.c.b16 %v2714, %v2711
  %v4035 = vpack.c.b16 %v2715, %v2712
  %v4036 = vpack.c.b16 %v2719, %v2716
  %v4037 = vpack.c.b16 %v2720, %v2717
  %v4038 = vpack.c.b16 %v2721, %v2718
  %v4039 = vpack.c.b16 %v2725, %v2722
  %v4040 = vpack.c.b16 %v2726, %v2723
  %v4041 = vpack.c.b16 %v2727, %v2724
  %v4042 = vpack.c.b16 %v2731, %v2728
  %v4043 = vpack.c.b16 %v2732, %v2729
  %v4044 = vpack.c.b16 %v2733, %v2730
  %v4045 = vpack.c.b16 %v2737, %v2734
  %v4046 = vpack.c.b16 %v2738, %v2735
  %v4047 = vpack.c.b16 %v2739, %v2736
  %v4048 = vpack.c.b16 %v2743, %v2740
  %v4049 = vpack.c.b16 %v2744, %v2741
  %v4050 = vpack.c.b16 %v2745, %v2742
  %v4051 = vpack.c.b16 %v2749, %v2746
  %v4052 = vpack.c.b16 %v2750, %v2747
  %v4053 = vpack.c.b16 %v2751, %v2748
  %v4054 = vpack.c.b16 %v2755, %v2752
  %v4055 = vpack.c.b16 %v2756, %v2753
  %v4056 = vpack.c.b16 %v2757, %v2754
  %v4057 = vpack.c.b16 %v2761, %v2758
  %v4058 = vpack.c.b16 %v2762, %v2759
  %v4059 = vpack.c.b16 %v2763, %v2760
  %v4060 = vpack.c.b16 %v2767, %v2764
  %v4061 = vpack.c.b16 %v2768, %v2765
  %v4062 = vpack.c.b16 %v2769, %v2766
  %v4063 = vpack.c.b16 %v2773, %v2770
  %v4064 = vpack.c.b16 %v2774, %v2771
  %v4065 = vpack.c.b16 %v2775, %v2772
  %v4066 = vpack.c.b16 %v2779, %v2776
  %v4067 = vpack.c.b16 %v2780, %v2777
  %v4068 = vpack.c.b16 %v2781, %v2778
  %v4069 = vpack.c.b16 %v2785, %v2782
  %v4070 = vpack.c.b16 %v2786, %v2783
  %v4071 = vpack.c.b16 %v2787, %v2784
  %v4072 = vpack.c.b16 %v2791, %v2788
  %v4073 = vpack.c.b16 %v2792, %v2789
  %v4074 = vpack.c.b16 %v2793, %v2790
  %v4075 = vpack.c.b16 %v2797, %v2794
  %v4076 = vpack.c.b16 %v2798, %v2795
  %v4077 = vpack.c.b16 %v2799, %v2796
  %v4078 = vpack.c.b16 %v2803, %v2800
  %v4079 = vpack.c.b16 %v2804, %v2801
  %v4080 = vpack.c.b16 %v2805, %v2802
  %v4081 = vpack.c.b16 %v2809, %v2806
  %v4082 = vpack.c.b16 %v2810, %v2807
  %v4083 = vpack.c.b16 %v2811, %v2808
  %v4084 = vpack.c.b16 %v2815, %v2812
  %v4085 = vpack.c.b16 %v2816, %v2813
  %v4086 = vpack.c.b16 %v2817, %v2814
  %v4087 = vpack.c.b16 %v2821, %v2818
  %v4088 = vpack.c.b16 %v2822, %v2819
  %v4089 = vpack.c.b16 %v2823, %v2820
  %v4090 = vpack.c.b16 %v2827, %v2824
  %v4091 = vpack.c.b16 %v2828, %v2825
  %v4092 = vpack.c.b16 %v2829, %v2826
  %v4093 = vpack.c.b16 %v2833, %v2830
  %v4094 = vpack.c.b16 %v2834, %v2831
  %v4095 = vpack.c.b16 %v2835, %v2832
  %v4096 = vpack.c.b16 %v2839, %v2836
  %v4097 = vpack.c.b16 %v2840, %v2837
  %v4098 = vpack.c.b16 %v2841, %v2838
  %v4099 = vpack.c.b16 %v2845, %v2842
  %v4100 = vpack.c.b16 %v2846, %v2843
  %v4101 = vpack.c.b16 %v2847, %v2844
  %v4102 = vpack.c.b16 %v2851, %v2848
  %v4103 = vpack.c.b16 %v2852, %v2849
  %v4104 = vpack.c.b16 %v2853, %v2850
  %v4105 = vpack.c.b16 %v2857, %v2854
  %v4106 = vpack.c.b16 %v2858, %v2855
  %v4107 = vpack.c.b16 %v2859, %v2856
  %v4108 = vpack.c.b16 %v2863, %v2860
  %v4109 = vpack.c.b16 %v2864, %v2861
  %v4110 = vpack.c.b16 %v2865, %v2862
  %v4111 = vpack.c.b16 %v2869, %v2866
  %v4112 = vpack.c.b16 %v2870, %v2867
  %v4113 = vpack.c.b16 %v2871, %v2868
  %v4114 = vpack.c.b16 %v2875, %v2872
  %v4115 = vpack.c.b16 %v2876, %v2873
  %v4116 = vpack.c.b16 %v2877, %v2874
  %v4117 = vpack.c.b16 %v2881, %v2878
  %v4118 = vpack.c.b16 %v2882, %v2879
  %v4119 = vpack.c.b16 %v2883, %v2880
  %v4120 = vpack.c.b16 %v2887, %v2884
  %v4121 = vpack.c.b16 %v2888, %v2885
  %v4122 = vpack.c.b16 %v2889, %v2886
  %v4123 = vpack.c.b16 %v2893, %v2890
  %v4124 = vpack.c.b16 %v2894, %v2891
  %v4125 = vpack.c.b16 %v2895, %v2892
  %v4126 = vpack.c.b16 %v2899, %v2896
  %v4127 = vpack.c.b16 %v2900, %v2897
  %v4128 = vpack.c.b16 %v2901, %v2898
  %v4129 = vpack.c.b16 %v2905, %v2902
  %v4130 = vpack.c.b16 %v2906, %v2903
  %v4131 = vpack.c.b16 %v2907, %v2904
  %v4132 = vpack.c.b16 %v2911, %v2908
  %v4133 = vpack.c.b16 %v2912, %v2909
  %v4134 = vpack.c.b16 %v2913, %v2910
  %v4135 = vpack.c.b16 %v2917, %v2914
  %v4136 = vpack.c.b16 %v2918, %v2915
  %v4137 = vpack.c.b16 %v2919, %v2916
  %v4138 = vpack.c.b16 %v2923, %v2920
  %v4139 = vpack.c.b16 %v2924, %v2921
  %v4140 = vpack.c.b16 %v2925, %v2922
  %v4141 = vpack.c.b16 %v2929, %v2926
  %v4142 = vpack.c.b16 %v2930, %v2927
  %v4143 = vpack.c.b16 %v2931, %v2928
  %v4144 = vpack.c.b16 %v2935, %v2932
  %v4145 = vpack.c.b16 %v2936, %v2933
  %v4146 = vpack.c.b16 %v2937, %v2934
  %v4147 = vpack.c.b16 %v2941, %v2938
  %v4148 = vpack.c.b16 %v2942, %v2939
  %v4149 = vpack.c.b16 %v2943, %v2940
  %v4150 = vpack.c.b16 %v2947, %v2944
  %v4151 = vpack.c.b16 %v2948, %v2945
  %v4152 = vpack.c.b16 %v2949, %v2946
  %v4153 = vpack.c.b16 %v2953, %v2950
  %v4154 = vpack.c.b16 %v2954, %v2951
  %v4155 = vpack.c.b16 %v2955, %v2952
  %v4156 = vpack.c.b16 %v2959, %v2956
  %v4157 = vpack.c.b16 %v2960, %v2957
  %v4158 = vpack.c.b16 %v2961, %v2958
  %v4159 = vpack.c.b16 %v2965, %v2962
  %v4160 = vpack.c.b16 %v2966, %v2963
  %v4161 = vpack.c.b16 %v2967, %v2964
  %v4162 = vpack.c.b16 %v2971, %v2968
  %v4163 = vpack.c.b16 %v2972, %v2969
  %v4164 = vpack.c.b16 %v2973, %v2970
  %v4165 = vpack.c.b16 %v2977, %v2974
  %v4166 = vpack.c.b16 %v2978, %v2975
  %v4167 = vpack.c.b16 %v2979, %v2976
  %v4168 = vpack.c.b16 %v2983, %v2980
  %v4169 = vpack.c.b16 %v2984, %v2981
  %v4170 = vpack.c.b16 %v2985, %v2982
  %v4171 = vpack.c.b16 %v2989, %v2986
  %v4172 = vpack.c.b16 %v2990, %v2987
  %v4173 = vpack.c.b16 %v2991, %v2988
  %v4174 = vpack.c.b16 %v2995, %v2992
  %v4175 = vpack.c.b16 %v2996, %v2993
  %v4176 = vpack.c.b16 %v2997, %v2994
  %v4177 = vpack.c.b16 %v3001, %v2998
  %v4178 = vpack.c.b16 %v3002, %v2999
  %v4179 = vpack.c.b16 %v3003, %v3000
  %v4180 = vpack.c.b16 %v3007, %v3004
  %v4181 = vpack.c.b16 %v3008, %v3005
  %v4182 = vpack.c.b16 %v3009, %v3006
  %v4183 = vpack.c.b16 %v3013, %v3010
  %v4184 = vpack.c.b16 %v3014, %v3011
  %v4185 = vpack.c.b16 %v3015, %v3012
  %v4186 = vpack.c.b16 %v3019, %v3016
  %v4187 = vpack.c.b16 %v3020, %v3017
  %v4188 = vpack.c.b16 %v3021, %v3018
  %v4189 = vpack.c.b16 %v3025, %v3022
  %v4190 = vpack.c.b16 %v3026, %v3023
  %v4191 = vpack.c.b16 %v3027, %v3024
  %v4192 = vpack.c.b16 %v3031, %v3028
  %v4193 = vpack.c.b16 %v3032, %v3029
  %v4194 = vpack.c.b16 %v3033, %v3030
  %v4195 = vpack.c.b16 %v3037, %v3034
  %v4196 = vpack.c.b16 %v3038, %v3035
  %v4197 = vpack.c.b16 %v3039, %v3036
  %v4198 = vpack.c.b16 %v3043, %v3040
  %v4199 = vpack.c.b16 %v3044, %v3041
  %v4200 = vpack.c.b16 %v3045, %v3042
  %v4201 = vpack.c.b16 %v3049, %v3046
  %v4202 = vpack.c.b16 %v3050, %v3047
  %v4203 = vpack.c.b16 %v3051, %v3048
  %v4204 = vpack.c.b16 %v3055, %v3052
  %v4205 = vpack.c.b16 %v3056, %v3053
  %v4206 = vpack.c.b16 %v3057, %v3054
  %v4207 = vpack.c.b16 %v3061, %v3058
  %v4208 = vpack.c.b16 %v3062, %v3059
  %v4209 = vpack.c.b16 %v3063, %v3060
  %v4210 = vpack.c.b16 %v3067, %v3064
  %v4211 = vpack.c.b16 %v3068, %v3065
  %v4212 = vpack.c.b16 %v3069, %v3066
  %v4213 = vpack.c.b16 %v3073, %v3070
  %v4214 = vpack.c.b16 %v3074, %v3071
  %v4215 = vpack.c.b16 %v3075, %v3072
  %v4216 = vpack.c.b16 %v3079, %v3076
  %v4217 = vpack.c.b16 %v3080, %v3077
  %v4218 = vpack.c.b16 %v3081, %v3078
  %v4219 = vpack.c.b16 %v3085, %v3082
  %v4220 = vpack.c.b16 %v3086, %v3083
  %v4221 = vpack.c.b16 %v3087, %v3084
  %v4222 = vpack.c.b16 %v3091, %v3088
  %v4223 = vpack.c.b16 %v3092, %v3089
  %v4224 = vpack.c.b16 %v3093, %v3090
  %v4225 = vpack.c.b16 %v3097, %v3094
  %v4226 = vpack.c.b16 %v3098, %v3095
  %v4227 = vpack.c.b16 %v3099, %v3096
  %v4228 = vpack.c.b16 %v3103, %v3100
  %v4229 = vpack.c.b16 %v3104, %v3101
  %v4230 = vpack.c.b16 %v3105, %v3102
  %v4231 = vpack.c.b16 %v3109, %v3106
  %v4232 = vpack.c.b16 %v3110, %v3107
  %v4233 = vpack.c.b16 %v3111, %v3108
  %v4234 = vpack.c.b16 %v3115, %v3112
  %v4235 = vpack.c.b16 %v3116, %v3113
  %v4236 = vpack.c.b16 %v3117, %v3114
  %v4237 = vpack.c.b16 %v3121, %v3118
  %v4238 = vpack.c.b16 %v3122, %v3119
  %v4239 = vpack.c.b16 %v3123, %v3120
  %v4240 = vpack.c.b16 %v3127, %v3124
  %v4241 = vpack.c.b16 %v3128, %v3125
  %v4242 = vpack.c.b16 %v3129, %v3126
  %v4243 = vpack.c.b16 %v3133, %v3130
  %v4244 = vpack.c.b16 %v3134, %v3131
  %v4245 = vpack.c.b16 %v3135, %v3132
  %v4246 = vpack.c.b16 %v3139, %v3136
  %v4247 = vpack.c.b16 %v3140, %v3137
  %v4248 = vpack.c.b16 %v3141, %v3138
  %v4249 = vpack.c.b16 %v3145, %v3142
  %v4250 = vpack.c.b16 %v3146, %v3143
  %v4251 = vpack.c.b16 %v3147, %v3144
  %v4252 = vpack.c.b16 %v3151, %v3148
  %v4253 = vpack.c.b16 %v3152, %v3149
  %v4254 = vpack.c.b16 %v3153, %v3150
  %v4255 = vpack.c.b16 %v3157, %v3154
  %v4256 = vpack.c.b16 %v3158, %v3155
  %v4257 = vpack.c.b16 %v3159, %v3156
  %v4258 = vpack.c.b16 %v3163, %v3160
  %v4259 = vpack.c.b16 %v3164, %v3161
  %v4260 = vpack.c.b16 %v3165, %v3162
  %v4261 = vpack.c.b16 %v3169, %v3166
  %v4262 = vpack.c.b16 %v3170, %v3167
  %v4263 = vpack.c.b16 %v3171, %v3168
  %v4264 = vpack.c.b16 %v3175, %v3172
  %v4265 = vpack.c.b16 %v3176, %v3173
  %v4266 = vpack.c.b16 %v3177, %v3174
  %v4267 = vpack.c.b16 %v3181, %v3178
  %v4268 = vpack.c.b16 %v3182, %v3179
  %v4269 = vpack.c.b16 %v3183, %v3180
  %v4270 = vpack.c.b16 %v3187, %v3184
  %v4271 = vpack.c.b16 %v3188, %v3185
  %v4272 = vpack.c.b16 %v3189, %v3186
  %v4273 = vpack.c.b16 %v3193, %v3190
  %v4274 = vpack.c.b16 %v3194, %v3191
  %v4275 = vpack.c.b16 %v3195, %v3192
  %v4276 = vpack.c.b16 %v3199, %v3196
  %v4277 = vpack.c.b16 %v3200, %v3197
  %v4278 = vpack.c.b16 %v3201, %v3198
  %v4279 = vpack.c.b16 %v3205, %v3202
  %v4280 = vpack.c.b16 %v3206, %v3203
  %v4281 = vpack.c.b16 %v3207, %v3204
  %v4282 = vpack.c.b16 %v3211, %v3208
  %v4283 = vpack.c.b16 %v3212, %v3209
  %v4284 = vpack.c.b16 %v3213, %v3210
  %v4285 = vpack.c.b16 %v3217, %v3214
  %v4286 = vpack.c.b16 %v3218, %v3215
  %v4287 = vpack.c.b16 %v3219, %v3216
  %v4288 = vpack.c.b16 %v3223, %v3220
  %v4289 = vpack.c.b16 %v3224, %v3221
  %v4290 = vpack.c.b16 %v3225, %v3222
  %v4291 = vpack.c.b16 %v3229, %v3226
  %v4292 = vpack.c.b16 %v3230, %v3227
  %v4293 = vpack.c.b16 %v3231, %v3228
  %v4294 = vpack.c.b16 %v3235, %v3232
  %v4295 = vpack.c.b16 %v3236, %v3233
  %v4296 = vpack.c.b16 %v3237, %v3234
  %v4297 = vpack.c.b16 %v3241, %v3238
  %v4298 = vpack.c.b16 %v3242, %v3239
  %v4299 = vpack.c.b16 %v3243, %v3240
  %v4300 = vpack.c.b16 %v3247, %v3244
  %v4301 = vpack.c.b16 %v3248, %v3245
  %v4302 = vpack.c.b16 %v3249, %v3246
  %v4303 = vpack.c.b16 %v3253, %v3250
  %v4304 = vpack.c.b16 %v3254, %v3251
  %v4305 = vpack.c.b16 %v3255, %v3252
  %v4306 = vpack.c.b16 %v3259, %v3256
  %v4307 = vpack.c.b16 %v3260, %v3257
  %v4308 = vpack.c.b16 %v3261, %v3258
  %v4309 = vpack.c.b16 %v3265, %v3262
  %v4310 = vpack.c.b16 %v3266, %v3263
  %v4311 = vpack.c.b16 %v3267, %v3264
  %v4312 = vpack.c.b16 %v3271, %v3268
  %v4313 = vpack.c.b16 %v3272, %v3269
  %v4314 = vpack.c.b16 %v3273, %v3270
  %v4315 = vpack.c.b16 %v3277, %v3274
  %v4316 = vpack.c.b16 %v3278, %v3275
  %v4317 = vpack.c.b16 %v3279, %v3276
  %v4318 = vpack.c.b16 %v3283, %v3280
  %v4319 = vpack.c.b16 %v3284, %v3281
  %v4320 = vpack.c.b16 %v3285, %v3282
  %v4321 = vpack.c.b16 %v3289, %v3286
  %v4322 = vpack.c.b16 %v3290, %v3287
  %v4323 = vpack.c.b16 %v3291, %v3288
  %v4324 = vpack.c.b16 %v3295, %v3292
  %v4325 = vpack.c.b16 %v3296, %v3293
  %v4326 = vpack.c.b16 %v3297, %v3294
  %v4327 = vpack.c.b16 %v3301, %v3298
  %v4328 = vpack.c.b16 %v3302, %v3299
  %v4329 = vpack.c.b16 %v3303, %v3300
  %v4330 = vpack.c.b16 %v3307, %v3304
  %v4331 = vpack.c.b16 %v3308, %v3305
  %v4332 = vpack.c.b16 %v3309, %v3306
  %v4333 = vpack.c.b16 %v3313, %v3310
  %v4334 = vpack.c.b16 %v3314, %v3311
  %v4335 = vpack.c.b16 %v3315, %v3312
  %v4336 = vpack.c.b16 %v3319, %v3316
  %v4337 = vpack.c.b16 %v3320, %v3317
  %v4338 = vpack.c.b16 %v3321, %v3318
  %v4339 = vpack.c.b16 %v3325, %v3322
  %v4340 = vpack.c.b16 %v3326, %v3323
  %v4341 = vpack.c.b16 %v3327, %v3324
  %v4342 = vpack.c.b16 %v3331, %v3328
  %v4343 = vpack.c.b16 %v3332, %v3329
  %v4344 = vpack.c.b16 %v3333, %v3330
  %v4345 = vpack.c.b16 %v3337, %v3334
  %v4346 = vpack.c.b16 %v3338, %v3335
  %v4347 = vpack.c.b16 %v3339, %v3336
  %v4348 = vpack.c.b16 %v3343, %v3340
  %v4349 = vpack.c.b16 %v3344, %v3341
  %v4350 = vpack.c.b16 %v3345, %v3342
  %v4351 = vpack.c.b16 %v3349, %v3346
  %v4352 = vpack.c.b16 %v3350, %v3347
  %v4353 = vpack.c.b16 %v3351, %v3348
  %v4354 = vpack.c.b16 %v3355, %v3352
  %v4355 = vpack.c.b16 %v3356, %v3353
  %v4356 = vpack.c.b16 %v3357, %v3354
  %v4357 = vpack.c.b16 %v3361, %v3358
  %v4358 = vpack.c.b16 %v3362, %v3359
  %v4359 = vpack.c.b16 %v3363, %v3360
  %v4360 = vpack.c.b16 %v3367, %v3364
  %v4361 = vpack.c.b16 %v3368, %v3365
  %v4362 = vpack.c.b16 %v3369, %v3366
  %v4363 = vpack.c.b16 %v3373, %v3370
  %v4364 = vpack.c.b16 %v3374, %v3371
  %v4365 = vpack.c.b16 %v3375, %v3372
  %v4366 = vpack.c.b16 %v3379, %v3376
  %v4367 = vpack.c.b16 %v3380, %v3377
  %v4368 = vpack.c.b16 %v3381, %v3378
  %v4369 = vpack.c.b16 %v3385, %v3382
  %v4370 = vpack.c.b16 %v3386, %v3383
  %v4371 = vpack.c.b16 %v3387, %v3384
  %v4372 = vpack.c.b16 %v3391, %v3388
  %v4373 = vpack.c.b16 %v3392, %v3389
  %v4374 = vpack.c.b16 %v3393, %v3390
  %v4375 = vpack.c.b16 %v3397, %v3394
  %v4376 = vpack.c.b16 %v3398, %v3395
  %v4377 = vpack.c.b16 %v3399, %v3396
  %v4378 = vpack.c.b16 %v3403, %v3400
  %v4379 = vpack.c.b16 %v3404, %v3401
  %v4380 = vpack.c.b16 %v3405, %v3402
  %v4381 = vpack.c.b16 %v3409, %v3406
  %v4382 = vpack.c.b16 %v3410, %v3407
  %v4383 = vpack.c.b16 %v3411, %v3408
  %v4384 = vpack.c.b16 %v3415, %v3412
  %v4385 = vpack.c.b16 %v3416, %v3413
  %v4386 = vpack.c.b16 %v3417, %v3414
  %v4387 = vpack.c.b16 %v3421, %v3418
  %v4388 = vpack.c.b16 %v3422, %v3419
  %v4389 = vpack.c.b16 %v3423, %v3420
  %v4390 = vpack.c.b16 %v3427, %v3424
  %v4391 = vpack.c.b16 %v3428, %v3425
  %v4392 = vpack.c.b16 %v3429, %v3426
  %v4393 = vpack.c.b16 %v3433, %v3430
  %v4394 = vpack.c.b16 %v3434, %v3431
  %v4395 = vpack.c.b16 %v3435, %v3432
  %v4396 = vpack.c.b16 %v3439, %v3436
  %v4397 = vpack.c.b16 %v3440, %v3437
  %v4398 = vpack.c.b16 %v3441, %v3438
  %v4399 = vpack.c.b16 %v3445, %v3442
  %v4400 = vpack.c.b16 %v3446, %v3443
  %v4401 = vpack.c.b16 %v3447, %v3444
  %v4402 = vpack.c.b16 %v3451, %v3448
  %v4403 = vpack.c.b16 %v3452, %v3449
  %v4404 = vpack.c.b16 %v3453, %v3450
  %v4405 = vpack.c.b16 %v3457, %v3454
  %v4406 = vpack.c.b16 %v3458, %v3455
  %v4407 = vpack.c.b16 %v3459, %v3456
  %v4408 = vpack.c.b16 %v3463, %v3460
  %v4409 = vpack.c.b16 %v3464, %v3461
  %v4410 = vpack.c.b16 %v3465, %v3462
  %v4411 = vpack.c.b16 %v3469, %v3466
  %v4412 = vpack.c.b16 %v3470, %v3467
  %v4413 = vpack.c.b16 %v3471, %v3468
  %v4414 = vpack.c.b16 %v3475, %v3472
  %v4415 = vpack.c.b16 %v3476, %v3473
  %v4416 = vpack.c.b16 %v3477, %v3474
  %v4417 = vpack.c.b16 %v3481, %v3478
  %v4418 = vpack.c.b16 %v3482, %v3479
  %v4419 = vpack.c.b16 %v3483, %v3480
  %v4420 = vpack.c.b16 %v3487, %v3484
  %v4421 = vpack.c.b16 %v3488, %v3485
  %v4422 = vpack.c.b16 %v3489, %v3486
  %v4423 = vpack.c.b16 %v3493, %v3490
  %v4424 = vpack.c.b16 %v3494, %v3491
  %v4425 = vpack.c.b16 %v3495, %v3492
  %v4426 = vpack.c.b16 %v3499, %v3496
  %v4427 = vpack.c.b16 %v3500, %v3497
  %v4428 = vpack.c.b16 %v3501, %v3498
  %v4429 = vpack.c.b16 %v3505, %v3502
  %v4430 = vpack.c.b16 %v3506, %v3503
  %v4431 = vpack.c.b16 %v3507, %v3504
  %v4432 = vpack.c.b16 %v3511, %v3508
  %v4433 = vpack.c.b16 %v3512, %v3509
  %v4434 = vpack.c.b16 %v3513, %v3510
  %v4435 = vpack.c.b16 %v3517, %v3514
  %v4436 = vpack.c.b16 %v3518, %v3515
  %v4437 = vpack.c.b16 %v3519, %v3516
  %v4438 = vpack.c.b16 %v3523, %v3520
  %v4439 = vpack.c.b16 %v3524, %v3521
  %v4440 = vpack.c.b16 %v3525, %v3522
  %v4441 = vpack.c.b16 %v3529, %v3526
  %v4442 = vpack.c.b16 %v3530, %v3527
  %v4443 = vpack.c.b16 %v3531, %v3528
  %v4444 = vpack.c.b16 %v3535, %v3532
  %v4445 = vpack.c.b16 %v3536, %v3533
  %v4446 = vpack.c.b16 %v3537, %v3534
  %v4447 = vpack.c.b16 %v3541, %v3538
  %v4448 = vpack.c.b16 %v3542, %v3539
  %v4449 = vpack.c.b16 %v3543, %v3540
  %v4450 = vpack.c.b16 %v3547, %v3544
  %v4451 = vpack.c.b16 %v3548, %v3545
  %v4452 = vpack.c.b16 %v3549, %v3546
  %v4453 = vpack.c.b16 %v3553, %v3550
  %v4454 = vpack.c.b16 %v3554, %v3551
  %v4455 = vpack.c.b16 %v3555, %v3552
  %v4456 = vpack.c.b16 %v3559, %v3556
  %v4457 = vpack.c.b16 %v3560, %v3557
  %v4458 = vpack.c.b16 %v3561, %v3558
  %v4459 = vpack.c.b16 %v3565, %v3562
  %v4460 = vpack.c.b16 %v3566, %v3563
  %v4461 = vpack.c.b16 %v3567, %v3564
  %v4462 = vpack.c.b16 %v3571, %v3568
  %v4463 = vpack.c.b16 %v3572, %v3569
  %v4464 = vpack.c.b16 %v3573, %v3570
  %v4465 = vpack.c.b16 %v3577, %v3574
  %v4466 = vpack.c.b16 %v3578, %v3575
  %v4467 = vpack.c.b16 %v3579, %v3576
  %v4468 = vpack.c.b16 %v3583, %v3580
  %v4469 = vpack.c.b16 %v3584, %v3581
  %v4470 = vpack.c.b16 %v3585, %v3582
  %v4471 = vpack.c.b16 %v3589, %v3586
  %v4472 = vpack.c.b16 %v3590, %v3587
  %v4473 = vpack.c.b16 %v3591, %v3588
  %v4474 = vpack.c.b16 %v3595, %v3592
  %v4475 = vpack.c.b16 %v3596, %v3593
  %v4476 = vpack.c.b16 %v3597, %v3594
  %v4477 = vpack.c.b16 %v3601, %v3598
  %v4478 = vpack.c.b16 %v3602, %v3599
  %v4479 = vpack.c.b16 %v3603, %v3600
  %v4480 = vpack.c.b16 %v3607, %v3604
  %v4481 = vpack.c.b16 %v3608, %v3605
  %v4482 = vpack.c.b16 %v3609, %v3606
  %v4483 = vpack.c.b16 %v3613, %v3610
  %v4484 = vpack.c.b16 %v3614, %v3611
  %v4485 = vpack.c.b16 %v3615, %v3612
  %v4486 = vpack.c.b16 %v3619, %v3616
  %v4487 = vpack.c.b16 %v3620, %v3617
  %v4488 = vpack.c.b16 %v3621, %v3618
  %v4489 = vpack.c.b16 %v3625, %v3622
  %v4490 = vpack.c.b16 %v3626, %v3623
  %v4491 = vpack.c.b16 %v3627, %v3624
  %v4492 = vpack.c.b16 %v3631, %v3628
  %v4493 = vpack.c.b16 %v3632, %v3629
  %v4494 = vpack.c.b16 %v3633, %v3630
  %v4495 = vpack.c.b16 %v3637, %v3634
  %v4496 = vpack.c.b16 %v3638, %v3635
  %v4497 = vpack.c.b16 %v3639, %v3636
  %v4498 = vpack.c.b16 %v3643, %v3640
  %v4499 = vpack.c.b16 %v3644, %v3641
  %v4500 = vpack.c.b16 %v3645, %v3642
  %v4501 = vpack.c.b16 %v3649, %v3646
  %v4502 = vpack.c.b16 %v3650, %v3647
  %v4503 = vpack.c.b16 %v3651, %v3648
  %v4504 = vpack.c.b16 %v3655, %v3652
  %v4505 = vpack.c.b16 %v3656, %v3653
  %v4506 = vpack.c.b16 %v3657, %v3654
  %v4507 = vpack.c.b16 %v3661, %v3658
  %v4508 = vpack.c.b16 %v3662, %v3659
  %v4509 = vpack.c.b16 %v3663, %v3660
  %v4510 = vpack.c.b16 %v3667, %v3664
  %v4511 = vpack.c.b16 %v3668, %v3665
  %v4512 = vpack.c.b16 %v3669, %v3666
  %v4513 = vpack.c.b16 %v3673, %v3670
  %v4514 = vpack.c.b16 %v3674, %v3671
  %v4515 = vpack.c.b16 %v3675, %v3672
  %v4516 = vpack.c.b16 %v3679, %v3676
  %v4517 = vpack.c.b16 %v3680, %v3677
  %v4518 = vpack.c.b16 %v3681, %v3678
  %v4519 = vpack.c.b16 %v3685, %v3682
  %v4520 = vpack.c.b16 %v3686, %v3683
  %v4521 = vpack.c.b16 %v3687, %v3684
  %v4522 = vpack.c.b16 %v3691, %v3688
  %v4523 = vpack.c.b16 %v3692, %v3689
  %v4524 = vpack.c.b16 %v3693, %v3690
  %v4525 = vpack.c.b16 %v3697, %v3694
  %v4526 = vpack.c.b16 %v3698, %v3695
  %v4527 = vpack.c.b16 %v3699, %v3696
  %v4528 = vpack.c.b16 %v3703, %v3700
  %v4529 = vpack.c.b16 %v3704, %v3701
  %v4530 = vpack.c.b16 %v3705, %v3702
  %v4531 = vpack.c.b16 %v3709, %v3706
  %v4532 = vpack.c.b16 %v3710, %v3707
  %v4533 = vpack.c.b16 %v3711, %v3708
  %v4534 = vpack.c.b16 %v3715, %v3712
  %v4535 = vpack.c.b16 %v3716, %v3713
  %v4536 = vpack.c.b16 %v3717, %v3714
  %v4537 = vpack.c.b16 %v3721, %v3718
  %v4538 = vpack.c.b16 %v3722, %v3719
  %v4539 = vpack.c.b16 %v3723, %v3720
  %v4540 = vpack.c.b16 %v3727, %v3724
  %v4541 = vpack.c.b16 %v3728, %v3725
  %v4542 = vpack.c.b16 %v3729, %v3726
  %v4543 = vpack.c.b16 %v3733, %v3730
  %v4544 = vpack.c.b16 %v3734, %v3731
  %v4545 = vpack.c.b16 %v3735, %v3732
  %v4546 = vpack.c.b16 %v3739, %v3736
  %v4547 = vpack.c.b16 %v3740, %v3737
  %v4548 = vpack.c.b16 %v3741, %v3738
  %v4549 = vpack.c.b16 %v3745, %v3742
  %v4550 = vpack.c.b16 %v3746, %v3743
  %v4551 = vpack.c.b16 %v3747, %v3744
  %v4552 = vpack.c.b16 %v3751, %v3748
  %v4553 = vpack.c.b16 %v3752, %v3749
  %v4554 = vpack.c.b16 %v3753, %v3750
  %v4555 = vpack.c.b16 %v3757, %v3754
  %v4556 = vpack.c.b16 %v3758, %v3755
  %v4557 = vpack.c.b16 %v3759, %v3756
  %v4558 = vpack.c.b16 %v3763, %v3760
  %v4559 = vpack.c.b16 %v3764, %v3761
  %v4560 = vpack.c.b16 %v3765, %v3762
  %v4561 = vpack.c.b16 %v3769, %v3766
  %v4562 = vpack.c.b16 %v3770, %v3767
  %v4563 = vpack.c.b16 %v3771, %v3768
  %v4564 = vpack.c.b16 %v3775, %v3772
  %v4565 = vpack.c.b16 %v3776, %v3773
  %v4566 = vpack.c.b16 %v3777, %v3774
  %v4567 = vpack.c.b16 %v3781, %v3778
  %v4568 = vpack.c.b16 %v3782, %v3779
  %v4569 = vpack.c.b16 %v3783, %v3780
  %v4570 = vpack.c.b16 %v3787, %v3784
  %v4571 = vpack.c.b16 %v3788, %v3785
  %v4572 = vpack.c.b16 %v3789, %v3786
  %v4573 = vpack.c.b16 %v3793, %v3790
  %v4574 = vpack.c.b16 %v3794, %v3791
  %v4575 = vpack.c.b16 %v3795, %v3792
  %v4576 = vpack.c.b16 %v3799, %v3796
  %v4577 = vpack.c.b16 %v3800, %v3797
  %v4578 = vpack.c.b16 %v3801, %v3798
  %v4579 = vpack.c.b16 %v3805, %v3802
  %v4580 = vpack.c.b16 %v3806, %v3803
  %v4581 = vpack.c.b16 %v3807, %v3804
  %v4582 = vpack.c.b16 %v3811, %v3808
  %v4583 = vpack.c.b16 %v3812, %v3809
  %v4584 = vpack.c.b16 %v3813, %v3810
  %v4585 = vpack.c.b16 %v3817, %v3814
  %v4586 = vpack.c.b16 %v3818, %v3815
  %v4587 = vpack.c.b16 %v3819, %v3816
  %5356 = vmatprep.subr.bf16.mxu0 %v3821
  %5357 = vmatpush1.bf16.msra.mxu0 %v3820
  %5358 = vmatprep.subr.bf16.mxu0 %v3824
  %5359 = vmatpush1.bf16.msra.mxu0 %v3823
  %5360 = vmatprep.subr.bf16.mxu0 %v3827
  %5361 = vmatpush1.bf16.msra.mxu0 %v3826
  %5362 = vmatprep.subr.bf16.mxu0 %v3830
  %5363 = vmatpush1.bf16.msra.mxu0 %v3829
  %5364 = vmatprep.subr.bf16.mxu0 %v3833
  %5365 = vmatpush1.bf16.msra.mxu0 %v3832
  %5366 = vmatprep.subr.bf16.mxu0 %v3836
  %5367 = vmatpush1.bf16.msra.mxu0 %v3835
  %5368 = vmatprep.subr.bf16.mxu0 %v3839
  %5369 = vmatpush1.bf16.msra.mxu0 %v3838
  %5370 = vmatprep.subr.bf16.mxu0 %v3842
  %5371 = vmatpush1.bf16.msra.mxu0 %v3841
  %5372 = vmatprep.subr.bf16.mxu0 %v3845
  %5373 = vmatpush1.bf16.msra.mxu0 %v3844
  %5374 = vmatprep.subr.bf16.mxu0 %v3848
  %5375 = vmatpush1.bf16.msra.mxu0 %v3847
  %5376 = vmatprep.subr.bf16.mxu0 %v3851
  %5377 = vmatpush1.bf16.msra.mxu0 %v3850
  %5378 = vmatprep.subr.bf16.mxu0 %v3854
  %5379 = vmatpush1.bf16.msra.mxu0 %v3853
  %5380 = vmatprep.subr.bf16.mxu0 %v3857
  %5381 = vmatpush1.bf16.msra.mxu0 %v3856
  %5382 = vmatprep.subr.bf16.mxu0 %v3860
  %5383 = vmatpush1.bf16.msra.mxu0 %v3859
  %5384 = vmatprep.subr.bf16.mxu0 %v3863
  %5385 = vmatpush1.bf16.msra.mxu0 %v3862
  %5386 = vmatprep.subr.bf16.mxu0 %v3866
  %5387 = vmatpush1.bf16.msra.mxu0 %v3865
  %5388 = vmatprep.mubr.bf16.mxu0 %v1197
  %5389 = vmatmul.mubr.bf16.gmra.mrb[0].mxu0 %v1196
  %v5390 = vpop.f32.mrb[0].mxu0
  %v5391 = vadd.f32 %v1088, %v5390
  %v5392 = vpop.f32.mrb[0].mxu0
  %v5393 = vadd.f32 %v1092, %v5392
  %v5394 = vpop.f32.mrb[0].mxu0
  %v5395 = vadd.f32 %v1088, %v5394
  %v5396 = vpop.f32.mrb[0].mxu0
  %v5397 = vadd.f32 %v1092, %v5396
  %5398 = vdwg.mxu0
  %5399 = vmatprep.subr.bf16.mxu0 %v3869
  %5400 = vmatpush1.bf16.msra.mxu0 %v3868
  %5401 = vmatprep.subr.bf16.mxu0 %v3872
  %5402 = vmatpush1.bf16.msra.mxu0 %v3871
  %5403 = vmatprep.subr.bf16.mxu0 %v3875
  %5404 = vmatpush1.bf16.msra.mxu0 %v3874
  %5405 = vmatprep.subr.bf16.mxu0 %v3878
  %5406 = vmatpush1.bf16.msra.mxu0 %v3877
  %5407 = vmatprep.subr.bf16.mxu0 %v3881
  %5408 = vmatpush1.bf16.msra.mxu0 %v3880
  %5409 = vmatprep.subr.bf16.mxu0 %v3884
  %5410 = vmatpush1.bf16.msra.mxu0 %v3883
  %5411 = vmatprep.subr.bf16.mxu0 %v3887
  %5412 = vmatpush1.bf16.msra.mxu0 %v3886
  %5413 = vmatprep.subr.bf16.mxu0 %v3890
  %5414 = vmatpush1.bf16.msra.mxu0 %v3889
  %5415 = vmatprep.subr.bf16.mxu0 %v3893
  %5416 = vmatpush1.bf16.msra.mxu0 %v3892
  %5417 = vmatprep.subr.bf16.mxu0 %v3896
  %5418 = vmatpush1.bf16.msra.mxu0 %v3895
  %5419 = vmatprep.subr.bf16.mxu0 %v3899
  %5420 = vmatpush1.bf16.msra.mxu0 %v3898
  %5421 = vmatprep.subr.bf16.mxu0 %v3902
  %5422 = vmatpush1.bf16.msra.mxu0 %v3901
  %5423 = vmatprep.subr.bf16.mxu0 %v3905
  %5424 = vmatpush1.bf16.msra.mxu0 %v3904
  %5425 = vmatprep.subr.bf16.mxu0 %v3908
  %5426 = vmatpush1.bf16.msra.mxu0 %v3907
  %5427 = vmatprep.subr.bf16.mxu0 %v3911
  %5428 = vmatpush1.bf16.msra.mxu0 %v3910
  %5429 = vmatprep.subr.bf16.mxu0 %v3914
  %5430 = vmatpush1.bf16.msra.mxu0 %v3913
  %5431 = vmatprep.mubr.bf16.mxu0 %v1199
  %5432 = vmatmul.mubr.bf16.gmra.mrb[0].mxu0 %v1198
  %v5433 = vpop.f32.mrb[0].mxu0
  %v5434 = vadd.f32 %v5391, %v5433
  %v5435 = vpop.f32.mrb[0].mxu0
  %v5436 = vadd.f32 %v5393, %v5435
  %v5437 = vpop.f32.mrb[0].mxu0
  %v5438 = vadd.f32 %v5395, %v5437
  %v5439 = vpop.f32.mrb[0].mxu0
  %v5440 = vadd.f32 %v5397, %v5439
  %5441 = vdwg.mxu0
  %5442 = vmatprep.subr.bf16.mxu0 %v3917
  %5443 = vmatpush1.bf16.msra.mxu0 %v3916
  %5444 = vmatprep.subr.bf16.mxu0 %v3920
  %5445 = vmatpush1.bf16.msra.mxu0 %v3919
  %5446 = vmatprep.subr.bf16.mxu0 %v3923
  %5447 = vmatpush1.bf16.msra.mxu0 %v3922
  %5448 = vmatprep.subr.bf16.mxu0 %v3926
  %5449 = vmatpush1.bf16.msra.mxu0 %v3925
  %5450 = vmatprep.subr.bf16.mxu0 %v3929
  %5451 = vmatpush1.bf16.msra.mxu0 %v3928
  %5452 = vmatprep.subr.bf16.mxu0 %v3932
  %5453 = vmatpush1.bf16.msra.mxu0 %v3931
  %5454 = vmatprep.subr.bf16.mxu0 %v3935
  %5455 = vmatpush1.bf16.msra.mxu0 %v3934
  %5456 = vmatprep.subr.bf16.mxu0 %v3938
  %5457 = vmatpush1.bf16.msra.mxu0 %v3937
  %5458 = vmatprep.subr.bf16.mxu0 %v3941
  %5459 = vmatpush1.bf16.msra.mxu0 %v3940
  %5460 = vmatprep.subr.bf16.mxu0 %v3944
  %5461 = vmatpush1.bf16.msra.mxu0 %v3943
  %5462 = vmatprep.subr.bf16.mxu0 %v3947
  %5463 = vmatpush1.bf16.msra.mxu0 %v3946
  %5464 = vmatprep.subr.bf16.mxu0 %v3950
  %5465 = vmatpush1.bf16.msra.mxu0 %v3949
  %5466 = vmatprep.subr.bf16.mxu0 %v3953
  %5467 = vmatpush1.bf16.msra.mxu0 %v3952
  %5468 = vmatprep.subr.bf16.mxu0 %v3956
  %5469 = vmatpush1.bf16.msra.mxu0 %v3955
  %5470 = vmatprep.subr.bf16.mxu0 %v3959
  %5471 = vmatpush1.bf16.msra.mxu0 %v3958
  %5472 = vmatprep.subr.bf16.mxu0 %v3962
  %5473 = vmatpush1.bf16.msra.mxu0 %v3961
  %5474 = vmatprep.mubr.bf16.mxu0 %v1201
  %5475 = vmatmul.mubr.bf16.gmra.mrb[0].mxu0 %v1200
  %v5476 = vpop.f32.mrb[0].mxu0
  %v5477 = vadd.f32 %v5434, %v5476
  %v5478 = vpop.f32.mrb[0].mxu0
  %v5479 = vadd.f32 %v5436, %v5478
  %v5480 = vpop.f32.mrb[0].mxu0
  %v5481 = vadd.f32 %v5438, %v5480
  %v5482 = vpop.f32.mrb[0].mxu0
  %v5483 = vadd.f32 %v5440, %v5482
  %5484 = vdwg.mxu0
  %5485 = vmatprep.subr.bf16.mxu0 %v3965
  %5486 = vmatpush1.bf16.msra.mxu0 %v3964
  %5487 = vmatprep.subr.bf16.mxu0 %v3968
  %5488 = vmatpush1.bf16.msra.mxu0 %v3967
  %5489 = vmatprep.subr.bf16.mxu0 %v3971
  %5490 = vmatpush1.bf16.msra.mxu0 %v3970
  %5491 = vmatprep.subr.bf16.mxu0 %v3974
  %5492 = vmatpush1.bf16.msra.mxu0 %v3973
  %5493 = vmatprep.subr.bf16.mxu0 %v3977
  %5494 = vmatpush1.bf16.msra.mxu0 %v3976
  %5495 = vmatprep.subr.bf16.mxu0 %v3980
  %5496 = vmatpush1.bf16.msra.mxu0 %v3979
  %5497 = vmatprep.subr.bf16.mxu0 %v3983
  %5498 = vmatpush1.bf16.msra.mxu0 %v3982
  %5499 = vmatprep.subr.bf16.mxu0 %v3986
  %5500 = vmatpush1.bf16.msra.mxu0 %v3985
  %5501 = vmatprep.subr.bf16.mxu0 %v3989
  %5502 = vmatpush1.bf16.msra.mxu0 %v3988
  %5503 = vmatprep.subr.bf16.mxu0 %v3992
  %5504 = vmatpush1.bf16.msra.mxu0 %v3991
  %5505 = vmatprep.subr.bf16.mxu0 %v3995
  %5506 = vmatpush1.bf16.msra.mxu0 %v3994
  %5507 = vmatprep.subr.bf16.mxu0 %v3998
  %5508 = vmatpush1.bf16.msra.mxu0 %v3997
  %5509 = vmatprep.subr.bf16.mxu0 %v4001
  %5510 = vmatpush1.bf16.msra.mxu0 %v4000
  %5511 = vmatprep.subr.bf16.mxu0 %v4004
  %5512 = vmatpush1.bf16.msra.mxu0 %v4003
  %5513 = vmatprep.subr.bf16.mxu0 %v4007
  %5514 = vmatpush1.bf16.msra.mxu0 %v4006
  %5515 = vmatprep.subr.bf16.mxu0 %v4010
  %5516 = vmatpush1.bf16.msra.mxu0 %v4009
  %5517 = vmatprep.mubr.bf16.mxu0 %v1203
  %5518 = vmatmul.mubr.bf16.gmra.mrb[0].mxu0 %v1202
  %v5519 = vpop.f32.mrb[0].mxu0
  %v5520 = vadd.f32 %v5477, %v5519
  %v5521 = vpop.f32.mrb[0].mxu0
  %v5522 = vadd.f32 %v5479, %v5521
  %v5523 = vpop.f32.mrb[0].mxu0
  %v5524 = vadd.f32 %v5481, %v5523
  %v5525 = vpop.f32.mrb[0].mxu0
  %v5526 = vadd.f32 %v5483, %v5525
  %5527 = vdwg.mxu0
  %5528 = vmatprep.subr.bf16.mxu0 %v4013
  %5529 = vmatpush1.bf16.msra.mxu0 %v4012
  %5530 = vmatprep.subr.bf16.mxu0 %v4016
  %5531 = vmatpush1.bf16.msra.mxu0 %v4015
  %5532 = vmatprep.subr.bf16.mxu0 %v4019
  %5533 = vmatpush1.bf16.msra.mxu0 %v4018
  %5534 = vmatprep.subr.bf16.mxu0 %v4022
  %5535 = vmatpush1.bf16.msra.mxu0 %v4021
  %5536 = vmatprep.subr.bf16.mxu0 %v4025
  %5537 = vmatpush1.bf16.msra.mxu0 %v4024
  %5538 = vmatprep.subr.bf16.mxu0 %v4028
  %5539 = vmatpush1.bf16.msra.mxu0 %v4027
  %5540 = vmatprep.subr.bf16.mxu0 %v4031
  %5541 = vmatpush1.bf16.msra.mxu0 %v4030
  %5542 = vmatprep.subr.bf16.mxu0 %v4034
  %5543 = vmatpush1.bf16.msra.mxu0 %v4033
  %5544 = vmatprep.subr.bf16.mxu0 %v4037
  %5545 = vmatpush1.bf16.msra.mxu0 %v4036
  %5546 = vmatprep.subr.bf16.mxu0 %v4040
  %5547 = vmatpush1.bf16.msra.mxu0 %v4039
  %5548 = vmatprep.subr.bf16.mxu0 %v4043
  %5549 = vmatpush1.bf16.msra.mxu0 %v4042
  %5550 = vmatprep.subr.bf16.mxu0 %v4046
  %5551 = vmatpush1.bf16.msra.mxu0 %v4045
  %5552 = vmatprep.subr.bf16.mxu0 %v4049
  %5553 = vmatpush1.bf16.msra.mxu0 %v4048
  %5554 = vmatprep.subr.bf16.mxu0 %v4052
  %5555 = vmatpush1.bf16.msra.mxu0 %v4051
  %5556 = vmatprep.subr.bf16.mxu0 %v4055
  %5557 = vmatpush1.bf16.msra.mxu0 %v4054
  %5558 = vmatprep.subr.bf16.mxu0 %v4058
  %5559 = vmatpush1.bf16.msra.mxu0 %v4057
  %5560 = vmatprep.mubr.bf16.mxu0 %v1205
  %5561 = vmatmul.mubr.bf16.gmra.mrb[0].mxu0 %v1204
  %v5562 = vpop.f32.mrb[0].mxu0
  %v5563 = vadd.f32 %v5520, %v5562
  %v5564 = vpop.f32.mrb[0].mxu0
  %v5565 = vadd.f32 %v5522, %v5564
  %v5566 = vpop.f32.mrb[0].mxu0
  %v5567 = vadd.f32 %v5524, %v5566
  %v5568 = vpop.f32.mrb[0].mxu0
  %v5569 = vadd.f32 %v5526, %v5568
  %5570 = vdwg.mxu0
  %5571 = vmatprep.subr.bf16.mxu0 %v4061
  %5572 = vmatpush1.bf16.msra.mxu0 %v4060
  %5573 = vmatprep.subr.bf16.mxu0 %v4064
  %5574 = vmatpush1.bf16.msra.mxu0 %v4063
  %5575 = vmatprep.subr.bf16.mxu0 %v4067
  %5576 = vmatpush1.bf16.msra.mxu0 %v4066
  %5577 = vmatprep.subr.bf16.mxu0 %v4070
  %5578 = vmatpush1.bf16.msra.mxu0 %v4069
  %5579 = vmatprep.subr.bf16.mxu0 %v4073
  %5580 = vmatpush1.bf16.msra.mxu0 %v4072
  %5581 = vmatprep.subr.bf16.mxu0 %v4076
  %5582 = vmatpush1.bf16.msra.mxu0 %v4075
  %5583 = vmatprep.subr.bf16.mxu0 %v4079
  %5584 = vmatpush1.bf16.msra.mxu0 %v4078
  %5585 = vmatprep.subr.bf16.mxu0 %v4082
  %5586 = vmatpush1.bf16.msra.mxu0 %v4081
  %5587 = vmatprep.subr.bf16.mxu0 %v4085
  %5588 = vmatpush1.bf16.msra.mxu0 %v4084
  %5589 = vmatprep.subr.bf16.mxu0 %v4088
  %5590 = vmatpush1.bf16.msra.mxu0 %v4087
  %5591 = vmatprep.subr.bf16.mxu0 %v4091
  %5592 = vmatpush1.bf16.msra.mxu0 %v4090
  %5593 = vmatprep.subr.bf16.mxu0 %v4094
  %5594 = vmatpush1.bf16.msra.mxu0 %v4093
  %5595 = vmatprep.subr.bf16.mxu0 %v4097
  %5596 = vmatpush1.bf16.msra.mxu0 %v4096
  %5597 = vmatprep.subr.bf16.mxu0 %v4100
  %5598 = vmatpush1.bf16.msra.mxu0 %v4099
  %5599 = vmatprep.subr.bf16.mxu0 %v4103
  %5600 = vmatpush1.bf16.msra.mxu0 %v4102
  %5601 = vmatprep.subr.bf16.mxu0 %v4106
  %5602 = vmatpush1.bf16.msra.mxu0 %v4105
  %5603 = vmatprep.mubr.bf16.mxu0 %v1207
  %5604 = vmatmul.mubr.bf16.gmra.mrb[0].mxu0 %v1206
  %v5605 = vpop.f32.mrb[0].mxu0
  %v5606 = vadd.f32 %v5563, %v5605
  %v5607 = vpop.f32.mrb[0].mxu0
  %v5608 = vadd.f32 %v5565, %v5607
  %v5609 = vpop.f32.mrb[0].mxu0
  %v5610 = vadd.f32 %v5567, %v5609
  %v5611 = vpop.f32.mrb[0].mxu0
  %v5612 = vadd.f32 %v5569, %v5611
  %5613 = vdwg.mxu0
  %5614 = vmatprep.subr.bf16.mxu0 %v4109
  %5615 = vmatpush1.bf16.msra.mxu0 %v4108
  %5616 = vmatprep.subr.bf16.mxu0 %v4112
  %5617 = vmatpush1.bf16.msra.mxu0 %v4111
  %5618 = vmatprep.subr.bf16.mxu0 %v4115
  %5619 = vmatpush1.bf16.msra.mxu0 %v4114
  %5620 = vmatprep.subr.bf16.mxu0 %v4118
  %5621 = vmatpush1.bf16.msra.mxu0 %v4117
  %5622 = vmatprep.subr.bf16.mxu0 %v4121
  %5623 = vmatpush1.bf16.msra.mxu0 %v4120
  %5624 = vmatprep.subr.bf16.mxu0 %v4124
  %5625 = vmatpush1.bf16.msra.mxu0 %v4123
  %5626 = vmatprep.subr.bf16.mxu0 %v4127
  %5627 = vmatpush1.bf16.msra.mxu0 %v4126
  %5628 = vmatprep.subr.bf16.mxu0 %v4130
  %5629 = vmatpush1.bf16.msra.mxu0 %v4129
  %5630 = vmatprep.subr.bf16.mxu0 %v4133
  %5631 = vmatpush1.bf16.msra.mxu0 %v4132
  %5632 = vmatprep.subr.bf16.mxu0 %v4136
  %5633 = vmatpush1.bf16.msra.mxu0 %v4135
  %5634 = vmatprep.subr.bf16.mxu0 %v4139
  %5635 = vmatpush1.bf16.msra.mxu0 %v4138
  %5636 = vmatprep.subr.bf16.mxu0 %v4142
  %5637 = vmatpush1.bf16.msra.mxu0 %v4141
  %5638 = vmatprep.subr.bf16.mxu0 %v4145
  %5639 = vmatpush1.bf16.msra.mxu0 %v4144
  %5640 = vmatprep.subr.bf16.mxu0 %v4148
  %5641 = vmatpush1.bf16.msra.mxu0 %v4147
  %5642 = vmatprep.subr.bf16.mxu0 %v4151
  %5643 = vmatpush1.bf16.msra.mxu0 %v4150
  %5644 = vmatprep.subr.bf16.mxu0 %v4154
  %5645 = vmatpush1.bf16.msra.mxu0 %v4153
  %5646 = vmatprep.mubr.bf16.mxu0 %v1209
  %5647 = vmatmul.mubr.bf16.gmra.mrb[0].mxu0 %v1208
  %v5648 = vpop.f32.mrb[0].mxu0
  %v5649 = vadd.f32 %v5606, %v5648
  %v5650 = vpop.f32.mrb[0].mxu0
  %v5651 = vadd.f32 %v5608, %v5650
  %v5652 = vpop.f32.mrb[0].mxu0
  %v5653 = vadd.f32 %v5610, %v5652
  %v5654 = vpop.f32.mrb[0].mxu0
  %v5655 = vadd.f32 %v5612, %v5654
  %5656 = vdwg.mxu0
  %5657 = vmatprep.subr.bf16.mxu0 %v4157
  %5658 = vmatpush1.bf16.msra.mxu0 %v4156
  %5659 = vmatprep.subr.bf16.mxu0 %v4160
  %5660 = vmatpush1.bf16.msra.mxu0 %v4159
  %5661 = vmatprep.subr.bf16.mxu0 %v4163
  %5662 = vmatpush1.bf16.msra.mxu0 %v4162
  %5663 = vmatprep.subr.bf16.mxu0 %v4166
  %5664 = vmatpush1.bf16.msra.mxu0 %v4165
  %5665 = vmatprep.subr.bf16.mxu0 %v4169
  %5666 = vmatpush1.bf16.msra.mxu0 %v4168
  %5667 = vmatprep.subr.bf16.mxu0 %v4172
  %5668 = vmatpush1.bf16.msra.mxu0 %v4171
  %5669 = vmatprep.subr.bf16.mxu0 %v4175
  %5670 = vmatpush1.bf16.msra.mxu0 %v4174
  %5671 = vmatprep.subr.bf16.mxu0 %v4178
  %5672 = vmatpush1.bf16.msra.mxu0 %v4177
  %5673 = vmatprep.subr.bf16.mxu0 %v4181
  %5674 = vmatpush1.bf16.msra.mxu0 %v4180
  %5675 = vmatprep.subr.bf16.mxu0 %v4184
  %5676 = vmatpush1.bf16.msra.mxu0 %v4183
  %5677 = vmatprep.subr.bf16.mxu0 %v4187
  %5678 = vmatpush1.bf16.msra.mxu0 %v4186
  %5679 = vmatprep.subr.bf16.mxu0 %v4190
  %5680 = vmatpush1.bf16.msra.mxu0 %v4189
  %5681 = vmatprep.subr.bf16.mxu0 %v4193
  %5682 = vmatpush1.bf16.msra.mxu0 %v4192
  %5683 = vmatprep.subr.bf16.mxu0 %v4196
  %5684 = vmatpush1.bf16.msra.mxu0 %v4195
  %5685 = vmatprep.subr.bf16.mxu0 %v4199
  %5686 = vmatpush1.bf16.msra.mxu0 %v4198
  %5687 = vmatprep.subr.bf16.mxu0 %v4202
  %5688 = vmatpush1.bf16.msra.mxu0 %v4201
  %5689 = vmatprep.mubr.bf16.mxu0 %v1211
  %5690 = vmatmul.mubr.bf16.gmra.mrb[0].mxu0 %v1210
  %v5691 = vpop.f32.mrb[0].mxu0
  %v5692 = vadd.f32 %v5649, %v5691
  %v5693 = vpop.f32.mrb[0].mxu0
  %v5694 = vadd.f32 %v5651, %v5693
  %v5695 = vpop.f32.mrb[0].mxu0
  %v5696 = vadd.f32 %v5653, %v5695
  %v5697 = vpop.f32.mrb[0].mxu0
  %v5698 = vadd.f32 %v5655, %v5697
  %5699 = vdwg.mxu0
  %5700 = vmatprep.subr.bf16.mxu0 %v4205
  %5701 = vmatpush1.bf16.msra.mxu0 %v4204
  %5702 = vmatprep.subr.bf16.mxu0 %v4208
  %5703 = vmatpush1.bf16.msra.mxu0 %v4207
  %5704 = vmatprep.subr.bf16.mxu0 %v4211
  %5705 = vmatpush1.bf16.msra.mxu0 %v4210
  %5706 = vmatprep.subr.bf16.mxu0 %v4214
  %5707 = vmatpush1.bf16.msra.mxu0 %v4213
  %5708 = vmatprep.subr.bf16.mxu0 %v4217
  %5709 = vmatpush1.bf16.msra.mxu0 %v4216
  %5710 = vmatprep.subr.bf16.mxu0 %v4220
  %5711 = vmatpush1.bf16.msra.mxu0 %v4219
  %5712 = vmatprep.subr.bf16.mxu0 %v4223
  %5713 = vmatpush1.bf16.msra.mxu0 %v4222
  %5714 = vmatprep.subr.bf16.mxu0 %v4226
  %5715 = vmatpush1.bf16.msra.mxu0 %v4225
  %5716 = vmatprep.subr.bf16.mxu0 %v4229
  %5717 = vmatpush1.bf16.msra.mxu0 %v4228
  %5718 = vmatprep.subr.bf16.mxu0 %v4232
  %5719 = vmatpush1.bf16.msra.mxu0 %v4231
  %5720 = vmatprep.subr.bf16.mxu0 %v4235
  %5721 = vmatpush1.bf16.msra.mxu0 %v4234
  %5722 = vmatprep.subr.bf16.mxu0 %v4238
  %5723 = vmatpush1.bf16.msra.mxu0 %v4237
  %5724 = vmatprep.subr.bf16.mxu0 %v4241
  %5725 = vmatpush1.bf16.msra.mxu0 %v4240
  %5726 = vmatprep.subr.bf16.mxu0 %v4244
  %5727 = vmatpush1.bf16.msra.mxu0 %v4243
  %5728 = vmatprep.subr.bf16.mxu0 %v4247
  %5729 = vmatpush1.bf16.msra.mxu0 %v4246
  %5730 = vmatprep.subr.bf16.mxu0 %v4250
  %5731 = vmatpush1.bf16.msra.mxu0 %v4249
  %5732 = vmatprep.mubr.bf16.mxu0 %v1213
  %5733 = vmatmul.mubr.bf16.gmra.mrb[0].mxu0 %v1212
  %v5734 = vpop.f32.mrb[0].mxu0
  %v5735 = vadd.f32 %v5692, %v5734
  %v5736 = vpop.f32.mrb[0].mxu0
  %v5737 = vadd.f32 %v5694, %v5736
  %v5738 = vpop.f32.mrb[0].mxu0
  %v5739 = vadd.f32 %v5696, %v5738
  %v5740 = vpop.f32.mrb[0].mxu0
  %v5741 = vadd.f32 %v5698, %v5740
  %5742 = vdwg.mxu0
  %5743 = vmatprep.subr.bf16.mxu0 %v4253
  %5744 = vmatpush1.bf16.msra.mxu0 %v4252
  %5745 = vmatprep.subr.bf16.mxu0 %v4256
  %5746 = vmatpush1.bf16.msra.mxu0 %v4255
  %5747 = vmatprep.subr.bf16.mxu0 %v4259
  %5748 = vmatpush1.bf16.msra.mxu0 %v4258
  %5749 = vmatprep.subr.bf16.mxu0 %v4262
  %5750 = vmatpush1.bf16.msra.mxu0 %v4261
  %5751 = vmatprep.subr.bf16.mxu0 %v4265
  %5752 = vmatpush1.bf16.msra.mxu0 %v4264
  %5753 = vmatprep.subr.bf16.mxu0 %v4268
  %5754 = vmatpush1.bf16.msra.mxu0 %v4267
  %5755 = vmatprep.subr.bf16.mxu0 %v4271
  %5756 = vmatpush1.bf16.msra.mxu0 %v4270
  %5757 = vmatprep.subr.bf16.mxu0 %v4274
  %5758 = vmatpush1.bf16.msra.mxu0 %v4273
  %5759 = vmatprep.subr.bf16.mxu0 %v4277
  %5760 = vmatpush1.bf16.msra.mxu0 %v4276
  %5761 = vmatprep.subr.bf16.mxu0 %v4280
  %5762 = vmatpush1.bf16.msra.mxu0 %v4279
  %5763 = vmatprep.subr.bf16.mxu0 %v4283
  %5764 = vmatpush1.bf16.msra.mxu0 %v4282
  %5765 = vmatprep.subr.bf16.mxu0 %v4286
  %5766 = vmatpush1.bf16.msra.mxu0 %v4285
  %5767 = vmatprep.subr.bf16.mxu0 %v4289
  %5768 = vmatpush1.bf16.msra.mxu0 %v4288
  %5769 = vmatprep.subr.bf16.mxu0 %v4292
  %5770 = vmatpush1.bf16.msra.mxu0 %v4291
  %5771 = vmatprep.subr.bf16.mxu0 %v4295
  %5772 = vmatpush1.bf16.msra.mxu0 %v4294
  %5773 = vmatprep.subr.bf16.mxu0 %v4298
  %5774 = vmatpush1.bf16.msra.mxu0 %v4297
  %5775 = vmatprep.mubr.bf16.mxu0 %v1215
  %5776 = vmatmul.mubr.bf16.gmra.mrb[0].mxu0 %v1214
  %v5777 = vpop.f32.mrb[0].mxu0
  %v5778 = vadd.f32 %v5735, %v5777
  %v5779 = vpop.f32.mrb[0].mxu0
  %v5780 = vadd.f32 %v5737, %v5779
  %v5781 = vpop.f32.mrb[0].mxu0
  %v5782 = vadd.f32 %v5739, %v5781
  %v5783 = vpop.f32.mrb[0].mxu0
  %v5784 = vadd.f32 %v5741, %v5783
  %5785 = vdwg.mxu0
  %5786 = vmatprep.subr.bf16.mxu0 %v4301
  %5787 = vmatpush1.bf16.msra.mxu0 %v4300
  %5788 = vmatprep.subr.bf16.mxu0 %v4304
  %5789 = vmatpush1.bf16.msra.mxu0 %v4303
  %5790 = vmatprep.subr.bf16.mxu0 %v4307
  %5791 = vmatpush1.bf16.msra.mxu0 %v4306
  %5792 = vmatprep.subr.bf16.mxu0 %v4310
  %5793 = vmatpush1.bf16.msra.mxu0 %v4309
  %5794 = vmatprep.subr.bf16.mxu0 %v4313
  %5795 = vmatpush1.bf16.msra.mxu0 %v4312
  %5796 = vmatprep.subr.bf16.mxu0 %v4316
  %5797 = vmatpush1.bf16.msra.mxu0 %v4315
  %5798 = vmatprep.subr.bf16.mxu0 %v4319
  %5799 = vmatpush1.bf16.msra.mxu0 %v4318
  %5800 = vmatprep.subr.bf16.mxu0 %v4322
  %5801 = vmatpush1.bf16.msra.mxu0 %v4321
  %5802 = vmatprep.subr.bf16.mxu0 %v4325
  %5803 = vmatpush1.bf16.msra.mxu0 %v4324
  %5804 = vmatprep.subr.bf16.mxu0 %v4328
  %5805 = vmatpush1.bf16.msra.mxu0 %v4327
  %5806 = vmatprep.subr.bf16.mxu0 %v4331
  %5807 = vmatpush1.bf16.msra.mxu0 %v4330
  %5808 = vmatprep.subr.bf16.mxu0 %v4334
  %5809 = vmatpush1.bf16.msra.mxu0 %v4333
  %5810 = vmatprep.subr.bf16.mxu0 %v4337
  %5811 = vmatpush1.bf16.msra.mxu0 %v4336
  %5812 = vmatprep.subr.bf16.mxu0 %v4340
  %5813 = vmatpush1.bf16.msra.mxu0 %v4339
  %5814 = vmatprep.subr.bf16.mxu0 %v4343
  %5815 = vmatpush1.bf16.msra.mxu0 %v4342
  %5816 = vmatprep.subr.bf16.mxu0 %v4346
  %5817 = vmatpush1.bf16.msra.mxu0 %v4345
  %5818 = vmatprep.mubr.bf16.mxu0 %v1217
  %5819 = vmatmul.mubr.bf16.gmra.mrb[0].mxu0 %v1216
  %v5820 = vpop.f32.mrb[0].mxu0
  %v5821 = vadd.f32 %v5778, %v5820
  %v5822 = vpop.f32.mrb[0].mxu0
  %v5823 = vadd.f32 %v5780, %v5822
  %v5824 = vpop.f32.mrb[0].mxu0
  %v5825 = vadd.f32 %v5782, %v5824
  %v5826 = vpop.f32.mrb[0].mxu0
  %v5827 = vadd.f32 %v5784, %v5826
  %5828 = vdwg.mxu0
  %5829 = vmatprep.subr.bf16.mxu0 %v4349
  %5830 = vmatpush1.bf16.msra.mxu0 %v4348
  %5831 = vmatprep.subr.bf16.mxu0 %v4352
  %5832 = vmatpush1.bf16.msra.mxu0 %v4351
  %5833 = vmatprep.subr.bf16.mxu0 %v4355
  %5834 = vmatpush1.bf16.msra.mxu0 %v4354
  %5835 = vmatprep.subr.bf16.mxu0 %v4358
  %5836 = vmatpush1.bf16.msra.mxu0 %v4357
  %5837 = vmatprep.subr.bf16.mxu0 %v4361
  %5838 = vmatpush1.bf16.msra.mxu0 %v4360
  %5839 = vmatprep.subr.bf16.mxu0 %v4364
  %5840 = vmatpush1.bf16.msra.mxu0 %v4363
  %5841 = vmatprep.subr.bf16.mxu0 %v4367
  %5842 = vmatpush1.bf16.msra.mxu0 %v4366
  %5843 = vmatprep.subr.bf16.mxu0 %v4370
  %5844 = vmatpush1.bf16.msra.mxu0 %v4369
  %5845 = vmatprep.subr.bf16.mxu0 %v4373
  %5846 = vmatpush1.bf16.msra.mxu0 %v4372
  %5847 = vmatprep.subr.bf16.mxu0 %v4376
  %5848 = vmatpush1.bf16.msra.mxu0 %v4375
  %5849 = vmatprep.subr.bf16.mxu0 %v4379
  %5850 = vmatpush1.bf16.msra.mxu0 %v4378
  %5851 = vmatprep.subr.bf16.mxu0 %v4382
  %5852 = vmatpush1.bf16.msra.mxu0 %v4381
  %5853 = vmatprep.subr.bf16.mxu0 %v4385
  %5854 = vmatpush1.bf16.msra.mxu0 %v4384
  %5855 = vmatprep.subr.bf16.mxu0 %v4388
  %5856 = vmatpush1.bf16.msra.mxu0 %v4387
  %5857 = vmatprep.subr.bf16.mxu0 %v4391
  %5858 = vmatpush1.bf16.msra.mxu0 %v4390
  %5859 = vmatprep.subr.bf16.mxu0 %v4394
  %5860 = vmatpush1.bf16.msra.mxu0 %v4393
  %5861 = vmatprep.mubr.bf16.mxu0 %v1219
  %5862 = vmatmul.mubr.bf16.gmra.mrb[0].mxu0 %v1218
  %v5863 = vpop.f32.mrb[0].mxu0
  %v5864 = vadd.f32 %v5821, %v5863
  %v5865 = vpop.f32.mrb[0].mxu0
  %v5866 = vadd.f32 %v5823, %v5865
  %v5867 = vpop.f32.mrb[0].mxu0
  %v5868 = vadd.f32 %v5825, %v5867
  %v5869 = vpop.f32.mrb[0].mxu0
  %v5870 = vadd.f32 %v5827, %v5869
  %5871 = vdwg.mxu0
  %5872 = vmatprep.subr.bf16.mxu0 %v4397
  %5873 = vmatpush1.bf16.msra.mxu0 %v4396
  %5874 = vmatprep.subr.bf16.mxu0 %v4400
  %5875 = vmatpush1.bf16.msra.mxu0 %v4399
  %5876 = vmatprep.subr.bf16.mxu0 %v4403
  %5877 = vmatpush1.bf16.msra.mxu0 %v4402
  %5878 = vmatprep.subr.bf16.mxu0 %v4406
  %5879 = vmatpush1.bf16.msra.mxu0 %v4405
  %5880 = vmatprep.subr.bf16.mxu0 %v4409
  %5881 = vmatpush1.bf16.msra.mxu0 %v4408
  %5882 = vmatprep.subr.bf16.mxu0 %v4412
  %5883 = vmatpush1.bf16.msra.mxu0 %v4411
  %5884 = vmatprep.subr.bf16.mxu0 %v4415
  %5885 = vmatpush1.bf16.msra.mxu0 %v4414
  %5886 = vmatprep.subr.bf16.mxu0 %v4418
  %5887 = vmatpush1.bf16.msra.mxu0 %v4417
  %5888 = vmatprep.subr.bf16.mxu0 %v4421
  %5889 = vmatpush1.bf16.msra.mxu0 %v4420
  %5890 = vmatprep.subr.bf16.mxu0 %v4424
  %5891 = vmatpush1.bf16.msra.mxu0 %v4423
  %5892 = vmatprep.subr.bf16.mxu0 %v4427
  %5893 = vmatpush1.bf16.msra.mxu0 %v4426
  %5894 = vmatprep.subr.bf16.mxu0 %v4430
  %5895 = vmatpush1.bf16.msra.mxu0 %v4429
  %5896 = vmatprep.subr.bf16.mxu0 %v4433
  %5897 = vmatpush1.bf16.msra.mxu0 %v4432
  %5898 = vmatprep.subr.bf16.mxu0 %v4436
  %5899 = vmatpush1.bf16.msra.mxu0 %v4435
  %5900 = vmatprep.subr.bf16.mxu0 %v4439
  %5901 = vmatpush1.bf16.msra.mxu0 %v4438
  %5902 = vmatprep.subr.bf16.mxu0 %v4442
  %5903 = vmatpush1.bf16.msra.mxu0 %v4441
  %5904 = vmatprep.mubr.bf16.mxu0 %v1221
  %5905 = vmatmul.mubr.bf16.gmra.mrb[0].mxu0 %v1220
  %v5906 = vpop.f32.mrb[0].mxu0
  %v5907 = vadd.f32 %v5864, %v5906
  %v5908 = vpop.f32.mrb[0].mxu0
  %v5909 = vadd.f32 %v5866, %v5908
  %v5910 = vpop.f32.mrb[0].mxu0
  %v5911 = vadd.f32 %v5868, %v5910
  %v5912 = vpop.f32.mrb[0].mxu0
  %v5913 = vadd.f32 %v5870, %v5912
  %5914 = vdwg.mxu0
  %5915 = vmatprep.subr.bf16.mxu0 %v4445
  %5916 = vmatpush1.bf16.msra.mxu0 %v4444
  %5917 = vmatprep.subr.bf16.mxu0 %v4448
  %5918 = vmatpush1.bf16.msra.mxu0 %v4447
  %5919 = vmatprep.subr.bf16.mxu0 %v4451
  %5920 = vmatpush1.bf16.msra.mxu0 %v4450
  %5921 = vmatprep.subr.bf16.mxu0 %v4454
  %5922 = vmatpush1.bf16.msra.mxu0 %v4453
  %5923 = vmatprep.subr.bf16.mxu0 %v4457
  %5924 = vmatpush1.bf16.msra.mxu0 %v4456
  %5925 = vmatprep.subr.bf16.mxu0 %v4460
  %5926 = vmatpush1.bf16.msra.mxu0 %v4459
  %5927 = vmatprep.subr.bf16.mxu0 %v4463
  %5928 = vmatpush1.bf16.msra.mxu0 %v4462
  %5929 = vmatprep.subr.bf16.mxu0 %v4466
  %5930 = vmatpush1.bf16.msra.mxu0 %v4465
  %5931 = vmatprep.subr.bf16.mxu0 %v4469
  %5932 = vmatpush1.bf16.msra.mxu0 %v4468
  %5933 = vmatprep.subr.bf16.mxu0 %v4472
  %5934 = vmatpush1.bf16.msra.mxu0 %v4471
  %5935 = vmatprep.subr.bf16.mxu0 %v4475
  %5936 = vmatpush1.bf16.msra.mxu0 %v4474
  %5937 = vmatprep.subr.bf16.mxu0 %v4478
  %5938 = vmatpush1.bf16.msra.mxu0 %v4477
  %5939 = vmatprep.subr.bf16.mxu0 %v4481
  %5940 = vmatpush1.bf16.msra.mxu0 %v4480
  %5941 = vmatprep.subr.bf16.mxu0 %v4484
  %5942 = vmatpush1.bf16.msra.mxu0 %v4483
  %5943 = vmatprep.subr.bf16.mxu0 %v4487
  %5944 = vmatpush1.bf16.msra.mxu0 %v4486
  %5945 = vmatprep.subr.bf16.mxu0 %v4490
  %5946 = vmatpush1.bf16.msra.mxu0 %v4489
  %5947 = vmatprep.mubr.bf16.mxu0 %v1223
  %5948 = vmatmul.mubr.bf16.gmra.mrb[0].mxu0 %v1222
  %v5949 = vpop.f32.mrb[0].mxu0
  %v5950 = vadd.f32 %v5907, %v5949
  %v5951 = vpop.f32.mrb[0].mxu0
  %v5952 = vadd.f32 %v5909, %v5951
  %v5953 = vpop.f32.mrb[0].mxu0
  %v5954 = vadd.f32 %v5911, %v5953
  %v5955 = vpop.f32.mrb[0].mxu0
  %v5956 = vadd.f32 %v5913, %v5955
  %5957 = vdwg.mxu0
  %5958 = vmatprep.subr.bf16.mxu0 %v4493
  %5959 = vmatpush1.bf16.msra.mxu0 %v4492
  %5960 = vmatprep.subr.bf16.mxu0 %v4496
  %5961 = vmatpush1.bf16.msra.mxu0 %v4495
  %5962 = vmatprep.subr.bf16.mxu0 %v4499
  %5963 = vmatpush1.bf16.msra.mxu0 %v4498
  %5964 = vmatprep.subr.bf16.mxu0 %v4502
  %5965 = vmatpush1.bf16.msra.mxu0 %v4501
  %5966 = vmatprep.subr.bf16.mxu0 %v4505
  %5967 = vmatpush1.bf16.msra.mxu0 %v4504
  %5968 = vmatprep.subr.bf16.mxu0 %v4508
  %5969 = vmatpush1.bf16.msra.mxu0 %v4507
  %5970 = vmatprep.subr.bf16.mxu0 %v4511
  %5971 = vmatpush1.bf16.msra.mxu0 %v4510
  %5972 = vmatprep.subr.bf16.mxu0 %v4514
  %5973 = vmatpush1.bf16.msra.mxu0 %v4513
  %5974 = vmatprep.subr.bf16.mxu0 %v4517
  %5975 = vmatpush1.bf16.msra.mxu0 %v4516
  %5976 = vmatprep.subr.bf16.mxu0 %v4520
  %5977 = vmatpush1.bf16.msra.mxu0 %v4519
  %5978 = vmatprep.subr.bf16.mxu0 %v4523
  %5979 = vmatpush1.bf16.msra.mxu0 %v4522
  %5980 = vmatprep.subr.bf16.mxu0 %v4526
  %5981 = vmatpush1.bf16.msra.mxu0 %v4525
  %5982 = vmatprep.subr.bf16.mxu0 %v4529
  %5983 = vmatpush1.bf16.msra.mxu0 %v4528
  %5984 = vmatprep.subr.bf16.mxu0 %v4532
  %5985 = vmatpush1.bf16.msra.mxu0 %v4531
  %5986 = vmatprep.subr.bf16.mxu0 %v4535
  %5987 = vmatpush1.bf16.msra.mxu0 %v4534
  %5988 = vmatprep.subr.bf16.mxu0 %v4538
  %5989 = vmatpush1.bf16.msra.mxu0 %v4537
  %5990 = vmatprep.mubr.bf16.mxu0 %v1225
  %5991 = vmatmul.mubr.bf16.gmra.mrb[0].mxu0 %v1224
  %v5992 = vpop.f32.mrb[0].mxu0
  %v5993 = vadd.f32 %v5950, %v5992
  %v5994 = vpop.f32.mrb[0].mxu0
  %v5995 = vadd.f32 %v5952, %v5994
  %v5996 = vpop.f32.mrb[0].mxu0
  %v5997 = vadd.f32 %v5954, %v5996
  %v5998 = vpop.f32.mrb[0].mxu0
  %v5999 = vadd.f32 %v5956, %v5998
  %6000 = vdwg.mxu0
  %6001 = vmatprep.subr.bf16.mxu0 %v4541
  %6002 = vmatpush1.bf16.msra.mxu0 %v4540
  %6003 = vmatprep.subr.bf16.mxu0 %v4544
  %6004 = vmatpush1.bf16.msra.mxu0 %v4543
  %6005 = vmatprep.subr.bf16.mxu0 %v4547
  %6006 = vmatpush1.bf16.msra.mxu0 %v4546
  %6007 = vmatprep.subr.bf16.mxu0 %v4550
  %6008 = vmatpush1.bf16.msra.mxu0 %v4549
  %6009 = vmatprep.subr.bf16.mxu0 %v4553
  %6010 = vmatpush1.bf16.msra.mxu0 %v4552
  %6011 = vmatprep.subr.bf16.mxu0 %v4556
  %6012 = vmatpush1.bf16.msra.mxu0 %v4555
  %6013 = vmatprep.subr.bf16.mxu0 %v4559
  %6014 = vmatpush1.bf16.msra.mxu0 %v4558
  %6015 = vmatprep.subr.bf16.mxu0 %v4562
  %6016 = vmatpush1.bf16.msra.mxu0 %v4561
  %6017 = vmatprep.subr.bf16.mxu0 %v4565
  %6018 = vmatpush1.bf16.msra.mxu0 %v4564
  %6019 = vmatprep.subr.bf16.mxu0 %v4568
  %6020 = vmatpush1.bf16.msra.mxu0 %v4567
  %6021 = vmatprep.subr.bf16.mxu0 %v4571
  %6022 = vmatpush1.bf16.msra.mxu0 %v4570
  %6023 = vmatprep.subr.bf16.mxu0 %v4574
  %6024 = vmatpush1.bf16.msra.mxu0 %v4573
  %6025 = vmatprep.subr.bf16.mxu0 %v4577
  %6026 = vmatpush1.bf16.msra.mxu0 %v4576
  %6027 = vmatprep.subr.bf16.mxu0 %v4580
  %6028 = vmatpush1.bf16.msra.mxu0 %v4579
  %6029 = vmatprep.subr.bf16.mxu0 %v4583
  %6030 = vmatpush1.bf16.msra.mxu0 %v4582
  %6031 = vmatprep.subr.bf16.mxu0 %v4586
  %6032 = vmatpush1.bf16.msra.mxu0 %v4585
  %6033 = vmatprep.mubr.bf16.mxu0 %v1227
  %6034 = vmatmul.mubr.bf16.gmra.mrb[0].mxu0 %v1226
  %v6035 = vpop.f32.mrb[0].mxu0
  %v6036 = vadd.f32 %v5993, %v6035
  %v6037 = vpop.f32.mrb[0].mxu0
  %v6038 = vadd.f32 %v5995, %v6037
  %v6039 = vpop.f32.mrb[0].mxu0
  %v6040 = vadd.f32 %v5997, %v6039
  %v6041 = vpop.f32.mrb[0].mxu0
  %v6042 = vadd.f32 %v5999, %v6041
  %6043 = vdwg.mxu0
  %6044 = vmatprep.subr.bf16.mxu0 0
  %6045 = vmatpush1.bf16.msra.mxu0 %v3822
  %6046 = vmatprep.subr.bf16.mxu0 0
  %6047 = vmatpush1.bf16.msra.mxu0 %v3825
  %6048 = vmatprep.subr.bf16.mxu0 0
  %6049 = vmatpush1.bf16.msra.mxu0 %v3828
  %6050 = vmatprep.subr.bf16.mxu0 0
  %6051 = vmatpush1.bf16.msra.mxu0 %v3831
  %6052 = vmatprep.subr.bf16.mxu0 0
  %6053 = vmatpush1.bf16.msra.mxu0 %v3834
  %6054 = vmatprep.subr.bf16.mxu0 0
  %6055 = vmatpush1.bf16.msra.mxu0 %v3837
  %6056 = vmatprep.subr.bf16.mxu0 0
  %6057 = vmatpush1.bf16.msra.mxu0 %v3840
  %6058 = vmatprep.subr.bf16.mxu0 0
  %6059 = vmatpush1.bf16.msra.mxu0 %v3843
  %6060 = vmatprep.subr.bf16.mxu0 0
  %6061 = vmatpush1.bf16.msra.mxu0 %v3846
  %6062 = vmatprep.subr.bf16.mxu0 0
  %6063 = vmatpush1.bf16.msra.mxu0 %v3849
  %6064 = vmatprep.subr.bf16.mxu0 0
  %6065 = vmatpush1.bf16.msra.mxu0 %v3852
  %6066 = vmatprep.subr.bf16.mxu0 0
  %6067 = vmatpush1.bf16.msra.mxu0 %v3855
  %6068 = vmatprep.subr.bf16.mxu0 0
  %6069 = vmatpush1.bf16.msra.mxu0 %v3858
  %6070 = vmatprep.subr.bf16.mxu0 0
  %6071 = vmatpush1.bf16.msra.mxu0 %v3861
  %6072 = vmatprep.subr.bf16.mxu0 0
  %6073 = vmatpush1.bf16.msra.mxu0 %v3864
  %6074 = vmatprep.subr.bf16.mxu0 0
  %6075 = vmatpush1.bf16.msra.mxu0 %v3867
  %6076 = vmatprep.mubr.bf16.mxu0 %v1197
  %6077 = vmatmul.mubr.bf16.gmra.mrb[0].mxu0 %v1196
  %v6078 = vpop.f32.mrb[0].mxu0
  %v6079 = vadd.f32 %v1096, %v6078
  %v6080 = vpop.f32.mrb[0].mxu0
  %v6081 = vpop.f32.mrb[0].mxu0
  %v6082 = vadd.f32 %v1096, %v6081
  %v6083 = vpop.f32.mrb[0].mxu0
  %6084 = vdwg.mxu0
  %6085 = vmatprep.subr.bf16.mxu0 0
  %6086 = vmatpush1.bf16.msra.mxu0 %v3870
  %6087 = vmatprep.subr.bf16.mxu0 0
  %6088 = vmatpush1.bf16.msra.mxu0 %v3873
  %6089 = vmatprep.subr.bf16.mxu0 0
  %6090 = vmatpush1.bf16.msra.mxu0 %v3876
  %6091 = vmatprep.subr.bf16.mxu0 0
  %6092 = vmatpush1.bf16.msra.mxu0 %v3879
  %6093 = vmatprep.subr.bf16.mxu0 0
  %6094 = vmatpush1.bf16.msra.mxu0 %v3882
  %6095 = vmatprep.subr.bf16.mxu0 0
  %6096 = vmatpush1.bf16.msra.mxu0 %v3885
  %6097 = vmatprep.subr.bf16.mxu0 0
  %6098 = vmatpush1.bf16.msra.mxu0 %v3888
  %6099 = vmatprep.subr.bf16.mxu0 0
  %6100 = vmatpush1.bf16.msra.mxu0 %v3891
  %6101 = vmatprep.subr.bf16.mxu0 0
  %6102 = vmatpush1.bf16.msra.mxu0 %v3894
  %6103 = vmatprep.subr.bf16.mxu0 0
  %6104 = vmatpush1.bf16.msra.mxu0 %v3897
  %6105 = vmatprep.subr.bf16.mxu0 0
  %6106 = vmatpush1.bf16.msra.mxu0 %v3900
  %6107 = vmatprep.subr.bf16.mxu0 0
  %6108 = vmatpush1.bf16.msra.mxu0 %v3903
  %6109 = vmatprep.subr.bf16.mxu0 0
  %6110 = vmatpush1.bf16.msra.mxu0 %v3906
  %6111 = vmatprep.subr.bf16.mxu0 0
  %6112 = vmatpush1.bf16.msra.mxu0 %v3909
  %6113 = vmatprep.subr.bf16.mxu0 0
  %6114 = vmatpush1.bf16.msra.mxu0 %v3912
  %6115 = vmatprep.subr.bf16.mxu0 0
  %6116 = vmatpush1.bf16.msra.mxu0 %v3915
  %6117 = vmatprep.mubr.bf16.mxu0 %v1199
  %6118 = vmatmul.mubr.bf16.gmra.mrb[0].mxu0 %v1198
  %v6119 = vpop.f32.mrb[0].mxu0
  %v6120 = vadd.f32 %v6079, %v6119
  %v6121 = vpop.f32.mrb[0].mxu0
  %v6122 = vpop.f32.mrb[0].mxu0
  %v6123 = vadd.f32 %v6082, %v6122
  %v6124 = vpop.f32.mrb[0].mxu0
  %6125 = vdwg.mxu0
  %6126 = vmatprep.subr.bf16.mxu0 0
  %6127 = vmatpush1.bf16.msra.mxu0 %v3918
  %6128 = vmatprep.subr.bf16.mxu0 0
  %6129 = vmatpush1.bf16.msra.mxu0 %v3921
  %6130 = vmatprep.subr.bf16.mxu0 0
  %6131 = vmatpush1.bf16.msra.mxu0 %v3924
  %6132 = vmatprep.subr.bf16.mxu0 0
  %6133 = vmatpush1.bf16.msra.mxu0 %v3927
  %6134 = vmatprep.subr.bf16.mxu0 0
  %6135 = vmatpush1.bf16.msra.mxu0 %v3930
  %6136 = vmatprep.subr.bf16.mxu0 0
  %6137 = vmatpush1.bf16.msra.mxu0 %v3933
  %6138 = vmatprep.subr.bf16.mxu0 0
  %6139 = vmatpush1.bf16.msra.mxu0 %v3936
  %6140 = vmatprep.subr.bf16.mxu0 0
  %6141 = vmatpush1.bf16.msra.mxu0 %v3939
  %6142 = vmatprep.subr.bf16.mxu0 0
  %6143 = vmatpush1.bf16.msra.mxu0 %v3942
  %6144 = vmatprep.subr.bf16.mxu0 0
  %6145 = vmatpush1.bf16.msra.mxu0 %v3945
  %6146 = vmatprep.subr.bf16.mxu0 0
  %6147 = vmatpush1.bf16.msra.mxu0 %v3948
  %6148 = vmatprep.subr.bf16.mxu0 0
  %6149 = vmatpush1.bf16.msra.mxu0 %v3951
  %6150 = vmatprep.subr.bf16.mxu0 0
  %6151 = vmatpush1.bf16.msra.mxu0 %v3954
  %6152 = vmatprep.subr.bf16.mxu0 0
  %6153 = vmatpush1.bf16.msra.mxu0 %v3957
  %6154 = vmatprep.subr.bf16.mxu0 0
  %6155 = vmatpush1.bf16.msra.mxu0 %v3960
  %6156 = vmatprep.subr.bf16.mxu0 0
  %6157 = vmatpush1.bf16.msra.mxu0 %v3963
  %6158 = vmatprep.mubr.bf16.mxu0 %v1201
  %6159 = vmatmul.mubr.bf16.gmra.mrb[0].mxu0 %v1200
  %v6160 = vpop.f32.mrb[0].mxu0
  %v6161 = vadd.f32 %v6120, %v6160
  %v6162 = vpop.f32.mrb[0].mxu0
  %v6163 = vpop.f32.mrb[0].mxu0
  %v6164 = vadd.f32 %v6123, %v6163
  %v6165 = vpop.f32.mrb[0].mxu0
  %6166 = vdwg.mxu0
  %6167 = vmatprep.subr.bf16.mxu0 0
  %6168 = vmatpush1.bf16.msra.mxu0 %v3966
  %6169 = vmatprep.subr.bf16.mxu0 0
  %6170 = vmatpush1.bf16.msra.mxu0 %v3969
  %6171 = vmatprep.subr.bf16.mxu0 0
  %6172 = vmatpush1.bf16.msra.mxu0 %v3972
  %6173 = vmatprep.subr.bf16.mxu0 0
  %6174 = vmatpush1.bf16.msra.mxu0 %v3975
  %6175 = vmatprep.subr.bf16.mxu0 0
  %6176 = vmatpush1.bf16.msra.mxu0 %v3978
  %6177 = vmatprep.subr.bf16.mxu0 0
  %6178 = vmatpush1.bf16.msra.mxu0 %v3981
  %6179 = vmatprep.subr.bf16.mxu0 0
  %6180 = vmatpush1.bf16.msra.mxu0 %v3984
  %6181 = vmatprep.subr.bf16.mxu0 0
  %6182 = vmatpush1.bf16.msra.mxu0 %v3987
  %6183 = vmatprep.subr.bf16.mxu0 0
  %6184 = vmatpush1.bf16.msra.mxu0 %v3990
  %6185 = vmatprep.subr.bf16.mxu0 0
  %6186 = vmatpush1.bf16.msra.mxu0 %v3993
  %6187 = vmatprep.subr.bf16.mxu0 0
  %6188 = vmatpush1.bf16.msra.mxu0 %v3996
  %6189 = vmatprep.subr.bf16.mxu0 0
  %6190 = vmatpush1.bf16.msra.mxu0 %v3999
  %6191 = vmatprep.subr.bf16.mxu0 0
  %6192 = vmatpush1.bf16.msra.mxu0 %v4002
  %6193 = vmatprep.subr.bf16.mxu0 0
  %6194 = vmatpush1.bf16.msra.mxu0 %v4005
  %6195 = vmatprep.subr.bf16.mxu0 0
  %6196 = vmatpush1.bf16.msra.mxu0 %v4008
  %6197 = vmatprep.subr.bf16.mxu0 0
  %6198 = vmatpush1.bf16.msra.mxu0 %v4011
  %6199 = vmatprep.mubr.bf16.mxu0 %v1203
  %6200 = vmatmul.mubr.bf16.gmra.mrb[0].mxu0 %v1202
  %v6201 = vpop.f32.mrb[0].mxu0
  %v6202 = vadd.f32 %v6161, %v6201
  %v6203 = vpop.f32.mrb[0].mxu0
  %v6204 = vpop.f32.mrb[0].mxu0
  %v6205 = vadd.f32 %v6164, %v6204
  %v6206 = vpop.f32.mrb[0].mxu0
  %6207 = vdwg.mxu0
  %6208 = vmatprep.subr.bf16.mxu0 0
  %6209 = vmatpush1.bf16.msra.mxu0 %v4014
  %6210 = vmatprep.subr.bf16.mxu0 0
  %6211 = vmatpush1.bf16.msra.mxu0 %v4017
  %6212 = vmatprep.subr.bf16.mxu0 0
  %6213 = vmatpush1.bf16.msra.mxu0 %v4020
  %6214 = vmatprep.subr.bf16.mxu0 0
  %6215 = vmatpush1.bf16.msra.mxu0 %v4023
  %6216 = vmatprep.subr.bf16.mxu0 0
  %6217 = vmatpush1.bf16.msra.mxu0 %v4026
  %6218 = vmatprep.subr.bf16.mxu0 0
  %6219 = vmatpush1.bf16.msra.mxu0 %v4029
  %6220 = vmatprep.subr.bf16.mxu0 0
  %6221 = vmatpush1.bf16.msra.mxu0 %v4032
  %6222 = vmatprep.subr.bf16.mxu0 0
  %6223 = vmatpush1.bf16.msra.mxu0 %v4035
  %6224 = vmatprep.subr.bf16.mxu0 0
  %6225 = vmatpush1.bf16.msra.mxu0 %v4038
  %6226 = vmatprep.subr.bf16.mxu0 0
  %6227 = vmatpush1.bf16.msra.mxu0 %v4041
  %6228 = vmatprep.subr.bf16.mxu0 0
  %6229 = vmatpush1.bf16.msra.mxu0 %v4044
  %6230 = vmatprep.subr.bf16.mxu0 0
  %6231 = vmatpush1.bf16.msra.mxu0 %v4047
  %6232 = vmatprep.subr.bf16.mxu0 0
  %6233 = vmatpush1.bf16.msra.mxu0 %v4050
  %6234 = vmatprep.subr.bf16.mxu0 0
  %6235 = vmatpush1.bf16.msra.mxu0 %v4053
  %6236 = vmatprep.subr.bf16.mxu0 0
  %6237 = vmatpush1.bf16.msra.mxu0 %v4056
  %6238 = vmatprep.subr.bf16.mxu0 0
  %6239 = vmatpush1.bf16.msra.mxu0 %v4059
  %6240 = vmatprep.mubr.bf16.mxu0 %v1205
  %6241 = vmatmul.mubr.bf16.gmra.mrb[0].mxu0 %v1204
  %v6242 = vpop.f32.mrb[0].mxu0
  %v6243 = vadd.f32 %v6202, %v6242
  %v6244 = vpop.f32.mrb[0].mxu0
  %v6245 = vpop.f32.mrb[0].mxu0
  %v6246 = vadd.f32 %v6205, %v6245
  %v6247 = vpop.f32.mrb[0].mxu0
  %6248 = vdwg.mxu0
  %6249 = vmatprep.subr.bf16.mxu0 0
  %6250 = vmatpush1.bf16.msra.mxu0 %v4062
  %6251 = vmatprep.subr.bf16.mxu0 0
  %6252 = vmatpush1.bf16.msra.mxu0 %v4065
  %6253 = vmatprep.subr.bf16.mxu0 0
  %6254 = vmatpush1.bf16.msra.mxu0 %v4068
  %6255 = vmatprep.subr.bf16.mxu0 0
  %6256 = vmatpush1.bf16.msra.mxu0 %v4071
  %6257 = vmatprep.subr.bf16.mxu0 0
  %6258 = vmatpush1.bf16.msra.mxu0 %v4074
  %6259 = vmatprep.subr.bf16.mxu0 0
  %6260 = vmatpush1.bf16.msra.mxu0 %v4077
  %6261 = vmatprep.subr.bf16.mxu0 0
  %6262 = vmatpush1.bf16.msra.mxu0 %v4080
  %6263 = vmatprep.subr.bf16.mxu0 0
  %6264 = vmatpush1.bf16.msra.mxu0 %v4083
  %6265 = vmatprep.subr.bf16.mxu0 0
  %6266 = vmatpush1.bf16.msra.mxu0 %v4086
  %6267 = vmatprep.subr.bf16.mxu0 0
  %6268 = vmatpush1.bf16.msra.mxu0 %v4089
  %6269 = vmatprep.subr.bf16.mxu0 0
  %6270 = vmatpush1.bf16.msra.mxu0 %v4092
  %6271 = vmatprep.subr.bf16.mxu0 0
  %6272 = vmatpush1.bf16.msra.mxu0 %v4095
  %6273 = vmatprep.subr.bf16.mxu0 0
  %6274 = vmatpush1.bf16.msra.mxu0 %v4098
  %6275 = vmatprep.subr.bf16.mxu0 0
  %6276 = vmatpush1.bf16.msra.mxu0 %v4101
  %6277 = vmatprep.subr.bf16.mxu0 0
  %6278 = vmatpush1.bf16.msra.mxu0 %v4104
  %6279 = vmatprep.subr.bf16.mxu0 0
  %6280 = vmatpush1.bf16.msra.mxu0 %v4107
  %6281 = vmatprep.mubr.bf16.mxu0 %v1207
  %6282 = vmatmul.mubr.bf16.gmra.mrb[0].mxu0 %v1206
  %v6283 = vpop.f32.mrb[0].mxu0
  %v6284 = vadd.f32 %v6243, %v6283
  %v6285 = vpop.f32.mrb[0].mxu0
  %v6286 = vpop.f32.mrb[0].mxu0
  %v6287 = vadd.f32 %v6246, %v6286
  %v6288 = vpop.f32.mrb[0].mxu0
  %6289 = vdwg.mxu0
  %6290 = vmatprep.subr.bf16.mxu0 0
  %6291 = vmatpush1.bf16.msra.mxu0 %v4110
  %6292 = vmatprep.subr.bf16.mxu0 0
  %6293 = vmatpush1.bf16.msra.mxu0 %v4113
  %6294 = vmatprep.subr.bf16.mxu0 0
  %6295 = vmatpush1.bf16.msra.mxu0 %v4116
  %6296 = vmatprep.subr.bf16.mxu0 0
  %6297 = vmatpush1.bf16.msra.mxu0 %v4119
  %6298 = vmatprep.subr.bf16.mxu0 0
  %6299 = vmatpush1.bf16.msra.mxu0 %v4122
  %6300 = vmatprep.subr.bf16.mxu0 0
  %6301 = vmatpush1.bf16.msra.mxu0 %v4125
  %6302 = vmatprep.subr.bf16.mxu0 0
  %6303 = vmatpush1.bf16.msra.mxu0 %v4128
  %6304 = vmatprep.subr.bf16.mxu0 0
  %6305 = vmatpush1.bf16.msra.mxu0 %v4131
  %6306 = vmatprep.subr.bf16.mxu0 0
  %6307 = vmatpush1.bf16.msra.mxu0 %v4134
  %6308 = vmatprep.subr.bf16.mxu0 0
  %6309 = vmatpush1.bf16.msra.mxu0 %v4137
  %6310 = vmatprep.subr.bf16.mxu0 0
  %6311 = vmatpush1.bf16.msra.mxu0 %v4140
  %6312 = vmatprep.subr.bf16.mxu0 0
  %6313 = vmatpush1.bf16.msra.mxu0 %v4143
  %6314 = vmatprep.subr.bf16.mxu0 0
  %6315 = vmatpush1.bf16.msra.mxu0 %v4146
  %6316 = vmatprep.subr.bf16.mxu0 0
  %6317 = vmatpush1.bf16.msra.mxu0 %v4149
  %6318 = vmatprep.subr.bf16.mxu0 0
  %6319 = vmatpush1.bf16.msra.mxu0 %v4152
  %6320 = vmatprep.subr.bf16.mxu0 0
  %6321 = vmatpush1.bf16.msra.mxu0 %v4155
  %6322 = vmatprep.mubr.bf16.mxu0 %v1209
  %6323 = vmatmul.mubr.bf16.gmra.mrb[0].mxu0 %v1208
  %v6324 = vpop.f32.mrb[0].mxu0
  %v6325 = vadd.f32 %v6284, %v6324
  %v6326 = vpop.f32.mrb[0].mxu0
  %v6327 = vpop.f32.mrb[0].mxu0
  %v6328 = vadd.f32 %v6287, %v6327
  %v6329 = vpop.f32.mrb[0].mxu0
  %6330 = vdwg.mxu0
  %6331 = vmatprep.subr.bf16.mxu0 0
  %6332 = vmatpush1.bf16.msra.mxu0 %v4158
  %6333 = vmatprep.subr.bf16.mxu0 0
  %6334 = vmatpush1.bf16.msra.mxu0 %v4161
  %6335 = vmatprep.subr.bf16.mxu0 0
  %6336 = vmatpush1.bf16.msra.mxu0 %v4164
  %6337 = vmatprep.subr.bf16.mxu0 0
  %6338 = vmatpush1.bf16.msra.mxu0 %v4167
  %6339 = vmatprep.subr.bf16.mxu0 0
  %6340 = vmatpush1.bf16.msra.mxu0 %v4170
  %6341 = vmatprep.subr.bf16.mxu0 0
  %6342 = vmatpush1.bf16.msra.mxu0 %v4173
  %6343 = vmatprep.subr.bf16.mxu0 0
  %6344 = vmatpush1.bf16.msra.mxu0 %v4176
  %6345 = vmatprep.subr.bf16.mxu0 0
  %6346 = vmatpush1.bf16.msra.mxu0 %v4179
  %6347 = vmatprep.subr.bf16.mxu0 0
  %6348 = vmatpush1.bf16.msra.mxu0 %v4182
  %6349 = vmatprep.subr.bf16.mxu0 0
  %6350 = vmatpush1.bf16.msra.mxu0 %v4185
  %6351 = vmatprep.subr.bf16.mxu0 0
  %6352 = vmatpush1.bf16.msra.mxu0 %v4188
  %6353 = vmatprep.subr.bf16.mxu0 0
  %6354 = vmatpush1.bf16.msra.mxu0 %v4191
  %6355 = vmatprep.subr.bf16.mxu0 0
  %6356 = vmatpush1.bf16.msra.mxu0 %v4194
  %6357 = vmatprep.subr.bf16.mxu0 0
  %6358 = vmatpush1.bf16.msra.mxu0 %v4197
  %6359 = vmatprep.subr.bf16.mxu0 0
  %6360 = vmatpush1.bf16.msra.mxu0 %v4200
  %6361 = vmatprep.subr.bf16.mxu0 0
  %6362 = vmatpush1.bf16.msra.mxu0 %v4203
  %6363 = vmatprep.mubr.bf16.mxu0 %v1211
  %6364 = vmatmul.mubr.bf16.gmra.mrb[0].mxu0 %v1210
  %v6365 = vpop.f32.mrb[0].mxu0
  %v6366 = vadd.f32 %v6325, %v6365
  %v6367 = vpop.f32.mrb[0].mxu0
  %v6368 = vpop.f32.mrb[0].mxu0
  %v6369 = vadd.f32 %v6328, %v6368
  %v6370 = vpop.f32.mrb[0].mxu0
  %6371 = vdwg.mxu0
  %6372 = vmatprep.subr.bf16.mxu0 0
  %6373 = vmatpush1.bf16.msra.mxu0 %v4206
  %6374 = vmatprep.subr.bf16.mxu0 0
  %6375 = vmatpush1.bf16.msra.mxu0 %v4209
  %6376 = vmatprep.subr.bf16.mxu0 0
  %6377 = vmatpush1.bf16.msra.mxu0 %v4212
  %6378 = vmatprep.subr.bf16.mxu0 0
  %6379 = vmatpush1.bf16.msra.mxu0 %v4215
  %6380 = vmatprep.subr.bf16.mxu0 0
  %6381 = vmatpush1.bf16.msra.mxu0 %v4218
  %6382 = vmatprep.subr.bf16.mxu0 0
  %6383 = vmatpush1.bf16.msra.mxu0 %v4221
  %6384 = vmatprep.subr.bf16.mxu0 0
  %6385 = vmatpush1.bf16.msra.mxu0 %v4224
  %6386 = vmatprep.subr.bf16.mxu0 0
  %6387 = vmatpush1.bf16.msra.mxu0 %v4227
  %6388 = vmatprep.subr.bf16.mxu0 0
  %6389 = vmatpush1.bf16.msra.mxu0 %v4230
  %6390 = vmatprep.subr.bf16.mxu0 0
  %6391 = vmatpush1.bf16.msra.mxu0 %v4233
  %6392 = vmatprep.subr.bf16.mxu0 0
  %6393 = vmatpush1.bf16.msra.mxu0 %v4236
  %6394 = vmatprep.subr.bf16.mxu0 0
  %6395 = vmatpush1.bf16.msra.mxu0 %v4239
  %6396 = vmatprep.subr.bf16.mxu0 0
  %6397 = vmatpush1.bf16.msra.mxu0 %v4242
  %6398 = vmatprep.subr.bf16.mxu0 0
  %6399 = vmatpush1.bf16.msra.mxu0 %v4245
  %6400 = vmatprep.subr.bf16.mxu0 0
  %6401 = vmatpush1.bf16.msra.mxu0 %v4248
  %6402 = vmatprep.subr.bf16.mxu0 0
  %6403 = vmatpush1.bf16.msra.mxu0 %v4251
  %6404 = vmatprep.mubr.bf16.mxu0 %v1213
  %6405 = vmatmul.mubr.bf16.gmra.mrb[0].mxu0 %v1212
  %v6406 = vpop.f32.mrb[0].mxu0
  %v6407 = vadd.f32 %v6366, %v6406
  %v6408 = vpop.f32.mrb[0].mxu0
  %v6409 = vpop.f32.mrb[0].mxu0
  %v6410 = vadd.f32 %v6369, %v6409
  %v6411 = vpop.f32.mrb[0].mxu0
  %6412 = vdwg.mxu0
  %6413 = vmatprep.subr.bf16.mxu0 0
  %6414 = vmatpush1.bf16.msra.mxu0 %v4254
  %6415 = vmatprep.subr.bf16.mxu0 0
  %6416 = vmatpush1.bf16.msra.mxu0 %v4257
  %6417 = vmatprep.subr.bf16.mxu0 0
  %6418 = vmatpush1.bf16.msra.mxu0 %v4260
  %6419 = vmatprep.subr.bf16.mxu0 0
  %6420 = vmatpush1.bf16.msra.mxu0 %v4263
  %6421 = vmatprep.subr.bf16.mxu0 0
  %6422 = vmatpush1.bf16.msra.mxu0 %v4266
  %6423 = vmatprep.subr.bf16.mxu0 0
  %6424 = vmatpush1.bf16.msra.mxu0 %v4269
  %6425 = vmatprep.subr.bf16.mxu0 0
  %6426 = vmatpush1.bf16.msra.mxu0 %v4272
  %6427 = vmatprep.subr.bf16.mxu0 0
  %6428 = vmatpush1.bf16.msra.mxu0 %v4275
  %6429 = vmatprep.subr.bf16.mxu0 0
  %6430 = vmatpush1.bf16.msra.mxu0 %v4278
  %6431 = vmatprep.subr.bf16.mxu0 0
  %6432 = vmatpush1.bf16.msra.mxu0 %v4281
  %6433 = vmatprep.subr.bf16.mxu0 0
  %6434 = vmatpush1.bf16.msra.mxu0 %v4284
  %6435 = vmatprep.subr.bf16.mxu0 0
  %6436 = vmatpush1.bf16.msra.mxu0 %v4287
  %6437 = vmatprep.subr.bf16.mxu0 0
  %6438 = vmatpush1.bf16.msra.mxu0 %v4290
  %6439 = vmatprep.subr.bf16.mxu0 0
  %6440 = vmatpush1.bf16.msra.mxu0 %v4293
  %6441 = vmatprep.subr.bf16.mxu0 0
  %6442 = vmatpush1.bf16.msra.mxu0 %v4296
  %6443 = vmatprep.subr.bf16.mxu0 0
  %6444 = vmatpush1.bf16.msra.mxu0 %v4299
  %6445 = vmatprep.mubr.bf16.mxu0 %v1215
  %6446 = vmatmul.mubr.bf16.gmra.mrb[0].mxu0 %v1214
  %v6447 = vpop.f32.mrb[0].mxu0
  %v6448 = vadd.f32 %v6407, %v6447
  %v6449 = vpop.f32.mrb[0].mxu0
  %v6450 = vpop.f32.mrb[0].mxu0
  %v6451 = vadd.f32 %v6410, %v6450
  %v6452 = vpop.f32.mrb[0].mxu0
  %6453 = vdwg.mxu0
  %6454 = vmatprep.subr.bf16.mxu0 0
  %6455 = vmatpush1.bf16.msra.mxu0 %v4302
  %6456 = vmatprep.subr.bf16.mxu0 0
  %6457 = vmatpush1.bf16.msra.mxu0 %v4305
  %6458 = vmatprep.subr.bf16.mxu0 0
  %6459 = vmatpush1.bf16.msra.mxu0 %v4308
  %6460 = vmatprep.subr.bf16.mxu0 0
  %6461 = vmatpush1.bf16.msra.mxu0 %v4311
  %6462 = vmatprep.subr.bf16.mxu0 0
  %6463 = vmatpush1.bf16.msra.mxu0 %v4314
  %6464 = vmatprep.subr.bf16.mxu0 0
  %6465 = vmatpush1.bf16.msra.mxu0 %v4317
  %6466 = vmatprep.subr.bf16.mxu0 0
  %6467 = vmatpush1.bf16.msra.mxu0 %v4320
  %6468 = vmatprep.subr.bf16.mxu0 0
  %6469 = vmatpush1.bf16.msra.mxu0 %v4323
  %6470 = vmatprep.subr.bf16.mxu0 0
  %6471 = vmatpush1.bf16.msra.mxu0 %v4326
  %6472 = vmatprep.subr.bf16.mxu0 0
  %6473 = vmatpush1.bf16.msra.mxu0 %v4329
  %6474 = vmatprep.subr.bf16.mxu0 0
  %6475 = vmatpush1.bf16.msra.mxu0 %v4332
  %6476 = vmatprep.subr.bf16.mxu0 0
  %6477 = vmatpush1.bf16.msra.mxu0 %v4335
  %6478 = vmatprep.subr.bf16.mxu0 0
  %6479 = vmatpush1.bf16.msra.mxu0 %v4338
  %6480 = vmatprep.subr.bf16.mxu0 0
  %6481 = vmatpush1.bf16.msra.mxu0 %v4341
  %6482 = vmatprep.subr.bf16.mxu0 0
  %6483 = vmatpush1.bf16.msra.mxu0 %v4344
  %6484 = vmatprep.subr.bf16.mxu0 0
  %6485 = vmatpush1.bf16.msra.mxu0 %v4347
  %6486 = vmatprep.mubr.bf16.mxu0 %v1217
  %6487 = vmatmul.mubr.bf16.gmra.mrb[0].mxu0 %v1216
  %v6488 = vpop.f32.mrb[0].mxu0
  %v6489 = vadd.f32 %v6448, %v6488
  %v6490 = vpop.f32.mrb[0].mxu0
  %v6491 = vpop.f32.mrb[0].mxu0
  %v6492 = vadd.f32 %v6451, %v6491
  %v6493 = vpop.f32.mrb[0].mxu0
  %6494 = vdwg.mxu0
  %6495 = vmatprep.subr.bf16.mxu0 0
  %6496 = vmatpush1.bf16.msra.mxu0 %v4350
  %6497 = vmatprep.subr.bf16.mxu0 0
  %6498 = vmatpush1.bf16.msra.mxu0 %v4353
  %6499 = vmatprep.subr.bf16.mxu0 0
  %6500 = vmatpush1.bf16.msra.mxu0 %v4356
  %6501 = vmatprep.subr.bf16.mxu0 0
  %6502 = vmatpush1.bf16.msra.mxu0 %v4359
  %6503 = vmatprep.subr.bf16.mxu0 0
  %6504 = vmatpush1.bf16.msra.mxu0 %v4362
  %6505 = vmatprep.subr.bf16.mxu0 0
  %6506 = vmatpush1.bf16.msra.mxu0 %v4365
  %6507 = vmatprep.subr.bf16.mxu0 0
  %6508 = vmatpush1.bf16.msra.mxu0 %v4368
  %6509 = vmatprep.subr.bf16.mxu0 0
  %6510 = vmatpush1.bf16.msra.mxu0 %v4371
  %6511 = vmatprep.subr.bf16.mxu0 0
  %6512 = vmatpush1.bf16.msra.mxu0 %v4374
  %6513 = vmatprep.subr.bf16.mxu0 0
  %6514 = vmatpush1.bf16.msra.mxu0 %v4377
  %6515 = vmatprep.subr.bf16.mxu0 0
  %6516 = vmatpush1.bf16.msra.mxu0 %v4380
  %6517 = vmatprep.subr.bf16.mxu0 0
  %6518 = vmatpush1.bf16.msra.mxu0 %v4383
  %6519 = vmatprep.subr.bf16.mxu0 0
  %6520 = vmatpush1.bf16.msra.mxu0 %v4386
  %6521 = vmatprep.subr.bf16.mxu0 0
  %6522 = vmatpush1.bf16.msra.mxu0 %v4389
  %6523 = vmatprep.subr.bf16.mxu0 0
  %6524 = vmatpush1.bf16.msra.mxu0 %v4392
  %6525 = vmatprep.subr.bf16.mxu0 0
  %6526 = vmatpush1.bf16.msra.mxu0 %v4395
  %6527 = vmatprep.mubr.bf16.mxu0 %v1219
  %6528 = vmatmul.mubr.bf16.gmra.mrb[0].mxu0 %v1218
  %v6529 = vpop.f32.mrb[0].mxu0
  %v6530 = vadd.f32 %v6489, %v6529
  %v6531 = vpop.f32.mrb[0].mxu0
  %v6532 = vpop.f32.mrb[0].mxu0
  %v6533 = vadd.f32 %v6492, %v6532
  %v6534 = vpop.f32.mrb[0].mxu0
  %6535 = vdwg.mxu0
  %6536 = vmatprep.subr.bf16.mxu0 0
  %6537 = vmatpush1.bf16.msra.mxu0 %v4398
  %6538 = vmatprep.subr.bf16.mxu0 0
  %6539 = vmatpush1.bf16.msra.mxu0 %v4401
  %6540 = vmatprep.subr.bf16.mxu0 0
  %6541 = vmatpush1.bf16.msra.mxu0 %v4404
  %6542 = vmatprep.subr.bf16.mxu0 0
  %6543 = vmatpush1.bf16.msra.mxu0 %v4407
  %6544 = vmatprep.subr.bf16.mxu0 0
  %6545 = vmatpush1.bf16.msra.mxu0 %v4410
  %6546 = vmatprep.subr.bf16.mxu0 0
  %6547 = vmatpush1.bf16.msra.mxu0 %v4413
  %6548 = vmatprep.subr.bf16.mxu0 0
  %6549 = vmatpush1.bf16.msra.mxu0 %v4416
  %6550 = vmatprep.subr.bf16.mxu0 0
  %6551 = vmatpush1.bf16.msra.mxu0 %v4419
  %6552 = vmatprep.subr.bf16.mxu0 0
  %6553 = vmatpush1.bf16.msra.mxu0 %v4422
  %6554 = vmatprep.subr.bf16.mxu0 0
  %6555 = vmatpush1.bf16.msra.mxu0 %v4425
  %6556 = vmatprep.subr.bf16.mxu0 0
  %6557 = vmatpush1.bf16.msra.mxu0 %v4428
  %6558 = vmatprep.subr.bf16.mxu0 0
  %6559 = vmatpush1.bf16.msra.mxu0 %v4431
  %6560 = vmatprep.subr.bf16.mxu0 0
  %6561 = vmatpush1.bf16.msra.mxu0 %v4434
  %6562 = vmatprep.subr.bf16.mxu0 0
  %6563 = vmatpush1.bf16.msra.mxu0 %v4437
  %6564 = vmatprep.subr.bf16.mxu0 0
  %6565 = vmatpush1.bf16.msra.mxu0 %v4440
  %6566 = vmatprep.subr.bf16.mxu0 0
  %6567 = vmatpush1.bf16.msra.mxu0 %v4443
  %6568 = vmatprep.mubr.bf16.mxu0 %v1221
  %6569 = vmatmul.mubr.bf16.gmra.mrb[0].mxu0 %v1220
  %v6570 = vpop.f32.mrb[0].mxu0
  %v6571 = vadd.f32 %v6530, %v6570
  %v6572 = vpop.f32.mrb[0].mxu0
  %v6573 = vpop.f32.mrb[0].mxu0
  %v6574 = vadd.f32 %v6533, %v6573
  %v6575 = vpop.f32.mrb[0].mxu0
  %6576 = vdwg.mxu0
  %6577 = vmatprep.subr.bf16.mxu0 0
  %6578 = vmatpush1.bf16.msra.mxu0 %v4446
  %6579 = vmatprep.subr.bf16.mxu0 0
  %6580 = vmatpush1.bf16.msra.mxu0 %v4449
  %6581 = vmatprep.subr.bf16.mxu0 0
  %6582 = vmatpush1.bf16.msra.mxu0 %v4452
  %6583 = vmatprep.subr.bf16.mxu0 0
  %6584 = vmatpush1.bf16.msra.mxu0 %v4455
  %6585 = vmatprep.subr.bf16.mxu0 0
  %6586 = vmatpush1.bf16.msra.mxu0 %v4458
  %6587 = vmatprep.subr.bf16.mxu0 0
  %6588 = vmatpush1.bf16.msra.mxu0 %v4461
  %6589 = vmatprep.subr.bf16.mxu0 0
  %6590 = vmatpush1.bf16.msra.mxu0 %v4464
  %6591 = vmatprep.subr.bf16.mxu0 0
  %6592 = vmatpush1.bf16.msra.mxu0 %v4467
  %6593 = vmatprep.subr.bf16.mxu0 0
  %6594 = vmatpush1.bf16.msra.mxu0 %v4470
  %6595 = vmatprep.subr.bf16.mxu0 0
  %6596 = vmatpush1.bf16.msra.mxu0 %v4473
  %6597 = vmatprep.subr.bf16.mxu0 0
  %6598 = vmatpush1.bf16.msra.mxu0 %v4476
  %6599 = vmatprep.subr.bf16.mxu0 0
  %6600 = vmatpush1.bf16.msra.mxu0 %v4479
  %6601 = vmatprep.subr.bf16.mxu0 0
  %6602 = vmatpush1.bf16.msra.mxu0 %v4482
  %6603 = vmatprep.subr.bf16.mxu0 0
  %6604 = vmatpush1.bf16.msra.mxu0 %v4485
  %6605 = vmatprep.subr.bf16.mxu0 0
  %6606 = vmatpush1.bf16.msra.mxu0 %v4488
  %6607 = vmatprep.subr.bf16.mxu0 0
  %6608 = vmatpush1.bf16.msra.mxu0 %v4491
  %6609 = vmatprep.mubr.bf16.mxu0 %v1223
  %6610 = vmatmul.mubr.bf16.gmra.mrb[0].mxu0 %v1222
  %v6611 = vpop.f32.mrb[0].mxu0
  %v6612 = vadd.f32 %v6571, %v6611
  %v6613 = vpop.f32.mrb[0].mxu0
  %v6614 = vpop.f32.mrb[0].mxu0
  %v6615 = vadd.f32 %v6574, %v6614
  %v6616 = vpop.f32.mrb[0].mxu0
  %6617 = vdwg.mxu0
  %6618 = vmatprep.subr.bf16.mxu0 0
  %6619 = vmatpush1.bf16.msra.mxu0 %v4494
  %6620 = vmatprep.subr.bf16.mxu0 0
  %6621 = vmatpush1.bf16.msra.mxu0 %v4497
  %6622 = vmatprep.subr.bf16.mxu0 0
  %6623 = vmatpush1.bf16.msra.mxu0 %v4500
  %6624 = vmatprep.subr.bf16.mxu0 0
  %6625 = vmatpush1.bf16.msra.mxu0 %v4503
  %6626 = vmatprep.subr.bf16.mxu0 0
  %6627 = vmatpush1.bf16.msra.mxu0 %v4506
  %6628 = vmatprep.subr.bf16.mxu0 0
  %6629 = vmatpush1.bf16.msra.mxu0 %v4509
  %6630 = vmatprep.subr.bf16.mxu0 0
  %6631 = vmatpush1.bf16.msra.mxu0 %v4512
  %6632 = vmatprep.subr.bf16.mxu0 0
  %6633 = vmatpush1.bf16.msra.mxu0 %v4515
  %6634 = vmatprep.subr.bf16.mxu0 0
  %6635 = vmatpush1.bf16.msra.mxu0 %v4518
  %6636 = vmatprep.subr.bf16.mxu0 0
  %6637 = vmatpush1.bf16.msra.mxu0 %v4521
  %6638 = vmatprep.subr.bf16.mxu0 0
  %6639 = vmatpush1.bf16.msra.mxu0 %v4524
  %6640 = vmatprep.subr.bf16.mxu0 0
  %6641 = vmatpush1.bf16.msra.mxu0 %v4527
  %6642 = vmatprep.subr.bf16.mxu0 0
  %6643 = vmatpush1.bf16.msra.mxu0 %v4530
  %6644 = vmatprep.subr.bf16.mxu0 0
  %6645 = vmatpush1.bf16.msra.mxu0 %v4533
  %6646 = vmatprep.subr.bf16.mxu0 0
  %6647 = vmatpush1.bf16.msra.mxu0 %v4536
  %6648 = vmatprep.subr.bf16.mxu0 0
  %6649 = vmatpush1.bf16.msra.mxu0 %v4539
  %6650 = vmatprep.mubr.bf16.mxu0 %v1225
  %6651 = vmatmul.mubr.bf16.gmra.mrb[0].mxu0 %v1224
  %v6652 = vpop.f32.mrb[0].mxu0
  %v6653 = vadd.f32 %v6612, %v6652
  %v6654 = vpop.f32.mrb[0].mxu0
  %v6655 = vpop.f32.mrb[0].mxu0
  %v6656 = vadd.f32 %v6615, %v6655
  %v6657 = vpop.f32.mrb[0].mxu0
  %6658 = vdwg.mxu0
  %6659 = vmatprep.subr.bf16.mxu0 0
  %6660 = vmatpush1.bf16.msra.mxu0 %v4542
  %6661 = vmatprep.subr.bf16.mxu0 0
  %6662 = vmatpush1.bf16.msra.mxu0 %v4545
  %6663 = vmatprep.subr.bf16.mxu0 0
  %6664 = vmatpush1.bf16.msra.mxu0 %v4548
  %6665 = vmatprep.subr.bf16.mxu0 0
  %6666 = vmatpush1.bf16.msra.mxu0 %v4551
  %6667 = vmatprep.subr.bf16.mxu0 0
  %6668 = vmatpush1.bf16.msra.mxu0 %v4554
  %6669 = vmatprep.subr.bf16.mxu0 0
  %6670 = vmatpush1.bf16.msra.mxu0 %v4557
  %6671 = vmatprep.subr.bf16.mxu0 0
  %6672 = vmatpush1.bf16.msra.mxu0 %v4560
  %6673 = vmatprep.subr.bf16.mxu0 0
  %6674 = vmatpush1.bf16.msra.mxu0 %v4563
  %6675 = vmatprep.subr.bf16.mxu0 0
  %6676 = vmatpush1.bf16.msra.mxu0 %v4566
  %6677 = vmatprep.subr.bf16.mxu0 0
  %6678 = vmatpush1.bf16.msra.mxu0 %v4569
  %6679 = vmatprep.subr.bf16.mxu0 0
  %6680 = vmatpush1.bf16.msra.mxu0 %v4572
  %6681 = vmatprep.subr.bf16.mxu0 0
  %6682 = vmatpush1.bf16.msra.mxu0 %v4575
  %6683 = vmatprep.subr.bf16.mxu0 0
  %6684 = vmatpush1.bf16.msra.mxu0 %v4578
  %6685 = vmatprep.subr.bf16.mxu0 0
  %6686 = vmatpush1.bf16.msra.mxu0 %v4581
  %6687 = vmatprep.subr.bf16.mxu0 0
  %6688 = vmatpush1.bf16.msra.mxu0 %v4584
  %6689 = vmatprep.subr.bf16.mxu0 0
  %6690 = vmatpush1.bf16.msra.mxu0 %v4587
  %6691 = vmatprep.mubr.bf16.mxu0 %v1227
  %6692 = vmatmul.mubr.bf16.gmra.mrb[0].mxu0 %v1226
  %v6693 = vpop.f32.mrb[0].mxu0
  %v6694 = vadd.f32 %v6653, %v6693
  %v6695 = vpop.f32.mrb[0].mxu0
  %v6696 = vpop.f32.mrb[0].mxu0
  %v6697 = vadd.f32 %v6656, %v6696
  %v6698 = vpop.f32.mrb[0].mxu0
  %6699 = vdwg.mxu0
  %v6700 = vmax.f32 %v6036, 0.0
  %v6701 = vmax.f32 %v6038, 0.0
  %v6702 = vmax.f32 %v6694, 0.0
  %v6703 = vmax.f32 %v6040, 0.0
  %v6704 = vmax.f32 %v6042, 0.0
  %v6705 = vmax.f32 %v6697, 0.0
  %v6706 = vpack.c.bf16 %v6703, %v6700
  %v6707 = vpack.c.bf16 %v6704, %v6701
  %v6708 = vpack.c.bf16 %v6705, %v6702
  %v6709 = vld [vmem:[%s3] sm:$0xff]
  %v6710 = vld [vmem:[%s3 + $0x8] sm:$0xff]
  %v6711 = vld [vmem:[%s3 + $0x10] sm:$0xff]
  %v6712 = vld [vmem:[%s3 + $0x18] sm:$0xff]
  %v6713 = vld [vmem:[%s3 + $0x20] sm:$0xff]
  %v6714 = vld [vmem:[%s3 + $0x28] sm:$0xff]
  %v6715 = vld [vmem:[%s3 + $0x30] sm:$0xff]
  %v6716 = vld [vmem:[%s3 + $0x38] sm:$0xff]
  %v6717 = vld [vmem:[%s3 + $0x40] sm:$0xff]
  %v6718 = vld [vmem:[%s3 + $0x48] sm:$0xff]
  %v6719 = vld [vmem:[%s3 + $0x50] sm:$0xff]
  %v6720 = vld [vmem:[%s3 + $0x58] sm:$0xff]
  %v6721 = vld [vmem:[%s3 + $0x60] sm:$0xff]
  %v6722 = vld [vmem:[%s3 + $0x68] sm:$0xff]
  %v6723 = vld [vmem:[%s3 + $0x70] sm:$0xff]
  %v6724 = vld [vmem:[%s3 + $0x78] sm:$0xff]
  %v6725 = vld [vmem:[%s3 + $0x80] sm:$0xff]
  %v6726 = vld [vmem:[%s3 + $0x88] sm:$0xff]
  %v6727 = vld [vmem:[%s3 + $0x90] sm:$0xff]
  %v6728 = vld [vmem:[%s3 + $0x98] sm:$0xff]
  %v6729 = vld [vmem:[%s3 + $0xa0] sm:$0xff]
  %v6730 = vld [vmem:[%s3 + $0xa8] sm:$0xff]
  %v6731 = vld [vmem:[%s3 + $0xb0] sm:$0xff]
  %v6732 = vld [vmem:[%s3 + $0xb8] sm:$0xff]
  %v6733 = vld [vmem:[%s3 + $0xc0] sm:$0xff]
  %v6734 = vld [vmem:[%s3 + $0xc8] sm:$0xff]
  %v6735 = vld [vmem:[%s3 + $0xd0] sm:$0xff]
  %v6736 = vld [vmem:[%s3 + $0xd8] sm:$0xff]
  %v6737 = vld [vmem:[%s3 + $0xe0] sm:$0xff]
  %v6738 = vld [vmem:[%s3 + $0xe8] sm:$0xff]
  %v6739 = vld [vmem:[%s3 + $0xf0] sm:$0xff]
  %v6740 = vld [vmem:[%s3 + $0xf8] sm:$0xff]
  %v6741 = vld [vmem:[%s3 + $0x100] sm:$0xff]
  %v6742 = vld [vmem:[%s3 + $0x108] sm:$0xff]
  %v6743 = vld [vmem:[%s3 + $0x110] sm:$0xff]
  %v6744 = vld [vmem:[%s3 + $0x118] sm:$0xff]
  %v6745 = vld [vmem:[%s3 + $0x120] sm:$0xff]
  %v6746 = vld [vmem:[%s3 + $0x128] sm:$0xff]
  %v6747 = vld [vmem:[%s3 + $0x130] sm:$0xff]
  %v6748 = vld [vmem:[%s3 + $0x138] sm:$0xff]
  %v6749 = vld [vmem:[%s3 + $0x140] sm:$0xff]
  %v6750 = vld [vmem:[%s3 + $0x148] sm:$0xff]
  %v6751 = vld [vmem:[%s3 + $0x150] sm:$0xff]
  %v6752 = vld [vmem:[%s3 + $0x158] sm:$0xff]
  %v6753 = vld [vmem:[%s3 + $0x160] sm:$0xff]
  %v6754 = vld [vmem:[%s3 + $0x168] sm:$0xff]
  %v6755 = vld [vmem:[%s3 + $0x170] sm:$0xff]
  %v6756 = vld [vmem:[%s3 + $0x178] sm:$0xff]
  %v6757 = vld [vmem:[%s4] sm:$0x3]
  %v6759 = vlaneseq
  %v6760 = vshrl.u32 %v6759, 7
  %v6761 = vsub.s32 0, %v6760
  %v6762 = vrot.slane %v6757, %v6761
  %v6763 = vlaneseq
  %v6764 = vshrl.u32 %v6763, 7
  %v6765 = vsub.s32 1, %v6764
  %v6766 = vrot.slane %v6757, %v6765
  %v6817 = vunpack.c.l.b16 %v6709
  %v6818 = vunpack.c.h.b16 %v6709
  %v6819 = vunpack.c.l.b16 %v6710
  %v6820 = vunpack.c.h.b16 %v6710
  %v6821 = vunpack.c.l.b16 %v6711
  %v6822 = vunpack.c.h.b16 %v6711
  %v6823 = vunpack.c.l.b16 %v6712
  %v6824 = vunpack.c.h.b16 %v6712
  %v6825 = vunpack.c.l.b16 %v6713
  %v6826 = vunpack.c.h.b16 %v6713
  %v6827 = vunpack.c.l.b16 %v6714
  %v6828 = vunpack.c.h.b16 %v6714
  %v6829 = vunpack.c.l.b16 %v6715
  %v6830 = vunpack.c.h.b16 %v6715
  %v6831 = vunpack.c.l.b16 %v6716
  %v6832 = vunpack.c.h.b16 %v6716
  %v6833 = vunpack.c.l.b16 %v6717
  %v6834 = vunpack.c.h.b16 %v6717
  %v6835 = vunpack.c.l.b16 %v6718
  %v6836 = vunpack.c.h.b16 %v6718
  %v6837 = vunpack.c.l.b16 %v6719
  %v6838 = vunpack.c.h.b16 %v6719
  %v6839 = vunpack.c.l.b16 %v6720
  %v6840 = vunpack.c.h.b16 %v6720
  %v6841 = vunpack.c.l.b16 %v6721
  %v6842 = vunpack.c.h.b16 %v6721
  %v6843 = vunpack.c.l.b16 %v6722
  %v6844 = vunpack.c.h.b16 %v6722
  %v6845 = vunpack.c.l.b16 %v6723
  %v6846 = vunpack.c.h.b16 %v6723
  %v6847 = vunpack.c.l.b16 %v6724
  %v6848 = vunpack.c.h.b16 %v6724
  %v6849 = vunpack.c.l.b16 %v6725
  %v6850 = vunpack.c.h.b16 %v6725
  %v6851 = vunpack.c.l.b16 %v6726
  %v6852 = vunpack.c.h.b16 %v6726
  %v6853 = vunpack.c.l.b16 %v6727
  %v6854 = vunpack.c.h.b16 %v6727
  %v6855 = vunpack.c.l.b16 %v6728
  %v6856 = vunpack.c.h.b16 %v6728
  %v6857 = vunpack.c.l.b16 %v6729
  %v6858 = vunpack.c.h.b16 %v6729
  %v6859 = vunpack.c.l.b16 %v6730
  %v6860 = vunpack.c.h.b16 %v6730
  %v6861 = vunpack.c.l.b16 %v6731
  %v6862 = vunpack.c.h.b16 %v6731
  %v6863 = vunpack.c.l.b16 %v6732
  %v6864 = vunpack.c.h.b16 %v6732
  %v6865 = vunpack.c.l.b16 %v6733
  %v6866 = vunpack.c.h.b16 %v6733
  %v6867 = vunpack.c.l.b16 %v6734
  %v6868 = vunpack.c.h.b16 %v6734
  %v6869 = vunpack.c.l.b16 %v6735
  %v6870 = vunpack.c.h.b16 %v6735
  %v6871 = vunpack.c.l.b16 %v6736
  %v6872 = vunpack.c.h.b16 %v6736
  %v6873 = vunpack.c.l.b16 %v6737
  %v6874 = vunpack.c.h.b16 %v6737
  %v6875 = vunpack.c.l.b16 %v6738
  %v6876 = vunpack.c.h.b16 %v6738
  %v6877 = vunpack.c.l.b16 %v6739
  %v6878 = vunpack.c.h.b16 %v6739
  %v6879 = vunpack.c.l.b16 %v6740
  %v6880 = vunpack.c.h.b16 %v6740
  %v6881 = vunpack.c.l.b16 %v6741
  %v6882 = vunpack.c.h.b16 %v6741
  %v6883 = vunpack.c.l.b16 %v6742
  %v6884 = vunpack.c.h.b16 %v6742
  %v6885 = vunpack.c.l.b16 %v6743
  %v6886 = vunpack.c.h.b16 %v6743
  %v6887 = vunpack.c.l.b16 %v6744
  %v6888 = vunpack.c.h.b16 %v6744
  %v6889 = vunpack.c.l.b16 %v6745
  %v6890 = vunpack.c.h.b16 %v6745
  %v6891 = vunpack.c.l.b16 %v6746
  %v6892 = vunpack.c.h.b16 %v6746
  %v6893 = vunpack.c.l.b16 %v6747
  %v6894 = vunpack.c.h.b16 %v6747
  %v6895 = vunpack.c.l.b16 %v6748
  %v6896 = vunpack.c.h.b16 %v6748
  %v6897 = vunpack.c.l.b16 %v6749
  %v6898 = vunpack.c.h.b16 %v6749
  %v6899 = vunpack.c.l.b16 %v6750
  %v6900 = vunpack.c.h.b16 %v6750
  %v6901 = vunpack.c.l.b16 %v6751
  %v6902 = vunpack.c.h.b16 %v6751
  %v6903 = vunpack.c.l.b16 %v6752
  %v6904 = vunpack.c.h.b16 %v6752
  %v6905 = vunpack.c.l.b16 %v6753
  %v6906 = vunpack.c.h.b16 %v6753
  %v6907 = vunpack.c.l.b16 %v6754
  %v6908 = vunpack.c.h.b16 %v6754
  %v6909 = vunpack.c.l.b16 %v6755
  %v6910 = vunpack.c.h.b16 %v6755
  %v6911 = vunpack.c.l.b16 %v6756
  %v6912 = vunpack.c.h.b16 %v6756
  %v6913 = vpack.c.b16 %v6819, %v6817
  %v6914 = vpack.c.b16 %v6820, %v6818
  %v6915 = vpack.c.b16 %v6823, %v6821
  %v6916 = vpack.c.b16 %v6824, %v6822
  %v6917 = vpack.c.b16 %v6827, %v6825
  %v6918 = vpack.c.b16 %v6828, %v6826
  %v6919 = vpack.c.b16 %v6831, %v6829
  %v6920 = vpack.c.b16 %v6832, %v6830
  %v6921 = vpack.c.b16 %v6835, %v6833
  %v6922 = vpack.c.b16 %v6836, %v6834
  %v6923 = vpack.c.b16 %v6839, %v6837
  %v6924 = vpack.c.b16 %v6840, %v6838
  %v6925 = vpack.c.b16 %v6843, %v6841
  %v6926 = vpack.c.b16 %v6844, %v6842
  %v6927 = vpack.c.b16 %v6847, %v6845
  %v6928 = vpack.c.b16 %v6848, %v6846
  %v6929 = vpack.c.b16 %v6851, %v6849
  %v6930 = vpack.c.b16 %v6852, %v6850
  %v6931 = vpack.c.b16 %v6855, %v6853
  %v6932 = vpack.c.b16 %v6856, %v6854
  %v6933 = vpack.c.b16 %v6859, %v6857
  %v6934 = vpack.c.b16 %v6860, %v6858
  %v6935 = vpack.c.b16 %v6863, %v6861
  %v6936 = vpack.c.b16 %v6864, %v6862
  %v6937 = vpack.c.b16 %v6867, %v6865
  %v6938 = vpack.c.b16 %v6868, %v6866
  %v6939 = vpack.c.b16 %v6871, %v6869
  %v6940 = vpack.c.b16 %v6872, %v6870
  %v6941 = vpack.c.b16 %v6875, %v6873
  %v6942 = vpack.c.b16 %v6876, %v6874
  %v6943 = vpack.c.b16 %v6879, %v6877
  %v6944 = vpack.c.b16 %v6880, %v6878
  %v6945 = vpack.c.b16 %v6883, %v6881
  %v6946 = vpack.c.b16 %v6884, %v6882
  %v6947 = vpack.c.b16 %v6887, %v6885
  %v6948 = vpack.c.b16 %v6888, %v6886
  %v6949 = vpack.c.b16 %v6891, %v6889
  %v6950 = vpack.c.b16 %v6892, %v6890
  %v6951 = vpack.c.b16 %v6895, %v6893
  %v6952 = vpack.c.b16 %v6896, %v6894
  %v6953 = vpack.c.b16 %v6899, %v6897
  %v6954 = vpack.c.b16 %v6900, %v6898
  %v6955 = vpack.c.b16 %v6903, %v6901
  %v6956 = vpack.c.b16 %v6904, %v6902
  %v6957 = vpack.c.b16 %v6907, %v6905
  %v6958 = vpack.c.b16 %v6908, %v6906
  %v6959 = vpack.c.b16 %v6911, %v6909
  %v6960 = vpack.c.b16 %v6912, %v6910
  %7009 = vmatprep.subr.bf16.mxu0 %v6914
  %7010 = vmatpush1.bf16.msra.mxu0 %v6913
  %7011 = vmatprep.subr.bf16.mxu0 %v6916
  %7012 = vmatpush1.bf16.msra.mxu0 %v6915
  %7013 = vmatprep.subr.bf16.mxu0 %v6918
  %7014 = vmatpush1.bf16.msra.mxu0 %v6917
  %7015 = vmatprep.subr.bf16.mxu0 %v6920
  %7016 = vmatpush1.bf16.msra.mxu0 %v6919
  %7017 = vmatprep.subr.bf16.mxu0 %v6922
  %7018 = vmatpush1.bf16.msra.mxu0 %v6921
  %7019 = vmatprep.subr.bf16.mxu0 %v6924
  %7020 = vmatpush1.bf16.msra.mxu0 %v6923
  %7021 = vmatprep.subr.bf16.mxu0 %v6926
  %7022 = vmatpush1.bf16.msra.mxu0 %v6925
  %7023 = vmatprep.subr.bf16.mxu0 %v6928
  %7024 = vmatpush1.bf16.msra.mxu0 %v6927
  %7025 = vmatprep.subr.bf16.mxu0 %v6930
  %7026 = vmatpush1.bf16.msra.mxu0 %v6929
  %7027 = vmatprep.subr.bf16.mxu0 %v6932
  %7028 = vmatpush1.bf16.msra.mxu0 %v6931
  %7029 = vmatprep.subr.bf16.mxu0 %v6934
  %7030 = vmatpush1.bf16.msra.mxu0 %v6933
  %7031 = vmatprep.subr.bf16.mxu0 %v6936
  %7032 = vmatpush1.bf16.msra.mxu0 %v6935
  %7033 = vmatprep.subr.bf16.mxu0 %v6938
  %7034 = vmatpush1.bf16.msra.mxu0 %v6937
  %7035 = vmatprep.subr.bf16.mxu0 %v6940
  %7036 = vmatpush1.bf16.msra.mxu0 %v6939
  %7037 = vmatprep.subr.bf16.mxu0 %v6942
  %7038 = vmatpush1.bf16.msra.mxu0 %v6941
  %7039 = vmatprep.subr.bf16.mxu0 %v6944
  %7040 = vmatpush1.bf16.msra.mxu0 %v6943
  %7041 = vmatprep.mubr.bf16.mxu0 %v6707
  %7042 = vmatmul.mubr.bf16.gmra.mrb[0].mxu0 %v6706
  %v7043 = vpop.f32.mrb[0].mxu0
  %v7044 = vadd.f32 %v6762, %v7043
  %v7045 = vpop.f32.mrb[0].mxu0
  %v7046 = vadd.f32 %v6766, %v7045
  %v7047 = vpop.f32.mrb[0].mxu0
  %v7048 = vadd.f32 %v6762, %v7047
  %v7049 = vpop.f32.mrb[0].mxu0
  %v7050 = vadd.f32 %v6766, %v7049
  %7051 = vdwg.mxu0
  %7052 = vmatprep.subr.bf16.mxu0 %v6946
  %7053 = vmatpush1.bf16.msra.mxu0 %v6945
  %7054 = vmatprep.subr.bf16.mxu0 %v6948
  %7055 = vmatpush1.bf16.msra.mxu0 %v6947
  %7056 = vmatprep.subr.bf16.mxu0 %v6950
  %7057 = vmatpush1.bf16.msra.mxu0 %v6949
  %7058 = vmatprep.subr.bf16.mxu0 %v6952
  %7059 = vmatpush1.bf16.msra.mxu0 %v6951
  %7060 = vmatprep.subr.bf16.mxu0 %v6954
  %7061 = vmatpush1.bf16.msra.mxu0 %v6953
  %7062 = vmatprep.subr.bf16.mxu0 %v6956
  %7063 = vmatpush1.bf16.msra.mxu0 %v6955
  %7064 = vmatprep.subr.bf16.mxu0 %v6958
  %7065 = vmatpush1.bf16.msra.mxu0 %v6957
  %7066 = vmatprep.subr.bf16.mxu0 %v6960
  %7067 = vmatpush1.bf16.msra.mxu0 %v6959
  %7068 = vmatprep.subr.bf16.mxu0 0
  %7069 = vmatpush1.bf16.msra.mxu0 0
  %7070 = vmatprep.subr.bf16.mxu0 0
  %7071 = vmatpush1.bf16.msra.mxu0 0
  %7072 = vmatprep.subr.bf16.mxu0 0
  %7073 = vmatpush1.bf16.msra.mxu0 0
  %7074 = vmatprep.subr.bf16.mxu0 0
  %7075 = vmatpush1.bf16.msra.mxu0 0
  %7076 = vmatprep.subr.bf16.mxu0 0
  %7077 = vmatpush1.bf16.msra.mxu0 0
  %7078 = vmatprep.subr.bf16.mxu0 0
  %7079 = vmatpush1.bf16.msra.mxu0 0
  %7080 = vmatprep.subr.bf16.mxu0 0
  %7081 = vmatpush1.bf16.msra.mxu0 0
  %7082 = vmatprep.subr.bf16.mxu0 0
  %7083 = vmatpush1.bf16.msra.mxu0 0
  %7084 = vmatprep.mubr.bf16.mxu0 0
  %7085 = vmatmul.mubr.bf16.gmra.mrb[0].mxu0 %v6708
  %v7086 = vpop.f32.mrb[0].mxu0
  %v7087 = vadd.f32 %v7044, %v7086
  %v7088 = vpop.f32.mrb[0].mxu0
  %v7089 = vadd.f32 %v7046, %v7088
  %v7090 = vpop.f32.mrb[0].mxu0
  %v7091 = vadd.f32 %v7048, %v7090
  %v7092 = vpop.f32.mrb[0].mxu0
  %v7093 = vadd.f32 %v7050, %v7092
  %7094 = vdwg.mxu0
  %v7095 = vmax.f32 %v7087, 0.0
  %v7096 = vmax.f32 %v7089, 0.0
  %v7097 = vmax.f32 %v7091, 0.0
  %v7098 = vmax.f32 %v7093, 0.0
  %v7099 = vpack.c.bf16 %v7097, %v7095
  %v7100 = vpack.c.bf16 %v7098, %v7096
  %v7101 = vld [vmem:[%s5] sm:$0xf]
  %v7102 = vld [vmem:[%s5 + $0x4] sm:$0xf]
  %v7103 = vld [vmem:[%s5 + $0x8] sm:$0xf]
  %v7104 = vld [vmem:[%s5 + $0xc] sm:$0xf]
  %v7105 = vld [vmem:[%s5 + $0x10] sm:$0xf]
  %v7106 = vld [vmem:[%s5 + $0x14] sm:$0xf]
  %v7107 = vld [vmem:[%s5 + $0x18] sm:$0xf]
  %v7108 = vld [vmem:[%s5 + $0x1c] sm:$0xf]
  %v7109 = vld [vmem:[%s5 + $0x20] sm:$0xf]
  %v7110 = vld [vmem:[%s5 + $0x24] sm:$0xf]
  %v7111 = vld [vmem:[%s5 + $0x28] sm:$0xf]
  %v7112 = vld [vmem:[%s5 + $0x2c] sm:$0xf]
  %v7113 = vld [vmem:[%s5 + $0x30] sm:$0xf]
  %v7114 = vld [vmem:[%s5 + $0x34] sm:$0xf]
  %v7115 = vld [vmem:[%s5 + $0x38] sm:$0xf]
  %v7116 = vld [vmem:[%s5 + $0x3c] sm:$0xf]
  %v7117 = vld [vmem:[%s5 + $0x40] sm:$0xf]
  %v7118 = vld [vmem:[%s5 + $0x44] sm:$0xf]
  %v7119 = vld [vmem:[%s5 + $0x48] sm:$0xf]
  %v7120 = vld [vmem:[%s5 + $0x4c] sm:$0xf]
  %v7121 = vld [vmem:[%s5 + $0x50] sm:$0xf]
  %v7122 = vld [vmem:[%s5 + $0x54] sm:$0xf]
  %v7123 = vld [vmem:[%s5 + $0x58] sm:$0xf]
  %v7124 = vld [vmem:[%s5 + $0x5c] sm:$0xf]
  %v7125 = vld [vmem:[%s5 + $0x60] sm:$0xf]
  %v7126 = vld [vmem:[%s5 + $0x64] sm:$0xf]
  %v7127 = vld [vmem:[%s5 + $0x68] sm:$0xf]
  %v7128 = vld [vmem:[%s5 + $0x6c] sm:$0xf]
  %v7129 = vld [vmem:[%s5 + $0x70] sm:$0xf]
  %v7130 = vld [vmem:[%s5 + $0x74] sm:$0xf]
  %v7131 = vld [vmem:[%s5 + $0x78] sm:$0xf]
  %v7132 = vld [vmem:[%s5 + $0x7c] sm:$0xf]
  %v7133 = vld [vmem:[%s6] sm:$0x1]
  %v7135 = vlaneseq
  %v7136 = vshrl.u32 %v7135, 7
  %v7137 = vsub.s32 0, %v7136
  %v7138 = vrot.slane %v7133, %v7137
  %v7172 = vunpack.c.l.b16 %v7101
  %v7173 = vunpack.c.l.b16 %v7102
  %v7174 = vunpack.c.l.b16 %v7103
  %v7175 = vunpack.c.l.b16 %v7104
  %v7176 = vunpack.c.l.b16 %v7105
  %v7177 = vunpack.c.l.b16 %v7106
  %v7178 = vunpack.c.l.b16 %v7107
  %v7179 = vunpack.c.l.b16 %v7108
  %v7180 = vunpack.c.l.b16 %v7109
  %v7181 = vunpack.c.l.b16 %v7110
  %v7182 = vunpack.c.l.b16 %v7111
  %v7183 = vunpack.c.l.b16 %v7112
  %v7184 = vunpack.c.l.b16 %v7113
  %v7185 = vunpack.c.l.b16 %v7114
  %v7186 = vunpack.c.l.b16 %v7115
  %v7187 = vunpack.c.l.b16 %v7116
  %v7188 = vunpack.c.l.b16 %v7117
  %v7189 = vunpack.c.l.b16 %v7118
  %v7190 = vunpack.c.l.b16 %v7119
  %v7191 = vunpack.c.l.b16 %v7120
  %v7192 = vunpack.c.l.b16 %v7121
  %v7193 = vunpack.c.l.b16 %v7122
  %v7194 = vunpack.c.l.b16 %v7123
  %v7195 = vunpack.c.l.b16 %v7124
  %v7196 = vunpack.c.l.b16 %v7125
  %v7197 = vunpack.c.l.b16 %v7126
  %v7198 = vunpack.c.l.b16 %v7127
  %v7199 = vunpack.c.l.b16 %v7128
  %v7200 = vunpack.c.l.b16 %v7129
  %v7201 = vunpack.c.l.b16 %v7130
  %v7202 = vunpack.c.l.b16 %v7131
  %v7203 = vunpack.c.l.b16 %v7132
  %v7204 = vpack.c.b16 %v7173, %v7172
  %v7205 = vpack.c.b16 %v7175, %v7174
  %v7206 = vpack.c.b16 %v7177, %v7176
  %v7207 = vpack.c.b16 %v7179, %v7178
  %v7208 = vpack.c.b16 %v7181, %v7180
  %v7209 = vpack.c.b16 %v7183, %v7182
  %v7210 = vpack.c.b16 %v7185, %v7184
  %v7211 = vpack.c.b16 %v7187, %v7186
  %v7212 = vpack.c.b16 %v7189, %v7188
  %v7213 = vpack.c.b16 %v7191, %v7190
  %v7214 = vpack.c.b16 %v7193, %v7192
  %v7215 = vpack.c.b16 %v7195, %v7194
  %v7216 = vpack.c.b16 %v7197, %v7196
  %v7217 = vpack.c.b16 %v7199, %v7198
  %v7218 = vpack.c.b16 %v7201, %v7200
  %v7219 = vpack.c.b16 %v7203, %v7202
  %7236 = vmatprep.subr.bf16.mxu0 0
  %7237 = vmatpush1.bf16.msra.mxu0 %v7204
  %7238 = vmatprep.subr.bf16.mxu0 0
  %7239 = vmatpush1.bf16.msra.mxu0 %v7205
  %7240 = vmatprep.subr.bf16.mxu0 0
  %7241 = vmatpush1.bf16.msra.mxu0 %v7206
  %7242 = vmatprep.subr.bf16.mxu0 0
  %7243 = vmatpush1.bf16.msra.mxu0 %v7207
  %7244 = vmatprep.subr.bf16.mxu0 0
  %7245 = vmatpush1.bf16.msra.mxu0 %v7208
  %7246 = vmatprep.subr.bf16.mxu0 0
  %7247 = vmatpush1.bf16.msra.mxu0 %v7209
  %7248 = vmatprep.subr.bf16.mxu0 0
  %7249 = vmatpush1.bf16.msra.mxu0 %v7210
  %7250 = vmatprep.subr.bf16.mxu0 0
  %7251 = vmatpush1.bf16.msra.mxu0 %v7211
  %7252 = vmatprep.subr.bf16.mxu0 0
  %7253 = vmatpush1.bf16.msra.mxu0 %v7212
  %7254 = vmatprep.subr.bf16.mxu0 0
  %7255 = vmatpush1.bf16.msra.mxu0 %v7213
  %7256 = vmatprep.subr.bf16.mxu0 0
  %7257 = vmatpush1.bf16.msra.mxu0 %v7214
  %7258 = vmatprep.subr.bf16.mxu0 0
  %7259 = vmatpush1.bf16.msra.mxu0 %v7215
  %7260 = vmatprep.subr.bf16.mxu0 0
  %7261 = vmatpush1.bf16.msra.mxu0 %v7216
  %7262 = vmatprep.subr.bf16.mxu0 0
  %7263 = vmatpush1.bf16.msra.mxu0 %v7217
  %7264 = vmatprep.subr.bf16.mxu0 0
  %7265 = vmatpush1.bf16.msra.mxu0 %v7218
  %7266 = vmatprep.subr.bf16.mxu0 0
  %7267 = vmatpush1.bf16.msra.mxu0 %v7219
  %7268 = vmatprep.mubr.bf16.mxu0 %v7100
  %7269 = vmatmul.mubr.bf16.gmra.mrb[0].mxu0 %v7099
  %v7270 = vpop.f32.mrb[0].mxu0
  %v7271 = vadd.f32 %v7138, %v7270
  %v7272 = vpop.f32.mrb[0].mxu0
  %v7273 = vpop.f32.mrb[0].mxu0
  %v7274 = vadd.f32 %v7138, %v7273
  %v7275 = vpop.f32.mrb[0].mxu0
  %7276 = vdwg.mxu0
  %7277 = vst [vmem:[%s7] sm:$0xff] %v7271
  %7278 = vst [vmem:[%s7 + $0x8] sm:$0xff] %v7274
  // Predicated region
  $region30: #{mini_alexnet_forward.9} parent=0 // pred_check
    _
  $region31: #{mini_alexnet_forward.9} parent=0 // pred_check_branch
    %7280 = sbr.rel (0) target = $region33
  $region32: #{mini_alexnet_forward.9} parent=0 // pred_region
    _
  $region33: #{mini_alexnet_forward.9} parent=0 // pred_fallthru
    _
  // Predicated region
  $region34: #{mini_alexnet_forward.9} parent=0 // pred_check
    _
  $region35: #{mini_alexnet_forward.9} parent=0 // pred_check_branch
    %7282 = sbr.rel (0) target = $region37
  $region36: #{mini_alexnet_forward.9} parent=0 // pred_region
    _
  $region37: #{mini_alexnet_forward.9} parent=0 // pred_fallthru
    _

</llo_original>
